<compile_context>
chip_gen: v6e
topology: v6e:2x2x1
jax: 0.10.0
libtpu: 0.0.40
codegen_flags: <defaults>
</compile_context>

<pallas_src>
import math

import jax
import jax.numpy as jnp
from jax.experimental import pallas as pl
from jax.experimental.pallas import tpu as pltpu


# ----------------------------------------------------------------------------
# Fused kernel: one batch item per grid step.
# ----------------------------------------------------------------------------
def make_stgnn_kernel(S, N, H, num_heads):
    DH = H // num_heads
    SN = S * N
    scale = 1.0 / math.sqrt(DH)

    def kernel(x_ref, adjb_ref,
               gc0w_ref, gc0b_ref, gc1w_ref, gc1b_ref,
               wqkv_ref, bqkv_ref, wo_ref, bo_ref,
               gwi_ref, gbi_ref, gwh_ref, gbh_ref,
               fcw_ref, fcb_ref,
               o_ref):
        f32 = jnp.float32

        # ---------------- GCN stack, all timesteps at once -------------------
        # Row order is (t, n).  adjb = kron(I_S, adj), so one (SN, SN) x (SN, H)
        # matmul performs `adj @ support_t` for every timestep simultaneously.
        h = x_ref[0].astype(f32)                                   # (SN, Fin)
        adjb = adjb_ref[...]                                       # (SN, SN)
        for w_ref, b_ref in ((gc0w_ref, gc0b_ref), (gc1w_ref, gc1b_ref)):
            support = jnp.dot(h, w_ref[...], preferred_element_type=f32)
            h = jnp.dot(adjb, support, preferred_element_type=f32) + b_ref[...]
            h = jnp.maximum(h, 0.0)                                # ReLU

        # ---------------- Multi-head self-attention over the node axis -------
        # Single fused QKV projection; attention batched over timesteps.
        qkv = jnp.dot(h, wqkv_ref[...], preferred_element_type=f32) + bqkv_ref[...]
        ctx_proj = None
        for hd in range(num_heads):
            lo = hd * DH
            qh = qkv[:, lo:lo + DH].reshape(S, N, DH)
            kh = qkv[:, H + lo:H + lo + DH].reshape(S, N, DH)
            vh = qkv[:, 2 * H + lo:2 * H + lo + DH].reshape(S, N, DH)
            s = jnp.einsum('tnd,tmd->tnm', qh, kh,
                           preferred_element_type=f32) * scale      # (S, N, N)
            s = s - jnp.max(s, axis=-1, keepdims=True)
            e = jnp.exp(s)
            a = e / jnp.sum(e, axis=-1, keepdims=True)
            ctx_h = jnp.einsum('tnm,tmd->tnd', a, vh,
                               preferred_element_type=f32).reshape(SN, DH)
            # accumulate output projection per head (avoids lane concatenate)
            part = jnp.dot(ctx_h, wo_ref[lo:lo + DH, :],
                           preferred_element_type=f32)
            ctx_proj = part if ctx_proj is None else ctx_proj + part
        attn_out = ctx_proj + bo_ref[...]                           # (SN, H)

        # ---------------- single-layer GRU over time --------------------------
        # Input-side gate projection hoisted out of the recurrence.
        gates_x = jnp.dot(attn_out, gwi_ref[...],
                          preferred_element_type=f32) + gbi_ref[...]  # (SN, 3H)
        w_h = gwh_ref[...]                                          # (H, 3H)
        b_h = gbh_ref[...]                                          # (1, 3H)
        hstate = jnp.zeros((N, H), f32)
        for t in range(S):                                          # short, static
            gx = gates_x[t * N:(t + 1) * N, :]                      # (N, 3H)
            gh = jnp.dot(hstate, w_h, preferred_element_type=f32) + b_h
            r = jax.nn.sigmoid(gx[:, :H] + gh[:, :H])
            z = jax.nn.sigmoid(gx[:, H:2 * H] + gh[:, H:2 * H])
            n = jnp.tanh(gx[:, 2 * H:] + r * gh[:, 2 * H:])
            hstate = (1.0 - z) * n + z * hstate

        # ---------------- fc_out = Linear + Softplus (fused epilogue) --------
        y = jnp.dot(hstate, fcw_ref[...],
                    preferred_element_type=f32) + fcb_ref[...]       # (N, O)
        # PyTorch Softplus with threshold 20
        y = jnp.where(y > 20.0, y, jnp.log1p(jnp.exp(jnp.minimum(y, 20.0))))
        o_ref[0] = y.astype(o_ref.dtype)

    return kernel


def _const_index_map(nd):
    def imap(i):
        return (0,) * nd
    return imap


def _const_spec(arr):
    return pl.BlockSpec(arr.shape, _const_index_map(arr.ndim))


# ----------------------------------------------------------------------------
# Full STGNN forward: all heavy work in one pallas_call.
# ----------------------------------------------------------------------------
def stgnn_forward(x, adj, params, *, num_heads, horizon):
    B, N, S, Fin = x.shape
    H = params["gc0_w"].shape[1]
    O = params["fc_w"].shape[1]
    SN = S * N

    # Row order (t, n): matches the reference's permute/view before attention.
    x_rows = jnp.transpose(x, (0, 2, 1, 3)).reshape(B, SN, Fin)
    # Block-diagonal adjacency: applies adj to every timestep in one matmul.
    adj_blk = jnp.kron(jnp.eye(S, dtype=adj.dtype), adj)            # (SN, SN)

    a = params["attn"]
    g = params["gru"]
    # Fused projection / gate weights (same mapping as PyTorch's packed layout).
    w_qkv = jnp.concatenate([a["wq"], a["wk"], a["wv"]], axis=1)    # (H, 3H)
    b_qkv = jnp.concatenate([a["bq"], a["bk"], a["bv"]], axis=1)    # (1, 3H)
    w_i = jnp.concatenate([g["w_ir"], g["w_iz"], g["w_in"]], axis=1)
    b_i = jnp.concatenate([g["b_ir"], g["b_iz"], g["b_in"]], axis=1)
    w_h = jnp.concatenate([g["w_hr"], g["w_hz"], g["w_hn"]], axis=1)
    b_h = jnp.concatenate([g["b_hr"], g["b_hz"], g["b_hn"]], axis=1)

    operands = (x_rows, adj_blk,
                params["gc0_w"], params["gc0_b"],
                params["gc1_w"], params["gc1_b"],
                w_qkv, b_qkv, a["wo"], a["bo"],
                w_i, b_i, w_h, b_h,
                params["fc_w"], params["fc_b"])

    in_specs = [pl.BlockSpec((1, SN, Fin), lambda i: (i, 0, 0))]
    in_specs += [_const_spec(op) for op in operands[1:]]

    last_out = pl.pallas_call(
        make_stgnn_kernel(S, N, H, num_heads),
        out_shape=jax.ShapeDtypeStruct((B, N, O), jnp.float32),
        grid=(B,),
        in_specs=in_specs,
        out_specs=pl.BlockSpec((1, N, O), lambda i: (i, 0, 0)),
        compiler_params=pltpu.CompilerParams(
            dimension_semantics=("parallel",)),   # batch -> 2 TCs on v7x
    )(*operands)

    # TODO(synk): the reference forward is truncated after `last_hidden`; we
    # apply fc_out once and repeat across the horizon as the decoder output.
    preds = jnp.broadcast_to(last_out.reshape(B, N, 1, O), (B, N, horizon, O))
    return preds


# ----------------------------------------------------------------------------
# Deterministic parameter initialization (per-gate, PyTorch-style layout)
# ----------------------------------------------------------------------------
def init_params(key, input_dim, hidden_dim, output_dim):
    ks = jax.random.split(key, 32)
    k = iter(ks)

    def w(shape, kk, scale=0.1):
        return (scale * jax.random.normal(kk, shape)).astype(jnp.float32)

    params = {
        "gc0_w": w((input_dim, hidden_dim), next(k)),
        "gc0_b": w((1, hidden_dim), next(k)),
        "gc1_w": w((hidden_dim, hidden_dim), next(k)),
        "gc1_b": w((1, hidden_dim), next(k)),
        "attn": {
            "wq": w((hidden_dim, hidden_dim), next(k)),
            "bq": w((1, hidden_dim), next(k)),
            "wk": w((hidden_dim, hidden_dim), next(k)),
            "bk": w((1, hidden_dim), next(k)),
            "wv": w((hidden_dim, hidden_dim), next(k)),
            "bv": w((1, hidden_dim), next(k)),
            "wo": w((hidden_dim, hidden_dim), next(k)),
            "bo": w((1, hidden_dim), next(k)),
        },
        "gru": {
            "w_ir": w((hidden_dim, hidden_dim), next(k)),
            "w_iz": w((hidden_dim, hidden_dim), next(k)),
            "w_in": w((hidden_dim, hidden_dim), next(k)),
            "w_hr": w((hidden_dim, hidden_dim), next(k)),
            "w_hz": w((hidden_dim, hidden_dim), next(k)),
            "w_hn": w((hidden_dim, hidden_dim), next(k)),
            "b_ir": w((1, hidden_dim), next(k)),
            "b_iz": w((1, hidden_dim), next(k)),
            "b_in": w((1, hidden_dim), next(k)),
            "b_hr": w((1, hidden_dim), next(k)),
            "b_hz": w((1, hidden_dim), next(k)),
            "b_hn": w((1, hidden_dim), next(k)),
        },
        "fc_w": w((hidden_dim, output_dim), next(k)),
        "fc_b": w((1, output_dim), next(k)),
    }
    return params


if __name__ == "__main__":
    # small config consistent with the module
    batch, num_nodes, seq_len = 2, 8, 8
    input_dim, hidden_dim, output_dim = 4, 32, 2
    num_heads, horizon = 4, 3

    key = jax.random.PRNGKey(0)
    kx, kadj, kp = jax.random.split(key, 3)

    x = jax.random.normal(kx, (batch, num_nodes, seq_len, input_dim), jnp.float32)

    # random symmetric, row-normalized adjacency with self loops
    a = jax.random.uniform(kadj, (num_nodes, num_nodes))
    a = (a + a.T) * 0.5 + jnp.eye(num_nodes)
    adj = (a / jnp.sum(a, axis=-1, keepdims=True)).astype(jnp.float32)

    params = init_params(kp, input_dim, hidden_dim, output_dim)

    fwd = jax.jit(lambda x, adj: stgnn_forward(
        x, adj, params, num_heads=num_heads, horizon=horizon))
    out = fwd(x, adj)
    jax.block_until_ready(out)

    assert out.shape == (batch, num_nodes, horizon, output_dim), out.shape
    assert bool(jnp.all(jnp.isfinite(out)))
    print("KERNEL_OK")
</pallas_src>

<mosaic_0001>
module attributes {stable_mosaic.version = 11 : i64} {
  func.func @kernel(%arg0: i32, %arg1: memref<1x64x4xf32, #tpu.memory_space<vmem>>, %arg2: memref<64x64xf32, #tpu.memory_space<vmem>>, %arg3: memref<4x32xf32, #tpu.memory_space<vmem>>, %arg4: memref<1x32xf32, #tpu.memory_space<vmem>>, %arg5: memref<32x32xf32, #tpu.memory_space<vmem>>, %arg6: memref<1x32xf32, #tpu.memory_space<vmem>>, %arg7: memref<32x96xf32, #tpu.memory_space<vmem>>, %arg8: memref<1x96xf32, #tpu.memory_space<vmem>>, %arg9: memref<32x32xf32, #tpu.memory_space<vmem>>, %arg10: memref<1x32xf32, #tpu.memory_space<vmem>>, %arg11: memref<32x96xf32, #tpu.memory_space<vmem>>, %arg12: memref<1x96xf32, #tpu.memory_space<vmem>>, %arg13: memref<32x96xf32, #tpu.memory_space<vmem>>, %arg14: memref<1x96xf32, #tpu.memory_space<vmem>>, %arg15: memref<32x2xf32, #tpu.memory_space<vmem>>, %arg16: memref<1x2xf32, #tpu.memory_space<vmem>>, %arg17: memref<1x8x2xf32, #tpu.memory_space<vmem>>) attributes {dimension_semantics = [#tpu.dimension_semantics<parallel>], iteration_bounds = array<i64: 2>, scalar_prefetch = 0 : i64, scratch_operands = 0 : i64, tpu.core_type = #tpu.core_type<tc>, window_params = [{transform_indices = @transform_0, window_bounds = array<i64: 1, 64, 4>}, {pipeline_mode = #tpu.pipeline_mode<synchronous>, transform_indices = @transform_1, window_bounds = array<i64: 64, 64>}, {pipeline_mode = #tpu.pipeline_mode<synchronous>, transform_indices = @transform_2, window_bounds = array<i64: 4, 32>}, {pipeline_mode = #tpu.pipeline_mode<synchronous>, transform_indices = @transform_3, window_bounds = array<i64: 1, 32>}, {pipeline_mode = #tpu.pipeline_mode<synchronous>, transform_indices = @transform_4, window_bounds = array<i64: 32, 32>}, {pipeline_mode = #tpu.pipeline_mode<synchronous>, transform_indices = @transform_5, window_bounds = array<i64: 1, 32>}, {pipeline_mode = #tpu.pipeline_mode<synchronous>, transform_indices = @transform_6, window_bounds = array<i64: 32, 96>}, {pipeline_mode = #tpu.pipeline_mode<synchronous>, transform_indices = @transform_7, window_bounds = array<i64: 1, 96>}, {pipeline_mode = #tpu.pipeline_mode<synchronous>, transform_indices = @transform_8, window_bounds = array<i64: 32, 32>}, {pipeline_mode = #tpu.pipeline_mode<synchronous>, transform_indices = @transform_9, window_bounds = array<i64: 1, 32>}, {pipeline_mode = #tpu.pipeline_mode<synchronous>, transform_indices = @transform_10, window_bounds = array<i64: 32, 96>}, {pipeline_mode = #tpu.pipeline_mode<synchronous>, transform_indices = @transform_11, window_bounds = array<i64: 1, 96>}, {pipeline_mode = #tpu.pipeline_mode<synchronous>, transform_indices = @transform_12, window_bounds = array<i64: 32, 96>}, {pipeline_mode = #tpu.pipeline_mode<synchronous>, transform_indices = @transform_13, window_bounds = array<i64: 1, 96>}, {pipeline_mode = #tpu.pipeline_mode<synchronous>, transform_indices = @transform_14, window_bounds = array<i64: 32, 2>}, {pipeline_mode = #tpu.pipeline_mode<synchronous>, transform_indices = @transform_15, window_bounds = array<i64: 1, 2>}, {transform_indices = @transform_16, window_bounds = array<i64: 1, 8, 2>}]} {
    %c0 = arith.constant 0 : index
    %c0_0 = arith.constant 0 : index
    %c0_1 = arith.constant 0 : index
    %0 = vector.load %arg1[%c0, %c0_0, %c0_1] : memref<1x64x4xf32, #tpu.memory_space<vmem>>, vector<1x64x4xf32>
    %1 = vector.shape_cast %0 : vector<1x64x4xf32> to vector<64x4xf32>
    %c0_2 = arith.constant 0 : index
    %c0_3 = arith.constant 0 : index
    %2 = vector.load %arg2[%c0_2, %c0_3] : memref<64x64xf32, #tpu.memory_space<vmem>>, vector<64x64xf32>
    %c0_4 = arith.constant 0 : index
    %c0_5 = arith.constant 0 : index
    %3 = vector.load %arg3[%c0_4, %c0_5] : memref<4x32xf32, #tpu.memory_space<vmem>>, vector<4x32xf32>
    %cst = arith.constant dense<0.000000e+00> : vector<64x32xf32>
    %4 = tpu.matmul %1, %3, %cst {dimension_numbers = #tpu.dot_dimension_numbers<[1], [0], [0], [1], [0, 0, 1, 1], [], []>} : vector<64x4xf32>, vector<4x32xf32>, vector<64x32xf32> -> vector<64x32xf32>
    %cst_6 = arith.constant dense<0.000000e+00> : vector<64x32xf32>
    %5 = tpu.matmul %2, %4, %cst_6 {dimension_numbers = #tpu.dot_dimension_numbers<[1], [0], [0], [1], [0, 0, 1, 1], [], []>} : vector<64x64xf32>, vector<64x32xf32>, vector<64x32xf32> -> vector<64x32xf32>
    %c0_7 = arith.constant 0 : index
    %c0_8 = arith.constant 0 : index
    %6 = vector.load %arg4[%c0_7, %c0_8] : memref<1x32xf32, #tpu.memory_space<vmem>>, vector<1x32xf32>
    %7 = vector.broadcast %6 : vector<1x32xf32> to vector<64x32xf32>
    %8 = arith.addf %5, %7 : vector<64x32xf32>
    %cst_9 = arith.constant 0.000000e+00 : f32
    %9 = vector.broadcast %cst_9 : f32 to vector<64x32xf32>
    %10 = arith.maximumf %8, %9 : vector<64x32xf32>
    %c0_10 = arith.constant 0 : index
    %c0_11 = arith.constant 0 : index
    %11 = vector.load %arg5[%c0_10, %c0_11] : memref<32x32xf32, #tpu.memory_space<vmem>>, vector<32x32xf32>
    %cst_12 = arith.constant dense<0.000000e+00> : vector<64x32xf32>
    %12 = tpu.matmul %10, %11, %cst_12 {dimension_numbers = #tpu.dot_dimension_numbers<[1], [0], [0], [1], [0, 0, 1, 1], [], []>} : vector<64x32xf32>, vector<32x32xf32>, vector<64x32xf32> -> vector<64x32xf32>
    %cst_13 = arith.constant dense<0.000000e+00> : vector<64x32xf32>
    %13 = tpu.matmul %2, %12, %cst_13 {dimension_numbers = #tpu.dot_dimension_numbers<[1], [0], [0], [1], [0, 0, 1, 1], [], []>} : vector<64x64xf32>, vector<64x32xf32>, vector<64x32xf32> -> vector<64x32xf32>
    %c0_14 = arith.constant 0 : index
    %c0_15 = arith.constant 0 : index
    %14 = vector.load %arg6[%c0_14, %c0_15] : memref<1x32xf32, #tpu.memory_space<vmem>>, vector<1x32xf32>
    %15 = vector.broadcast %14 : vector<1x32xf32> to vector<64x32xf32>
    %16 = arith.addf %13, %15 : vector<64x32xf32>
    %cst_16 = arith.constant 0.000000e+00 : f32
    %17 = vector.broadcast %cst_16 : f32 to vector<64x32xf32>
    %18 = arith.maximumf %16, %17 : vector<64x32xf32>
    %c0_17 = arith.constant 0 : index
    %c0_18 = arith.constant 0 : index
    %19 = vector.load %arg7[%c0_17, %c0_18] : memref<32x96xf32, #tpu.memory_space<vmem>>, vector<32x96xf32>
    %cst_19 = arith.constant dense<0.000000e+00> : vector<64x96xf32>
    %20 = tpu.matmul %18, %19, %cst_19 {dimension_numbers = #tpu.dot_dimension_numbers<[1], [0], [0], [1], [0, 0, 1, 1], [], []>} : vector<64x32xf32>, vector<32x96xf32>, vector<64x96xf32> -> vector<64x96xf32>
    %c0_20 = arith.constant 0 : index
    %c0_21 = arith.constant 0 : index
    %21 = vector.load %arg8[%c0_20, %c0_21] : memref<1x96xf32, #tpu.memory_space<vmem>>, vector<1x96xf32>
    %22 = vector.broadcast %21 : vector<1x96xf32> to vector<64x96xf32>
    %23 = arith.addf %20, %22 : vector<64x96xf32>
    %24 = vector.extract_strided_slice %23 {offsets = [0, 0], sizes = [64, 8], strides = [1, 1]} : vector<64x96xf32> to vector<64x8xf32>
    %25 = vector.shape_cast %24 : vector<64x8xf32> to vector<8x8x8xf32>
    %26 = vector.extract_strided_slice %23 {offsets = [0, 32], sizes = [64, 8], strides = [1, 1]} : vector<64x96xf32> to vector<64x8xf32>
    %27 = vector.shape_cast %26 : vector<64x8xf32> to vector<8x8x8xf32>
    %28 = vector.extract_strided_slice %23 {offsets = [0, 64], sizes = [64, 8], strides = [1, 1]} : vector<64x96xf32> to vector<64x8xf32>
    %29 = vector.shape_cast %28 : vector<64x8xf32> to vector<8x8x8xf32>
    "tpu.trace_start"() <{level = 10 : i32, message = "tnd,tmd->tnm"}> : () -> ()
    %cst_22 = arith.constant dense<0.000000e+00> : vector<8x8x8xf32>
    %30 = tpu.matmul %25, %27, %cst_22 {dimension_numbers = #tpu.dot_dimension_numbers<[2], [2], [1], [1], [0, 0, 0, 1, 1, 1], [0], [0]>} : vector<8x8x8xf32>, vector<8x8x8xf32>, vector<8x8x8xf32> -> vector<8x8x8xf32>
    "tpu.trace_stop"() : () -> ()
    %cst_23 = arith.constant 0.353553385 : f32
    %31 = vector.broadcast %cst_23 : f32 to vector<8x8x8xf32>
    %32 = arith.mulf %30, %31 : vector<8x8x8xf32>
    %cst_24 = arith.constant dense<0xFF800000> : vector<8x8xf32>
    %33 = vector.multi_reduction <maximumf>, %32, %cst_24 [2] : vector<8x8x8xf32> to vector<8x8xf32>
    %34 = vector.shape_cast %33 : vector<8x8xf32> to vector<8x8x1xf32>
    %35 = vector.broadcast %34 : vector<8x8x1xf32> to vector<8x8x8xf32>
    %36 = arith.subf %32, %35 : vector<8x8x8xf32>
    %37 = math.exp %36 : vector<8x8x8xf32>
    %cst_25 = arith.constant dense<0.000000e+00> : vector<8x8xf32>
    %38 = vector.multi_reduction <add>, %37, %cst_25 [2] : vector<8x8x8xf32> to vector<8x8xf32>
    %39 = vector.shape_cast %38 : vector<8x8xf32> to vector<8x8x1xf32>
    %40 = vector.broadcast %39 : vector<8x8x1xf32> to vector<8x8x8xf32>
    %41 = arith.divf %37, %40 : vector<8x8x8xf32>
    "tpu.trace_start"() <{level = 10 : i32, message = "tnm,tmd->tnd"}> : () -> ()
    %cst_26 = arith.constant dense<0.000000e+00> : vector<8x8x8xf32>
    %42 = tpu.matmul %41, %29, %cst_26 {dimension_numbers = #tpu.dot_dimension_numbers<[2], [1], [1], [2], [0, 0, 0, 1, 1, 2], [0], [0]>} : vector<8x8x8xf32>, vector<8x8x8xf32>, vector<8x8x8xf32> -> vector<8x8x8xf32>
    "tpu.trace_stop"() : () -> ()
    %43 = vector.shape_cast %42 : vector<8x8x8xf32> to vector<64x8xf32>
    %c0_27 = arith.constant 0 : index
    %c0_28 = arith.constant 0 : index
    %44 = vector.load %arg9[%c0_27, %c0_28] : memref<32x32xf32, #tpu.memory_space<vmem>>, vector<8x32xf32>
    %cst_29 = arith.constant dense<0.000000e+00> : vector<64x32xf32>
    %45 = tpu.matmul %43, %44, %cst_29 {dimension_numbers = #tpu.dot_dimension_numbers<[1], [0], [0], [1], [0, 0, 1, 1], [], []>} : vector<64x8xf32>, vector<8x32xf32>, vector<64x32xf32> -> vector<64x32xf32>
    %46 = vector.extract_strided_slice %23 {offsets = [0, 8], sizes = [64, 8], strides = [1, 1]} : vector<64x96xf32> to vector<64x8xf32>
    %47 = vector.shape_cast %46 : vector<64x8xf32> to vector<8x8x8xf32>
    %48 = vector.extract_strided_slice %23 {offsets = [0, 40], sizes = [64, 8], strides = [1, 1]} : vector<64x96xf32> to vector<64x8xf32>
    %49 = vector.shape_cast %48 : vector<64x8xf32> to vector<8x8x8xf32>
    %50 = vector.extract_strided_slice %23 {offsets = [0, 72], sizes = [64, 8], strides = [1, 1]} : vector<64x96xf32> to vector<64x8xf32>
    %51 = vector.shape_cast %50 : vector<64x8xf32> to vector<8x8x8xf32>
    "tpu.trace_start"() <{level = 10 : i32, message = "tnd,tmd->tnm"}> : () -> ()
    %cst_30 = arith.constant dense<0.000000e+00> : vector<8x8x8xf32>
    %52 = tpu.matmul %47, %49, %cst_30 {dimension_numbers = #tpu.dot_dimension_numbers<[2], [2], [1], [1], [0, 0, 0, 1, 1, 1], [0], [0]>} : vector<8x8x8xf32>, vector<8x8x8xf32>, vector<8x8x8xf32> -> vector<8x8x8xf32>
    "tpu.trace_stop"() : () -> ()
    %cst_31 = arith.constant 0.353553385 : f32
    %53 = vector.broadcast %cst_31 : f32 to vector<8x8x8xf32>
    %54 = arith.mulf %52, %53 : vector<8x8x8xf32>
    %cst_32 = arith.constant dense<0xFF800000> : vector<8x8xf32>
    %55 = vector.multi_reduction <maximumf>, %54, %cst_32 [2] : vector<8x8x8xf32> to vector<8x8xf32>
    %56 = vector.shape_cast %55 : vector<8x8xf32> to vector<8x8x1xf32>
    %57 = vector.broadcast %56 : vector<8x8x1xf32> to vector<8x8x8xf32>
    %58 = arith.subf %54, %57 : vector<8x8x8xf32>
    %59 = math.exp %58 : vector<8x8x8xf32>
    %cst_33 = arith.constant dense<0.000000e+00> : vector<8x8xf32>
    %60 = vector.multi_reduction <add>, %59, %cst_33 [2] : vector<8x8x8xf32> to vector<8x8xf32>
    %61 = vector.shape_cast %60 : vector<8x8xf32> to vector<8x8x1xf32>
    %62 = vector.broadcast %61 : vector<8x8x1xf32> to vector<8x8x8xf32>
    %63 = arith.divf %59, %62 : vector<8x8x8xf32>
    "tpu.trace_start"() <{level = 10 : i32, message = "tnm,tmd->tnd"}> : () -> ()
    %cst_34 = arith.constant dense<0.000000e+00> : vector<8x8x8xf32>
    %64 = tpu.matmul %63, %51, %cst_34 {dimension_numbers = #tpu.dot_dimension_numbers<[2], [1], [1], [2], [0, 0, 0, 1, 1, 2], [0], [0]>} : vector<8x8x8xf32>, vector<8x8x8xf32>, vector<8x8x8xf32> -> vector<8x8x8xf32>
    "tpu.trace_stop"() : () -> ()
    %65 = vector.shape_cast %64 : vector<8x8x8xf32> to vector<64x8xf32>
    %c8 = arith.constant 8 : index
    %c0_35 = arith.constant 0 : index
    %66 = vector.load %arg9[%c8, %c0_35] : memref<32x32xf32, #tpu.memory_space<vmem>>, vector<8x32xf32>
    %cst_36 = arith.constant dense<0.000000e+00> : vector<64x32xf32>
    %67 = tpu.matmul %65, %66, %cst_36 {dimension_numbers = #tpu.dot_dimension_numbers<[1], [0], [0], [1], [0, 0, 1, 1], [], []>} : vector<64x8xf32>, vector<8x32xf32>, vector<64x32xf32> -> vector<64x32xf32>
    %68 = arith.addf %45, %67 : vector<64x32xf32>
    %69 = vector.extract_strided_slice %23 {offsets = [0, 16], sizes = [64, 8], strides = [1, 1]} : vector<64x96xf32> to vector<64x8xf32>
    %70 = vector.shape_cast %69 : vector<64x8xf32> to vector<8x8x8xf32>
    %71 = vector.extract_strided_slice %23 {offsets = [0, 48], sizes = [64, 8], strides = [1, 1]} : vector<64x96xf32> to vector<64x8xf32>
    %72 = vector.shape_cast %71 : vector<64x8xf32> to vector<8x8x8xf32>
    %73 = vector.extract_strided_slice %23 {offsets = [0, 80], sizes = [64, 8], strides = [1, 1]} : vector<64x96xf32> to vector<64x8xf32>
    %74 = vector.shape_cast %73 : vector<64x8xf32> to vector<8x8x8xf32>
    "tpu.trace_start"() <{level = 10 : i32, message = "tnd,tmd->tnm"}> : () -> ()
    %cst_37 = arith.constant dense<0.000000e+00> : vector<8x8x8xf32>
    %75 = tpu.matmul %70, %72, %cst_37 {dimension_numbers = #tpu.dot_dimension_numbers<[2], [2], [1], [1], [0, 0, 0, 1, 1, 1], [0], [0]>} : vector<8x8x8xf32>, vector<8x8x8xf32>, vector<8x8x8xf32> -> vector<8x8x8xf32>
    "tpu.trace_stop"() : () -> ()
    %cst_38 = arith.constant 0.353553385 : f32
    %76 = vector.broadcast %cst_38 : f32 to vector<8x8x8xf32>
    %77 = arith.mulf %75, %76 : vector<8x8x8xf32>
    %cst_39 = arith.constant dense<0xFF800000> : vector<8x8xf32>
    %78 = vector.multi_reduction <maximumf>, %77, %cst_39 [2] : vector<8x8x8xf32> to vector<8x8xf32>
    %79 = vector.shape_cast %78 : vector<8x8xf32> to vector<8x8x1xf32>
    %80 = vector.broadcast %79 : vector<8x8x1xf32> to vector<8x8x8xf32>
    %81 = arith.subf %77, %80 : vector<8x8x8xf32>
    %82 = math.exp %81 : vector<8x8x8xf32>
    %cst_40 = arith.constant dense<0.000000e+00> : vector<8x8xf32>
    %83 = vector.multi_reduction <add>, %82, %cst_40 [2] : vector<8x8x8xf32> to vector<8x8xf32>
    %84 = vector.shape_cast %83 : vector<8x8xf32> to vector<8x8x1xf32>
    %85 = vector.broadcast %84 : vector<8x8x1xf32> to vector<8x8x8xf32>
    %86 = arith.divf %82, %85 : vector<8x8x8xf32>
    "tpu.trace_start"() <{level = 10 : i32, message = "tnm,tmd->tnd"}> : () -> ()
    %cst_41 = arith.constant dense<0.000000e+00> : vector<8x8x8xf32>
    %87 = tpu.matmul %86, %74, %cst_41 {dimension_numbers = #tpu.dot_dimension_numbers<[2], [1], [1], [2], [0, 0, 0, 1, 1, 2], [0], [0]>} : vector<8x8x8xf32>, vector<8x8x8xf32>, vector<8x8x8xf32> -> vector<8x8x8xf32>
    "tpu.trace_stop"() : () -> ()
    %88 = vector.shape_cast %87 : vector<8x8x8xf32> to vector<64x8xf32>
    %c16 = arith.constant 16 : index
    %c0_42 = arith.constant 0 : index
    %89 = vector.load %arg9[%c16, %c0_42] : memref<32x32xf32, #tpu.memory_space<vmem>>, vector<8x32xf32>
    %cst_43 = arith.constant dense<0.000000e+00> : vector<64x32xf32>
    %90 = tpu.matmul %88, %89, %cst_43 {dimension_numbers = #tpu.dot_dimension_numbers<[1], [0], [0], [1], [0, 0, 1, 1], [], []>} : vector<64x8xf32>, vector<8x32xf32>, vector<64x32xf32> -> vector<64x32xf32>
    %91 = arith.addf %68, %90 : vector<64x32xf32>
    %92 = vector.extract_strided_slice %23 {offsets = [0, 24], sizes = [64, 8], strides = [1, 1]} : vector<64x96xf32> to vector<64x8xf32>
    %93 = vector.shape_cast %92 : vector<64x8xf32> to vector<8x8x8xf32>
    %94 = vector.extract_strided_slice %23 {offsets = [0, 56], sizes = [64, 8], strides = [1, 1]} : vector<64x96xf32> to vector<64x8xf32>
    %95 = vector.shape_cast %94 : vector<64x8xf32> to vector<8x8x8xf32>
    %96 = vector.extract_strided_slice %23 {offsets = [0, 88], sizes = [64, 8], strides = [1, 1]} : vector<64x96xf32> to vector<64x8xf32>
    %97 = vector.shape_cast %96 : vector<64x8xf32> to vector<8x8x8xf32>
    "tpu.trace_start"() <{level = 10 : i32, message = "tnd,tmd->tnm"}> : () -> ()
    %cst_44 = arith.constant dense<0.000000e+00> : vector<8x8x8xf32>
    %98 = tpu.matmul %93, %95, %cst_44 {dimension_numbers = #tpu.dot_dimension_numbers<[2], [2], [1], [1], [0, 0, 0, 1, 1, 1], [0], [0]>} : vector<8x8x8xf32>, vector<8x8x8xf32>, vector<8x8x8xf32> -> vector<8x8x8xf32>
    "tpu.trace_stop"() : () -> ()
    %cst_45 = arith.constant 0.353553385 : f32
    %99 = vector.broadcast %cst_45 : f32 to vector<8x8x8xf32>
    %100 = arith.mulf %98, %99 : vector<8x8x8xf32>
    %cst_46 = arith.constant dense<0xFF800000> : vector<8x8xf32>
    %101 = vector.multi_reduction <maximumf>, %100, %cst_46 [2] : vector<8x8x8xf32> to vector<8x8xf32>
    %102 = vector.shape_cast %101 : vector<8x8xf32> to vector<8x8x1xf32>
    %103 = vector.broadcast %102 : vector<8x8x1xf32> to vector<8x8x8xf32>
    %104 = arith.subf %100, %103 : vector<8x8x8xf32>
    %105 = math.exp %104 : vector<8x8x8xf32>
    %cst_47 = arith.constant dense<0.000000e+00> : vector<8x8xf32>
    %106 = vector.multi_reduction <add>, %105, %cst_47 [2] : vector<8x8x8xf32> to vector<8x8xf32>
    %107 = vector.shape_cast %106 : vector<8x8xf32> to vector<8x8x1xf32>
    %108 = vector.broadcast %107 : vector<8x8x1xf32> to vector<8x8x8xf32>
    %109 = arith.divf %105, %108 : vector<8x8x8xf32>
    "tpu.trace_start"() <{level = 10 : i32, message = "tnm,tmd->tnd"}> : () -> ()
    %cst_48 = arith.constant dense<0.000000e+00> : vector<8x8x8xf32>
    %110 = tpu.matmul %109, %97, %cst_48 {dimension_numbers = #tpu.dot_dimension_numbers<[2], [1], [1], [2], [0, 0, 0, 1, 1, 2], [0], [0]>} : vector<8x8x8xf32>, vector<8x8x8xf32>, vector<8x8x8xf32> -> vector<8x8x8xf32>
    "tpu.trace_stop"() : () -> ()
    %111 = vector.shape_cast %110 : vector<8x8x8xf32> to vector<64x8xf32>
    %c24 = arith.constant 24 : index
    %c0_49 = arith.constant 0 : index
    %112 = vector.load %arg9[%c24, %c0_49] : memref<32x32xf32, #tpu.memory_space<vmem>>, vector<8x32xf32>
    %cst_50 = arith.constant dense<0.000000e+00> : vector<64x32xf32>
    %113 = tpu.matmul %111, %112, %cst_50 {dimension_numbers = #tpu.dot_dimension_numbers<[1], [0], [0], [1], [0, 0, 1, 1], [], []>} : vector<64x8xf32>, vector<8x32xf32>, vector<64x32xf32> -> vector<64x32xf32>
    %114 = arith.addf %91, %113 : vector<64x32xf32>
    %c0_51 = arith.constant 0 : index
    %c0_52 = arith.constant 0 : index
    %115 = vector.load %arg10[%c0_51, %c0_52] : memref<1x32xf32, #tpu.memory_space<vmem>>, vector<1x32xf32>
    %116 = vector.broadcast %115 : vector<1x32xf32> to vector<64x32xf32>
    %117 = arith.addf %114, %116 : vector<64x32xf32>
    %c0_53 = arith.constant 0 : index
    %c0_54 = arith.constant 0 : index
    %118 = vector.load %arg11[%c0_53, %c0_54] : memref<32x96xf32, #tpu.memory_space<vmem>>, vector<32x96xf32>
    %cst_55 = arith.constant dense<0.000000e+00> : vector<64x96xf32>
    %119 = tpu.matmul %117, %118, %cst_55 {dimension_numbers = #tpu.dot_dimension_numbers<[1], [0], [0], [1], [0, 0, 1, 1], [], []>} : vector<64x32xf32>, vector<32x96xf32>, vector<64x96xf32> -> vector<64x96xf32>
    %c0_56 = arith.constant 0 : index
    %c0_57 = arith.constant 0 : index
    %120 = vector.load %arg12[%c0_56, %c0_57] : memref<1x96xf32, #tpu.memory_space<vmem>>, vector<1x96xf32>
    %121 = vector.broadcast %120 : vector<1x96xf32> to vector<64x96xf32>
    %122 = arith.addf %119, %121 : vector<64x96xf32>
    %c0_58 = arith.constant 0 : index
    %c0_59 = arith.constant 0 : index
    %123 = vector.load %arg13[%c0_58, %c0_59] : memref<32x96xf32, #tpu.memory_space<vmem>>, vector<32x96xf32>
    %c0_60 = arith.constant 0 : index
    %c0_61 = arith.constant 0 : index
    %124 = vector.load %arg14[%c0_60, %c0_61] : memref<1x96xf32, #tpu.memory_space<vmem>>, vector<1x96xf32>
    %cst_62 = arith.constant 0.000000e+00 : f32
    %125 = vector.broadcast %cst_62 : f32 to vector<8x32xf32>
    %126 = vector.extract_strided_slice %122 {offsets = [0, 0], sizes = [8, 96], strides = [1, 1]} : vector<64x96xf32> to vector<8x96xf32>
    %cst_63 = arith.constant dense<0.000000e+00> : vector<8x96xf32>
    %127 = tpu.matmul %125, %123, %cst_63 {dimension_numbers = #tpu.dot_dimension_numbers<[1], [0], [0], [1], [0, 0, 1, 1], [], []>} : vector<8x32xf32>, vector<32x96xf32>, vector<8x96xf32> -> vector<8x96xf32>
    %128 = vector.broadcast %124 : vector<1x96xf32> to vector<8x96xf32>
    %129 = arith.addf %127, %128 : vector<8x96xf32>
    %130 = vector.extract_strided_slice %126 {offsets = [0, 0], sizes = [8, 32], strides = [1, 1]} : vector<8x96xf32> to vector<8x32xf32>
    %131 = vector.extract_strided_slice %129 {offsets = [0, 0], sizes = [8, 32], strides = [1, 1]} : vector<8x96xf32> to vector<8x32xf32>
    %132 = arith.addf %130, %131 : vector<8x32xf32>
    %133 = arith.negf %132 : vector<8x32xf32>
    %134 = math.exp %133 : vector<8x32xf32>
    %cst_64 = arith.constant 1.000000e+00 : f32
    %135 = vector.broadcast %cst_64 : f32 to vector<8x32xf32>
    %136 = arith.addf %135, %134 : vector<8x32xf32>
    %137 = arith.divf %135, %136 : vector<8x32xf32>
    %138 = vector.extract_strided_slice %126 {offsets = [0, 32], sizes = [8, 32], strides = [1, 1]} : vector<8x96xf32> to vector<8x32xf32>
    %139 = vector.extract_strided_slice %129 {offsets = [0, 32], sizes = [8, 32], strides = [1, 1]} : vector<8x96xf32> to vector<8x32xf32>
    %140 = arith.addf %138, %139 : vector<8x32xf32>
    %141 = arith.negf %140 : vector<8x32xf32>
    %142 = math.exp %141 : vector<8x32xf32>
    %cst_65 = arith.constant 1.000000e+00 : f32
    %143 = vector.broadcast %cst_65 : f32 to vector<8x32xf32>
    %144 = arith.addf %143, %142 : vector<8x32xf32>
    %145 = arith.divf %143, %144 : vector<8x32xf32>
    %146 = vector.extract_strided_slice %126 {offsets = [0, 64], sizes = [8, 32], strides = [1, 1]} : vector<8x96xf32> to vector<8x32xf32>
    %147 = vector.extract_strided_slice %129 {offsets = [0, 64], sizes = [8, 32], strides = [1, 1]} : vector<8x96xf32> to vector<8x32xf32>
    %148 = arith.mulf %137, %147 : vector<8x32xf32>
    %149 = arith.addf %146, %148 : vector<8x32xf32>
    %150 = math.tanh %149 : vector<8x32xf32>
    %cst_66 = arith.constant 1.000000e+00 : f32
    %151 = vector.broadcast %cst_66 : f32 to vector<8x32xf32>
    %152 = arith.subf %151, %145 : vector<8x32xf32>
    %153 = arith.mulf %152, %150 : vector<8x32xf32>
    %154 = arith.mulf %145, %125 : vector<8x32xf32>
    %155 = arith.addf %153, %154 : vector<8x32xf32>
    %156 = vector.extract_strided_slice %122 {offsets = [8, 0], sizes = [8, 96], strides = [1, 1]} : vector<64x96xf32> to vector<8x96xf32>
    %cst_67 = arith.constant dense<0.000000e+00> : vector<8x96xf32>
    %157 = tpu.matmul %155, %123, %cst_67 {dimension_numbers = #tpu.dot_dimension_numbers<[1], [0], [0], [1], [0, 0, 1, 1], [], []>} : vector<8x32xf32>, vector<32x96xf32>, vector<8x96xf32> -> vector<8x96xf32>
    %158 = vector.broadcast %124 : vector<1x96xf32> to vector<8x96xf32>
    %159 = arith.addf %157, %158 : vector<8x96xf32>
    %160 = vector.extract_strided_slice %156 {offsets = [0, 0], sizes = [8, 32], strides = [1, 1]} : vector<8x96xf32> to vector<8x32xf32>
    %161 = vector.extract_strided_slice %159 {offsets = [0, 0], sizes = [8, 32], strides = [1, 1]} : vector<8x96xf32> to vector<8x32xf32>
    %162 = arith.addf %160, %161 : vector<8x32xf32>
    %163 = arith.negf %162 : vector<8x32xf32>
    %164 = math.exp %163 : vector<8x32xf32>
    %cst_68 = arith.constant 1.000000e+00 : f32
    %165 = vector.broadcast %cst_68 : f32 to vector<8x32xf32>
    %166 = arith.addf %165, %164 : vector<8x32xf32>
    %167 = arith.divf %165, %166 : vector<8x32xf32>
    %168 = vector.extract_strided_slice %156 {offsets = [0, 32], sizes = [8, 32], strides = [1, 1]} : vector<8x96xf32> to vector<8x32xf32>
    %169 = vector.extract_strided_slice %159 {offsets = [0, 32], sizes = [8, 32], strides = [1, 1]} : vector<8x96xf32> to vector<8x32xf32>
    %170 = arith.addf %168, %169 : vector<8x32xf32>
    %171 = arith.negf %170 : vector<8x32xf32>
    %172 = math.exp %171 : vector<8x32xf32>
    %cst_69 = arith.constant 1.000000e+00 : f32
    %173 = vector.broadcast %cst_69 : f32 to vector<8x32xf32>
    %174 = arith.addf %173, %172 : vector<8x32xf32>
    %175 = arith.divf %173, %174 : vector<8x32xf32>
    %176 = vector.extract_strided_slice %156 {offsets = [0, 64], sizes = [8, 32], strides = [1, 1]} : vector<8x96xf32> to vector<8x32xf32>
    %177 = vector.extract_strided_slice %159 {offsets = [0, 64], sizes = [8, 32], strides = [1, 1]} : vector<8x96xf32> to vector<8x32xf32>
    %178 = arith.mulf %167, %177 : vector<8x32xf32>
    %179 = arith.addf %176, %178 : vector<8x32xf32>
    %180 = math.tanh %179 : vector<8x32xf32>
    %cst_70 = arith.constant 1.000000e+00 : f32
    %181 = vector.broadcast %cst_70 : f32 to vector<8x32xf32>
    %182 = arith.subf %181, %175 : vector<8x32xf32>
    %183 = arith.mulf %182, %180 : vector<8x32xf32>
    %184 = arith.mulf %175, %155 : vector<8x32xf32>
    %185 = arith.addf %183, %184 : vector<8x32xf32>
    %186 = vector.extract_strided_slice %122 {offsets = [16, 0], sizes = [8, 96], strides = [1, 1]} : vector<64x96xf32> to vector<8x96xf32>
    %cst_71 = arith.constant dense<0.000000e+00> : vector<8x96xf32>
    %187 = tpu.matmul %185, %123, %cst_71 {dimension_numbers = #tpu.dot_dimension_numbers<[1], [0], [0], [1], [0, 0, 1, 1], [], []>} : vector<8x32xf32>, vector<32x96xf32>, vector<8x96xf32> -> vector<8x96xf32>
    %188 = vector.broadcast %124 : vector<1x96xf32> to vector<8x96xf32>
    %189 = arith.addf %187, %188 : vector<8x96xf32>
    %190 = vector.extract_strided_slice %186 {offsets = [0, 0], sizes = [8, 32], strides = [1, 1]} : vector<8x96xf32> to vector<8x32xf32>
    %191 = vector.extract_strided_slice %189 {offsets = [0, 0], sizes = [8, 32], strides = [1, 1]} : vector<8x96xf32> to vector<8x32xf32>
    %192 = arith.addf %190, %191 : vector<8x32xf32>
    %193 = arith.negf %192 : vector<8x32xf32>
    %194 = math.exp %193 : vector<8x32xf32>
    %cst_72 = arith.constant 1.000000e+00 : f32
    %195 = vector.broadcast %cst_72 : f32 to vector<8x32xf32>
    %196 = arith.addf %195, %194 : vector<8x32xf32>
    %197 = arith.divf %195, %196 : vector<8x32xf32>
    %198 = vector.extract_strided_slice %186 {offsets = [0, 32], sizes = [8, 32], strides = [1, 1]} : vector<8x96xf32> to vector<8x32xf32>
    %199 = vector.extract_strided_slice %189 {offsets = [0, 32], sizes = [8, 32], strides = [1, 1]} : vector<8x96xf32> to vector<8x32xf32>
    %200 = arith.addf %198, %199 : vector<8x32xf32>
    %201 = arith.negf %200 : vector<8x32xf32>
    %202 = math.exp %201 : vector<8x32xf32>
    %cst_73 = arith.constant 1.000000e+00 : f32
    %203 = vector.broadcast %cst_73 : f32 to vector<8x32xf32>
    %204 = arith.addf %203, %202 : vector<8x32xf32>
    %205 = arith.divf %203, %204 : vector<8x32xf32>
    %206 = vector.extract_strided_slice %186 {offsets = [0, 64], sizes = [8, 32], strides = [1, 1]} : vector<8x96xf32> to vector<8x32xf32>
    %207 = vector.extract_strided_slice %189 {offsets = [0, 64], sizes = [8, 32], strides = [1, 1]} : vector<8x96xf32> to vector<8x32xf32>
    %208 = arith.mulf %197, %207 : vector<8x32xf32>
    %209 = arith.addf %206, %208 : vector<8x32xf32>
    %210 = math.tanh %209 : vector<8x32xf32>
    %cst_74 = arith.constant 1.000000e+00 : f32
    %211 = vector.broadcast %cst_74 : f32 to vector<8x32xf32>
    %212 = arith.subf %211, %205 : vector<8x32xf32>
    %213 = arith.mulf %212, %210 : vector<8x32xf32>
    %214 = arith.mulf %205, %185 : vector<8x32xf32>
    %215 = arith.addf %213, %214 : vector<8x32xf32>
    %216 = vector.extract_strided_slice %122 {offsets = [24, 0], sizes = [8, 96], strides = [1, 1]} : vector<64x96xf32> to vector<8x96xf32>
    %cst_75 = arith.constant dense<0.000000e+00> : vector<8x96xf32>
    %217 = tpu.matmul %215, %123, %cst_75 {dimension_numbers = #tpu.dot_dimension_numbers<[1], [0], [0], [1], [0, 0, 1, 1], [], []>} : vector<8x32xf32>, vector<32x96xf32>, vector<8x96xf32> -> vector<8x96xf32>
    %218 = vector.broadcast %124 : vector<1x96xf32> to vector<8x96xf32>
    %219 = arith.addf %217, %218 : vector<8x96xf32>
    %220 = vector.extract_strided_slice %216 {offsets = [0, 0], sizes = [8, 32], strides = [1, 1]} : vector<8x96xf32> to vector<8x32xf32>
    %221 = vector.extract_strided_slice %219 {offsets = [0, 0], sizes = [8, 32], strides = [1, 1]} : vector<8x96xf32> to vector<8x32xf32>
    %222 = arith.addf %220, %221 : vector<8x32xf32>
    %223 = arith.negf %222 : vector<8x32xf32>
    %224 = math.exp %223 : vector<8x32xf32>
    %cst_76 = arith.constant 1.000000e+00 : f32
    %225 = vector.broadcast %cst_76 : f32 to vector<8x32xf32>
    %226 = arith.addf %225, %224 : vector<8x32xf32>
    %227 = arith.divf %225, %226 : vector<8x32xf32>
    %228 = vector.extract_strided_slice %216 {offsets = [0, 32], sizes = [8, 32], strides = [1, 1]} : vector<8x96xf32> to vector<8x32xf32>
    %229 = vector.extract_strided_slice %219 {offsets = [0, 32], sizes = [8, 32], strides = [1, 1]} : vector<8x96xf32> to vector<8x32xf32>
    %230 = arith.addf %228, %229 : vector<8x32xf32>
    %231 = arith.negf %230 : vector<8x32xf32>
    %232 = math.exp %231 : vector<8x32xf32>
    %cst_77 = arith.constant 1.000000e+00 : f32
    %233 = vector.broadcast %cst_77 : f32 to vector<8x32xf32>
    %234 = arith.addf %233, %232 : vector<8x32xf32>
    %235 = arith.divf %233, %234 : vector<8x32xf32>
    %236 = vector.extract_strided_slice %216 {offsets = [0, 64], sizes = [8, 32], strides = [1, 1]} : vector<8x96xf32> to vector<8x32xf32>
    %237 = vector.extract_strided_slice %219 {offsets = [0, 64], sizes = [8, 32], strides = [1, 1]} : vector<8x96xf32> to vector<8x32xf32>
    %238 = arith.mulf %227, %237 : vector<8x32xf32>
    %239 = arith.addf %236, %238 : vector<8x32xf32>
    %240 = math.tanh %239 : vector<8x32xf32>
    %cst_78 = arith.constant 1.000000e+00 : f32
    %241 = vector.broadcast %cst_78 : f32 to vector<8x32xf32>
    %242 = arith.subf %241, %235 : vector<8x32xf32>
    %243 = arith.mulf %242, %240 : vector<8x32xf32>
    %244 = arith.mulf %235, %215 : vector<8x32xf32>
    %245 = arith.addf %243, %244 : vector<8x32xf32>
    %246 = vector.extract_strided_slice %122 {offsets = [32, 0], sizes = [8, 96], strides = [1, 1]} : vector<64x96xf32> to vector<8x96xf32>
    %cst_79 = arith.constant dense<0.000000e+00> : vector<8x96xf32>
    %247 = tpu.matmul %245, %123, %cst_79 {dimension_numbers = #tpu.dot_dimension_numbers<[1], [0], [0], [1], [0, 0, 1, 1], [], []>} : vector<8x32xf32>, vector<32x96xf32>, vector<8x96xf32> -> vector<8x96xf32>
    %248 = vector.broadcast %124 : vector<1x96xf32> to vector<8x96xf32>
    %249 = arith.addf %247, %248 : vector<8x96xf32>
    %250 = vector.extract_strided_slice %246 {offsets = [0, 0], sizes = [8, 32], strides = [1, 1]} : vector<8x96xf32> to vector<8x32xf32>
    %251 = vector.extract_strided_slice %249 {offsets = [0, 0], sizes = [8, 32], strides = [1, 1]} : vector<8x96xf32> to vector<8x32xf32>
    %252 = arith.addf %250, %251 : vector<8x32xf32>
    %253 = arith.negf %252 : vector<8x32xf32>
    %254 = math.exp %253 : vector<8x32xf32>
    %cst_80 = arith.constant 1.000000e+00 : f32
    %255 = vector.broadcast %cst_80 : f32 to vector<8x32xf32>
    %256 = arith.addf %255, %254 : vector<8x32xf32>
    %257 = arith.divf %255, %256 : vector<8x32xf32>
    %258 = vector.extract_strided_slice %246 {offsets = [0, 32], sizes = [8, 32], strides = [1, 1]} : vector<8x96xf32> to vector<8x32xf32>
    %259 = vector.extract_strided_slice %249 {offsets = [0, 32], sizes = [8, 32], strides = [1, 1]} : vector<8x96xf32> to vector<8x32xf32>
    %260 = arith.addf %258, %259 : vector<8x32xf32>
    %261 = arith.negf %260 : vector<8x32xf32>
    %262 = math.exp %261 : vector<8x32xf32>
    %cst_81 = arith.constant 1.000000e+00 : f32
    %263 = vector.broadcast %cst_81 : f32 to vector<8x32xf32>
    %264 = arith.addf %263, %262 : vector<8x32xf32>
    %265 = arith.divf %263, %264 : vector<8x32xf32>
    %266 = vector.extract_strided_slice %246 {offsets = [0, 64], sizes = [8, 32], strides = [1, 1]} : vector<8x96xf32> to vector<8x32xf32>
    %267 = vector.extract_strided_slice %249 {offsets = [0, 64], sizes = [8, 32], strides = [1, 1]} : vector<8x96xf32> to vector<8x32xf32>
    %268 = arith.mulf %257, %267 : vector<8x32xf32>
    %269 = arith.addf %266, %268 : vector<8x32xf32>
    %270 = math.tanh %269 : vector<8x32xf32>
    %cst_82 = arith.constant 1.000000e+00 : f32
    %271 = vector.broadcast %cst_82 : f32 to vector<8x32xf32>
    %272 = arith.subf %271, %265 : vector<8x32xf32>
    %273 = arith.mulf %272, %270 : vector<8x32xf32>
    %274 = arith.mulf %265, %245 : vector<8x32xf32>
    %275 = arith.addf %273, %274 : vector<8x32xf32>
    %276 = vector.extract_strided_slice %122 {offsets = [40, 0], sizes = [8, 96], strides = [1, 1]} : vector<64x96xf32> to vector<8x96xf32>
    %cst_83 = arith.constant dense<0.000000e+00> : vector<8x96xf32>
    %277 = tpu.matmul %275, %123, %cst_83 {dimension_numbers = #tpu.dot_dimension_numbers<[1], [0], [0], [1], [0, 0, 1, 1], [], []>} : vector<8x32xf32>, vector<32x96xf32>, vector<8x96xf32> -> vector<8x96xf32>
    %278 = vector.broadcast %124 : vector<1x96xf32> to vector<8x96xf32>
    %279 = arith.addf %277, %278 : vector<8x96xf32>
    %280 = vector.extract_strided_slice %276 {offsets = [0, 0], sizes = [8, 32], strides = [1, 1]} : vector<8x96xf32> to vector<8x32xf32>
    %281 = vector.extract_strided_slice %279 {offsets = [0, 0], sizes = [8, 32], strides = [1, 1]} : vector<8x96xf32> to vector<8x32xf32>
    %282 = arith.addf %280, %281 : vector<8x32xf32>
    %283 = arith.negf %282 : vector<8x32xf32>
    %284 = math.exp %283 : vector<8x32xf32>
    %cst_84 = arith.constant 1.000000e+00 : f32
    %285 = vector.broadcast %cst_84 : f32 to vector<8x32xf32>
    %286 = arith.addf %285, %284 : vector<8x32xf32>
    %287 = arith.divf %285, %286 : vector<8x32xf32>
    %288 = vector.extract_strided_slice %276 {offsets = [0, 32], sizes = [8, 32], strides = [1, 1]} : vector<8x96xf32> to vector<8x32xf32>
    %289 = vector.extract_strided_slice %279 {offsets = [0, 32], sizes = [8, 32], strides = [1, 1]} : vector<8x96xf32> to vector<8x32xf32>
    %290 = arith.addf %288, %289 : vector<8x32xf32>
    %291 = arith.negf %290 : vector<8x32xf32>
    %292 = math.exp %291 : vector<8x32xf32>
    %cst_85 = arith.constant 1.000000e+00 : f32
    %293 = vector.broadcast %cst_85 : f32 to vector<8x32xf32>
    %294 = arith.addf %293, %292 : vector<8x32xf32>
    %295 = arith.divf %293, %294 : vector<8x32xf32>
    %296 = vector.extract_strided_slice %276 {offsets = [0, 64], sizes = [8, 32], strides = [1, 1]} : vector<8x96xf32> to vector<8x32xf32>
    %297 = vector.extract_strided_slice %279 {offsets = [0, 64], sizes = [8, 32], strides = [1, 1]} : vector<8x96xf32> to vector<8x32xf32>
    %298 = arith.mulf %287, %297 : vector<8x32xf32>
    %299 = arith.addf %296, %298 : vector<8x32xf32>
    %300 = math.tanh %299 : vector<8x32xf32>
    %cst_86 = arith.constant 1.000000e+00 : f32
    %301 = vector.broadcast %cst_86 : f32 to vector<8x32xf32>
    %302 = arith.subf %301, %295 : vector<8x32xf32>
    %303 = arith.mulf %302, %300 : vector<8x32xf32>
    %304 = arith.mulf %295, %275 : vector<8x32xf32>
    %305 = arith.addf %303, %304 : vector<8x32xf32>
    %306 = vector.extract_strided_slice %122 {offsets = [48, 0], sizes = [8, 96], strides = [1, 1]} : vector<64x96xf32> to vector<8x96xf32>
    %cst_87 = arith.constant dense<0.000000e+00> : vector<8x96xf32>
    %307 = tpu.matmul %305, %123, %cst_87 {dimension_numbers = #tpu.dot_dimension_numbers<[1], [0], [0], [1], [0, 0, 1, 1], [], []>} : vector<8x32xf32>, vector<32x96xf32>, vector<8x96xf32> -> vector<8x96xf32>
    %308 = vector.broadcast %124 : vector<1x96xf32> to vector<8x96xf32>
    %309 = arith.addf %307, %308 : vector<8x96xf32>
    %310 = vector.extract_strided_slice %306 {offsets = [0, 0], sizes = [8, 32], strides = [1, 1]} : vector<8x96xf32> to vector<8x32xf32>
    %311 = vector.extract_strided_slice %309 {offsets = [0, 0], sizes = [8, 32], strides = [1, 1]} : vector<8x96xf32> to vector<8x32xf32>
    %312 = arith.addf %310, %311 : vector<8x32xf32>
    %313 = arith.negf %312 : vector<8x32xf32>
    %314 = math.exp %313 : vector<8x32xf32>
    %cst_88 = arith.constant 1.000000e+00 : f32
    %315 = vector.broadcast %cst_88 : f32 to vector<8x32xf32>
    %316 = arith.addf %315, %314 : vector<8x32xf32>
    %317 = arith.divf %315, %316 : vector<8x32xf32>
    %318 = vector.extract_strided_slice %306 {offsets = [0, 32], sizes = [8, 32], strides = [1, 1]} : vector<8x96xf32> to vector<8x32xf32>
    %319 = vector.extract_strided_slice %309 {offsets = [0, 32], sizes = [8, 32], strides = [1, 1]} : vector<8x96xf32> to vector<8x32xf32>
    %320 = arith.addf %318, %319 : vector<8x32xf32>
    %321 = arith.negf %320 : vector<8x32xf32>
    %322 = math.exp %321 : vector<8x32xf32>
    %cst_89 = arith.constant 1.000000e+00 : f32
    %323 = vector.broadcast %cst_89 : f32 to vector<8x32xf32>
    %324 = arith.addf %323, %322 : vector<8x32xf32>
    %325 = arith.divf %323, %324 : vector<8x32xf32>
    %326 = vector.extract_strided_slice %306 {offsets = [0, 64], sizes = [8, 32], strides = [1, 1]} : vector<8x96xf32> to vector<8x32xf32>
    %327 = vector.extract_strided_slice %309 {offsets = [0, 64], sizes = [8, 32], strides = [1, 1]} : vector<8x96xf32> to vector<8x32xf32>
    %328 = arith.mulf %317, %327 : vector<8x32xf32>
    %329 = arith.addf %326, %328 : vector<8x32xf32>
    %330 = math.tanh %329 : vector<8x32xf32>
    %cst_90 = arith.constant 1.000000e+00 : f32
    %331 = vector.broadcast %cst_90 : f32 to vector<8x32xf32>
    %332 = arith.subf %331, %325 : vector<8x32xf32>
    %333 = arith.mulf %332, %330 : vector<8x32xf32>
    %334 = arith.mulf %325, %305 : vector<8x32xf32>
    %335 = arith.addf %333, %334 : vector<8x32xf32>
    %336 = vector.extract_strided_slice %122 {offsets = [56, 0], sizes = [8, 96], strides = [1, 1]} : vector<64x96xf32> to vector<8x96xf32>
    %cst_91 = arith.constant dense<0.000000e+00> : vector<8x96xf32>
    %337 = tpu.matmul %335, %123, %cst_91 {dimension_numbers = #tpu.dot_dimension_numbers<[1], [0], [0], [1], [0, 0, 1, 1], [], []>} : vector<8x32xf32>, vector<32x96xf32>, vector<8x96xf32> -> vector<8x96xf32>
    %338 = vector.broadcast %124 : vector<1x96xf32> to vector<8x96xf32>
    %339 = arith.addf %337, %338 : vector<8x96xf32>
    %340 = vector.extract_strided_slice %336 {offsets = [0, 0], sizes = [8, 32], strides = [1, 1]} : vector<8x96xf32> to vector<8x32xf32>
    %341 = vector.extract_strided_slice %339 {offsets = [0, 0], sizes = [8, 32], strides = [1, 1]} : vector<8x96xf32> to vector<8x32xf32>
    %342 = arith.addf %340, %341 : vector<8x32xf32>
    %343 = arith.negf %342 : vector<8x32xf32>
    %344 = math.exp %343 : vector<8x32xf32>
    %cst_92 = arith.constant 1.000000e+00 : f32
    %345 = vector.broadcast %cst_92 : f32 to vector<8x32xf32>
    %346 = arith.addf %345, %344 : vector<8x32xf32>
    %347 = arith.divf %345, %346 : vector<8x32xf32>
    %348 = vector.extract_strided_slice %336 {offsets = [0, 32], sizes = [8, 32], strides = [1, 1]} : vector<8x96xf32> to vector<8x32xf32>
    %349 = vector.extract_strided_slice %339 {offsets = [0, 32], sizes = [8, 32], strides = [1, 1]} : vector<8x96xf32> to vector<8x32xf32>
    %350 = arith.addf %348, %349 : vector<8x32xf32>
    %351 = arith.negf %350 : vector<8x32xf32>
    %352 = math.exp %351 : vector<8x32xf32>
    %cst_93 = arith.constant 1.000000e+00 : f32
    %353 = vector.broadcast %cst_93 : f32 to vector<8x32xf32>
    %354 = arith.addf %353, %352 : vector<8x32xf32>
    %355 = arith.divf %353, %354 : vector<8x32xf32>
    %356 = vector.extract_strided_slice %336 {offsets = [0, 64], sizes = [8, 32], strides = [1, 1]} : vector<8x96xf32> to vector<8x32xf32>
    %357 = vector.extract_strided_slice %339 {offsets = [0, 64], sizes = [8, 32], strides = [1, 1]} : vector<8x96xf32> to vector<8x32xf32>
    %358 = arith.mulf %347, %357 : vector<8x32xf32>
    %359 = arith.addf %356, %358 : vector<8x32xf32>
    %360 = math.tanh %359 : vector<8x32xf32>
    %cst_94 = arith.constant 1.000000e+00 : f32
    %361 = vector.broadcast %cst_94 : f32 to vector<8x32xf32>
    %362 = arith.subf %361, %355 : vector<8x32xf32>
    %363 = arith.mulf %362, %360 : vector<8x32xf32>
    %364 = arith.mulf %355, %335 : vector<8x32xf32>
    %365 = arith.addf %363, %364 : vector<8x32xf32>
    %c0_95 = arith.constant 0 : index
    %c0_96 = arith.constant 0 : index
    %366 = vector.load %arg15[%c0_95, %c0_96] : memref<32x2xf32, #tpu.memory_space<vmem>>, vector<32x2xf32>
    %cst_97 = arith.constant dense<0.000000e+00> : vector<8x2xf32>
    %367 = tpu.matmul %365, %366, %cst_97 {dimension_numbers = #tpu.dot_dimension_numbers<[1], [0], [0], [1], [0, 0, 1, 1], [], []>} : vector<8x32xf32>, vector<32x2xf32>, vector<8x2xf32> -> vector<8x2xf32>
    %c0_98 = arith.constant 0 : index
    %c0_99 = arith.constant 0 : index
    %368 = vector.load %arg16[%c0_98, %c0_99] : memref<1x2xf32, #tpu.memory_space<vmem>>, vector<1x2xf32>
    %369 = vector.broadcast %368 : vector<1x2xf32> to vector<8x2xf32>
    %370 = arith.addf %367, %369 : vector<8x2xf32>
    %cst_100 = arith.constant 2.000000e+01 : f32
    %371 = vector.broadcast %cst_100 : f32 to vector<8x2xf32>
    %372 = arith.cmpf ogt, %370, %371 : vector<8x2xf32>
    %cst_101 = arith.constant 2.000000e+01 : f32
    %373 = vector.broadcast %cst_101 : f32 to vector<8x2xf32>
    %374 = arith.minimumf %370, %373 : vector<8x2xf32>
    %375 = math.exp %374 : vector<8x2xf32>
    %376 = math.log1p %375 : vector<8x2xf32>
    %377 = arith.select %372, %370, %376 : vector<8x2xi1>, vector<8x2xf32>
    %c0_102 = arith.constant 0 : index
    %c0_103 = arith.constant 0 : index
    %c0_104 = arith.constant 0 : index
    %378 = vector.load %arg17[%c0_102, %c0_103, %c0_104] : memref<1x8x2xf32, #tpu.memory_space<vmem>>, vector<1x8x2xf32>
    %379 = vector.shape_cast %378 : vector<1x8x2xf32> to vector<8x2xf32>
    %380 = vector.shape_cast %377 : vector<8x2xf32> to vector<1x8x2xf32>
    tpu.vector_store %arg17[%c0_102, %c0_103, %c0_104], %380 {strides = array<i32>} : memref<1x8x2xf32, #tpu.memory_space<vmem>>, vector<1x8x2xf32>,
    return
  }
  func.func @transform_0(%arg0: i32) -> (i32, i32, i32) {
    %c0_i32 = arith.constant 0 : i32
    %c0_i32_0 = arith.constant 0 : i32
    %c0_i32_1 = arith.constant 0 : i32
    return %arg0, %c0_i32, %c0_i32_0 : i32, i32, i32
  }
  func.func @transform_1(%arg0: i32) -> (i32, i32) {
    %c0_i32 = arith.constant 0 : i32
    %c0_i32_0 = arith.constant 0 : i32
    %c0_i32_1 = arith.constant 0 : i32
    return %c0_i32, %c0_i32_0 : i32, i32
  }
  func.func @transform_2(%arg0: i32) -> (i32, i32) {
    %c0_i32 = arith.constant 0 : i32
    %c0_i32_0 = arith.constant 0 : i32
    %c0_i32_1 = arith.constant 0 : i32
    return %c0_i32, %c0_i32_0 : i32, i32
  }
  func.func @transform_3(%arg0: i32) -> (i32, i32) {
    %c0_i32 = arith.constant 0 : i32
    %c0_i32_0 = arith.constant 0 : i32
    %c0_i32_1 = arith.constant 0 : i32
    return %c0_i32, %c0_i32_0 : i32, i32
  }
  func.func @transform_4(%arg0: i32) -> (i32, i32) {
    %c0_i32 = arith.constant 0 : i32
    %c0_i32_0 = arith.constant 0 : i32
    %c0_i32_1 = arith.constant 0 : i32
    return %c0_i32, %c0_i32_0 : i32, i32
  }
  func.func @transform_5(%arg0: i32) -> (i32, i32) {
    %c0_i32 = arith.constant 0 : i32
    %c0_i32_0 = arith.constant 0 : i32
    %c0_i32_1 = arith.constant 0 : i32
    return %c0_i32, %c0_i32_0 : i32, i32
  }
  func.func @transform_6(%arg0: i32) -> (i32, i32) {
    %c0_i32 = arith.constant 0 : i32
    %c0_i32_0 = arith.constant 0 : i32
    %c0_i32_1 = arith.constant 0 : i32
    return %c0_i32, %c0_i32_0 : i32, i32
  }
  func.func @transform_7(%arg0: i32) -> (i32, i32) {
    %c0_i32 = arith.constant 0 : i32
    %c0_i32_0 = arith.constant 0 : i32
    %c0_i32_1 = arith.constant 0 : i32
    return %c0_i32, %c0_i32_0 : i32, i32
  }
  func.func @transform_8(%arg0: i32) -> (i32, i32) {
    %c0_i32 = arith.constant 0 : i32
    %c0_i32_0 = arith.constant 0 : i32
    %c0_i32_1 = arith.constant 0 : i32
    return %c0_i32, %c0_i32_0 : i32, i32
  }
  func.func @transform_9(%arg0: i32) -> (i32, i32) {
    %c0_i32 = arith.constant 0 : i32
    %c0_i32_0 = arith.constant 0 : i32
    %c0_i32_1 = arith.constant 0 : i32
    return %c0_i32, %c0_i32_0 : i32, i32
  }
  func.func @transform_10(%arg0: i32) -> (i32, i32) {
    %c0_i32 = arith.constant 0 : i32
    %c0_i32_0 = arith.constant 0 : i32
    %c0_i32_1 = arith.constant 0 : i32
    return %c0_i32, %c0_i32_0 : i32, i32
  }
  func.func @transform_11(%arg0: i32) -> (i32, i32) {
    %c0_i32 = arith.constant 0 : i32
    %c0_i32_0 = arith.constant 0 : i32
    %c0_i32_1 = arith.constant 0 : i32
    return %c0_i32, %c0_i32_0 : i32, i32
  }
  func.func @transform_12(%arg0: i32) -> (i32, i32) {
    %c0_i32 = arith.constant 0 : i32
    %c0_i32_0 = arith.constant 0 : i32
    %c0_i32_1 = arith.constant 0 : i32
    return %c0_i32, %c0_i32_0 : i32, i32
  }
  func.func @transform_13(%arg0: i32) -> (i32, i32) {
    %c0_i32 = arith.constant 0 : i32
    %c0_i32_0 = arith.constant 0 : i32
    %c0_i32_1 = arith.constant 0 : i32
    return %c0_i32, %c0_i32_0 : i32, i32
  }
  func.func @transform_14(%arg0: i32) -> (i32, i32) {
    %c0_i32 = arith.constant 0 : i32
    %c0_i32_0 = arith.constant 0 : i32
    %c0_i32_1 = arith.constant 0 : i32
    return %c0_i32, %c0_i32_0 : i32, i32
  }
  func.func @transform_15(%arg0: i32) -> (i32, i32) {
    %c0_i32 = arith.constant 0 : i32
    %c0_i32_0 = arith.constant 0 : i32
    %c0_i32_1 = arith.constant 0 : i32
    return %c0_i32, %c0_i32_0 : i32, i32
  }
  func.func @transform_16(%arg0: i32) -> (i32, i32, i32) {
    %c0_i32 = arith.constant 0 : i32
    %c0_i32_0 = arith.constant 0 : i32
    %c0_i32_1 = arith.constant 0 : i32
    return %arg0, %c0_i32, %c0_i32_0 : i32, i32, i32
  }
}

</mosaic_0001>

<llo_original>
// kernel: _lambda_.1
$region0: #{_lambda_.1}
  #allocation0 [shape = 'u32[]', space=smem, size = 0x4, offset = 0x4, fixed_abs, tag = 'smem constant byte address 0x4 - core index']
  #allocation1 [shape = 'u32[144,128]{1,0:T(1,128)}', space=vmem, size = 0x12000, scoped, tag = 'internal scratch']
  %s0 = inlined_call_operand.vmem [shape: f32[2,64,4], index: 0, kind: input, shape index: {}]
  %s1 = inlined_call_operand.vmem [shape: f32[64,64], index: 1, kind: input, shape index: {}]
  %s2 = inlined_call_operand.vmem [shape: f32[4,32], index: 2, kind: input, shape index: {}]
  %s3 = inlined_call_operand.vmem [shape: f32[1,32], index: 3, kind: input, shape index: {}]
  %s4 = inlined_call_operand.vmem [shape: f32[32,32], index: 4, kind: input, shape index: {}]
  %s5 = inlined_call_operand.vmem [shape: f32[1,32], index: 5, kind: input, shape index: {}]
  %s6 = inlined_call_operand.vmem [shape: f32[32,96], index: 6, kind: input, shape index: {}]
  %s7 = inlined_call_operand.vmem [shape: f32[1,96], index: 7, kind: input, shape index: {}]
  %s8 = inlined_call_operand.vmem [shape: f32[32,32], index: 8, kind: input, shape index: {}]
  %s9 = inlined_call_operand.vmem [shape: f32[1,32], index: 9, kind: input, shape index: {}]
  %s10 = inlined_call_operand.vmem [shape: f32[32,96], index: 10, kind: input, shape index: {}]
  %s11 = inlined_call_operand.vmem [shape: f32[1,96], index: 11, kind: input, shape index: {}]
  %s12 = inlined_call_operand.vmem [shape: f32[32,96], index: 12, kind: input, shape index: {}]
  %s13 = inlined_call_operand.vmem [shape: f32[1,96], index: 13, kind: input, shape index: {}]
  %s14 = inlined_call_operand.vmem [shape: f32[32,2], index: 14, kind: input, shape index: {}]
  %s15 = inlined_call_operand.vmem [shape: f32[1,2], index: 15, kind: input, shape index: {}]
  %s16 = inlined_call_operand.vmem [shape: f32[2,8,2], index: 16, kind: output, shape index: {}]
  %s17 = sld [smem:[#allocation0]]
  $region97: #{_lambda_.1} parent=0
    _
  %s19 = ssub.s32 1, %s17
  %s20 = scalar_select 0, %s19, %s17
  loop: start=0, step=1, limit=4
  $region2: #{_lambda_.1} parent=0 // loop_pre_header
    _
  $region3: #{_lambda_.1} parent=0 // loop_header
    %s22 = sphi 0, %s26
    %p23 = scmp.ge.s32.totalorder %s22, 4
    %s32 = sphi 0, %s34
    %s35 = sphi 0, %s32
    %s36 = sphi 0, %s35
    %s52 = sphi 0, %s36
    %s56 = sphi 0, %s56
    %s58 = sphi 0, %s56
    %s59 = sphi 0, %s58
    %s73 = sphi 0, %s59
    %s77 = sphi 0, %s77
    %s79 = sphi 0, %s77
    %s80 = sphi 0, %s79
    %s94 = sphi 0, %s80
    %s98 = sphi 0, %s98
    %s100 = sphi 0, %s98
    %s101 = sphi 0, %s100
    %s115 = sphi 0, %s101
    %s119 = sphi 0, %s119
    %s121 = sphi 0, %s119
    %s122 = sphi 0, %s121
    %s136 = sphi 0, %s122
    %s140 = sphi 0, %s140
    %s142 = sphi 0, %s140
    %s143 = sphi 0, %s142
    %s157 = sphi 0, %s143
    %s161 = sphi 0, %s161
    %s163 = sphi 0, %s161
    %s164 = sphi 0, %s163
    %s178 = sphi 0, %s164
    %s182 = sphi 0, %s182
    %s184 = sphi 0, %s182
    %s185 = sphi 0, %s184
    %s199 = sphi 0, %s185
    %s203 = sphi 0, %s203
    %s205 = sphi 0, %s203
    %s206 = sphi 0, %s205
    %s220 = sphi 0, %s206
    %s224 = sphi 0, %s224
    %s226 = sphi 0, %s224
    %s227 = sphi 0, %s226
    %s241 = sphi 0, %s227
    %s245 = sphi 0, %s245
    %s247 = sphi 0, %s245
    %s248 = sphi 0, %s247
    %s262 = sphi 0, %s248
    %s266 = sphi 0, %s266
    %s268 = sphi 0, %s266
    %s269 = sphi 0, %s268
    %s283 = sphi 0, %s269
    %s287 = sphi 0, %s287
    %s289 = sphi 0, %s287
    %s290 = sphi 0, %s289
    %s304 = sphi 0, %s290
    %s308 = sphi 0, %s308
    %s310 = sphi 0, %s308
    %s311 = sphi 0, %s310
    %s325 = sphi 0, %s311
    %s329 = sphi 0, %s329
    %s331 = sphi 0, %s329
    %s332 = sphi 0, %s331
    %s346 = sphi 0, %s332
    %s350 = sphi 0, %s350
    %s352 = sphi 0, %s350
    %s353 = sphi 0, %s352
    %s367 = sphi 0, %s353
    %s373 = sphi 0, %s375
    %s376 = sphi 0, %s373
    %s377 = sphi 0, %s376
    %s393 = sphi 0, %s377
  $region4: #{_lambda_.1} parent=0 // loop_header_branch
    %25 = sbr.rel (%p23) target = $region8
  $region5: #{_lambda_.1} parent=0 // loop_body
    %s27 = ssub.s32 %s22, 1
    %s28 = ssub.s32 %s22, 2
    %s29 = sadd.s32 %s22, 1
    %s30 = ssub.s32 %s22, %s29
    %p31 = scmp.eq.s32.totalorder %s30, 0
    %s33 = sadd.s32 %s32, 1
    %s34 = scalar_select %p31, %s32, %s33
    %p37 = pneg %p31
    %p38 = scmp.eq.s32.totalorder %s22, 1
    %p39 = por %p37, %p38
    %p40 = scmp.ne.s32.totalorder %s32, %s35
    %p41 = scmp.eq.s32.totalorder %s22, 0
    %p42 = por %p40, %p41
    %p43 = scmp.ne.s32.totalorder %s32, %s35
    %p44 = scmp.eq.s32.totalorder %s27, 1
    %p45 = por %p43, %p44
    %p46 = scmp.ne.s32.totalorder %s35, %s36
    %p47 = scmp.eq.s32.totalorder %s27, 0
    %p48 = por %p46, %p47
    %p49 = scmp.ne.s32.totalorder %s35, %s36
    %p50 = scmp.eq.s32.totalorder %s28, 1
    %p51 = por %p49, %p50
    %p53 = scmp.ne.s32.totalorder %s36, %s52
    %p54 = scmp.eq.s32.totalorder %s28, 0
    %p55 = por %p53, %p54
    %s57 = sadd.s32 %s56, 1
    %p60 = scmp.eq.s32.totalorder %s22, 1
    %p61 = scmp.ne.s32.totalorder %s56, %s58
    %p62 = scmp.eq.s32.totalorder %s22, 0
    %p63 = por %p61, %p62
    %p64 = scmp.ne.s32.totalorder %s56, %s58
    %p65 = scmp.eq.s32.totalorder %s27, 1
    %p66 = por %p64, %p65
    %p67 = scmp.ne.s32.totalorder %s58, %s59
    %p68 = scmp.eq.s32.totalorder %s27, 0
    %p69 = por %p67, %p68
    %p70 = scmp.ne.s32.totalorder %s58, %s59
    %p71 = scmp.eq.s32.totalorder %s28, 1
    %p72 = por %p70, %p71
    %p74 = scmp.ne.s32.totalorder %s59, %s73
    %p75 = scmp.eq.s32.totalorder %s28, 0
    %p76 = por %p74, %p75
    %s78 = sadd.s32 %s77, 1
    %p81 = scmp.eq.s32.totalorder %s22, 1
    %p82 = scmp.ne.s32.totalorder %s77, %s79
    %p83 = scmp.eq.s32.totalorder %s22, 0
    %p84 = por %p82, %p83
    %p85 = scmp.ne.s32.totalorder %s77, %s79
    %p86 = scmp.eq.s32.totalorder %s27, 1
    %p87 = por %p85, %p86
    %p88 = scmp.ne.s32.totalorder %s79, %s80
    %p89 = scmp.eq.s32.totalorder %s27, 0
    %p90 = por %p88, %p89
    %p91 = scmp.ne.s32.totalorder %s79, %s80
    %p92 = scmp.eq.s32.totalorder %s28, 1
    %p93 = por %p91, %p92
    %p95 = scmp.ne.s32.totalorder %s80, %s94
    %p96 = scmp.eq.s32.totalorder %s28, 0
    %p97 = por %p95, %p96
    %s99 = sadd.s32 %s98, 1
    %p102 = scmp.eq.s32.totalorder %s22, 1
    %p103 = scmp.ne.s32.totalorder %s98, %s100
    %p104 = scmp.eq.s32.totalorder %s22, 0
    %p105 = por %p103, %p104
    %p106 = scmp.ne.s32.totalorder %s98, %s100
    %p107 = scmp.eq.s32.totalorder %s27, 1
    %p108 = por %p106, %p107
    %p109 = scmp.ne.s32.totalorder %s100, %s101
    %p110 = scmp.eq.s32.totalorder %s27, 0
    %p111 = por %p109, %p110
    %p112 = scmp.ne.s32.totalorder %s100, %s101
    %p113 = scmp.eq.s32.totalorder %s28, 1
    %p114 = por %p112, %p113
    %p116 = scmp.ne.s32.totalorder %s101, %s115
    %p117 = scmp.eq.s32.totalorder %s28, 0
    %p118 = por %p116, %p117
    %s120 = sadd.s32 %s119, 1
    %p123 = scmp.eq.s32.totalorder %s22, 1
    %p124 = scmp.ne.s32.totalorder %s119, %s121
    %p125 = scmp.eq.s32.totalorder %s22, 0
    %p126 = por %p124, %p125
    %p127 = scmp.ne.s32.totalorder %s119, %s121
    %p128 = scmp.eq.s32.totalorder %s27, 1
    %p129 = por %p127, %p128
    %p130 = scmp.ne.s32.totalorder %s121, %s122
    %p131 = scmp.eq.s32.totalorder %s27, 0
    %p132 = por %p130, %p131
    %p133 = scmp.ne.s32.totalorder %s121, %s122
    %p134 = scmp.eq.s32.totalorder %s28, 1
    %p135 = por %p133, %p134
    %p137 = scmp.ne.s32.totalorder %s122, %s136
    %p138 = scmp.eq.s32.totalorder %s28, 0
    %p139 = por %p137, %p138
    %s141 = sadd.s32 %s140, 1
    %p144 = scmp.eq.s32.totalorder %s22, 1
    %p145 = scmp.ne.s32.totalorder %s140, %s142
    %p146 = scmp.eq.s32.totalorder %s22, 0
    %p147 = por %p145, %p146
    %p148 = scmp.ne.s32.totalorder %s140, %s142
    %p149 = scmp.eq.s32.totalorder %s27, 1
    %p150 = por %p148, %p149
    %p151 = scmp.ne.s32.totalorder %s142, %s143
    %p152 = scmp.eq.s32.totalorder %s27, 0
    %p153 = por %p151, %p152
    %p154 = scmp.ne.s32.totalorder %s142, %s143
    %p155 = scmp.eq.s32.totalorder %s28, 1
    %p156 = por %p154, %p155
    %p158 = scmp.ne.s32.totalorder %s143, %s157
    %p159 = scmp.eq.s32.totalorder %s28, 0
    %p160 = por %p158, %p159
    %s162 = sadd.s32 %s161, 1
    %p165 = scmp.eq.s32.totalorder %s22, 1
    %p166 = scmp.ne.s32.totalorder %s161, %s163
    %p167 = scmp.eq.s32.totalorder %s22, 0
    %p168 = por %p166, %p167
    %p169 = scmp.ne.s32.totalorder %s161, %s163
    %p170 = scmp.eq.s32.totalorder %s27, 1
    %p171 = por %p169, %p170
    %p172 = scmp.ne.s32.totalorder %s163, %s164
    %p173 = scmp.eq.s32.totalorder %s27, 0
    %p174 = por %p172, %p173
    %p175 = scmp.ne.s32.totalorder %s163, %s164
    %p176 = scmp.eq.s32.totalorder %s28, 1
    %p177 = por %p175, %p176
    %p179 = scmp.ne.s32.totalorder %s164, %s178
    %p180 = scmp.eq.s32.totalorder %s28, 0
    %p181 = por %p179, %p180
    %s183 = sadd.s32 %s182, 1
    %p186 = scmp.eq.s32.totalorder %s22, 1
    %p187 = scmp.ne.s32.totalorder %s182, %s184
    %p188 = scmp.eq.s32.totalorder %s22, 0
    %p189 = por %p187, %p188
    %p190 = scmp.ne.s32.totalorder %s182, %s184
    %p191 = scmp.eq.s32.totalorder %s27, 1
    %p192 = por %p190, %p191
    %p193 = scmp.ne.s32.totalorder %s184, %s185
    %p194 = scmp.eq.s32.totalorder %s27, 0
    %p195 = por %p193, %p194
    %p196 = scmp.ne.s32.totalorder %s184, %s185
    %p197 = scmp.eq.s32.totalorder %s28, 1
    %p198 = por %p196, %p197
    %p200 = scmp.ne.s32.totalorder %s185, %s199
    %p201 = scmp.eq.s32.totalorder %s28, 0
    %p202 = por %p200, %p201
    %s204 = sadd.s32 %s203, 1
    %p207 = scmp.eq.s32.totalorder %s22, 1
    %p208 = scmp.ne.s32.totalorder %s203, %s205
    %p209 = scmp.eq.s32.totalorder %s22, 0
    %p210 = por %p208, %p209
    %p211 = scmp.ne.s32.totalorder %s203, %s205
    %p212 = scmp.eq.s32.totalorder %s27, 1
    %p213 = por %p211, %p212
    %p214 = scmp.ne.s32.totalorder %s205, %s206
    %p215 = scmp.eq.s32.totalorder %s27, 0
    %p216 = por %p214, %p215
    %p217 = scmp.ne.s32.totalorder %s205, %s206
    %p218 = scmp.eq.s32.totalorder %s28, 1
    %p219 = por %p217, %p218
    %p221 = scmp.ne.s32.totalorder %s206, %s220
    %p222 = scmp.eq.s32.totalorder %s28, 0
    %p223 = por %p221, %p222
    %s225 = sadd.s32 %s224, 1
    %p228 = scmp.eq.s32.totalorder %s22, 1
    %p229 = scmp.ne.s32.totalorder %s224, %s226
    %p230 = scmp.eq.s32.totalorder %s22, 0
    %p231 = por %p229, %p230
    %p232 = scmp.ne.s32.totalorder %s224, %s226
    %p233 = scmp.eq.s32.totalorder %s27, 1
    %p234 = por %p232, %p233
    %p235 = scmp.ne.s32.totalorder %s226, %s227
    %p236 = scmp.eq.s32.totalorder %s27, 0
    %p237 = por %p235, %p236
    %p238 = scmp.ne.s32.totalorder %s226, %s227
    %p239 = scmp.eq.s32.totalorder %s28, 1
    %p240 = por %p238, %p239
    %p242 = scmp.ne.s32.totalorder %s227, %s241
    %p243 = scmp.eq.s32.totalorder %s28, 0
    %p244 = por %p242, %p243
    %s246 = sadd.s32 %s245, 1
    %p249 = scmp.eq.s32.totalorder %s22, 1
    %p250 = scmp.ne.s32.totalorder %s245, %s247
    %p251 = scmp.eq.s32.totalorder %s22, 0
    %p252 = por %p250, %p251
    %p253 = scmp.ne.s32.totalorder %s245, %s247
    %p254 = scmp.eq.s32.totalorder %s27, 1
    %p255 = por %p253, %p254
    %p256 = scmp.ne.s32.totalorder %s247, %s248
    %p257 = scmp.eq.s32.totalorder %s27, 0
    %p258 = por %p256, %p257
    %p259 = scmp.ne.s32.totalorder %s247, %s248
    %p260 = scmp.eq.s32.totalorder %s28, 1
    %p261 = por %p259, %p260
    %p263 = scmp.ne.s32.totalorder %s248, %s262
    %p264 = scmp.eq.s32.totalorder %s28, 0
    %p265 = por %p263, %p264
    %s267 = sadd.s32 %s266, 1
    %p270 = scmp.eq.s32.totalorder %s22, 1
    %p271 = scmp.ne.s32.totalorder %s266, %s268
    %p272 = scmp.eq.s32.totalorder %s22, 0
    %p273 = por %p271, %p272
    %p274 = scmp.ne.s32.totalorder %s266, %s268
    %p275 = scmp.eq.s32.totalorder %s27, 1
    %p276 = por %p274, %p275
    %p277 = scmp.ne.s32.totalorder %s268, %s269
    %p278 = scmp.eq.s32.totalorder %s27, 0
    %p279 = por %p277, %p278
    %p280 = scmp.ne.s32.totalorder %s268, %s269
    %p281 = scmp.eq.s32.totalorder %s28, 1
    %p282 = por %p280, %p281
    %p284 = scmp.ne.s32.totalorder %s269, %s283
    %p285 = scmp.eq.s32.totalorder %s28, 0
    %p286 = por %p284, %p285
    %s288 = sadd.s32 %s287, 1
    %p291 = scmp.eq.s32.totalorder %s22, 1
    %p292 = scmp.ne.s32.totalorder %s287, %s289
    %p293 = scmp.eq.s32.totalorder %s22, 0
    %p294 = por %p292, %p293
    %p295 = scmp.ne.s32.totalorder %s287, %s289
    %p296 = scmp.eq.s32.totalorder %s27, 1
    %p297 = por %p295, %p296
    %p298 = scmp.ne.s32.totalorder %s289, %s290
    %p299 = scmp.eq.s32.totalorder %s27, 0
    %p300 = por %p298, %p299
    %p301 = scmp.ne.s32.totalorder %s289, %s290
    %p302 = scmp.eq.s32.totalorder %s28, 1
    %p303 = por %p301, %p302
    %p305 = scmp.ne.s32.totalorder %s290, %s304
    %p306 = scmp.eq.s32.totalorder %s28, 0
    %p307 = por %p305, %p306
    %s309 = sadd.s32 %s308, 1
    %p312 = scmp.eq.s32.totalorder %s22, 1
    %p313 = scmp.ne.s32.totalorder %s308, %s310
    %p314 = scmp.eq.s32.totalorder %s22, 0
    %p315 = por %p313, %p314
    %p316 = scmp.ne.s32.totalorder %s308, %s310
    %p317 = scmp.eq.s32.totalorder %s27, 1
    %p318 = por %p316, %p317
    %p319 = scmp.ne.s32.totalorder %s310, %s311
    %p320 = scmp.eq.s32.totalorder %s27, 0
    %p321 = por %p319, %p320
    %p322 = scmp.ne.s32.totalorder %s310, %s311
    %p323 = scmp.eq.s32.totalorder %s28, 1
    %p324 = por %p322, %p323
    %p326 = scmp.ne.s32.totalorder %s311, %s325
    %p327 = scmp.eq.s32.totalorder %s28, 0
    %p328 = por %p326, %p327
    %s330 = sadd.s32 %s329, 1
    %p333 = scmp.eq.s32.totalorder %s22, 1
    %p334 = scmp.ne.s32.totalorder %s329, %s331
    %p335 = scmp.eq.s32.totalorder %s22, 0
    %p336 = por %p334, %p335
    %p337 = scmp.ne.s32.totalorder %s329, %s331
    %p338 = scmp.eq.s32.totalorder %s27, 1
    %p339 = por %p337, %p338
    %p340 = scmp.ne.s32.totalorder %s331, %s332
    %p341 = scmp.eq.s32.totalorder %s27, 0
    %p342 = por %p340, %p341
    %p343 = scmp.ne.s32.totalorder %s331, %s332
    %p344 = scmp.eq.s32.totalorder %s28, 1
    %p345 = por %p343, %p344
    %p347 = scmp.ne.s32.totalorder %s332, %s346
    %p348 = scmp.eq.s32.totalorder %s28, 0
    %p349 = por %p347, %p348
    %s351 = sadd.s32 %s350, 1
    %p354 = scmp.eq.s32.totalorder %s22, 1
    %p355 = scmp.ne.s32.totalorder %s350, %s352
    %p356 = scmp.eq.s32.totalorder %s22, 0
    %p357 = por %p355, %p356
    %p358 = scmp.ne.s32.totalorder %s350, %s352
    %p359 = scmp.eq.s32.totalorder %s27, 1
    %p360 = por %p358, %p359
    %p361 = scmp.ne.s32.totalorder %s352, %s353
    %p362 = scmp.eq.s32.totalorder %s27, 0
    %p363 = por %p361, %p362
    %p364 = scmp.ne.s32.totalorder %s352, %s353
    %p365 = scmp.eq.s32.totalorder %s28, 1
    %p366 = por %p364, %p365
    %p368 = scmp.ne.s32.totalorder %s353, %s367
    %p369 = scmp.eq.s32.totalorder %s28, 0
    %p370 = por %p368, %p369
    %s371 = ssub.s32 %s22, %s29
    %p372 = scmp.eq.s32.totalorder %s371, 0
    %s374 = sadd.s32 %s373, 1
    %s375 = scalar_select %p372, %s373, %s374
    %p378 = pneg %p372
    %p379 = scmp.eq.s32.totalorder %s22, 1
    %p380 = por %p378, %p379
    %p381 = scmp.ne.s32.totalorder %s373, %s376
    %p382 = scmp.eq.s32.totalorder %s22, 0
    %p383 = por %p381, %p382
    %p384 = scmp.ne.s32.totalorder %s373, %s376
    %p385 = scmp.eq.s32.totalorder %s27, 1
    %p386 = por %p384, %p385
    %p387 = scmp.ne.s32.totalorder %s376, %s377
    %p388 = scmp.eq.s32.totalorder %s27, 0
    %p389 = por %p387, %p388
    %p390 = scmp.ne.s32.totalorder %s376, %s377
    %p391 = scmp.eq.s32.totalorder %s28, 1
    %p392 = por %p390, %p391
    %p394 = scmp.ne.s32.totalorder %s377, %s393
    %p395 = scmp.eq.s32.totalorder %s28, 0
    %p396 = por %p394, %p395
    %p397 = scmp.le.s32.totalorder 1, %s22
    %p398 = scmp.lt.s32.totalorder %s22, 3
    %p399 = pnand %p397, %p398
    %p400 = pneg %p399
    // Predicated region
    $region9: #{_lambda_.1} parent=5 // pred_check
      _
    $region10: #{_lambda_.1} parent=5 // pred_check_branch
      %402 = sbr.rel (%p399) target = $region12
    $region11: #{_lambda_.1} parent=5 // pred_region
      %s403 = ssub.s32 %s22, 1
      // Predicated region
      $region13: #{_lambda_.1} parent=11 // pred_check
        %p404 = pneg %p69
      $region14: #{_lambda_.1} parent=11 // pred_check_branch
        %406 = sbr.rel (%p404) target = $region16
      $region15: #{_lambda_.1} parent=11 // pred_region
        _
      $region16: #{_lambda_.1} parent=11 // pred_fallthru
        _
      // Predicated region
      $region17: #{_lambda_.1} parent=11 // pred_check
        %p407 = pneg %p90
      $region18: #{_lambda_.1} parent=11 // pred_check_branch
        %409 = sbr.rel (%p407) target = $region20
      $region19: #{_lambda_.1} parent=11 // pred_region
        _
      $region20: #{_lambda_.1} parent=11 // pred_fallthru
        _
      // Predicated region
      $region21: #{_lambda_.1} parent=11 // pred_check
        %p410 = pneg %p111
      $region22: #{_lambda_.1} parent=11 // pred_check_branch
        %412 = sbr.rel (%p410) target = $region24
      $region23: #{_lambda_.1} parent=11 // pred_region
        _
      $region24: #{_lambda_.1} parent=11 // pred_fallthru
        _
      // Predicated region
      $region25: #{_lambda_.1} parent=11 // pred_check
        %p413 = pneg %p132
      $region26: #{_lambda_.1} parent=11 // pred_check_branch
        %415 = sbr.rel (%p413) target = $region28
      $region27: #{_lambda_.1} parent=11 // pred_region
        _
      $region28: #{_lambda_.1} parent=11 // pred_fallthru
        _
      // Predicated region
      $region29: #{_lambda_.1} parent=11 // pred_check
        %p416 = pneg %p153
      $region30: #{_lambda_.1} parent=11 // pred_check_branch
        %418 = sbr.rel (%p416) target = $region32
      $region31: #{_lambda_.1} parent=11 // pred_region
        _
      $region32: #{_lambda_.1} parent=11 // pred_fallthru
        _
      // Predicated region
      $region33: #{_lambda_.1} parent=11 // pred_check
        %p419 = pneg %p174
      $region34: #{_lambda_.1} parent=11 // pred_check_branch
        %421 = sbr.rel (%p419) target = $region36
      $region35: #{_lambda_.1} parent=11 // pred_region
        _
      $region36: #{_lambda_.1} parent=11 // pred_fallthru
        _
      // Predicated region
      $region37: #{_lambda_.1} parent=11 // pred_check
        %p422 = pneg %p195
      $region38: #{_lambda_.1} parent=11 // pred_check_branch
        %424 = sbr.rel (%p422) target = $region40
      $region39: #{_lambda_.1} parent=11 // pred_region
        _
      $region40: #{_lambda_.1} parent=11 // pred_fallthru
        _
      // Predicated region
      $region41: #{_lambda_.1} parent=11 // pred_check
        %p425 = pneg %p216
      $region42: #{_lambda_.1} parent=11 // pred_check_branch
        %427 = sbr.rel (%p425) target = $region44
      $region43: #{_lambda_.1} parent=11 // pred_region
        _
      $region44: #{_lambda_.1} parent=11 // pred_fallthru
        _
      // Predicated region
      $region45: #{_lambda_.1} parent=11 // pred_check
        %p428 = pneg %p237
      $region46: #{_lambda_.1} parent=11 // pred_check_branch
        %430 = sbr.rel (%p428) target = $region48
      $region47: #{_lambda_.1} parent=11 // pred_region
        _
      $region48: #{_lambda_.1} parent=11 // pred_fallthru
        _
      // Predicated region
      $region49: #{_lambda_.1} parent=11 // pred_check
        %p431 = pneg %p258
      $region50: #{_lambda_.1} parent=11 // pred_check_branch
        %433 = sbr.rel (%p431) target = $region52
      $region51: #{_lambda_.1} parent=11 // pred_region
        _
      $region52: #{_lambda_.1} parent=11 // pred_fallthru
        _
      // Predicated region
      $region53: #{_lambda_.1} parent=11 // pred_check
        %p434 = pneg %p279
      $region54: #{_lambda_.1} parent=11 // pred_check_branch
        %436 = sbr.rel (%p434) target = $region56
      $region55: #{_lambda_.1} parent=11 // pred_region
        _
      $region56: #{_lambda_.1} parent=11 // pred_fallthru
        _
      // Predicated region
      $region57: #{_lambda_.1} parent=11 // pred_check
        %p437 = pneg %p300
      $region58: #{_lambda_.1} parent=11 // pred_check_branch
        %439 = sbr.rel (%p437) target = $region60
      $region59: #{_lambda_.1} parent=11 // pred_region
        _
      $region60: #{_lambda_.1} parent=11 // pred_fallthru
        _
      // Predicated region
      $region61: #{_lambda_.1} parent=11 // pred_check
        %p440 = pneg %p321
      $region62: #{_lambda_.1} parent=11 // pred_check_branch
        %442 = sbr.rel (%p440) target = $region64
      $region63: #{_lambda_.1} parent=11 // pred_region
        _
      $region64: #{_lambda_.1} parent=11 // pred_fallthru
        _
      // Predicated region
      $region65: #{_lambda_.1} parent=11 // pred_check
        %p443 = pneg %p342
      $region66: #{_lambda_.1} parent=11 // pred_check_branch
        %445 = sbr.rel (%p443) target = $region68
      $region67: #{_lambda_.1} parent=11 // pred_region
        _
      $region68: #{_lambda_.1} parent=11 // pred_fallthru
        _
      // Predicated region
      $region69: #{_lambda_.1} parent=11 // pred_check
        %p446 = pneg %p363
      $region70: #{_lambda_.1} parent=11 // pred_check_branch
        %448 = sbr.rel (%p446) target = $region72
      $region71: #{_lambda_.1} parent=11 // pred_region
        _
      $region72: #{_lambda_.1} parent=11 // pred_fallthru
        _
    $region12: #{_lambda_.1} parent=5 // pred_fallthru
      _
    %p449 = scmp.lt.s32.totalorder %s22, 2
    // Predicated region
    $region73: #{_lambda_.1} parent=5 // pred_check
      %p450 = pneg %p449
    $region74: #{_lambda_.1} parent=5 // pred_check_branch
      %452 = sbr.rel (%p450) target = $region76
    $region75: #{_lambda_.1} parent=5 // pred_region
      // Predicated region
      $region77: #{_lambda_.1} parent=75 // pred_check
        %p453 = pneg %p42
      $region78: #{_lambda_.1} parent=75 // pred_check_branch
        %455 = sbr.rel (%p453) target = $region80
      $region79: #{_lambda_.1} parent=75 // pred_region
        %p456 = scmp.lt.s32.totalorder %s22, 1
        %s457 = scalar_select %p456, %s22, 1
        %s458 = smul.addr %s457, 8
        %s459 = smul.addr %s458, 8
        %s460 = scalar_lea.vmem %s0, %s459
      $region80: #{_lambda_.1} parent=75 // pred_fallthru
        _
    $region76: #{_lambda_.1} parent=5 // pred_fallthru
      _
    %p461 = scmp.le.s32.totalorder 1, %s22
    %p462 = scmp.lt.s32.totalorder %s22, 3
    %p463 = pnand %p461, %p462
    %p464 = pneg %p463
    // Predicated region
    $region81: #{_lambda_.1} parent=5 // pred_check
      _
    $region82: #{_lambda_.1} parent=5 // pred_check_branch
      %466 = sbr.rel (%p463) target = $region84
    $region83: #{_lambda_.1} parent=5 // pred_region
      %s467 = ssub.s32 %s22, 1
      %p468 = scmp.lt.s32.totalorder %s27, 1
      %s469 = scalar_select %p468, %s27, 1
      %s470 = smul.addr %s469, 8
      %s471 = smul.addr %s470, 8
      %s472 = scalar_lea.vmem %s0, %s471
      %p473 = pneg %p48
      %p474 = pneg %p45
      %p475 = pneg %p69
      %p476 = pneg %p66
      %p477 = pneg %p90
      %p478 = pneg %p87
      %p479 = pneg %p111
      %p480 = pneg %p108
      %p481 = pneg %p132
      %p482 = pneg %p129
      %p483 = pneg %p153
      %p484 = pneg %p150
      %p485 = pneg %p174
      %p486 = pneg %p171
      %p487 = pneg %p195
      %p488 = pneg %p192
      %p489 = pneg %p216
      %p490 = pneg %p213
      %p491 = pneg %p237
      %p492 = pneg %p234
      %p493 = pneg %p258
      %p494 = pneg %p255
      %p495 = pneg %p279
      %p496 = pneg %p276
      %p497 = pneg %p300
      %p498 = pneg %p297
      %p499 = pneg %p321
      %p500 = pneg %p318
      %p501 = pneg %p342
      %p502 = pneg %p339
      %p503 = pneg %p363
      %p504 = pneg %p360
      %p505 = pneg %p389
      %p506 = pneg %p386
      %p507 = scmp.lt.s32.totalorder %s27, 1
      %s508 = scalar_select %p507, %s27, 1
      %s509 = smul.addr %s508, 8
      %s510 = scalar_lea.vmem %s16, %s509
      %p511 = scmp.lt.s32.totalorder %s27, 1
      %s512 = scalar_select %p511, %s27, 1
      %s513 = smul.addr %s512, 8
      %s514 = smul.addr %s513, 8
      %s515 = scalar_lea.vmem %s0, %s514
      %p516 = scmp.lt.s32.totalorder %s27, 1
      %s517 = scalar_select %p516, %s27, 1
      %s518 = smul.addr %s517, 8
      %s519 = scalar_lea.vmem %s16, %s518
      %v520 = vld [vmem:[%s515] sm:$0xff]
      %v521 = vld [vmem:[%s515 + $0x8] sm:$0xff]
      %v522 = vld [vmem:[%s515 + $0x10] sm:$0xff]
      %v523 = vld [vmem:[%s515 + $0x18] sm:$0xff]
      %v524 = vld [vmem:[%s515 + $0x20] sm:$0xff]
      %v525 = vld [vmem:[%s515 + $0x28] sm:$0xff]
      %v526 = vld [vmem:[%s515 + $0x30] sm:$0xff]
      %v527 = vld [vmem:[%s515 + $0x38] sm:$0xff]
      %v528 = vld [vmem:[%s1] sm:$0xff]
      %v529 = vld [vmem:[%s1 + $0x8] sm:$0xff]
      %v530 = vld [vmem:[%s1 + $0x10] sm:$0xff]
      %v531 = vld [vmem:[%s1 + $0x18] sm:$0xff]
      %v532 = vld [vmem:[%s1 + $0x20] sm:$0xff]
      %v533 = vld [vmem:[%s1 + $0x28] sm:$0xff]
      %v534 = vld [vmem:[%s1 + $0x30] sm:$0xff]
      %v535 = vld [vmem:[%s1 + $0x38] sm:$0xff]
      %v536 = vld [vmem:[%s2] sm:$0xf]
      %vm537 = vcmask 31744
      %v539 = vsel %vm537, %v520, 0
      %v542 = vsel %vm537, %v521, 0
      %v545 = vsel %vm537, %v522, 0
      %v548 = vsel %vm537, %v523, 0
      %v551 = vsel %vm537, %v524, 0
      %v554 = vsel %vm537, %v525, 0
      %v557 = vsel %vm537, %v526, 0
      %v560 = vsel %vm537, %v527, 0
      %vm562 = vcmask 1043456
      %v564 = vsel %vm562, %v536, 0
      %566 = vmatprep.subr.mxu0 0.0
      %567 = vmatpush1.msra.mxu0 0.0
      %568 = vmatprep.subr.mxu0 0.0
      %569 = vmatpush1.msra.mxu0 0.0
      %570 = vmatprep.subr.mxu0 0.0
      %571 = vmatpush1.msra.mxu0 0.0
      %572 = vmatprep.subr.mxu0 0.0
      %573 = vmatpush1.msra.mxu0 0.0
      %574 = vmatprep.subr.mxu0 0.0
      %575 = vmatpush1.msra.mxu0 0.0
      %576 = vmatprep.subr.mxu0 0.0
      %577 = vmatpush1.msra.mxu0 0.0
      %578 = vmatprep.subr.mxu0 0.0
      %579 = vmatpush1.msra.mxu0 0.0
      %580 = vmatprep.subr.mxu0 0.0
      %581 = vmatpush1.msra.mxu0 0.0
      %582 = vmatprep.subr.mxu0 0.0
      %583 = vmatpush1.msra.mxu0 0.0
      %584 = vmatprep.subr.mxu0 0.0
      %585 = vmatpush1.msra.mxu0 0.0
      %586 = vmatprep.subr.mxu0 0.0
      %587 = vmatpush1.msra.mxu0 0.0
      %588 = vmatprep.subr.mxu0 0.0
      %589 = vmatpush1.msra.mxu0 0.0
      %590 = vmatprep.subr.mxu0 0.0
      %591 = vmatpush1.msra.mxu0 0.0
      %592 = vmatprep.subr.mxu0 0.0
      %593 = vmatpush1.msra.mxu0 0.0
      %594 = vmatprep.subr.mxu0 0.0
      %595 = vmatpush1.msra.mxu0 0.0
      %596 = vmatprep.subr.mxu0 0.0
      %597 = vmatpush1.msra.mxu0 %v564
      %598 = vmatprep.subr.mxu0 0.0
      %599 = vmatpush2.msra.mxu0 0.0
      %600 = vmatprep.subr.mxu0 0.0
      %601 = vmatpush2.msra.mxu0 0.0
      %602 = vmatprep.subr.mxu0 0.0
      %603 = vmatpush2.msra.mxu0 0.0
      %604 = vmatprep.subr.mxu0 0.0
      %605 = vmatpush2.msra.mxu0 0.0
      %606 = vmatprep.subr.mxu0 0.0
      %607 = vmatpush2.msra.mxu0 0.0
      %608 = vmatprep.subr.mxu0 0.0
      %609 = vmatpush2.msra.mxu0 0.0
      %610 = vmatprep.subr.mxu0 0.0
      %611 = vmatpush2.msra.mxu0 0.0
      %612 = vmatprep.subr.mxu0 0.0
      %613 = vmatpush2.msra.mxu0 0.0
      %614 = vmatprep.subr.mxu0 0.0
      %615 = vmatpush2.msra.mxu0 0.0
      %616 = vmatprep.subr.mxu0 0.0
      %617 = vmatpush2.msra.mxu0 0.0
      %618 = vmatprep.subr.mxu0 0.0
      %619 = vmatpush2.msra.mxu0 0.0
      %620 = vmatprep.subr.mxu0 0.0
      %621 = vmatpush2.msra.mxu0 0.0
      %622 = vmatprep.subr.mxu0 0.0
      %623 = vmatpush2.msra.mxu0 0.0
      %624 = vmatprep.subr.mxu0 0.0
      %625 = vmatpush2.msra.mxu0 0.0
      %626 = vmatprep.subr.mxu0 0.0
      %627 = vmatpush2.msra.mxu0 0.0
      %628 = vmatprep.subr.mxu0 0.0
      %629 = vmatpush2.msra.mxu0 0.0
      %630 = vmatprep.mubr.f32.mxu0 0.0
      %631 = vmatmul.mubr.f32.gmra.mxu0 %v539
      %v632 = vpop.f32.mrf.mxu0
      %v633 = vadd.f32 0.0, %v632
      %v634 = vpop.f32.mrf.mxu0
      %635 = vmatprep.mubr.f32.mxu0 0.0
      %636 = vmatmul.mubr.f32.gmra.mxu0 %v542
      %v637 = vpop.f32.mrf.mxu0
      %v638 = vadd.f32 0.0, %v637
      %v639 = vpop.f32.mrf.mxu0
      %640 = vmatprep.mubr.f32.mxu0 0.0
      %641 = vmatmul.mubr.f32.gmra.mxu0 %v545
      %v642 = vpop.f32.mrf.mxu0
      %v643 = vadd.f32 0.0, %v642
      %v644 = vpop.f32.mrf.mxu0
      %645 = vmatprep.mubr.f32.mxu0 0.0
      %646 = vmatmul.mubr.f32.gmra.mxu0 %v548
      %v647 = vpop.f32.mrf.mxu0
      %v648 = vadd.f32 0.0, %v647
      %v649 = vpop.f32.mrf.mxu0
      %650 = vmatprep.mubr.f32.mxu0 0.0
      %651 = vmatmul.mubr.f32.gmra.mxu0 %v551
      %v652 = vpop.f32.mrf.mxu0
      %v653 = vadd.f32 0.0, %v652
      %v654 = vpop.f32.mrf.mxu0
      %655 = vmatprep.mubr.f32.mxu0 0.0
      %656 = vmatmul.mubr.f32.gmra.mxu0 %v554
      %v657 = vpop.f32.mrf.mxu0
      %v658 = vadd.f32 0.0, %v657
      %v659 = vpop.f32.mrf.mxu0
      %660 = vmatprep.mubr.f32.mxu0 0.0
      %661 = vmatmul.mubr.f32.gmra.mxu0 %v557
      %v662 = vpop.f32.mrf.mxu0
      %v663 = vadd.f32 0.0, %v662
      %v664 = vpop.f32.mrf.mxu0
      %665 = vmatprep.mubr.f32.mxu0 0.0
      %666 = vmatmul.mubr.f32.gmra.mxu0 %v560
      %v667 = vpop.f32.mrf.mxu0
      %v668 = vadd.f32 0.0, %v667
      %v669 = vpop.f32.mrf.mxu0
      %670 = vdwg.mxu0
      %v671 = vld [vmem:[%s3] sm:$0x1]
      %v673 = vlaneseq
      %v674 = vshrl.u32 %v673, 7
      %v675 = vsub.s32 0, %v674
      %v676 = vrot.slane %v671, %v675
      %vm678 = vcmask 523264
      %v680 = vsel %vm678, %v528, 0
      %v683 = vsel %vm678, %v529, 0
      %v686 = vsel %vm678, %v530, 0
      %v689 = vsel %vm678, %v531, 0
      %v692 = vsel %vm678, %v532, 0
      %v695 = vsel %vm678, %v533, 0
      %v698 = vsel %vm678, %v534, 0
      %v701 = vsel %vm678, %v535, 0
      %703 = vmatprep.subr.mxu0 0.0
      %704 = vmatpush1.msra.mxu0 0.0
      %705 = vmatprep.subr.mxu0 0.0
      %706 = vmatpush1.msra.mxu0 0.0
      %707 = vmatprep.subr.mxu0 0.0
      %708 = vmatpush1.msra.mxu0 0.0
      %709 = vmatprep.subr.mxu0 0.0
      %710 = vmatpush1.msra.mxu0 0.0
      %711 = vmatprep.subr.mxu0 0.0
      %712 = vmatpush1.msra.mxu0 0.0
      %713 = vmatprep.subr.mxu0 0.0
      %714 = vmatpush1.msra.mxu0 0.0
      %715 = vmatprep.subr.mxu0 0.0
      %716 = vmatpush1.msra.mxu0 0.0
      %717 = vmatprep.subr.mxu0 0.0
      %718 = vmatpush1.msra.mxu0 0.0
      %719 = vmatprep.subr.mxu0 0.0
      %720 = vmatpush1.msra.mxu0 %v668
      %721 = vmatprep.subr.mxu0 0.0
      %722 = vmatpush1.msra.mxu0 %v663
      %723 = vmatprep.subr.mxu0 0.0
      %724 = vmatpush1.msra.mxu0 %v658
      %725 = vmatprep.subr.mxu0 0.0
      %726 = vmatpush1.msra.mxu0 %v653
      %727 = vmatprep.subr.mxu0 0.0
      %728 = vmatpush1.msra.mxu0 %v648
      %729 = vmatprep.subr.mxu0 0.0
      %730 = vmatpush1.msra.mxu0 %v643
      %731 = vmatprep.subr.mxu0 0.0
      %732 = vmatpush1.msra.mxu0 %v638
      %733 = vmatprep.subr.mxu0 0.0
      %734 = vmatpush1.msra.mxu0 %v633
      %735 = vmatprep.subr.mxu0 0.0
      %736 = vmatpush2.msra.mxu0 0.0
      %737 = vmatprep.subr.mxu0 0.0
      %738 = vmatpush2.msra.mxu0 0.0
      %739 = vmatprep.subr.mxu0 0.0
      %740 = vmatpush2.msra.mxu0 0.0
      %741 = vmatprep.subr.mxu0 0.0
      %742 = vmatpush2.msra.mxu0 0.0
      %743 = vmatprep.subr.mxu0 0.0
      %744 = vmatpush2.msra.mxu0 0.0
      %745 = vmatprep.subr.mxu0 0.0
      %746 = vmatpush2.msra.mxu0 0.0
      %747 = vmatprep.subr.mxu0 0.0
      %748 = vmatpush2.msra.mxu0 0.0
      %749 = vmatprep.subr.mxu0 0.0
      %750 = vmatpush2.msra.mxu0 0.0
      %751 = vmatprep.subr.mxu0 0.0
      %752 = vmatpush2.msra.mxu0 0.0
      %753 = vmatprep.subr.mxu0 0.0
      %754 = vmatpush2.msra.mxu0 0.0
      %755 = vmatprep.subr.mxu0 0.0
      %756 = vmatpush2.msra.mxu0 0.0
      %757 = vmatprep.subr.mxu0 0.0
      %758 = vmatpush2.msra.mxu0 0.0
      %759 = vmatprep.subr.mxu0 0.0
      %760 = vmatpush2.msra.mxu0 0.0
      %761 = vmatprep.subr.mxu0 0.0
      %762 = vmatpush2.msra.mxu0 0.0
      %763 = vmatprep.subr.mxu0 0.0
      %764 = vmatpush2.msra.mxu0 0.0
      %765 = vmatprep.subr.mxu0 0.0
      %766 = vmatpush2.msra.mxu0 0.0
      %767 = vmatprep.mubr.f32.mxu0 0.0
      %768 = vmatmul.mubr.f32.gmra.mxu0 %v680
      %v769 = vpop.f32.mrf.mxu0
      %v770 = vadd.f32 %v676, %v769
      %v771 = vpop.f32.mrf.mxu0
      %772 = vmatprep.mubr.f32.mxu0 0.0
      %773 = vmatmul.mubr.f32.gmra.mxu0 %v683
      %v774 = vpop.f32.mrf.mxu0
      %v775 = vadd.f32 %v676, %v774
      %v776 = vpop.f32.mrf.mxu0
      %777 = vmatprep.mubr.f32.mxu0 0.0
      %778 = vmatmul.mubr.f32.gmra.mxu0 %v686
      %v779 = vpop.f32.mrf.mxu0
      %v780 = vadd.f32 %v676, %v779
      %v781 = vpop.f32.mrf.mxu0
      %782 = vmatprep.mubr.f32.mxu0 0.0
      %783 = vmatmul.mubr.f32.gmra.mxu0 %v689
      %v784 = vpop.f32.mrf.mxu0
      %v785 = vadd.f32 %v676, %v784
      %v786 = vpop.f32.mrf.mxu0
      %787 = vmatprep.mubr.f32.mxu0 0.0
      %788 = vmatmul.mubr.f32.gmra.mxu0 %v692
      %v789 = vpop.f32.mrf.mxu0
      %v790 = vadd.f32 %v676, %v789
      %v791 = vpop.f32.mrf.mxu0
      %792 = vmatprep.mubr.f32.mxu0 0.0
      %793 = vmatmul.mubr.f32.gmra.mxu0 %v695
      %v794 = vpop.f32.mrf.mxu0
      %v795 = vadd.f32 %v676, %v794
      %v796 = vpop.f32.mrf.mxu0
      %797 = vmatprep.mubr.f32.mxu0 0.0
      %798 = vmatmul.mubr.f32.gmra.mxu0 %v698
      %v799 = vpop.f32.mrf.mxu0
      %v800 = vadd.f32 %v676, %v799
      %v801 = vpop.f32.mrf.mxu0
      %802 = vmatprep.mubr.f32.mxu0 0.0
      %803 = vmatmul.mubr.f32.gmra.mxu0 %v701
      %v804 = vpop.f32.mrf.mxu0
      %v805 = vadd.f32 %v676, %v804
      %v806 = vpop.f32.mrf.mxu0
      %807 = vdwg.mxu0
      %v808 = vmax.f32 %v770, 0.0
      %v809 = vmax.f32 %v775, 0.0
      %v810 = vmax.f32 %v780, 0.0
      %v811 = vmax.f32 %v785, 0.0
      %v812 = vmax.f32 %v790, 0.0
      %v813 = vmax.f32 %v795, 0.0
      %v814 = vmax.f32 %v800, 0.0
      %v815 = vmax.f32 %v805, 0.0
      %v816 = vld [vmem:[%s4] sm:$0xff]
      %v817 = vld [vmem:[%s4 + $0x8] sm:$0xff]
      %v818 = vld [vmem:[%s4 + $0x10] sm:$0xff]
      %v819 = vld [vmem:[%s4 + $0x18] sm:$0xff]
      %vm820 = vcmask 261120
      %v822 = vsel %vm820, %v808, 0
      %v825 = vsel %vm820, %v809, 0
      %v828 = vsel %vm820, %v810, 0
      %v831 = vsel %vm820, %v811, 0
      %v834 = vsel %vm820, %v812, 0
      %v837 = vsel %vm820, %v813, 0
      %v840 = vsel %vm820, %v814, 0
      %v843 = vsel %vm820, %v815, 0
      %845 = vmatprep.subr.mxu0 0.0
      %846 = vmatpush1.msra.mxu0 0.0
      %847 = vmatprep.subr.mxu0 0.0
      %848 = vmatpush1.msra.mxu0 0.0
      %849 = vmatprep.subr.mxu0 0.0
      %850 = vmatpush1.msra.mxu0 0.0
      %851 = vmatprep.subr.mxu0 0.0
      %852 = vmatpush1.msra.mxu0 0.0
      %853 = vmatprep.subr.mxu0 0.0
      %854 = vmatpush1.msra.mxu0 0.0
      %855 = vmatprep.subr.mxu0 0.0
      %856 = vmatpush1.msra.mxu0 0.0
      %857 = vmatprep.subr.mxu0 0.0
      %858 = vmatpush1.msra.mxu0 0.0
      %859 = vmatprep.subr.mxu0 0.0
      %860 = vmatpush1.msra.mxu0 0.0
      %861 = vmatprep.subr.mxu0 0.0
      %862 = vmatpush1.msra.mxu0 0.0
      %863 = vmatprep.subr.mxu0 0.0
      %864 = vmatpush1.msra.mxu0 0.0
      %865 = vmatprep.subr.mxu0 0.0
      %866 = vmatpush1.msra.mxu0 0.0
      %867 = vmatprep.subr.mxu0 0.0
      %868 = vmatpush1.msra.mxu0 0.0
      %869 = vmatprep.subr.mxu0 0.0
      %870 = vmatpush1.msra.mxu0 %v819
      %871 = vmatprep.subr.mxu0 0.0
      %872 = vmatpush1.msra.mxu0 %v818
      %873 = vmatprep.subr.mxu0 0.0
      %874 = vmatpush1.msra.mxu0 %v817
      %875 = vmatprep.subr.mxu0 0.0
      %876 = vmatpush1.msra.mxu0 %v816
      %877 = vmatprep.subr.mxu0 0.0
      %878 = vmatpush2.msra.mxu0 0.0
      %879 = vmatprep.subr.mxu0 0.0
      %880 = vmatpush2.msra.mxu0 0.0
      %881 = vmatprep.subr.mxu0 0.0
      %882 = vmatpush2.msra.mxu0 0.0
      %883 = vmatprep.subr.mxu0 0.0
      %884 = vmatpush2.msra.mxu0 0.0
      %885 = vmatprep.subr.mxu0 0.0
      %886 = vmatpush2.msra.mxu0 0.0
      %887 = vmatprep.subr.mxu0 0.0
      %888 = vmatpush2.msra.mxu0 0.0
      %889 = vmatprep.subr.mxu0 0.0
      %890 = vmatpush2.msra.mxu0 0.0
      %891 = vmatprep.subr.mxu0 0.0
      %892 = vmatpush2.msra.mxu0 0.0
      %893 = vmatprep.subr.mxu0 0.0
      %894 = vmatpush2.msra.mxu0 0.0
      %895 = vmatprep.subr.mxu0 0.0
      %896 = vmatpush2.msra.mxu0 0.0
      %897 = vmatprep.subr.mxu0 0.0
      %898 = vmatpush2.msra.mxu0 0.0
      %899 = vmatprep.subr.mxu0 0.0
      %900 = vmatpush2.msra.mxu0 0.0
      %901 = vmatprep.subr.mxu0 0.0
      %902 = vmatpush2.msra.mxu0 0.0
      %903 = vmatprep.subr.mxu0 0.0
      %904 = vmatpush2.msra.mxu0 0.0
      %905 = vmatprep.subr.mxu0 0.0
      %906 = vmatpush2.msra.mxu0 0.0
      %907 = vmatprep.subr.mxu0 0.0
      %908 = vmatpush2.msra.mxu0 0.0
      %909 = vmatprep.mubr.f32.mxu0 0.0
      %910 = vmatmul.mubr.f32.gmra.mxu0 %v822
      %v911 = vpop.f32.mrf.mxu0
      %v912 = vadd.f32 0.0, %v911
      %v913 = vpop.f32.mrf.mxu0
      %914 = vmatprep.mubr.f32.mxu0 0.0
      %915 = vmatmul.mubr.f32.gmra.mxu0 %v825
      %v916 = vpop.f32.mrf.mxu0
      %v917 = vadd.f32 0.0, %v916
      %v918 = vpop.f32.mrf.mxu0
      %919 = vmatprep.mubr.f32.mxu0 0.0
      %920 = vmatmul.mubr.f32.gmra.mxu0 %v828
      %v921 = vpop.f32.mrf.mxu0
      %v922 = vadd.f32 0.0, %v921
      %v923 = vpop.f32.mrf.mxu0
      %924 = vmatprep.mubr.f32.mxu0 0.0
      %925 = vmatmul.mubr.f32.gmra.mxu0 %v831
      %v926 = vpop.f32.mrf.mxu0
      %v927 = vadd.f32 0.0, %v926
      %v928 = vpop.f32.mrf.mxu0
      %929 = vmatprep.mubr.f32.mxu0 0.0
      %930 = vmatmul.mubr.f32.gmra.mxu0 %v834
      %v931 = vpop.f32.mrf.mxu0
      %v932 = vadd.f32 0.0, %v931
      %v933 = vpop.f32.mrf.mxu0
      %934 = vmatprep.mubr.f32.mxu0 0.0
      %935 = vmatmul.mubr.f32.gmra.mxu0 %v837
      %v936 = vpop.f32.mrf.mxu0
      %v937 = vadd.f32 0.0, %v936
      %v938 = vpop.f32.mrf.mxu0
      %939 = vmatprep.mubr.f32.mxu0 0.0
      %940 = vmatmul.mubr.f32.gmra.mxu0 %v840
      %v941 = vpop.f32.mrf.mxu0
      %v942 = vadd.f32 0.0, %v941
      %v943 = vpop.f32.mrf.mxu0
      %944 = vmatprep.mubr.f32.mxu0 0.0
      %945 = vmatmul.mubr.f32.gmra.mxu0 %v843
      %v946 = vpop.f32.mrf.mxu0
      %v947 = vadd.f32 0.0, %v946
      %v948 = vpop.f32.mrf.mxu0
      %949 = vdwg.mxu0
      %v950 = vld [vmem:[%s5] sm:$0x1]
      %v952 = vlaneseq
      %v953 = vshrl.u32 %v952, 7
      %v954 = vsub.s32 0, %v953
      %v955 = vrot.slane %v950, %v954
      %957 = vmatprep.subr.mxu0 0.0
      %958 = vmatpush1.msra.mxu0 0.0
      %959 = vmatprep.subr.mxu0 0.0
      %960 = vmatpush1.msra.mxu0 0.0
      %961 = vmatprep.subr.mxu0 0.0
      %962 = vmatpush1.msra.mxu0 0.0
      %963 = vmatprep.subr.mxu0 0.0
      %964 = vmatpush1.msra.mxu0 0.0
      %965 = vmatprep.subr.mxu0 0.0
      %966 = vmatpush1.msra.mxu0 0.0
      %967 = vmatprep.subr.mxu0 0.0
      %968 = vmatpush1.msra.mxu0 0.0
      %969 = vmatprep.subr.mxu0 0.0
      %970 = vmatpush1.msra.mxu0 0.0
      %971 = vmatprep.subr.mxu0 0.0
      %972 = vmatpush1.msra.mxu0 0.0
      %973 = vmatprep.subr.mxu0 0.0
      %974 = vmatpush1.msra.mxu0 %v947
      %975 = vmatprep.subr.mxu0 0.0
      %976 = vmatpush1.msra.mxu0 %v942
      %977 = vmatprep.subr.mxu0 0.0
      %978 = vmatpush1.msra.mxu0 %v937
      %979 = vmatprep.subr.mxu0 0.0
      %980 = vmatpush1.msra.mxu0 %v932
      %981 = vmatprep.subr.mxu0 0.0
      %982 = vmatpush1.msra.mxu0 %v927
      %983 = vmatprep.subr.mxu0 0.0
      %984 = vmatpush1.msra.mxu0 %v922
      %985 = vmatprep.subr.mxu0 0.0
      %986 = vmatpush1.msra.mxu0 %v917
      %987 = vmatprep.subr.mxu0 0.0
      %988 = vmatpush1.msra.mxu0 %v912
      %989 = vmatprep.subr.mxu0 0.0
      %990 = vmatpush2.msra.mxu0 0.0
      %991 = vmatprep.subr.mxu0 0.0
      %992 = vmatpush2.msra.mxu0 0.0
      %993 = vmatprep.subr.mxu0 0.0
      %994 = vmatpush2.msra.mxu0 0.0
      %995 = vmatprep.subr.mxu0 0.0
      %996 = vmatpush2.msra.mxu0 0.0
      %997 = vmatprep.subr.mxu0 0.0
      %998 = vmatpush2.msra.mxu0 0.0
      %999 = vmatprep.subr.mxu0 0.0
      %1000 = vmatpush2.msra.mxu0 0.0
      %1001 = vmatprep.subr.mxu0 0.0
      %1002 = vmatpush2.msra.mxu0 0.0
      %1003 = vmatprep.subr.mxu0 0.0
      %1004 = vmatpush2.msra.mxu0 0.0
      %1005 = vmatprep.subr.mxu0 0.0
      %1006 = vmatpush2.msra.mxu0 0.0
      %1007 = vmatprep.subr.mxu0 0.0
      %1008 = vmatpush2.msra.mxu0 0.0
      %1009 = vmatprep.subr.mxu0 0.0
      %1010 = vmatpush2.msra.mxu0 0.0
      %1011 = vmatprep.subr.mxu0 0.0
      %1012 = vmatpush2.msra.mxu0 0.0
      %1013 = vmatprep.subr.mxu0 0.0
      %1014 = vmatpush2.msra.mxu0 0.0
      %1015 = vmatprep.subr.mxu0 0.0
      %1016 = vmatpush2.msra.mxu0 0.0
      %1017 = vmatprep.subr.mxu0 0.0
      %1018 = vmatpush2.msra.mxu0 0.0
      %1019 = vmatprep.subr.mxu0 0.0
      %1020 = vmatpush2.msra.mxu0 0.0
      %1021 = vmatprep.mubr.f32.mxu0 0.0
      %1022 = vmatmul.mubr.f32.gmra.mxu0 %v680
      %v1023 = vpop.f32.mrf.mxu0
      %v1024 = vadd.f32 %v955, %v1023
      %v1025 = vpop.f32.mrf.mxu0
      %1026 = vmatprep.mubr.f32.mxu0 0.0
      %1027 = vmatmul.mubr.f32.gmra.mxu0 %v683
      %v1028 = vpop.f32.mrf.mxu0
      %v1029 = vadd.f32 %v955, %v1028
      %v1030 = vpop.f32.mrf.mxu0
      %1031 = vmatprep.mubr.f32.mxu0 0.0
      %1032 = vmatmul.mubr.f32.gmra.mxu0 %v686
      %v1033 = vpop.f32.mrf.mxu0
      %v1034 = vadd.f32 %v955, %v1033
      %v1035 = vpop.f32.mrf.mxu0
      %1036 = vmatprep.mubr.f32.mxu0 0.0
      %1037 = vmatmul.mubr.f32.gmra.mxu0 %v689
      %v1038 = vpop.f32.mrf.mxu0
      %v1039 = vadd.f32 %v955, %v1038
      %v1040 = vpop.f32.mrf.mxu0
      %1041 = vmatprep.mubr.f32.mxu0 0.0
      %1042 = vmatmul.mubr.f32.gmra.mxu0 %v692
      %v1043 = vpop.f32.mrf.mxu0
      %v1044 = vadd.f32 %v955, %v1043
      %v1045 = vpop.f32.mrf.mxu0
      %1046 = vmatprep.mubr.f32.mxu0 0.0
      %1047 = vmatmul.mubr.f32.gmra.mxu0 %v695
      %v1048 = vpop.f32.mrf.mxu0
      %v1049 = vadd.f32 %v955, %v1048
      %v1050 = vpop.f32.mrf.mxu0
      %1051 = vmatprep.mubr.f32.mxu0 0.0
      %1052 = vmatmul.mubr.f32.gmra.mxu0 %v698
      %v1053 = vpop.f32.mrf.mxu0
      %v1054 = vadd.f32 %v955, %v1053
      %v1055 = vpop.f32.mrf.mxu0
      %1056 = vmatprep.mubr.f32.mxu0 0.0
      %1057 = vmatmul.mubr.f32.gmra.mxu0 %v701
      %v1058 = vpop.f32.mrf.mxu0
      %v1059 = vadd.f32 %v955, %v1058
      %v1060 = vpop.f32.mrf.mxu0
      %1061 = vdwg.mxu0
      %v1062 = vmax.f32 %v1024, 0.0
      %v1063 = vmax.f32 %v1029, 0.0
      %v1064 = vmax.f32 %v1034, 0.0
      %v1065 = vmax.f32 %v1039, 0.0
      %v1066 = vmax.f32 %v1044, 0.0
      %v1067 = vmax.f32 %v1049, 0.0
      %v1068 = vmax.f32 %v1054, 0.0
      %v1069 = vmax.f32 %v1059, 0.0
      %v1070 = vld [vmem:[%s6] sm:$0xff]
      %v1071 = vld [vmem:[%s6 + $0x8] sm:$0xff]
      %v1072 = vld [vmem:[%s6 + $0x10] sm:$0xff]
      %v1073 = vld [vmem:[%s6 + $0x18] sm:$0xff]
      %v1074 = vld [vmem:[%s7] sm:$0x1]
      %v1076 = vlaneseq
      %v1077 = vshrl.u32 %v1076, 7
      %v1078 = vsub.s32 0, %v1077
      %v1079 = vrot.slane %v1074, %v1078
      %v1082 = vsel %vm820, %v1062, 0
      %v1085 = vsel %vm820, %v1063, 0
      %v1088 = vsel %vm820, %v1064, 0
      %v1091 = vsel %vm820, %v1065, 0
      %v1094 = vsel %vm820, %v1066, 0
      %v1097 = vsel %vm820, %v1067, 0
      %v1100 = vsel %vm820, %v1068, 0
      %v1103 = vsel %vm820, %v1069, 0
      %1105 = vmatprep.subr.mxu0 0.0
      %1106 = vmatpush1.msra.mxu0 0.0
      %1107 = vmatprep.subr.mxu0 0.0
      %1108 = vmatpush1.msra.mxu0 0.0
      %1109 = vmatprep.subr.mxu0 0.0
      %1110 = vmatpush1.msra.mxu0 0.0
      %1111 = vmatprep.subr.mxu0 0.0
      %1112 = vmatpush1.msra.mxu0 0.0
      %1113 = vmatprep.subr.mxu0 0.0
      %1114 = vmatpush1.msra.mxu0 0.0
      %1115 = vmatprep.subr.mxu0 0.0
      %1116 = vmatpush1.msra.mxu0 0.0
      %1117 = vmatprep.subr.mxu0 0.0
      %1118 = vmatpush1.msra.mxu0 0.0
      %1119 = vmatprep.subr.mxu0 0.0
      %1120 = vmatpush1.msra.mxu0 0.0
      %1121 = vmatprep.subr.mxu0 0.0
      %1122 = vmatpush1.msra.mxu0 0.0
      %1123 = vmatprep.subr.mxu0 0.0
      %1124 = vmatpush1.msra.mxu0 0.0
      %1125 = vmatprep.subr.mxu0 0.0
      %1126 = vmatpush1.msra.mxu0 0.0
      %1127 = vmatprep.subr.mxu0 0.0
      %1128 = vmatpush1.msra.mxu0 0.0
      %1129 = vmatprep.subr.mxu0 0.0
      %1130 = vmatpush1.msra.mxu0 %v1073
      %1131 = vmatprep.subr.mxu0 0.0
      %1132 = vmatpush1.msra.mxu0 %v1072
      %1133 = vmatprep.subr.mxu0 0.0
      %1134 = vmatpush1.msra.mxu0 %v1071
      %1135 = vmatprep.subr.mxu0 0.0
      %1136 = vmatpush1.msra.mxu0 %v1070
      %1137 = vmatprep.subr.mxu0 0.0
      %1138 = vmatpush2.msra.mxu0 0.0
      %1139 = vmatprep.subr.mxu0 0.0
      %1140 = vmatpush2.msra.mxu0 0.0
      %1141 = vmatprep.subr.mxu0 0.0
      %1142 = vmatpush2.msra.mxu0 0.0
      %1143 = vmatprep.subr.mxu0 0.0
      %1144 = vmatpush2.msra.mxu0 0.0
      %1145 = vmatprep.subr.mxu0 0.0
      %1146 = vmatpush2.msra.mxu0 0.0
      %1147 = vmatprep.subr.mxu0 0.0
      %1148 = vmatpush2.msra.mxu0 0.0
      %1149 = vmatprep.subr.mxu0 0.0
      %1150 = vmatpush2.msra.mxu0 0.0
      %1151 = vmatprep.subr.mxu0 0.0
      %1152 = vmatpush2.msra.mxu0 0.0
      %1153 = vmatprep.subr.mxu0 0.0
      %1154 = vmatpush2.msra.mxu0 0.0
      %1155 = vmatprep.subr.mxu0 0.0
      %1156 = vmatpush2.msra.mxu0 0.0
      %1157 = vmatprep.subr.mxu0 0.0
      %1158 = vmatpush2.msra.mxu0 0.0
      %1159 = vmatprep.subr.mxu0 0.0
      %1160 = vmatpush2.msra.mxu0 0.0
      %1161 = vmatprep.subr.mxu0 0.0
      %1162 = vmatpush2.msra.mxu0 0.0
      %1163 = vmatprep.subr.mxu0 0.0
      %1164 = vmatpush2.msra.mxu0 0.0
      %1165 = vmatprep.subr.mxu0 0.0
      %1166 = vmatpush2.msra.mxu0 0.0
      %1167 = vmatprep.subr.mxu0 0.0
      %1168 = vmatpush2.msra.mxu0 0.0
      %1169 = vmatprep.mubr.f32.mxu0 0.0
      %1170 = vmatmul.mubr.f32.gmra.mxu0 %v1082
      %v1171 = vpop.f32.mrf.mxu0
      %v1172 = vadd.f32 %v1079, %v1171
      %v1173 = vpop.f32.mrf.mxu0
      %1174 = vmatprep.mubr.f32.mxu0 0.0
      %1175 = vmatmul.mubr.f32.gmra.mxu0 %v1085
      %v1176 = vpop.f32.mrf.mxu0
      %v1177 = vadd.f32 %v1079, %v1176
      %v1178 = vpop.f32.mrf.mxu0
      %1179 = vmatprep.mubr.f32.mxu0 0.0
      %1180 = vmatmul.mubr.f32.gmra.mxu0 %v1088
      %v1181 = vpop.f32.mrf.mxu0
      %v1182 = vadd.f32 %v1079, %v1181
      %v1183 = vpop.f32.mrf.mxu0
      %1184 = vmatprep.mubr.f32.mxu0 0.0
      %1185 = vmatmul.mubr.f32.gmra.mxu0 %v1091
      %v1186 = vpop.f32.mrf.mxu0
      %v1187 = vadd.f32 %v1079, %v1186
      %v1188 = vpop.f32.mrf.mxu0
      %1189 = vmatprep.mubr.f32.mxu0 0.0
      %1190 = vmatmul.mubr.f32.gmra.mxu0 %v1094
      %v1191 = vpop.f32.mrf.mxu0
      %v1192 = vadd.f32 %v1079, %v1191
      %v1193 = vpop.f32.mrf.mxu0
      %1194 = vmatprep.mubr.f32.mxu0 0.0
      %1195 = vmatmul.mubr.f32.gmra.mxu0 %v1097
      %v1196 = vpop.f32.mrf.mxu0
      %v1197 = vadd.f32 %v1079, %v1196
      %v1198 = vpop.f32.mrf.mxu0
      %1199 = vmatprep.mubr.f32.mxu0 0.0
      %1200 = vmatmul.mubr.f32.gmra.mxu0 %v1100
      %v1201 = vpop.f32.mrf.mxu0
      %v1202 = vadd.f32 %v1079, %v1201
      %v1203 = vpop.f32.mrf.mxu0
      %1204 = vmatprep.mubr.f32.mxu0 0.0
      %1205 = vmatmul.mubr.f32.gmra.mxu0 %v1103
      %v1206 = vpop.f32.mrf.mxu0
      %v1207 = vadd.f32 %v1079, %v1206
      %v1208 = vpop.f32.mrf.mxu0
      %1209 = vdwg.mxu0
      %1211 = vrot.lane.b32.xlu0 %v1172, 96
      %v1212 = vpop.permute.xlu0 %1211
      %vm1213 = vcmask 64512
      %v1214 = vsel %vm1213, %v1172, 0
      %v1216 = vsel %vm1213, %v1212, 0
      %1218 = vmatprep.subr.mxu0 0.0
      %1219 = vmatpush1.xpose.msra.mxu0 0.0
      %1220 = vmatprep.subr.mxu0 0.0
      %1221 = vmatpush1.xpose.msra.mxu0 0.0
      %1222 = vmatprep.subr.mxu0 0.0
      %1223 = vmatpush1.xpose.msra.mxu0 0.0
      %1224 = vmatprep.subr.mxu0 0.0
      %1225 = vmatpush1.xpose.msra.mxu0 0.0
      %1226 = vmatprep.subr.mxu0 0.0
      %1227 = vmatpush1.xpose.msra.mxu0 0.0
      %1228 = vmatprep.subr.mxu0 0.0
      %1229 = vmatpush1.xpose.msra.mxu0 0.0
      %1230 = vmatprep.subr.mxu0 0.0
      %1231 = vmatpush1.xpose.msra.mxu0 0.0
      %1232 = vmatprep.subr.mxu0 0.0
      %1233 = vmatpush1.xpose.msra.mxu0 0.0
      %1234 = vmatprep.subr.mxu0 0.0
      %1235 = vmatpush1.xpose.msra.mxu0 0.0
      %1236 = vmatprep.subr.mxu0 0.0
      %1237 = vmatpush1.xpose.msra.mxu0 0.0
      %1238 = vmatprep.subr.mxu0 0.0
      %1239 = vmatpush1.xpose.msra.mxu0 0.0
      %1240 = vmatprep.subr.mxu0 0.0
      %1241 = vmatpush1.xpose.msra.mxu0 0.0
      %1242 = vmatprep.subr.mxu0 0.0
      %1243 = vmatpush1.xpose.msra.mxu0 0.0
      %1244 = vmatprep.subr.mxu0 0.0
      %1245 = vmatpush1.xpose.msra.mxu0 0.0
      %1246 = vmatprep.subr.mxu0 0.0
      %1247 = vmatpush1.xpose.msra.mxu0 0.0
      %1248 = vmatprep.subr.mxu0 0.0
      %1249 = vmatpush1.xpose.msra.mxu0 %v1216
      %1250 = vmatprep.subr.mxu0 0.0
      %1251 = vmatpush2.xpose.msra.mxu0 0.0
      %1252 = vmatprep.subr.mxu0 0.0
      %1253 = vmatpush2.xpose.msra.mxu0 0.0
      %1254 = vmatprep.subr.mxu0 0.0
      %1255 = vmatpush2.xpose.msra.mxu0 0.0
      %1256 = vmatprep.subr.mxu0 0.0
      %1257 = vmatpush2.xpose.msra.mxu0 0.0
      %1258 = vmatprep.subr.mxu0 0.0
      %1259 = vmatpush2.xpose.msra.mxu0 0.0
      %1260 = vmatprep.subr.mxu0 0.0
      %1261 = vmatpush2.xpose.msra.mxu0 0.0
      %1262 = vmatprep.subr.mxu0 0.0
      %1263 = vmatpush2.xpose.msra.mxu0 0.0
      %1264 = vmatprep.subr.mxu0 0.0
      %1265 = vmatpush2.xpose.msra.mxu0 0.0
      %1266 = vmatprep.subr.mxu0 0.0
      %1267 = vmatpush2.xpose.msra.mxu0 0.0
      %1268 = vmatprep.subr.mxu0 0.0
      %1269 = vmatpush2.xpose.msra.mxu0 0.0
      %1270 = vmatprep.subr.mxu0 0.0
      %1271 = vmatpush2.xpose.msra.mxu0 0.0
      %1272 = vmatprep.subr.mxu0 0.0
      %1273 = vmatpush2.xpose.msra.mxu0 0.0
      %1274 = vmatprep.subr.mxu0 0.0
      %1275 = vmatpush2.xpose.msra.mxu0 0.0
      %1276 = vmatprep.subr.mxu0 0.0
      %1277 = vmatpush2.xpose.msra.mxu0 0.0
      %1278 = vmatprep.subr.mxu0 0.0
      %1279 = vmatpush2.xpose.msra.mxu0 0.0
      %1280 = vmatprep.subr.mxu0 0.0
      %1281 = vmatpush2.xpose.msra.mxu0 0.0
      %1282 = vmatprep.mubr.f32.mxu0 0.0
      %1283 = vmatmul.mubr.f32.gmra.mxu0 %v1214
      %v1284 = vpop.f32.mrf.mxu0
      %v1285 = vadd.f32 0.0, %v1284
      %v1286 = vpop.f32.mrf.mxu0
      %1287 = vdwg.mxu0
      %1289 = vrot.lane.b32.xlu0 %v1177, 96
      %v1290 = vpop.permute.xlu0 %1289
      %v1291 = vsel %vm1213, %v1177, 0
      %v1293 = vsel %vm1213, %v1290, 0
      %1295 = vmatprep.subr.mxu0 0.0
      %1296 = vmatpush1.xpose.msra.mxu0 0.0
      %1297 = vmatprep.subr.mxu0 0.0
      %1298 = vmatpush1.xpose.msra.mxu0 0.0
      %1299 = vmatprep.subr.mxu0 0.0
      %1300 = vmatpush1.xpose.msra.mxu0 0.0
      %1301 = vmatprep.subr.mxu0 0.0
      %1302 = vmatpush1.xpose.msra.mxu0 0.0
      %1303 = vmatprep.subr.mxu0 0.0
      %1304 = vmatpush1.xpose.msra.mxu0 0.0
      %1305 = vmatprep.subr.mxu0 0.0
      %1306 = vmatpush1.xpose.msra.mxu0 0.0
      %1307 = vmatprep.subr.mxu0 0.0
      %1308 = vmatpush1.xpose.msra.mxu0 0.0
      %1309 = vmatprep.subr.mxu0 0.0
      %1310 = vmatpush1.xpose.msra.mxu0 0.0
      %1311 = vmatprep.subr.mxu0 0.0
      %1312 = vmatpush1.xpose.msra.mxu0 0.0
      %1313 = vmatprep.subr.mxu0 0.0
      %1314 = vmatpush1.xpose.msra.mxu0 0.0
      %1315 = vmatprep.subr.mxu0 0.0
      %1316 = vmatpush1.xpose.msra.mxu0 0.0
      %1317 = vmatprep.subr.mxu0 0.0
      %1318 = vmatpush1.xpose.msra.mxu0 0.0
      %1319 = vmatprep.subr.mxu0 0.0
      %1320 = vmatpush1.xpose.msra.mxu0 0.0
      %1321 = vmatprep.subr.mxu0 0.0
      %1322 = vmatpush1.xpose.msra.mxu0 0.0
      %1323 = vmatprep.subr.mxu0 0.0
      %1324 = vmatpush1.xpose.msra.mxu0 0.0
      %1325 = vmatprep.subr.mxu0 0.0
      %1326 = vmatpush1.xpose.msra.mxu0 %v1293
      %1327 = vmatprep.subr.mxu0 0.0
      %1328 = vmatpush2.xpose.msra.mxu0 0.0
      %1329 = vmatprep.subr.mxu0 0.0
      %1330 = vmatpush2.xpose.msra.mxu0 0.0
      %1331 = vmatprep.subr.mxu0 0.0
      %1332 = vmatpush2.xpose.msra.mxu0 0.0
      %1333 = vmatprep.subr.mxu0 0.0
      %1334 = vmatpush2.xpose.msra.mxu0 0.0
      %1335 = vmatprep.subr.mxu0 0.0
      %1336 = vmatpush2.xpose.msra.mxu0 0.0
      %1337 = vmatprep.subr.mxu0 0.0
      %1338 = vmatpush2.xpose.msra.mxu0 0.0
      %1339 = vmatprep.subr.mxu0 0.0
      %1340 = vmatpush2.xpose.msra.mxu0 0.0
      %1341 = vmatprep.subr.mxu0 0.0
      %1342 = vmatpush2.xpose.msra.mxu0 0.0
      %1343 = vmatprep.subr.mxu0 0.0
      %1344 = vmatpush2.xpose.msra.mxu0 0.0
      %1345 = vmatprep.subr.mxu0 0.0
      %1346 = vmatpush2.xpose.msra.mxu0 0.0
      %1347 = vmatprep.subr.mxu0 0.0
      %1348 = vmatpush2.xpose.msra.mxu0 0.0
      %1349 = vmatprep.subr.mxu0 0.0
      %1350 = vmatpush2.xpose.msra.mxu0 0.0
      %1351 = vmatprep.subr.mxu0 0.0
      %1352 = vmatpush2.xpose.msra.mxu0 0.0
      %1353 = vmatprep.subr.mxu0 0.0
      %1354 = vmatpush2.xpose.msra.mxu0 0.0
      %1355 = vmatprep.subr.mxu0 0.0
      %1356 = vmatpush2.xpose.msra.mxu0 0.0
      %1357 = vmatprep.subr.mxu0 0.0
      %1358 = vmatpush2.xpose.msra.mxu0 0.0
      %1359 = vmatprep.mubr.f32.mxu0 0.0
      %1360 = vmatmul.mubr.f32.gmra.mxu0 %v1291
      %v1361 = vpop.f32.mrf.mxu0
      %v1362 = vadd.f32 0.0, %v1361
      %v1363 = vpop.f32.mrf.mxu0
      %1364 = vdwg.mxu0
      %1366 = vrot.lane.b32.xlu0 %v1182, 96
      %v1367 = vpop.permute.xlu0 %1366
      %v1368 = vsel %vm1213, %v1182, 0
      %v1370 = vsel %vm1213, %v1367, 0
      %1372 = vmatprep.subr.mxu0 0.0
      %1373 = vmatpush1.xpose.msra.mxu0 0.0
      %1374 = vmatprep.subr.mxu0 0.0
      %1375 = vmatpush1.xpose.msra.mxu0 0.0
      %1376 = vmatprep.subr.mxu0 0.0
      %1377 = vmatpush1.xpose.msra.mxu0 0.0
      %1378 = vmatprep.subr.mxu0 0.0
      %1379 = vmatpush1.xpose.msra.mxu0 0.0
      %1380 = vmatprep.subr.mxu0 0.0
      %1381 = vmatpush1.xpose.msra.mxu0 0.0
      %1382 = vmatprep.subr.mxu0 0.0
      %1383 = vmatpush1.xpose.msra.mxu0 0.0
      %1384 = vmatprep.subr.mxu0 0.0
      %1385 = vmatpush1.xpose.msra.mxu0 0.0
      %1386 = vmatprep.subr.mxu0 0.0
      %1387 = vmatpush1.xpose.msra.mxu0 0.0
      %1388 = vmatprep.subr.mxu0 0.0
      %1389 = vmatpush1.xpose.msra.mxu0 0.0
      %1390 = vmatprep.subr.mxu0 0.0
      %1391 = vmatpush1.xpose.msra.mxu0 0.0
      %1392 = vmatprep.subr.mxu0 0.0
      %1393 = vmatpush1.xpose.msra.mxu0 0.0
      %1394 = vmatprep.subr.mxu0 0.0
      %1395 = vmatpush1.xpose.msra.mxu0 0.0
      %1396 = vmatprep.subr.mxu0 0.0
      %1397 = vmatpush1.xpose.msra.mxu0 0.0
      %1398 = vmatprep.subr.mxu0 0.0
      %1399 = vmatpush1.xpose.msra.mxu0 0.0
      %1400 = vmatprep.subr.mxu0 0.0
      %1401 = vmatpush1.xpose.msra.mxu0 0.0
      %1402 = vmatprep.subr.mxu0 0.0
      %1403 = vmatpush1.xpose.msra.mxu0 %v1370
      %1404 = vmatprep.subr.mxu0 0.0
      %1405 = vmatpush2.xpose.msra.mxu0 0.0
      %1406 = vmatprep.subr.mxu0 0.0
      %1407 = vmatpush2.xpose.msra.mxu0 0.0
      %1408 = vmatprep.subr.mxu0 0.0
      %1409 = vmatpush2.xpose.msra.mxu0 0.0
      %1410 = vmatprep.subr.mxu0 0.0
      %1411 = vmatpush2.xpose.msra.mxu0 0.0
      %1412 = vmatprep.subr.mxu0 0.0
      %1413 = vmatpush2.xpose.msra.mxu0 0.0
      %1414 = vmatprep.subr.mxu0 0.0
      %1415 = vmatpush2.xpose.msra.mxu0 0.0
      %1416 = vmatprep.subr.mxu0 0.0
      %1417 = vmatpush2.xpose.msra.mxu0 0.0
      %1418 = vmatprep.subr.mxu0 0.0
      %1419 = vmatpush2.xpose.msra.mxu0 0.0
      %1420 = vmatprep.subr.mxu0 0.0
      %1421 = vmatpush2.xpose.msra.mxu0 0.0
      %1422 = vmatprep.subr.mxu0 0.0
      %1423 = vmatpush2.xpose.msra.mxu0 0.0
      %1424 = vmatprep.subr.mxu0 0.0
      %1425 = vmatpush2.xpose.msra.mxu0 0.0
      %1426 = vmatprep.subr.mxu0 0.0
      %1427 = vmatpush2.xpose.msra.mxu0 0.0
      %1428 = vmatprep.subr.mxu0 0.0
      %1429 = vmatpush2.xpose.msra.mxu0 0.0
      %1430 = vmatprep.subr.mxu0 0.0
      %1431 = vmatpush2.xpose.msra.mxu0 0.0
      %1432 = vmatprep.subr.mxu0 0.0
      %1433 = vmatpush2.xpose.msra.mxu0 0.0
      %1434 = vmatprep.subr.mxu0 0.0
      %1435 = vmatpush2.xpose.msra.mxu0 0.0
      %1436 = vmatprep.mubr.f32.mxu0 0.0
      %1437 = vmatmul.mubr.f32.gmra.mxu0 %v1368
      %v1438 = vpop.f32.mrf.mxu0
      %v1439 = vadd.f32 0.0, %v1438
      %v1440 = vpop.f32.mrf.mxu0
      %1441 = vdwg.mxu0
      %1443 = vrot.lane.b32.xlu0 %v1187, 96
      %v1444 = vpop.permute.xlu0 %1443
      %v1445 = vsel %vm1213, %v1187, 0
      %v1447 = vsel %vm1213, %v1444, 0
      %1449 = vmatprep.subr.mxu0 0.0
      %1450 = vmatpush1.xpose.msra.mxu0 0.0
      %1451 = vmatprep.subr.mxu0 0.0
      %1452 = vmatpush1.xpose.msra.mxu0 0.0
      %1453 = vmatprep.subr.mxu0 0.0
      %1454 = vmatpush1.xpose.msra.mxu0 0.0
      %1455 = vmatprep.subr.mxu0 0.0
      %1456 = vmatpush1.xpose.msra.mxu0 0.0
      %1457 = vmatprep.subr.mxu0 0.0
      %1458 = vmatpush1.xpose.msra.mxu0 0.0
      %1459 = vmatprep.subr.mxu0 0.0
      %1460 = vmatpush1.xpose.msra.mxu0 0.0
      %1461 = vmatprep.subr.mxu0 0.0
      %1462 = vmatpush1.xpose.msra.mxu0 0.0
      %1463 = vmatprep.subr.mxu0 0.0
      %1464 = vmatpush1.xpose.msra.mxu0 0.0
      %1465 = vmatprep.subr.mxu0 0.0
      %1466 = vmatpush1.xpose.msra.mxu0 0.0
      %1467 = vmatprep.subr.mxu0 0.0
      %1468 = vmatpush1.xpose.msra.mxu0 0.0
      %1469 = vmatprep.subr.mxu0 0.0
      %1470 = vmatpush1.xpose.msra.mxu0 0.0
      %1471 = vmatprep.subr.mxu0 0.0
      %1472 = vmatpush1.xpose.msra.mxu0 0.0
      %1473 = vmatprep.subr.mxu0 0.0
      %1474 = vmatpush1.xpose.msra.mxu0 0.0
      %1475 = vmatprep.subr.mxu0 0.0
      %1476 = vmatpush1.xpose.msra.mxu0 0.0
      %1477 = vmatprep.subr.mxu0 0.0
      %1478 = vmatpush1.xpose.msra.mxu0 0.0
      %1479 = vmatprep.subr.mxu0 0.0
      %1480 = vmatpush1.xpose.msra.mxu0 %v1447
      %1481 = vmatprep.subr.mxu0 0.0
      %1482 = vmatpush2.xpose.msra.mxu0 0.0
      %1483 = vmatprep.subr.mxu0 0.0
      %1484 = vmatpush2.xpose.msra.mxu0 0.0
      %1485 = vmatprep.subr.mxu0 0.0
      %1486 = vmatpush2.xpose.msra.mxu0 0.0
      %1487 = vmatprep.subr.mxu0 0.0
      %1488 = vmatpush2.xpose.msra.mxu0 0.0
      %1489 = vmatprep.subr.mxu0 0.0
      %1490 = vmatpush2.xpose.msra.mxu0 0.0
      %1491 = vmatprep.subr.mxu0 0.0
      %1492 = vmatpush2.xpose.msra.mxu0 0.0
      %1493 = vmatprep.subr.mxu0 0.0
      %1494 = vmatpush2.xpose.msra.mxu0 0.0
      %1495 = vmatprep.subr.mxu0 0.0
      %1496 = vmatpush2.xpose.msra.mxu0 0.0
      %1497 = vmatprep.subr.mxu0 0.0
      %1498 = vmatpush2.xpose.msra.mxu0 0.0
      %1499 = vmatprep.subr.mxu0 0.0
      %1500 = vmatpush2.xpose.msra.mxu0 0.0
      %1501 = vmatprep.subr.mxu0 0.0
      %1502 = vmatpush2.xpose.msra.mxu0 0.0
      %1503 = vmatprep.subr.mxu0 0.0
      %1504 = vmatpush2.xpose.msra.mxu0 0.0
      %1505 = vmatprep.subr.mxu0 0.0
      %1506 = vmatpush2.xpose.msra.mxu0 0.0
      %1507 = vmatprep.subr.mxu0 0.0
      %1508 = vmatpush2.xpose.msra.mxu0 0.0
      %1509 = vmatprep.subr.mxu0 0.0
      %1510 = vmatpush2.xpose.msra.mxu0 0.0
      %1511 = vmatprep.subr.mxu0 0.0
      %1512 = vmatpush2.xpose.msra.mxu0 0.0
      %1513 = vmatprep.mubr.f32.mxu0 0.0
      %1514 = vmatmul.mubr.f32.gmra.mxu0 %v1445
      %v1515 = vpop.f32.mrf.mxu0
      %v1516 = vadd.f32 0.0, %v1515
      %v1517 = vpop.f32.mrf.mxu0
      %1518 = vdwg.mxu0
      %1520 = vrot.lane.b32.xlu0 %v1192, 96
      %v1521 = vpop.permute.xlu0 %1520
      %v1522 = vsel %vm1213, %v1192, 0
      %v1524 = vsel %vm1213, %v1521, 0
      %1526 = vmatprep.subr.mxu0 0.0
      %1527 = vmatpush1.xpose.msra.mxu0 0.0
      %1528 = vmatprep.subr.mxu0 0.0
      %1529 = vmatpush1.xpose.msra.mxu0 0.0
      %1530 = vmatprep.subr.mxu0 0.0
      %1531 = vmatpush1.xpose.msra.mxu0 0.0
      %1532 = vmatprep.subr.mxu0 0.0
      %1533 = vmatpush1.xpose.msra.mxu0 0.0
      %1534 = vmatprep.subr.mxu0 0.0
      %1535 = vmatpush1.xpose.msra.mxu0 0.0
      %1536 = vmatprep.subr.mxu0 0.0
      %1537 = vmatpush1.xpose.msra.mxu0 0.0
      %1538 = vmatprep.subr.mxu0 0.0
      %1539 = vmatpush1.xpose.msra.mxu0 0.0
      %1540 = vmatprep.subr.mxu0 0.0
      %1541 = vmatpush1.xpose.msra.mxu0 0.0
      %1542 = vmatprep.subr.mxu0 0.0
      %1543 = vmatpush1.xpose.msra.mxu0 0.0
      %1544 = vmatprep.subr.mxu0 0.0
      %1545 = vmatpush1.xpose.msra.mxu0 0.0
      %1546 = vmatprep.subr.mxu0 0.0
      %1547 = vmatpush1.xpose.msra.mxu0 0.0
      %1548 = vmatprep.subr.mxu0 0.0
      %1549 = vmatpush1.xpose.msra.mxu0 0.0
      %1550 = vmatprep.subr.mxu0 0.0
      %1551 = vmatpush1.xpose.msra.mxu0 0.0
      %1552 = vmatprep.subr.mxu0 0.0
      %1553 = vmatpush1.xpose.msra.mxu0 0.0
      %1554 = vmatprep.subr.mxu0 0.0
      %1555 = vmatpush1.xpose.msra.mxu0 0.0
      %1556 = vmatprep.subr.mxu0 0.0
      %1557 = vmatpush1.xpose.msra.mxu0 %v1524
      %1558 = vmatprep.subr.mxu0 0.0
      %1559 = vmatpush2.xpose.msra.mxu0 0.0
      %1560 = vmatprep.subr.mxu0 0.0
      %1561 = vmatpush2.xpose.msra.mxu0 0.0
      %1562 = vmatprep.subr.mxu0 0.0
      %1563 = vmatpush2.xpose.msra.mxu0 0.0
      %1564 = vmatprep.subr.mxu0 0.0
      %1565 = vmatpush2.xpose.msra.mxu0 0.0
      %1566 = vmatprep.subr.mxu0 0.0
      %1567 = vmatpush2.xpose.msra.mxu0 0.0
      %1568 = vmatprep.subr.mxu0 0.0
      %1569 = vmatpush2.xpose.msra.mxu0 0.0
      %1570 = vmatprep.subr.mxu0 0.0
      %1571 = vmatpush2.xpose.msra.mxu0 0.0
      %1572 = vmatprep.subr.mxu0 0.0
      %1573 = vmatpush2.xpose.msra.mxu0 0.0
      %1574 = vmatprep.subr.mxu0 0.0
      %1575 = vmatpush2.xpose.msra.mxu0 0.0
      %1576 = vmatprep.subr.mxu0 0.0
      %1577 = vmatpush2.xpose.msra.mxu0 0.0
      %1578 = vmatprep.subr.mxu0 0.0
      %1579 = vmatpush2.xpose.msra.mxu0 0.0
      %1580 = vmatprep.subr.mxu0 0.0
      %1581 = vmatpush2.xpose.msra.mxu0 0.0
      %1582 = vmatprep.subr.mxu0 0.0
      %1583 = vmatpush2.xpose.msra.mxu0 0.0
      %1584 = vmatprep.subr.mxu0 0.0
      %1585 = vmatpush2.xpose.msra.mxu0 0.0
      %1586 = vmatprep.subr.mxu0 0.0
      %1587 = vmatpush2.xpose.msra.mxu0 0.0
      %1588 = vmatprep.subr.mxu0 0.0
      %1589 = vmatpush2.xpose.msra.mxu0 0.0
      %1590 = vmatprep.mubr.f32.mxu0 0.0
      %1591 = vmatmul.mubr.f32.gmra.mxu0 %v1522
      %v1592 = vpop.f32.mrf.mxu0
      %v1593 = vadd.f32 0.0, %v1592
      %v1594 = vpop.f32.mrf.mxu0
      %1595 = vdwg.mxu0
      %1597 = vrot.lane.b32.xlu0 %v1197, 96
      %v1598 = vpop.permute.xlu0 %1597
      %v1599 = vsel %vm1213, %v1197, 0
      %v1601 = vsel %vm1213, %v1598, 0
      %1603 = vmatprep.subr.mxu0 0.0
      %1604 = vmatpush1.xpose.msra.mxu0 0.0
      %1605 = vmatprep.subr.mxu0 0.0
      %1606 = vmatpush1.xpose.msra.mxu0 0.0
      %1607 = vmatprep.subr.mxu0 0.0
      %1608 = vmatpush1.xpose.msra.mxu0 0.0
      %1609 = vmatprep.subr.mxu0 0.0
      %1610 = vmatpush1.xpose.msra.mxu0 0.0
      %1611 = vmatprep.subr.mxu0 0.0
      %1612 = vmatpush1.xpose.msra.mxu0 0.0
      %1613 = vmatprep.subr.mxu0 0.0
      %1614 = vmatpush1.xpose.msra.mxu0 0.0
      %1615 = vmatprep.subr.mxu0 0.0
      %1616 = vmatpush1.xpose.msra.mxu0 0.0
      %1617 = vmatprep.subr.mxu0 0.0
      %1618 = vmatpush1.xpose.msra.mxu0 0.0
      %1619 = vmatprep.subr.mxu0 0.0
      %1620 = vmatpush1.xpose.msra.mxu0 0.0
      %1621 = vmatprep.subr.mxu0 0.0
      %1622 = vmatpush1.xpose.msra.mxu0 0.0
      %1623 = vmatprep.subr.mxu0 0.0
      %1624 = vmatpush1.xpose.msra.mxu0 0.0
      %1625 = vmatprep.subr.mxu0 0.0
      %1626 = vmatpush1.xpose.msra.mxu0 0.0
      %1627 = vmatprep.subr.mxu0 0.0
      %1628 = vmatpush1.xpose.msra.mxu0 0.0
      %1629 = vmatprep.subr.mxu0 0.0
      %1630 = vmatpush1.xpose.msra.mxu0 0.0
      %1631 = vmatprep.subr.mxu0 0.0
      %1632 = vmatpush1.xpose.msra.mxu0 0.0
      %1633 = vmatprep.subr.mxu0 0.0
      %1634 = vmatpush1.xpose.msra.mxu0 %v1601
      %1635 = vmatprep.subr.mxu0 0.0
      %1636 = vmatpush2.xpose.msra.mxu0 0.0
      %1637 = vmatprep.subr.mxu0 0.0
      %1638 = vmatpush2.xpose.msra.mxu0 0.0
      %1639 = vmatprep.subr.mxu0 0.0
      %1640 = vmatpush2.xpose.msra.mxu0 0.0
      %1641 = vmatprep.subr.mxu0 0.0
      %1642 = vmatpush2.xpose.msra.mxu0 0.0
      %1643 = vmatprep.subr.mxu0 0.0
      %1644 = vmatpush2.xpose.msra.mxu0 0.0
      %1645 = vmatprep.subr.mxu0 0.0
      %1646 = vmatpush2.xpose.msra.mxu0 0.0
      %1647 = vmatprep.subr.mxu0 0.0
      %1648 = vmatpush2.xpose.msra.mxu0 0.0
      %1649 = vmatprep.subr.mxu0 0.0
      %1650 = vmatpush2.xpose.msra.mxu0 0.0
      %1651 = vmatprep.subr.mxu0 0.0
      %1652 = vmatpush2.xpose.msra.mxu0 0.0
      %1653 = vmatprep.subr.mxu0 0.0
      %1654 = vmatpush2.xpose.msra.mxu0 0.0
      %1655 = vmatprep.subr.mxu0 0.0
      %1656 = vmatpush2.xpose.msra.mxu0 0.0
      %1657 = vmatprep.subr.mxu0 0.0
      %1658 = vmatpush2.xpose.msra.mxu0 0.0
      %1659 = vmatprep.subr.mxu0 0.0
      %1660 = vmatpush2.xpose.msra.mxu0 0.0
      %1661 = vmatprep.subr.mxu0 0.0
      %1662 = vmatpush2.xpose.msra.mxu0 0.0
      %1663 = vmatprep.subr.mxu0 0.0
      %1664 = vmatpush2.xpose.msra.mxu0 0.0
      %1665 = vmatprep.subr.mxu0 0.0
      %1666 = vmatpush2.xpose.msra.mxu0 0.0
      %1667 = vmatprep.mubr.f32.mxu0 0.0
      %1668 = vmatmul.mubr.f32.gmra.mxu0 %v1599
      %v1669 = vpop.f32.mrf.mxu0
      %v1670 = vadd.f32 0.0, %v1669
      %v1671 = vpop.f32.mrf.mxu0
      %1672 = vdwg.mxu0
      %1674 = vrot.lane.b32.xlu0 %v1202, 96
      %v1675 = vpop.permute.xlu0 %1674
      %v1676 = vsel %vm1213, %v1202, 0
      %v1678 = vsel %vm1213, %v1675, 0
      %1680 = vmatprep.subr.mxu0 0.0
      %1681 = vmatpush1.xpose.msra.mxu0 0.0
      %1682 = vmatprep.subr.mxu0 0.0
      %1683 = vmatpush1.xpose.msra.mxu0 0.0
      %1684 = vmatprep.subr.mxu0 0.0
      %1685 = vmatpush1.xpose.msra.mxu0 0.0
      %1686 = vmatprep.subr.mxu0 0.0
      %1687 = vmatpush1.xpose.msra.mxu0 0.0
      %1688 = vmatprep.subr.mxu0 0.0
      %1689 = vmatpush1.xpose.msra.mxu0 0.0
      %1690 = vmatprep.subr.mxu0 0.0
      %1691 = vmatpush1.xpose.msra.mxu0 0.0
      %1692 = vmatprep.subr.mxu0 0.0
      %1693 = vmatpush1.xpose.msra.mxu0 0.0
      %1694 = vmatprep.subr.mxu0 0.0
      %1695 = vmatpush1.xpose.msra.mxu0 0.0
      %1696 = vmatprep.subr.mxu0 0.0
      %1697 = vmatpush1.xpose.msra.mxu0 0.0
      %1698 = vmatprep.subr.mxu0 0.0
      %1699 = vmatpush1.xpose.msra.mxu0 0.0
      %1700 = vmatprep.subr.mxu0 0.0
      %1701 = vmatpush1.xpose.msra.mxu0 0.0
      %1702 = vmatprep.subr.mxu0 0.0
      %1703 = vmatpush1.xpose.msra.mxu0 0.0
      %1704 = vmatprep.subr.mxu0 0.0
      %1705 = vmatpush1.xpose.msra.mxu0 0.0
      %1706 = vmatprep.subr.mxu0 0.0
      %1707 = vmatpush1.xpose.msra.mxu0 0.0
      %1708 = vmatprep.subr.mxu0 0.0
      %1709 = vmatpush1.xpose.msra.mxu0 0.0
      %1710 = vmatprep.subr.mxu0 0.0
      %1711 = vmatpush1.xpose.msra.mxu0 %v1678
      %1712 = vmatprep.subr.mxu0 0.0
      %1713 = vmatpush2.xpose.msra.mxu0 0.0
      %1714 = vmatprep.subr.mxu0 0.0
      %1715 = vmatpush2.xpose.msra.mxu0 0.0
      %1716 = vmatprep.subr.mxu0 0.0
      %1717 = vmatpush2.xpose.msra.mxu0 0.0
      %1718 = vmatprep.subr.mxu0 0.0
      %1719 = vmatpush2.xpose.msra.mxu0 0.0
      %1720 = vmatprep.subr.mxu0 0.0
      %1721 = vmatpush2.xpose.msra.mxu0 0.0
      %1722 = vmatprep.subr.mxu0 0.0
      %1723 = vmatpush2.xpose.msra.mxu0 0.0
      %1724 = vmatprep.subr.mxu0 0.0
      %1725 = vmatpush2.xpose.msra.mxu0 0.0
      %1726 = vmatprep.subr.mxu0 0.0
      %1727 = vmatpush2.xpose.msra.mxu0 0.0
      %1728 = vmatprep.subr.mxu0 0.0
      %1729 = vmatpush2.xpose.msra.mxu0 0.0
      %1730 = vmatprep.subr.mxu0 0.0
      %1731 = vmatpush2.xpose.msra.mxu0 0.0
      %1732 = vmatprep.subr.mxu0 0.0
      %1733 = vmatpush2.xpose.msra.mxu0 0.0
      %1734 = vmatprep.subr.mxu0 0.0
      %1735 = vmatpush2.xpose.msra.mxu0 0.0
      %1736 = vmatprep.subr.mxu0 0.0
      %1737 = vmatpush2.xpose.msra.mxu0 0.0
      %1738 = vmatprep.subr.mxu0 0.0
      %1739 = vmatpush2.xpose.msra.mxu0 0.0
      %1740 = vmatprep.subr.mxu0 0.0
      %1741 = vmatpush2.xpose.msra.mxu0 0.0
      %1742 = vmatprep.subr.mxu0 0.0
      %1743 = vmatpush2.xpose.msra.mxu0 0.0
      %1744 = vmatprep.mubr.f32.mxu0 0.0
      %1745 = vmatmul.mubr.f32.gmra.mxu0 %v1676
      %v1746 = vpop.f32.mrf.mxu0
      %v1747 = vadd.f32 0.0, %v1746
      %v1748 = vpop.f32.mrf.mxu0
      %1749 = vdwg.mxu0
      %1751 = vrot.lane.b32.xlu0 %v1207, 96
      %v1752 = vpop.permute.xlu0 %1751
      %v1753 = vsel %vm1213, %v1207, 0
      %v1755 = vsel %vm1213, %v1752, 0
      %1757 = vmatprep.subr.mxu0 0.0
      %1758 = vmatpush1.xpose.msra.mxu0 0.0
      %1759 = vmatprep.subr.mxu0 0.0
      %1760 = vmatpush1.xpose.msra.mxu0 0.0
      %1761 = vmatprep.subr.mxu0 0.0
      %1762 = vmatpush1.xpose.msra.mxu0 0.0
      %1763 = vmatprep.subr.mxu0 0.0
      %1764 = vmatpush1.xpose.msra.mxu0 0.0
      %1765 = vmatprep.subr.mxu0 0.0
      %1766 = vmatpush1.xpose.msra.mxu0 0.0
      %1767 = vmatprep.subr.mxu0 0.0
      %1768 = vmatpush1.xpose.msra.mxu0 0.0
      %1769 = vmatprep.subr.mxu0 0.0
      %1770 = vmatpush1.xpose.msra.mxu0 0.0
      %1771 = vmatprep.subr.mxu0 0.0
      %1772 = vmatpush1.xpose.msra.mxu0 0.0
      %1773 = vmatprep.subr.mxu0 0.0
      %1774 = vmatpush1.xpose.msra.mxu0 0.0
      %1775 = vmatprep.subr.mxu0 0.0
      %1776 = vmatpush1.xpose.msra.mxu0 0.0
      %1777 = vmatprep.subr.mxu0 0.0
      %1778 = vmatpush1.xpose.msra.mxu0 0.0
      %1779 = vmatprep.subr.mxu0 0.0
      %1780 = vmatpush1.xpose.msra.mxu0 0.0
      %1781 = vmatprep.subr.mxu0 0.0
      %1782 = vmatpush1.xpose.msra.mxu0 0.0
      %1783 = vmatprep.subr.mxu0 0.0
      %1784 = vmatpush1.xpose.msra.mxu0 0.0
      %1785 = vmatprep.subr.mxu0 0.0
      %1786 = vmatpush1.xpose.msra.mxu0 0.0
      %1787 = vmatprep.subr.mxu0 0.0
      %1788 = vmatpush1.xpose.msra.mxu0 %v1755
      %1789 = vmatprep.subr.mxu0 0.0
      %1790 = vmatpush2.xpose.msra.mxu0 0.0
      %1791 = vmatprep.subr.mxu0 0.0
      %1792 = vmatpush2.xpose.msra.mxu0 0.0
      %1793 = vmatprep.subr.mxu0 0.0
      %1794 = vmatpush2.xpose.msra.mxu0 0.0
      %1795 = vmatprep.subr.mxu0 0.0
      %1796 = vmatpush2.xpose.msra.mxu0 0.0
      %1797 = vmatprep.subr.mxu0 0.0
      %1798 = vmatpush2.xpose.msra.mxu0 0.0
      %1799 = vmatprep.subr.mxu0 0.0
      %1800 = vmatpush2.xpose.msra.mxu0 0.0
      %1801 = vmatprep.subr.mxu0 0.0
      %1802 = vmatpush2.xpose.msra.mxu0 0.0
      %1803 = vmatprep.subr.mxu0 0.0
      %1804 = vmatpush2.xpose.msra.mxu0 0.0
      %1805 = vmatprep.subr.mxu0 0.0
      %1806 = vmatpush2.xpose.msra.mxu0 0.0
      %1807 = vmatprep.subr.mxu0 0.0
      %1808 = vmatpush2.xpose.msra.mxu0 0.0
      %1809 = vmatprep.subr.mxu0 0.0
      %1810 = vmatpush2.xpose.msra.mxu0 0.0
      %1811 = vmatprep.subr.mxu0 0.0
      %1812 = vmatpush2.xpose.msra.mxu0 0.0
      %1813 = vmatprep.subr.mxu0 0.0
      %1814 = vmatpush2.xpose.msra.mxu0 0.0
      %1815 = vmatprep.subr.mxu0 0.0
      %1816 = vmatpush2.xpose.msra.mxu0 0.0
      %1817 = vmatprep.subr.mxu0 0.0
      %1818 = vmatpush2.xpose.msra.mxu0 0.0
      %1819 = vmatprep.subr.mxu0 0.0
      %1820 = vmatpush2.xpose.msra.mxu0 0.0
      %1821 = vmatprep.mubr.f32.mxu0 0.0
      %1822 = vmatmul.mubr.f32.gmra.mxu0 %v1753
      %v1823 = vpop.f32.mrf.mxu0
      %v1824 = vadd.f32 0.0, %v1823
      %v1825 = vpop.f32.mrf.mxu0
      %1826 = vdwg.mxu0
      %v1827 = vmul.f32 %v1285, 0.35355338
      %v1828 = vmul.f32 %v1362, 0.35355338
      %v1829 = vmul.f32 %v1439, 0.35355338
      %v1830 = vmul.f32 %v1516, 0.35355338
      %v1831 = vmul.f32 %v1593, 0.35355338
      %v1832 = vmul.f32 %v1670, 0.35355338
      %v1833 = vmul.f32 %v1747, 0.35355338
      %v1834 = vmul.f32 %v1824, 0.35355338
      %v1835 = vsel %vm1213, %v1827, -inf
      %1836 = vmax.xlane.f32.xlu0 %v1835
      %v1837 = vpop.xlane.xlu0 %1836
      %v1838 = vsel %vm1213, %v1828, -inf
      %1839 = vmax.xlane.f32.xlu0 %v1838
      %v1840 = vpop.xlane.xlu0 %1839
      %v1841 = vsel %vm1213, %v1829, -inf
      %1842 = vmax.xlane.f32.xlu0 %v1841
      %v1843 = vpop.xlane.xlu0 %1842
      %v1844 = vsel %vm1213, %v1830, -inf
      %1845 = vmax.xlane.f32.xlu0 %v1844
      %v1846 = vpop.xlane.xlu0 %1845
      %v1847 = vsel %vm1213, %v1831, -inf
      %1848 = vmax.xlane.f32.xlu0 %v1847
      %v1849 = vpop.xlane.xlu0 %1848
      %v1850 = vsel %vm1213, %v1832, -inf
      %1851 = vmax.xlane.f32.xlu0 %v1850
      %v1852 = vpop.xlane.xlu0 %1851
      %v1853 = vsel %vm1213, %v1833, -inf
      %1854 = vmax.xlane.f32.xlu0 %v1853
      %v1855 = vpop.xlane.xlu0 %1854
      %v1856 = vsel %vm1213, %v1834, -inf
      %1857 = vmax.xlane.f32.xlu0 %v1856
      %v1858 = vpop.xlane.xlu0 %1857
      %v1859 = vsub.f32 %v1827, %v1837
      %v1860 = vsub.f32 %v1828, %v1840
      %v1861 = vsub.f32 %v1829, %v1843
      %v1862 = vsub.f32 %v1830, %v1846
      %v1863 = vsub.f32 %v1831, %v1849
      %v1864 = vsub.f32 %v1832, %v1852
      %v1865 = vsub.f32 %v1833, %v1855
      %v1866 = vsub.f32 %v1834, %v1858
      %v1867 = vmul.f32 %v1859, 1.442695
      %v1868 = vpow.pop %v1867
      %v1869 = vmul.f32 %v1860, 1.442695
      %v1870 = vpow.pop %v1869
      %v1871 = vmul.f32 %v1861, 1.442695
      %v1872 = vpow.pop %v1871
      %v1873 = vmul.f32 %v1862, 1.442695
      %v1874 = vpow.pop %v1873
      %v1875 = vmul.f32 %v1863, 1.442695
      %v1876 = vpow.pop %v1875
      %v1877 = vmul.f32 %v1864, 1.442695
      %v1878 = vpow.pop %v1877
      %v1879 = vmul.f32 %v1865, 1.442695
      %v1880 = vpow.pop %v1879
      %v1881 = vmul.f32 %v1866, 1.442695
      %v1882 = vpow.pop %v1881
      %v1883 = vsel %vm1213, %v1868, 0.0
      %1884 = vadd.xlane.f32.xlu0 %v1883
      %v1885 = vpop.xlane.xlu0 %1884
      %v1886 = vsel %vm1213, %v1870, 0.0
      %1887 = vadd.xlane.f32.xlu0 %v1886
      %v1888 = vpop.xlane.xlu0 %1887
      %v1889 = vsel %vm1213, %v1872, 0.0
      %1890 = vadd.xlane.f32.xlu0 %v1889
      %v1891 = vpop.xlane.xlu0 %1890
      %v1892 = vsel %vm1213, %v1874, 0.0
      %1893 = vadd.xlane.f32.xlu0 %v1892
      %v1894 = vpop.xlane.xlu0 %1893
      %v1895 = vsel %vm1213, %v1876, 0.0
      %1896 = vadd.xlane.f32.xlu0 %v1895
      %v1897 = vpop.xlane.xlu0 %1896
      %v1898 = vsel %vm1213, %v1878, 0.0
      %1899 = vadd.xlane.f32.xlu0 %v1898
      %v1900 = vpop.xlane.xlu0 %1899
      %v1901 = vsel %vm1213, %v1880, 0.0
      %1902 = vadd.xlane.f32.xlu0 %v1901
      %v1903 = vpop.xlane.xlu0 %1902
      %v1904 = vsel %vm1213, %v1882, 0.0
      %1905 = vadd.xlane.f32.xlu0 %v1904
      %v1906 = vpop.xlane.xlu0 %1905
      %v1907 = vrcp.pop %v1885
      %v1908 = vmul.f32 %v1868, %v1907
      %v1909 = vrcp.pop %v1888
      %v1910 = vmul.f32 %v1870, %v1909
      %v1911 = vrcp.pop %v1891
      %v1912 = vmul.f32 %v1872, %v1911
      %v1913 = vrcp.pop %v1894
      %v1914 = vmul.f32 %v1874, %v1913
      %v1915 = vrcp.pop %v1897
      %v1916 = vmul.f32 %v1876, %v1915
      %v1917 = vrcp.pop %v1900
      %v1918 = vmul.f32 %v1878, %v1917
      %v1919 = vrcp.pop %v1903
      %v1920 = vmul.f32 %v1880, %v1919
      %v1921 = vrcp.pop %v1906
      %v1922 = vmul.f32 %v1882, %v1921
      %1923 = vrot.lane.b32.xlu0 %v1172, 64
      %v1924 = vpop.permute.xlu0 %1923
      %v1927 = vsel %vm1213, %v1908, 0
      %1929 = vmatprep.subr.mxu0 0.0
      %1930 = vmatpush1.msra.mxu0 0.0
      %1931 = vmatprep.subr.mxu0 0.0
      %1932 = vmatpush1.msra.mxu0 0.0
      %1933 = vmatprep.subr.mxu0 0.0
      %1934 = vmatpush1.msra.mxu0 0.0
      %1935 = vmatprep.subr.mxu0 0.0
      %1936 = vmatpush1.msra.mxu0 0.0
      %1937 = vmatprep.subr.mxu0 0.0
      %1938 = vmatpush1.msra.mxu0 0.0
      %1939 = vmatprep.subr.mxu0 0.0
      %1940 = vmatpush1.msra.mxu0 0.0
      %1941 = vmatprep.subr.mxu0 0.0
      %1942 = vmatpush1.msra.mxu0 0.0
      %1943 = vmatprep.subr.mxu0 0.0
      %1944 = vmatpush1.msra.mxu0 0.0
      %1945 = vmatprep.subr.mxu0 0.0
      %1946 = vmatpush1.msra.mxu0 0.0
      %1947 = vmatprep.subr.mxu0 0.0
      %1948 = vmatpush1.msra.mxu0 0.0
      %1949 = vmatprep.subr.mxu0 0.0
      %1950 = vmatpush1.msra.mxu0 0.0
      %1951 = vmatprep.subr.mxu0 0.0
      %1952 = vmatpush1.msra.mxu0 0.0
      %1953 = vmatprep.subr.mxu0 0.0
      %1954 = vmatpush1.msra.mxu0 0.0
      %1955 = vmatprep.subr.mxu0 0.0
      %1956 = vmatpush1.msra.mxu0 0.0
      %1957 = vmatprep.subr.mxu0 0.0
      %1958 = vmatpush1.msra.mxu0 0.0
      %1959 = vmatprep.subr.mxu0 0.0
      %1960 = vmatpush1.msra.mxu0 %v1924
      %1961 = vmatprep.subr.mxu0 0.0
      %1962 = vmatpush2.msra.mxu0 0.0
      %1963 = vmatprep.subr.mxu0 0.0
      %1964 = vmatpush2.msra.mxu0 0.0
      %1965 = vmatprep.subr.mxu0 0.0
      %1966 = vmatpush2.msra.mxu0 0.0
      %1967 = vmatprep.subr.mxu0 0.0
      %1968 = vmatpush2.msra.mxu0 0.0
      %1969 = vmatprep.subr.mxu0 0.0
      %1970 = vmatpush2.msra.mxu0 0.0
      %1971 = vmatprep.subr.mxu0 0.0
      %1972 = vmatpush2.msra.mxu0 0.0
      %1973 = vmatprep.subr.mxu0 0.0
      %1974 = vmatpush2.msra.mxu0 0.0
      %1975 = vmatprep.subr.mxu0 0.0
      %1976 = vmatpush2.msra.mxu0 0.0
      %1977 = vmatprep.subr.mxu0 0.0
      %1978 = vmatpush2.msra.mxu0 0.0
      %1979 = vmatprep.subr.mxu0 0.0
      %1980 = vmatpush2.msra.mxu0 0.0
      %1981 = vmatprep.subr.mxu0 0.0
      %1982 = vmatpush2.msra.mxu0 0.0
      %1983 = vmatprep.subr.mxu0 0.0
      %1984 = vmatpush2.msra.mxu0 0.0
      %1985 = vmatprep.subr.mxu0 0.0
      %1986 = vmatpush2.msra.mxu0 0.0
      %1987 = vmatprep.subr.mxu0 0.0
      %1988 = vmatpush2.msra.mxu0 0.0
      %1989 = vmatprep.subr.mxu0 0.0
      %1990 = vmatpush2.msra.mxu0 0.0
      %1991 = vmatprep.subr.mxu0 0.0
      %1992 = vmatpush2.msra.mxu0 0.0
      %1993 = vmatprep.mubr.f32.mxu0 0.0
      %1994 = vmatmul.mubr.f32.gmra.mxu0 %v1927
      %v1995 = vpop.f32.mrf.mxu0
      %v1996 = vadd.f32 0.0, %v1995
      %v1997 = vpop.f32.mrf.mxu0
      %1998 = vdwg.mxu0
      %1999 = vrot.lane.b32.xlu0 %v1177, 64
      %v2000 = vpop.permute.xlu0 %1999
      %v2003 = vsel %vm1213, %v1910, 0
      %2005 = vmatprep.subr.mxu0 0.0
      %2006 = vmatpush1.msra.mxu0 0.0
      %2007 = vmatprep.subr.mxu0 0.0
      %2008 = vmatpush1.msra.mxu0 0.0
      %2009 = vmatprep.subr.mxu0 0.0
      %2010 = vmatpush1.msra.mxu0 0.0
      %2011 = vmatprep.subr.mxu0 0.0
      %2012 = vmatpush1.msra.mxu0 0.0
      %2013 = vmatprep.subr.mxu0 0.0
      %2014 = vmatpush1.msra.mxu0 0.0
      %2015 = vmatprep.subr.mxu0 0.0
      %2016 = vmatpush1.msra.mxu0 0.0
      %2017 = vmatprep.subr.mxu0 0.0
      %2018 = vmatpush1.msra.mxu0 0.0
      %2019 = vmatprep.subr.mxu0 0.0
      %2020 = vmatpush1.msra.mxu0 0.0
      %2021 = vmatprep.subr.mxu0 0.0
      %2022 = vmatpush1.msra.mxu0 0.0
      %2023 = vmatprep.subr.mxu0 0.0
      %2024 = vmatpush1.msra.mxu0 0.0
      %2025 = vmatprep.subr.mxu0 0.0
      %2026 = vmatpush1.msra.mxu0 0.0
      %2027 = vmatprep.subr.mxu0 0.0
      %2028 = vmatpush1.msra.mxu0 0.0
      %2029 = vmatprep.subr.mxu0 0.0
      %2030 = vmatpush1.msra.mxu0 0.0
      %2031 = vmatprep.subr.mxu0 0.0
      %2032 = vmatpush1.msra.mxu0 0.0
      %2033 = vmatprep.subr.mxu0 0.0
      %2034 = vmatpush1.msra.mxu0 0.0
      %2035 = vmatprep.subr.mxu0 0.0
      %2036 = vmatpush1.msra.mxu0 %v2000
      %2037 = vmatprep.subr.mxu0 0.0
      %2038 = vmatpush2.msra.mxu0 0.0
      %2039 = vmatprep.subr.mxu0 0.0
      %2040 = vmatpush2.msra.mxu0 0.0
      %2041 = vmatprep.subr.mxu0 0.0
      %2042 = vmatpush2.msra.mxu0 0.0
      %2043 = vmatprep.subr.mxu0 0.0
      %2044 = vmatpush2.msra.mxu0 0.0
      %2045 = vmatprep.subr.mxu0 0.0
      %2046 = vmatpush2.msra.mxu0 0.0
      %2047 = vmatprep.subr.mxu0 0.0
      %2048 = vmatpush2.msra.mxu0 0.0
      %2049 = vmatprep.subr.mxu0 0.0
      %2050 = vmatpush2.msra.mxu0 0.0
      %2051 = vmatprep.subr.mxu0 0.0
      %2052 = vmatpush2.msra.mxu0 0.0
      %2053 = vmatprep.subr.mxu0 0.0
      %2054 = vmatpush2.msra.mxu0 0.0
      %2055 = vmatprep.subr.mxu0 0.0
      %2056 = vmatpush2.msra.mxu0 0.0
      %2057 = vmatprep.subr.mxu0 0.0
      %2058 = vmatpush2.msra.mxu0 0.0
      %2059 = vmatprep.subr.mxu0 0.0
      %2060 = vmatpush2.msra.mxu0 0.0
      %2061 = vmatprep.subr.mxu0 0.0
      %2062 = vmatpush2.msra.mxu0 0.0
      %2063 = vmatprep.subr.mxu0 0.0
      %2064 = vmatpush2.msra.mxu0 0.0
      %2065 = vmatprep.subr.mxu0 0.0
      %2066 = vmatpush2.msra.mxu0 0.0
      %2067 = vmatprep.subr.mxu0 0.0
      %2068 = vmatpush2.msra.mxu0 0.0
      %2069 = vmatprep.mubr.f32.mxu0 0.0
      %2070 = vmatmul.mubr.f32.gmra.mxu0 %v2003
      %v2071 = vpop.f32.mrf.mxu0
      %v2072 = vadd.f32 0.0, %v2071
      %v2073 = vpop.f32.mrf.mxu0
      %2074 = vdwg.mxu0
      %2075 = vrot.lane.b32.xlu0 %v1182, 64
      %v2076 = vpop.permute.xlu0 %2075
      %v2079 = vsel %vm1213, %v1912, 0
      %2081 = vmatprep.subr.mxu0 0.0
      %2082 = vmatpush1.msra.mxu0 0.0
      %2083 = vmatprep.subr.mxu0 0.0
      %2084 = vmatpush1.msra.mxu0 0.0
      %2085 = vmatprep.subr.mxu0 0.0
      %2086 = vmatpush1.msra.mxu0 0.0
      %2087 = vmatprep.subr.mxu0 0.0
      %2088 = vmatpush1.msra.mxu0 0.0
      %2089 = vmatprep.subr.mxu0 0.0
      %2090 = vmatpush1.msra.mxu0 0.0
      %2091 = vmatprep.subr.mxu0 0.0
      %2092 = vmatpush1.msra.mxu0 0.0
      %2093 = vmatprep.subr.mxu0 0.0
      %2094 = vmatpush1.msra.mxu0 0.0
      %2095 = vmatprep.subr.mxu0 0.0
      %2096 = vmatpush1.msra.mxu0 0.0
      %2097 = vmatprep.subr.mxu0 0.0
      %2098 = vmatpush1.msra.mxu0 0.0
      %2099 = vmatprep.subr.mxu0 0.0
      %2100 = vmatpush1.msra.mxu0 0.0
      %2101 = vmatprep.subr.mxu0 0.0
      %2102 = vmatpush1.msra.mxu0 0.0
      %2103 = vmatprep.subr.mxu0 0.0
      %2104 = vmatpush1.msra.mxu0 0.0
      %2105 = vmatprep.subr.mxu0 0.0
      %2106 = vmatpush1.msra.mxu0 0.0
      %2107 = vmatprep.subr.mxu0 0.0
      %2108 = vmatpush1.msra.mxu0 0.0
      %2109 = vmatprep.subr.mxu0 0.0
      %2110 = vmatpush1.msra.mxu0 0.0
      %2111 = vmatprep.subr.mxu0 0.0
      %2112 = vmatpush1.msra.mxu0 %v2076
      %2113 = vmatprep.subr.mxu0 0.0
      %2114 = vmatpush2.msra.mxu0 0.0
      %2115 = vmatprep.subr.mxu0 0.0
      %2116 = vmatpush2.msra.mxu0 0.0
      %2117 = vmatprep.subr.mxu0 0.0
      %2118 = vmatpush2.msra.mxu0 0.0
      %2119 = vmatprep.subr.mxu0 0.0
      %2120 = vmatpush2.msra.mxu0 0.0
      %2121 = vmatprep.subr.mxu0 0.0
      %2122 = vmatpush2.msra.mxu0 0.0
      %2123 = vmatprep.subr.mxu0 0.0
      %2124 = vmatpush2.msra.mxu0 0.0
      %2125 = vmatprep.subr.mxu0 0.0
      %2126 = vmatpush2.msra.mxu0 0.0
      %2127 = vmatprep.subr.mxu0 0.0
      %2128 = vmatpush2.msra.mxu0 0.0
      %2129 = vmatprep.subr.mxu0 0.0
      %2130 = vmatpush2.msra.mxu0 0.0
      %2131 = vmatprep.subr.mxu0 0.0
      %2132 = vmatpush2.msra.mxu0 0.0
      %2133 = vmatprep.subr.mxu0 0.0
      %2134 = vmatpush2.msra.mxu0 0.0
      %2135 = vmatprep.subr.mxu0 0.0
      %2136 = vmatpush2.msra.mxu0 0.0
      %2137 = vmatprep.subr.mxu0 0.0
      %2138 = vmatpush2.msra.mxu0 0.0
      %2139 = vmatprep.subr.mxu0 0.0
      %2140 = vmatpush2.msra.mxu0 0.0
      %2141 = vmatprep.subr.mxu0 0.0
      %2142 = vmatpush2.msra.mxu0 0.0
      %2143 = vmatprep.subr.mxu0 0.0
      %2144 = vmatpush2.msra.mxu0 0.0
      %2145 = vmatprep.mubr.f32.mxu0 0.0
      %2146 = vmatmul.mubr.f32.gmra.mxu0 %v2079
      %v2147 = vpop.f32.mrf.mxu0
      %v2148 = vadd.f32 0.0, %v2147
      %v2149 = vpop.f32.mrf.mxu0
      %2150 = vdwg.mxu0
      %2151 = vrot.lane.b32.xlu0 %v1187, 64
      %v2152 = vpop.permute.xlu0 %2151
      %v2155 = vsel %vm1213, %v1914, 0
      %2157 = vmatprep.subr.mxu0 0.0
      %2158 = vmatpush1.msra.mxu0 0.0
      %2159 = vmatprep.subr.mxu0 0.0
      %2160 = vmatpush1.msra.mxu0 0.0
      %2161 = vmatprep.subr.mxu0 0.0
      %2162 = vmatpush1.msra.mxu0 0.0
      %2163 = vmatprep.subr.mxu0 0.0
      %2164 = vmatpush1.msra.mxu0 0.0
      %2165 = vmatprep.subr.mxu0 0.0
      %2166 = vmatpush1.msra.mxu0 0.0
      %2167 = vmatprep.subr.mxu0 0.0
      %2168 = vmatpush1.msra.mxu0 0.0
      %2169 = vmatprep.subr.mxu0 0.0
      %2170 = vmatpush1.msra.mxu0 0.0
      %2171 = vmatprep.subr.mxu0 0.0
      %2172 = vmatpush1.msra.mxu0 0.0
      %2173 = vmatprep.subr.mxu0 0.0
      %2174 = vmatpush1.msra.mxu0 0.0
      %2175 = vmatprep.subr.mxu0 0.0
      %2176 = vmatpush1.msra.mxu0 0.0
      %2177 = vmatprep.subr.mxu0 0.0
      %2178 = vmatpush1.msra.mxu0 0.0
      %2179 = vmatprep.subr.mxu0 0.0
      %2180 = vmatpush1.msra.mxu0 0.0
      %2181 = vmatprep.subr.mxu0 0.0
      %2182 = vmatpush1.msra.mxu0 0.0
      %2183 = vmatprep.subr.mxu0 0.0
      %2184 = vmatpush1.msra.mxu0 0.0
      %2185 = vmatprep.subr.mxu0 0.0
      %2186 = vmatpush1.msra.mxu0 0.0
      %2187 = vmatprep.subr.mxu0 0.0
      %2188 = vmatpush1.msra.mxu0 %v2152
      %2189 = vmatprep.subr.mxu0 0.0
      %2190 = vmatpush2.msra.mxu0 0.0
      %2191 = vmatprep.subr.mxu0 0.0
      %2192 = vmatpush2.msra.mxu0 0.0
      %2193 = vmatprep.subr.mxu0 0.0
      %2194 = vmatpush2.msra.mxu0 0.0
      %2195 = vmatprep.subr.mxu0 0.0
      %2196 = vmatpush2.msra.mxu0 0.0
      %2197 = vmatprep.subr.mxu0 0.0
      %2198 = vmatpush2.msra.mxu0 0.0
      %2199 = vmatprep.subr.mxu0 0.0
      %2200 = vmatpush2.msra.mxu0 0.0
      %2201 = vmatprep.subr.mxu0 0.0
      %2202 = vmatpush2.msra.mxu0 0.0
      %2203 = vmatprep.subr.mxu0 0.0
      %2204 = vmatpush2.msra.mxu0 0.0
      %2205 = vmatprep.subr.mxu0 0.0
      %2206 = vmatpush2.msra.mxu0 0.0
      %2207 = vmatprep.subr.mxu0 0.0
      %2208 = vmatpush2.msra.mxu0 0.0
      %2209 = vmatprep.subr.mxu0 0.0
      %2210 = vmatpush2.msra.mxu0 0.0
      %2211 = vmatprep.subr.mxu0 0.0
      %2212 = vmatpush2.msra.mxu0 0.0
      %2213 = vmatprep.subr.mxu0 0.0
      %2214 = vmatpush2.msra.mxu0 0.0
      %2215 = vmatprep.subr.mxu0 0.0
      %2216 = vmatpush2.msra.mxu0 0.0
      %2217 = vmatprep.subr.mxu0 0.0
      %2218 = vmatpush2.msra.mxu0 0.0
      %2219 = vmatprep.subr.mxu0 0.0
      %2220 = vmatpush2.msra.mxu0 0.0
      %2221 = vmatprep.mubr.f32.mxu0 0.0
      %2222 = vmatmul.mubr.f32.gmra.mxu0 %v2155
      %v2223 = vpop.f32.mrf.mxu0
      %v2224 = vadd.f32 0.0, %v2223
      %v2225 = vpop.f32.mrf.mxu0
      %2226 = vdwg.mxu0
      %2227 = vrot.lane.b32.xlu0 %v1192, 64
      %v2228 = vpop.permute.xlu0 %2227
      %v2231 = vsel %vm1213, %v1916, 0
      %2233 = vmatprep.subr.mxu0 0.0
      %2234 = vmatpush1.msra.mxu0 0.0
      %2235 = vmatprep.subr.mxu0 0.0
      %2236 = vmatpush1.msra.mxu0 0.0
      %2237 = vmatprep.subr.mxu0 0.0
      %2238 = vmatpush1.msra.mxu0 0.0
      %2239 = vmatprep.subr.mxu0 0.0
      %2240 = vmatpush1.msra.mxu0 0.0
      %2241 = vmatprep.subr.mxu0 0.0
      %2242 = vmatpush1.msra.mxu0 0.0
      %2243 = vmatprep.subr.mxu0 0.0
      %2244 = vmatpush1.msra.mxu0 0.0
      %2245 = vmatprep.subr.mxu0 0.0
      %2246 = vmatpush1.msra.mxu0 0.0
      %2247 = vmatprep.subr.mxu0 0.0
      %2248 = vmatpush1.msra.mxu0 0.0
      %2249 = vmatprep.subr.mxu0 0.0
      %2250 = vmatpush1.msra.mxu0 0.0
      %2251 = vmatprep.subr.mxu0 0.0
      %2252 = vmatpush1.msra.mxu0 0.0
      %2253 = vmatprep.subr.mxu0 0.0
      %2254 = vmatpush1.msra.mxu0 0.0
      %2255 = vmatprep.subr.mxu0 0.0
      %2256 = vmatpush1.msra.mxu0 0.0
      %2257 = vmatprep.subr.mxu0 0.0
      %2258 = vmatpush1.msra.mxu0 0.0
      %2259 = vmatprep.subr.mxu0 0.0
      %2260 = vmatpush1.msra.mxu0 0.0
      %2261 = vmatprep.subr.mxu0 0.0
      %2262 = vmatpush1.msra.mxu0 0.0
      %2263 = vmatprep.subr.mxu0 0.0
      %2264 = vmatpush1.msra.mxu0 %v2228
      %2265 = vmatprep.subr.mxu0 0.0
      %2266 = vmatpush2.msra.mxu0 0.0
      %2267 = vmatprep.subr.mxu0 0.0
      %2268 = vmatpush2.msra.mxu0 0.0
      %2269 = vmatprep.subr.mxu0 0.0
      %2270 = vmatpush2.msra.mxu0 0.0
      %2271 = vmatprep.subr.mxu0 0.0
      %2272 = vmatpush2.msra.mxu0 0.0
      %2273 = vmatprep.subr.mxu0 0.0
      %2274 = vmatpush2.msra.mxu0 0.0
      %2275 = vmatprep.subr.mxu0 0.0
      %2276 = vmatpush2.msra.mxu0 0.0
      %2277 = vmatprep.subr.mxu0 0.0
      %2278 = vmatpush2.msra.mxu0 0.0
      %2279 = vmatprep.subr.mxu0 0.0
      %2280 = vmatpush2.msra.mxu0 0.0
      %2281 = vmatprep.subr.mxu0 0.0
      %2282 = vmatpush2.msra.mxu0 0.0
      %2283 = vmatprep.subr.mxu0 0.0
      %2284 = vmatpush2.msra.mxu0 0.0
      %2285 = vmatprep.subr.mxu0 0.0
      %2286 = vmatpush2.msra.mxu0 0.0
      %2287 = vmatprep.subr.mxu0 0.0
      %2288 = vmatpush2.msra.mxu0 0.0
      %2289 = vmatprep.subr.mxu0 0.0
      %2290 = vmatpush2.msra.mxu0 0.0
      %2291 = vmatprep.subr.mxu0 0.0
      %2292 = vmatpush2.msra.mxu0 0.0
      %2293 = vmatprep.subr.mxu0 0.0
      %2294 = vmatpush2.msra.mxu0 0.0
      %2295 = vmatprep.subr.mxu0 0.0
      %2296 = vmatpush2.msra.mxu0 0.0
      %2297 = vmatprep.mubr.f32.mxu0 0.0
      %2298 = vmatmul.mubr.f32.gmra.mxu0 %v2231
      %v2299 = vpop.f32.mrf.mxu0
      %v2300 = vadd.f32 0.0, %v2299
      %v2301 = vpop.f32.mrf.mxu0
      %2302 = vdwg.mxu0
      %2303 = vrot.lane.b32.xlu0 %v1197, 64
      %v2304 = vpop.permute.xlu0 %2303
      %v2307 = vsel %vm1213, %v1918, 0
      %2309 = vmatprep.subr.mxu0 0.0
      %2310 = vmatpush1.msra.mxu0 0.0
      %2311 = vmatprep.subr.mxu0 0.0
      %2312 = vmatpush1.msra.mxu0 0.0
      %2313 = vmatprep.subr.mxu0 0.0
      %2314 = vmatpush1.msra.mxu0 0.0
      %2315 = vmatprep.subr.mxu0 0.0
      %2316 = vmatpush1.msra.mxu0 0.0
      %2317 = vmatprep.subr.mxu0 0.0
      %2318 = vmatpush1.msra.mxu0 0.0
      %2319 = vmatprep.subr.mxu0 0.0
      %2320 = vmatpush1.msra.mxu0 0.0
      %2321 = vmatprep.subr.mxu0 0.0
      %2322 = vmatpush1.msra.mxu0 0.0
      %2323 = vmatprep.subr.mxu0 0.0
      %2324 = vmatpush1.msra.mxu0 0.0
      %2325 = vmatprep.subr.mxu0 0.0
      %2326 = vmatpush1.msra.mxu0 0.0
      %2327 = vmatprep.subr.mxu0 0.0
      %2328 = vmatpush1.msra.mxu0 0.0
      %2329 = vmatprep.subr.mxu0 0.0
      %2330 = vmatpush1.msra.mxu0 0.0
      %2331 = vmatprep.subr.mxu0 0.0
      %2332 = vmatpush1.msra.mxu0 0.0
      %2333 = vmatprep.subr.mxu0 0.0
      %2334 = vmatpush1.msra.mxu0 0.0
      %2335 = vmatprep.subr.mxu0 0.0
      %2336 = vmatpush1.msra.mxu0 0.0
      %2337 = vmatprep.subr.mxu0 0.0
      %2338 = vmatpush1.msra.mxu0 0.0
      %2339 = vmatprep.subr.mxu0 0.0
      %2340 = vmatpush1.msra.mxu0 %v2304
      %2341 = vmatprep.subr.mxu0 0.0
      %2342 = vmatpush2.msra.mxu0 0.0
      %2343 = vmatprep.subr.mxu0 0.0
      %2344 = vmatpush2.msra.mxu0 0.0
      %2345 = vmatprep.subr.mxu0 0.0
      %2346 = vmatpush2.msra.mxu0 0.0
      %2347 = vmatprep.subr.mxu0 0.0
      %2348 = vmatpush2.msra.mxu0 0.0
      %2349 = vmatprep.subr.mxu0 0.0
      %2350 = vmatpush2.msra.mxu0 0.0
      %2351 = vmatprep.subr.mxu0 0.0
      %2352 = vmatpush2.msra.mxu0 0.0
      %2353 = vmatprep.subr.mxu0 0.0
      %2354 = vmatpush2.msra.mxu0 0.0
      %2355 = vmatprep.subr.mxu0 0.0
      %2356 = vmatpush2.msra.mxu0 0.0
      %2357 = vmatprep.subr.mxu0 0.0
      %2358 = vmatpush2.msra.mxu0 0.0
      %2359 = vmatprep.subr.mxu0 0.0
      %2360 = vmatpush2.msra.mxu0 0.0
      %2361 = vmatprep.subr.mxu0 0.0
      %2362 = vmatpush2.msra.mxu0 0.0
      %2363 = vmatprep.subr.mxu0 0.0
      %2364 = vmatpush2.msra.mxu0 0.0
      %2365 = vmatprep.subr.mxu0 0.0
      %2366 = vmatpush2.msra.mxu0 0.0
      %2367 = vmatprep.subr.mxu0 0.0
      %2368 = vmatpush2.msra.mxu0 0.0
      %2369 = vmatprep.subr.mxu0 0.0
      %2370 = vmatpush2.msra.mxu0 0.0
      %2371 = vmatprep.subr.mxu0 0.0
      %2372 = vmatpush2.msra.mxu0 0.0
      %2373 = vmatprep.mubr.f32.mxu0 0.0
      %2374 = vmatmul.mubr.f32.gmra.mxu0 %v2307
      %v2375 = vpop.f32.mrf.mxu0
      %v2376 = vadd.f32 0.0, %v2375
      %v2377 = vpop.f32.mrf.mxu0
      %2378 = vdwg.mxu0
      %2379 = vrot.lane.b32.xlu0 %v1202, 64
      %v2380 = vpop.permute.xlu0 %2379
      %v2383 = vsel %vm1213, %v1920, 0
      %2385 = vmatprep.subr.mxu0 0.0
      %2386 = vmatpush1.msra.mxu0 0.0
      %2387 = vmatprep.subr.mxu0 0.0
      %2388 = vmatpush1.msra.mxu0 0.0
      %2389 = vmatprep.subr.mxu0 0.0
      %2390 = vmatpush1.msra.mxu0 0.0
      %2391 = vmatprep.subr.mxu0 0.0
      %2392 = vmatpush1.msra.mxu0 0.0
      %2393 = vmatprep.subr.mxu0 0.0
      %2394 = vmatpush1.msra.mxu0 0.0
      %2395 = vmatprep.subr.mxu0 0.0
      %2396 = vmatpush1.msra.mxu0 0.0
      %2397 = vmatprep.subr.mxu0 0.0
      %2398 = vmatpush1.msra.mxu0 0.0
      %2399 = vmatprep.subr.mxu0 0.0
      %2400 = vmatpush1.msra.mxu0 0.0
      %2401 = vmatprep.subr.mxu0 0.0
      %2402 = vmatpush1.msra.mxu0 0.0
      %2403 = vmatprep.subr.mxu0 0.0
      %2404 = vmatpush1.msra.mxu0 0.0
      %2405 = vmatprep.subr.mxu0 0.0
      %2406 = vmatpush1.msra.mxu0 0.0
      %2407 = vmatprep.subr.mxu0 0.0
      %2408 = vmatpush1.msra.mxu0 0.0
      %2409 = vmatprep.subr.mxu0 0.0
      %2410 = vmatpush1.msra.mxu0 0.0
      %2411 = vmatprep.subr.mxu0 0.0
      %2412 = vmatpush1.msra.mxu0 0.0
      %2413 = vmatprep.subr.mxu0 0.0
      %2414 = vmatpush1.msra.mxu0 0.0
      %2415 = vmatprep.subr.mxu0 0.0
      %2416 = vmatpush1.msra.mxu0 %v2380
      %2417 = vmatprep.subr.mxu0 0.0
      %2418 = vmatpush2.msra.mxu0 0.0
      %2419 = vmatprep.subr.mxu0 0.0
      %2420 = vmatpush2.msra.mxu0 0.0
      %2421 = vmatprep.subr.mxu0 0.0
      %2422 = vmatpush2.msra.mxu0 0.0
      %2423 = vmatprep.subr.mxu0 0.0
      %2424 = vmatpush2.msra.mxu0 0.0
      %2425 = vmatprep.subr.mxu0 0.0
      %2426 = vmatpush2.msra.mxu0 0.0
      %2427 = vmatprep.subr.mxu0 0.0
      %2428 = vmatpush2.msra.mxu0 0.0
      %2429 = vmatprep.subr.mxu0 0.0
      %2430 = vmatpush2.msra.mxu0 0.0
      %2431 = vmatprep.subr.mxu0 0.0
      %2432 = vmatpush2.msra.mxu0 0.0
      %2433 = vmatprep.subr.mxu0 0.0
      %2434 = vmatpush2.msra.mxu0 0.0
      %2435 = vmatprep.subr.mxu0 0.0
      %2436 = vmatpush2.msra.mxu0 0.0
      %2437 = vmatprep.subr.mxu0 0.0
      %2438 = vmatpush2.msra.mxu0 0.0
      %2439 = vmatprep.subr.mxu0 0.0
      %2440 = vmatpush2.msra.mxu0 0.0
      %2441 = vmatprep.subr.mxu0 0.0
      %2442 = vmatpush2.msra.mxu0 0.0
      %2443 = vmatprep.subr.mxu0 0.0
      %2444 = vmatpush2.msra.mxu0 0.0
      %2445 = vmatprep.subr.mxu0 0.0
      %2446 = vmatpush2.msra.mxu0 0.0
      %2447 = vmatprep.subr.mxu0 0.0
      %2448 = vmatpush2.msra.mxu0 0.0
      %2449 = vmatprep.mubr.f32.mxu0 0.0
      %2450 = vmatmul.mubr.f32.gmra.mxu0 %v2383
      %v2451 = vpop.f32.mrf.mxu0
      %v2452 = vadd.f32 0.0, %v2451
      %v2453 = vpop.f32.mrf.mxu0
      %2454 = vdwg.mxu0
      %2455 = vrot.lane.b32.xlu0 %v1207, 64
      %v2456 = vpop.permute.xlu0 %2455
      %v2459 = vsel %vm1213, %v1922, 0
      %2461 = vmatprep.subr.mxu0 0.0
      %2462 = vmatpush1.msra.mxu0 0.0
      %2463 = vmatprep.subr.mxu0 0.0
      %2464 = vmatpush1.msra.mxu0 0.0
      %2465 = vmatprep.subr.mxu0 0.0
      %2466 = vmatpush1.msra.mxu0 0.0
      %2467 = vmatprep.subr.mxu0 0.0
      %2468 = vmatpush1.msra.mxu0 0.0
      %2469 = vmatprep.subr.mxu0 0.0
      %2470 = vmatpush1.msra.mxu0 0.0
      %2471 = vmatprep.subr.mxu0 0.0
      %2472 = vmatpush1.msra.mxu0 0.0
      %2473 = vmatprep.subr.mxu0 0.0
      %2474 = vmatpush1.msra.mxu0 0.0
      %2475 = vmatprep.subr.mxu0 0.0
      %2476 = vmatpush1.msra.mxu0 0.0
      %2477 = vmatprep.subr.mxu0 0.0
      %2478 = vmatpush1.msra.mxu0 0.0
      %2479 = vmatprep.subr.mxu0 0.0
      %2480 = vmatpush1.msra.mxu0 0.0
      %2481 = vmatprep.subr.mxu0 0.0
      %2482 = vmatpush1.msra.mxu0 0.0
      %2483 = vmatprep.subr.mxu0 0.0
      %2484 = vmatpush1.msra.mxu0 0.0
      %2485 = vmatprep.subr.mxu0 0.0
      %2486 = vmatpush1.msra.mxu0 0.0
      %2487 = vmatprep.subr.mxu0 0.0
      %2488 = vmatpush1.msra.mxu0 0.0
      %2489 = vmatprep.subr.mxu0 0.0
      %2490 = vmatpush1.msra.mxu0 0.0
      %2491 = vmatprep.subr.mxu0 0.0
      %2492 = vmatpush1.msra.mxu0 %v2456
      %2493 = vmatprep.subr.mxu0 0.0
      %2494 = vmatpush2.msra.mxu0 0.0
      %2495 = vmatprep.subr.mxu0 0.0
      %2496 = vmatpush2.msra.mxu0 0.0
      %2497 = vmatprep.subr.mxu0 0.0
      %2498 = vmatpush2.msra.mxu0 0.0
      %2499 = vmatprep.subr.mxu0 0.0
      %2500 = vmatpush2.msra.mxu0 0.0
      %2501 = vmatprep.subr.mxu0 0.0
      %2502 = vmatpush2.msra.mxu0 0.0
      %2503 = vmatprep.subr.mxu0 0.0
      %2504 = vmatpush2.msra.mxu0 0.0
      %2505 = vmatprep.subr.mxu0 0.0
      %2506 = vmatpush2.msra.mxu0 0.0
      %2507 = vmatprep.subr.mxu0 0.0
      %2508 = vmatpush2.msra.mxu0 0.0
      %2509 = vmatprep.subr.mxu0 0.0
      %2510 = vmatpush2.msra.mxu0 0.0
      %2511 = vmatprep.subr.mxu0 0.0
      %2512 = vmatpush2.msra.mxu0 0.0
      %2513 = vmatprep.subr.mxu0 0.0
      %2514 = vmatpush2.msra.mxu0 0.0
      %2515 = vmatprep.subr.mxu0 0.0
      %2516 = vmatpush2.msra.mxu0 0.0
      %2517 = vmatprep.subr.mxu0 0.0
      %2518 = vmatpush2.msra.mxu0 0.0
      %2519 = vmatprep.subr.mxu0 0.0
      %2520 = vmatpush2.msra.mxu0 0.0
      %2521 = vmatprep.subr.mxu0 0.0
      %2522 = vmatpush2.msra.mxu0 0.0
      %2523 = vmatprep.subr.mxu0 0.0
      %2524 = vmatpush2.msra.mxu0 0.0
      %2525 = vmatprep.mubr.f32.mxu0 0.0
      %2526 = vmatmul.mubr.f32.gmra.mxu0 %v2459
      %v2527 = vpop.f32.mrf.mxu0
      %v2528 = vadd.f32 0.0, %v2527
      %v2529 = vpop.f32.mrf.mxu0
      %2530 = vdwg.mxu0
      %v2531 = vld [vmem:[%s8] sm:$0xff]
      %2532 = vrot.lane.b32.xlu0 %v1172, 120
      %v2533 = vpop.permute.xlu0 %2532
      %2534 = vrot.lane.b32.xlu0 %v1172, 88
      %v2535 = vpop.permute.xlu0 %2534
      %v2536 = vsel %vm1213, %v2533, 0
      %v2538 = vsel %vm1213, %v2535, 0
      %2540 = vmatprep.subr.mxu0 0.0
      %2541 = vmatpush1.xpose.msra.mxu0 0.0
      %2542 = vmatprep.subr.mxu0 0.0
      %2543 = vmatpush1.xpose.msra.mxu0 0.0
      %2544 = vmatprep.subr.mxu0 0.0
      %2545 = vmatpush1.xpose.msra.mxu0 0.0
      %2546 = vmatprep.subr.mxu0 0.0
      %2547 = vmatpush1.xpose.msra.mxu0 0.0
      %2548 = vmatprep.subr.mxu0 0.0
      %2549 = vmatpush1.xpose.msra.mxu0 0.0
      %2550 = vmatprep.subr.mxu0 0.0
      %2551 = vmatpush1.xpose.msra.mxu0 0.0
      %2552 = vmatprep.subr.mxu0 0.0
      %2553 = vmatpush1.xpose.msra.mxu0 0.0
      %2554 = vmatprep.subr.mxu0 0.0
      %2555 = vmatpush1.xpose.msra.mxu0 0.0
      %2556 = vmatprep.subr.mxu0 0.0
      %2557 = vmatpush1.xpose.msra.mxu0 0.0
      %2558 = vmatprep.subr.mxu0 0.0
      %2559 = vmatpush1.xpose.msra.mxu0 0.0
      %2560 = vmatprep.subr.mxu0 0.0
      %2561 = vmatpush1.xpose.msra.mxu0 0.0
      %2562 = vmatprep.subr.mxu0 0.0
      %2563 = vmatpush1.xpose.msra.mxu0 0.0
      %2564 = vmatprep.subr.mxu0 0.0
      %2565 = vmatpush1.xpose.msra.mxu0 0.0
      %2566 = vmatprep.subr.mxu0 0.0
      %2567 = vmatpush1.xpose.msra.mxu0 0.0
      %2568 = vmatprep.subr.mxu0 0.0
      %2569 = vmatpush1.xpose.msra.mxu0 0.0
      %2570 = vmatprep.subr.mxu0 0.0
      %2571 = vmatpush1.xpose.msra.mxu0 %v2538
      %2572 = vmatprep.subr.mxu0 0.0
      %2573 = vmatpush2.xpose.msra.mxu0 0.0
      %2574 = vmatprep.subr.mxu0 0.0
      %2575 = vmatpush2.xpose.msra.mxu0 0.0
      %2576 = vmatprep.subr.mxu0 0.0
      %2577 = vmatpush2.xpose.msra.mxu0 0.0
      %2578 = vmatprep.subr.mxu0 0.0
      %2579 = vmatpush2.xpose.msra.mxu0 0.0
      %2580 = vmatprep.subr.mxu0 0.0
      %2581 = vmatpush2.xpose.msra.mxu0 0.0
      %2582 = vmatprep.subr.mxu0 0.0
      %2583 = vmatpush2.xpose.msra.mxu0 0.0
      %2584 = vmatprep.subr.mxu0 0.0
      %2585 = vmatpush2.xpose.msra.mxu0 0.0
      %2586 = vmatprep.subr.mxu0 0.0
      %2587 = vmatpush2.xpose.msra.mxu0 0.0
      %2588 = vmatprep.subr.mxu0 0.0
      %2589 = vmatpush2.xpose.msra.mxu0 0.0
      %2590 = vmatprep.subr.mxu0 0.0
      %2591 = vmatpush2.xpose.msra.mxu0 0.0
      %2592 = vmatprep.subr.mxu0 0.0
      %2593 = vmatpush2.xpose.msra.mxu0 0.0
      %2594 = vmatprep.subr.mxu0 0.0
      %2595 = vmatpush2.xpose.msra.mxu0 0.0
      %2596 = vmatprep.subr.mxu0 0.0
      %2597 = vmatpush2.xpose.msra.mxu0 0.0
      %2598 = vmatprep.subr.mxu0 0.0
      %2599 = vmatpush2.xpose.msra.mxu0 0.0
      %2600 = vmatprep.subr.mxu0 0.0
      %2601 = vmatpush2.xpose.msra.mxu0 0.0
      %2602 = vmatprep.subr.mxu0 0.0
      %2603 = vmatpush2.xpose.msra.mxu0 0.0
      %2604 = vmatprep.mubr.f32.mxu0 0.0
      %2605 = vmatmul.mubr.f32.gmra.mxu0 %v2536
      %v2606 = vpop.f32.mrf.mxu0
      %v2607 = vadd.f32 0.0, %v2606
      %v2608 = vpop.f32.mrf.mxu0
      %2609 = vdwg.mxu0
      %2610 = vrot.lane.b32.xlu0 %v1177, 120
      %v2611 = vpop.permute.xlu0 %2610
      %2612 = vrot.lane.b32.xlu0 %v1177, 88
      %v2613 = vpop.permute.xlu0 %2612
      %v2614 = vsel %vm1213, %v2611, 0
      %v2616 = vsel %vm1213, %v2613, 0
      %2618 = vmatprep.subr.mxu0 0.0
      %2619 = vmatpush1.xpose.msra.mxu0 0.0
      %2620 = vmatprep.subr.mxu0 0.0
      %2621 = vmatpush1.xpose.msra.mxu0 0.0
      %2622 = vmatprep.subr.mxu0 0.0
      %2623 = vmatpush1.xpose.msra.mxu0 0.0
      %2624 = vmatprep.subr.mxu0 0.0
      %2625 = vmatpush1.xpose.msra.mxu0 0.0
      %2626 = vmatprep.subr.mxu0 0.0
      %2627 = vmatpush1.xpose.msra.mxu0 0.0
      %2628 = vmatprep.subr.mxu0 0.0
      %2629 = vmatpush1.xpose.msra.mxu0 0.0
      %2630 = vmatprep.subr.mxu0 0.0
      %2631 = vmatpush1.xpose.msra.mxu0 0.0
      %2632 = vmatprep.subr.mxu0 0.0
      %2633 = vmatpush1.xpose.msra.mxu0 0.0
      %2634 = vmatprep.subr.mxu0 0.0
      %2635 = vmatpush1.xpose.msra.mxu0 0.0
      %2636 = vmatprep.subr.mxu0 0.0
      %2637 = vmatpush1.xpose.msra.mxu0 0.0
      %2638 = vmatprep.subr.mxu0 0.0
      %2639 = vmatpush1.xpose.msra.mxu0 0.0
      %2640 = vmatprep.subr.mxu0 0.0
      %2641 = vmatpush1.xpose.msra.mxu0 0.0
      %2642 = vmatprep.subr.mxu0 0.0
      %2643 = vmatpush1.xpose.msra.mxu0 0.0
      %2644 = vmatprep.subr.mxu0 0.0
      %2645 = vmatpush1.xpose.msra.mxu0 0.0
      %2646 = vmatprep.subr.mxu0 0.0
      %2647 = vmatpush1.xpose.msra.mxu0 0.0
      %2648 = vmatprep.subr.mxu0 0.0
      %2649 = vmatpush1.xpose.msra.mxu0 %v2616
      %2650 = vmatprep.subr.mxu0 0.0
      %2651 = vmatpush2.xpose.msra.mxu0 0.0
      %2652 = vmatprep.subr.mxu0 0.0
      %2653 = vmatpush2.xpose.msra.mxu0 0.0
      %2654 = vmatprep.subr.mxu0 0.0
      %2655 = vmatpush2.xpose.msra.mxu0 0.0
      %2656 = vmatprep.subr.mxu0 0.0
      %2657 = vmatpush2.xpose.msra.mxu0 0.0
      %2658 = vmatprep.subr.mxu0 0.0
      %2659 = vmatpush2.xpose.msra.mxu0 0.0
      %2660 = vmatprep.subr.mxu0 0.0
      %2661 = vmatpush2.xpose.msra.mxu0 0.0
      %2662 = vmatprep.subr.mxu0 0.0
      %2663 = vmatpush2.xpose.msra.mxu0 0.0
      %2664 = vmatprep.subr.mxu0 0.0
      %2665 = vmatpush2.xpose.msra.mxu0 0.0
      %2666 = vmatprep.subr.mxu0 0.0
      %2667 = vmatpush2.xpose.msra.mxu0 0.0
      %2668 = vmatprep.subr.mxu0 0.0
      %2669 = vmatpush2.xpose.msra.mxu0 0.0
      %2670 = vmatprep.subr.mxu0 0.0
      %2671 = vmatpush2.xpose.msra.mxu0 0.0
      %2672 = vmatprep.subr.mxu0 0.0
      %2673 = vmatpush2.xpose.msra.mxu0 0.0
      %2674 = vmatprep.subr.mxu0 0.0
      %2675 = vmatpush2.xpose.msra.mxu0 0.0
      %2676 = vmatprep.subr.mxu0 0.0
      %2677 = vmatpush2.xpose.msra.mxu0 0.0
      %2678 = vmatprep.subr.mxu0 0.0
      %2679 = vmatpush2.xpose.msra.mxu0 0.0
      %2680 = vmatprep.subr.mxu0 0.0
      %2681 = vmatpush2.xpose.msra.mxu0 0.0
      %2682 = vmatprep.mubr.f32.mxu0 0.0
      %2683 = vmatmul.mubr.f32.gmra.mxu0 %v2614
      %v2684 = vpop.f32.mrf.mxu0
      %v2685 = vadd.f32 0.0, %v2684
      %v2686 = vpop.f32.mrf.mxu0
      %2687 = vdwg.mxu0
      %2688 = vrot.lane.b32.xlu0 %v1182, 120
      %v2689 = vpop.permute.xlu0 %2688
      %2690 = vrot.lane.b32.xlu0 %v1182, 88
      %v2691 = vpop.permute.xlu0 %2690
      %v2692 = vsel %vm1213, %v2689, 0
      %v2694 = vsel %vm1213, %v2691, 0
      %2696 = vmatprep.subr.mxu0 0.0
      %2697 = vmatpush1.xpose.msra.mxu0 0.0
      %2698 = vmatprep.subr.mxu0 0.0
      %2699 = vmatpush1.xpose.msra.mxu0 0.0
      %2700 = vmatprep.subr.mxu0 0.0
      %2701 = vmatpush1.xpose.msra.mxu0 0.0
      %2702 = vmatprep.subr.mxu0 0.0
      %2703 = vmatpush1.xpose.msra.mxu0 0.0
      %2704 = vmatprep.subr.mxu0 0.0
      %2705 = vmatpush1.xpose.msra.mxu0 0.0
      %2706 = vmatprep.subr.mxu0 0.0
      %2707 = vmatpush1.xpose.msra.mxu0 0.0
      %2708 = vmatprep.subr.mxu0 0.0
      %2709 = vmatpush1.xpose.msra.mxu0 0.0
      %2710 = vmatprep.subr.mxu0 0.0
      %2711 = vmatpush1.xpose.msra.mxu0 0.0
      %2712 = vmatprep.subr.mxu0 0.0
      %2713 = vmatpush1.xpose.msra.mxu0 0.0
      %2714 = vmatprep.subr.mxu0 0.0
      %2715 = vmatpush1.xpose.msra.mxu0 0.0
      %2716 = vmatprep.subr.mxu0 0.0
      %2717 = vmatpush1.xpose.msra.mxu0 0.0
      %2718 = vmatprep.subr.mxu0 0.0
      %2719 = vmatpush1.xpose.msra.mxu0 0.0
      %2720 = vmatprep.subr.mxu0 0.0
      %2721 = vmatpush1.xpose.msra.mxu0 0.0
      %2722 = vmatprep.subr.mxu0 0.0
      %2723 = vmatpush1.xpose.msra.mxu0 0.0
      %2724 = vmatprep.subr.mxu0 0.0
      %2725 = vmatpush1.xpose.msra.mxu0 0.0
      %2726 = vmatprep.subr.mxu0 0.0
      %2727 = vmatpush1.xpose.msra.mxu0 %v2694
      %2728 = vmatprep.subr.mxu0 0.0
      %2729 = vmatpush2.xpose.msra.mxu0 0.0
      %2730 = vmatprep.subr.mxu0 0.0
      %2731 = vmatpush2.xpose.msra.mxu0 0.0
      %2732 = vmatprep.subr.mxu0 0.0
      %2733 = vmatpush2.xpose.msra.mxu0 0.0
      %2734 = vmatprep.subr.mxu0 0.0
      %2735 = vmatpush2.xpose.msra.mxu0 0.0
      %2736 = vmatprep.subr.mxu0 0.0
      %2737 = vmatpush2.xpose.msra.mxu0 0.0
      %2738 = vmatprep.subr.mxu0 0.0
      %2739 = vmatpush2.xpose.msra.mxu0 0.0
      %2740 = vmatprep.subr.mxu0 0.0
      %2741 = vmatpush2.xpose.msra.mxu0 0.0
      %2742 = vmatprep.subr.mxu0 0.0
      %2743 = vmatpush2.xpose.msra.mxu0 0.0
      %2744 = vmatprep.subr.mxu0 0.0
      %2745 = vmatpush2.xpose.msra.mxu0 0.0
      %2746 = vmatprep.subr.mxu0 0.0
      %2747 = vmatpush2.xpose.msra.mxu0 0.0
      %2748 = vmatprep.subr.mxu0 0.0
      %2749 = vmatpush2.xpose.msra.mxu0 0.0
      %2750 = vmatprep.subr.mxu0 0.0
      %2751 = vmatpush2.xpose.msra.mxu0 0.0
      %2752 = vmatprep.subr.mxu0 0.0
      %2753 = vmatpush2.xpose.msra.mxu0 0.0
      %2754 = vmatprep.subr.mxu0 0.0
      %2755 = vmatpush2.xpose.msra.mxu0 0.0
      %2756 = vmatprep.subr.mxu0 0.0
      %2757 = vmatpush2.xpose.msra.mxu0 0.0
      %2758 = vmatprep.subr.mxu0 0.0
      %2759 = vmatpush2.xpose.msra.mxu0 0.0
      %2760 = vmatprep.mubr.f32.mxu0 0.0
      %2761 = vmatmul.mubr.f32.gmra.mxu0 %v2692
      %v2762 = vpop.f32.mrf.mxu0
      %v2763 = vadd.f32 0.0, %v2762
      %v2764 = vpop.f32.mrf.mxu0
      %2765 = vdwg.mxu0
      %2766 = vrot.lane.b32.xlu0 %v1187, 120
      %v2767 = vpop.permute.xlu0 %2766
      %2768 = vrot.lane.b32.xlu0 %v1187, 88
      %v2769 = vpop.permute.xlu0 %2768
      %v2770 = vsel %vm1213, %v2767, 0
      %v2772 = vsel %vm1213, %v2769, 0
      %2774 = vmatprep.subr.mxu0 0.0
      %2775 = vmatpush1.xpose.msra.mxu0 0.0
      %2776 = vmatprep.subr.mxu0 0.0
      %2777 = vmatpush1.xpose.msra.mxu0 0.0
      %2778 = vmatprep.subr.mxu0 0.0
      %2779 = vmatpush1.xpose.msra.mxu0 0.0
      %2780 = vmatprep.subr.mxu0 0.0
      %2781 = vmatpush1.xpose.msra.mxu0 0.0
      %2782 = vmatprep.subr.mxu0 0.0
      %2783 = vmatpush1.xpose.msra.mxu0 0.0
      %2784 = vmatprep.subr.mxu0 0.0
      %2785 = vmatpush1.xpose.msra.mxu0 0.0
      %2786 = vmatprep.subr.mxu0 0.0
      %2787 = vmatpush1.xpose.msra.mxu0 0.0
      %2788 = vmatprep.subr.mxu0 0.0
      %2789 = vmatpush1.xpose.msra.mxu0 0.0
      %2790 = vmatprep.subr.mxu0 0.0
      %2791 = vmatpush1.xpose.msra.mxu0 0.0
      %2792 = vmatprep.subr.mxu0 0.0
      %2793 = vmatpush1.xpose.msra.mxu0 0.0
      %2794 = vmatprep.subr.mxu0 0.0
      %2795 = vmatpush1.xpose.msra.mxu0 0.0
      %2796 = vmatprep.subr.mxu0 0.0
      %2797 = vmatpush1.xpose.msra.mxu0 0.0
      %2798 = vmatprep.subr.mxu0 0.0
      %2799 = vmatpush1.xpose.msra.mxu0 0.0
      %2800 = vmatprep.subr.mxu0 0.0
      %2801 = vmatpush1.xpose.msra.mxu0 0.0
      %2802 = vmatprep.subr.mxu0 0.0
      %2803 = vmatpush1.xpose.msra.mxu0 0.0
      %2804 = vmatprep.subr.mxu0 0.0
      %2805 = vmatpush1.xpose.msra.mxu0 %v2772
      %2806 = vmatprep.subr.mxu0 0.0
      %2807 = vmatpush2.xpose.msra.mxu0 0.0
      %2808 = vmatprep.subr.mxu0 0.0
      %2809 = vmatpush2.xpose.msra.mxu0 0.0
      %2810 = vmatprep.subr.mxu0 0.0
      %2811 = vmatpush2.xpose.msra.mxu0 0.0
      %2812 = vmatprep.subr.mxu0 0.0
      %2813 = vmatpush2.xpose.msra.mxu0 0.0
      %2814 = vmatprep.subr.mxu0 0.0
      %2815 = vmatpush2.xpose.msra.mxu0 0.0
      %2816 = vmatprep.subr.mxu0 0.0
      %2817 = vmatpush2.xpose.msra.mxu0 0.0
      %2818 = vmatprep.subr.mxu0 0.0
      %2819 = vmatpush2.xpose.msra.mxu0 0.0
      %2820 = vmatprep.subr.mxu0 0.0
      %2821 = vmatpush2.xpose.msra.mxu0 0.0
      %2822 = vmatprep.subr.mxu0 0.0
      %2823 = vmatpush2.xpose.msra.mxu0 0.0
      %2824 = vmatprep.subr.mxu0 0.0
      %2825 = vmatpush2.xpose.msra.mxu0 0.0
      %2826 = vmatprep.subr.mxu0 0.0
      %2827 = vmatpush2.xpose.msra.mxu0 0.0
      %2828 = vmatprep.subr.mxu0 0.0
      %2829 = vmatpush2.xpose.msra.mxu0 0.0
      %2830 = vmatprep.subr.mxu0 0.0
      %2831 = vmatpush2.xpose.msra.mxu0 0.0
      %2832 = vmatprep.subr.mxu0 0.0
      %2833 = vmatpush2.xpose.msra.mxu0 0.0
      %2834 = vmatprep.subr.mxu0 0.0
      %2835 = vmatpush2.xpose.msra.mxu0 0.0
      %2836 = vmatprep.subr.mxu0 0.0
      %2837 = vmatpush2.xpose.msra.mxu0 0.0
      %2838 = vmatprep.mubr.f32.mxu0 0.0
      %2839 = vmatmul.mubr.f32.gmra.mxu0 %v2770
      %v2840 = vpop.f32.mrf.mxu0
      %v2841 = vadd.f32 0.0, %v2840
      %v2842 = vpop.f32.mrf.mxu0
      %2843 = vdwg.mxu0
      %2844 = vrot.lane.b32.xlu0 %v1192, 120
      %v2845 = vpop.permute.xlu0 %2844
      %2846 = vrot.lane.b32.xlu0 %v1192, 88
      %v2847 = vpop.permute.xlu0 %2846
      %v2848 = vsel %vm1213, %v2845, 0
      %v2850 = vsel %vm1213, %v2847, 0
      %2852 = vmatprep.subr.mxu0 0.0
      %2853 = vmatpush1.xpose.msra.mxu0 0.0
      %2854 = vmatprep.subr.mxu0 0.0
      %2855 = vmatpush1.xpose.msra.mxu0 0.0
      %2856 = vmatprep.subr.mxu0 0.0
      %2857 = vmatpush1.xpose.msra.mxu0 0.0
      %2858 = vmatprep.subr.mxu0 0.0
      %2859 = vmatpush1.xpose.msra.mxu0 0.0
      %2860 = vmatprep.subr.mxu0 0.0
      %2861 = vmatpush1.xpose.msra.mxu0 0.0
      %2862 = vmatprep.subr.mxu0 0.0
      %2863 = vmatpush1.xpose.msra.mxu0 0.0
      %2864 = vmatprep.subr.mxu0 0.0
      %2865 = vmatpush1.xpose.msra.mxu0 0.0
      %2866 = vmatprep.subr.mxu0 0.0
      %2867 = vmatpush1.xpose.msra.mxu0 0.0
      %2868 = vmatprep.subr.mxu0 0.0
      %2869 = vmatpush1.xpose.msra.mxu0 0.0
      %2870 = vmatprep.subr.mxu0 0.0
      %2871 = vmatpush1.xpose.msra.mxu0 0.0
      %2872 = vmatprep.subr.mxu0 0.0
      %2873 = vmatpush1.xpose.msra.mxu0 0.0
      %2874 = vmatprep.subr.mxu0 0.0
      %2875 = vmatpush1.xpose.msra.mxu0 0.0
      %2876 = vmatprep.subr.mxu0 0.0
      %2877 = vmatpush1.xpose.msra.mxu0 0.0
      %2878 = vmatprep.subr.mxu0 0.0
      %2879 = vmatpush1.xpose.msra.mxu0 0.0
      %2880 = vmatprep.subr.mxu0 0.0
      %2881 = vmatpush1.xpose.msra.mxu0 0.0
      %2882 = vmatprep.subr.mxu0 0.0
      %2883 = vmatpush1.xpose.msra.mxu0 %v2850
      %2884 = vmatprep.subr.mxu0 0.0
      %2885 = vmatpush2.xpose.msra.mxu0 0.0
      %2886 = vmatprep.subr.mxu0 0.0
      %2887 = vmatpush2.xpose.msra.mxu0 0.0
      %2888 = vmatprep.subr.mxu0 0.0
      %2889 = vmatpush2.xpose.msra.mxu0 0.0
      %2890 = vmatprep.subr.mxu0 0.0
      %2891 = vmatpush2.xpose.msra.mxu0 0.0
      %2892 = vmatprep.subr.mxu0 0.0
      %2893 = vmatpush2.xpose.msra.mxu0 0.0
      %2894 = vmatprep.subr.mxu0 0.0
      %2895 = vmatpush2.xpose.msra.mxu0 0.0
      %2896 = vmatprep.subr.mxu0 0.0
      %2897 = vmatpush2.xpose.msra.mxu0 0.0
      %2898 = vmatprep.subr.mxu0 0.0
      %2899 = vmatpush2.xpose.msra.mxu0 0.0
      %2900 = vmatprep.subr.mxu0 0.0
      %2901 = vmatpush2.xpose.msra.mxu0 0.0
      %2902 = vmatprep.subr.mxu0 0.0
      %2903 = vmatpush2.xpose.msra.mxu0 0.0
      %2904 = vmatprep.subr.mxu0 0.0
      %2905 = vmatpush2.xpose.msra.mxu0 0.0
      %2906 = vmatprep.subr.mxu0 0.0
      %2907 = vmatpush2.xpose.msra.mxu0 0.0
      %2908 = vmatprep.subr.mxu0 0.0
      %2909 = vmatpush2.xpose.msra.mxu0 0.0
      %2910 = vmatprep.subr.mxu0 0.0
      %2911 = vmatpush2.xpose.msra.mxu0 0.0
      %2912 = vmatprep.subr.mxu0 0.0
      %2913 = vmatpush2.xpose.msra.mxu0 0.0
      %2914 = vmatprep.subr.mxu0 0.0
      %2915 = vmatpush2.xpose.msra.mxu0 0.0
      %2916 = vmatprep.mubr.f32.mxu0 0.0
      %2917 = vmatmul.mubr.f32.gmra.mxu0 %v2848
      %v2918 = vpop.f32.mrf.mxu0
      %v2919 = vadd.f32 0.0, %v2918
      %v2920 = vpop.f32.mrf.mxu0
      %2921 = vdwg.mxu0
      %2922 = vrot.lane.b32.xlu0 %v1197, 120
      %v2923 = vpop.permute.xlu0 %2922
      %2924 = vrot.lane.b32.xlu0 %v1197, 88
      %v2925 = vpop.permute.xlu0 %2924
      %v2926 = vsel %vm1213, %v2923, 0
      %v2928 = vsel %vm1213, %v2925, 0
      %2930 = vmatprep.subr.mxu0 0.0
      %2931 = vmatpush1.xpose.msra.mxu0 0.0
      %2932 = vmatprep.subr.mxu0 0.0
      %2933 = vmatpush1.xpose.msra.mxu0 0.0
      %2934 = vmatprep.subr.mxu0 0.0
      %2935 = vmatpush1.xpose.msra.mxu0 0.0
      %2936 = vmatprep.subr.mxu0 0.0
      %2937 = vmatpush1.xpose.msra.mxu0 0.0
      %2938 = vmatprep.subr.mxu0 0.0
      %2939 = vmatpush1.xpose.msra.mxu0 0.0
      %2940 = vmatprep.subr.mxu0 0.0
      %2941 = vmatpush1.xpose.msra.mxu0 0.0
      %2942 = vmatprep.subr.mxu0 0.0
      %2943 = vmatpush1.xpose.msra.mxu0 0.0
      %2944 = vmatprep.subr.mxu0 0.0
      %2945 = vmatpush1.xpose.msra.mxu0 0.0
      %2946 = vmatprep.subr.mxu0 0.0
      %2947 = vmatpush1.xpose.msra.mxu0 0.0
      %2948 = vmatprep.subr.mxu0 0.0
      %2949 = vmatpush1.xpose.msra.mxu0 0.0
      %2950 = vmatprep.subr.mxu0 0.0
      %2951 = vmatpush1.xpose.msra.mxu0 0.0
      %2952 = vmatprep.subr.mxu0 0.0
      %2953 = vmatpush1.xpose.msra.mxu0 0.0
      %2954 = vmatprep.subr.mxu0 0.0
      %2955 = vmatpush1.xpose.msra.mxu0 0.0
      %2956 = vmatprep.subr.mxu0 0.0
      %2957 = vmatpush1.xpose.msra.mxu0 0.0
      %2958 = vmatprep.subr.mxu0 0.0
      %2959 = vmatpush1.xpose.msra.mxu0 0.0
      %2960 = vmatprep.subr.mxu0 0.0
      %2961 = vmatpush1.xpose.msra.mxu0 %v2928
      %2962 = vmatprep.subr.mxu0 0.0
      %2963 = vmatpush2.xpose.msra.mxu0 0.0
      %2964 = vmatprep.subr.mxu0 0.0
      %2965 = vmatpush2.xpose.msra.mxu0 0.0
      %2966 = vmatprep.subr.mxu0 0.0
      %2967 = vmatpush2.xpose.msra.mxu0 0.0
      %2968 = vmatprep.subr.mxu0 0.0
      %2969 = vmatpush2.xpose.msra.mxu0 0.0
      %2970 = vmatprep.subr.mxu0 0.0
      %2971 = vmatpush2.xpose.msra.mxu0 0.0
      %2972 = vmatprep.subr.mxu0 0.0
      %2973 = vmatpush2.xpose.msra.mxu0 0.0
      %2974 = vmatprep.subr.mxu0 0.0
      %2975 = vmatpush2.xpose.msra.mxu0 0.0
      %2976 = vmatprep.subr.mxu0 0.0
      %2977 = vmatpush2.xpose.msra.mxu0 0.0
      %2978 = vmatprep.subr.mxu0 0.0
      %2979 = vmatpush2.xpose.msra.mxu0 0.0
      %2980 = vmatprep.subr.mxu0 0.0
      %2981 = vmatpush2.xpose.msra.mxu0 0.0
      %2982 = vmatprep.subr.mxu0 0.0
      %2983 = vmatpush2.xpose.msra.mxu0 0.0
      %2984 = vmatprep.subr.mxu0 0.0
      %2985 = vmatpush2.xpose.msra.mxu0 0.0
      %2986 = vmatprep.subr.mxu0 0.0
      %2987 = vmatpush2.xpose.msra.mxu0 0.0
      %2988 = vmatprep.subr.mxu0 0.0
      %2989 = vmatpush2.xpose.msra.mxu0 0.0
      %2990 = vmatprep.subr.mxu0 0.0
      %2991 = vmatpush2.xpose.msra.mxu0 0.0
      %2992 = vmatprep.subr.mxu0 0.0
      %2993 = vmatpush2.xpose.msra.mxu0 0.0
      %2994 = vmatprep.mubr.f32.mxu0 0.0
      %2995 = vmatmul.mubr.f32.gmra.mxu0 %v2926
      %v2996 = vpop.f32.mrf.mxu0
      %v2997 = vadd.f32 0.0, %v2996
      %v2998 = vpop.f32.mrf.mxu0
      %2999 = vdwg.mxu0
      %3000 = vrot.lane.b32.xlu0 %v1202, 120
      %v3001 = vpop.permute.xlu0 %3000
      %3002 = vrot.lane.b32.xlu0 %v1202, 88
      %v3003 = vpop.permute.xlu0 %3002
      %v3004 = vsel %vm1213, %v3001, 0
      %v3006 = vsel %vm1213, %v3003, 0
      %3008 = vmatprep.subr.mxu0 0.0
      %3009 = vmatpush1.xpose.msra.mxu0 0.0
      %3010 = vmatprep.subr.mxu0 0.0
      %3011 = vmatpush1.xpose.msra.mxu0 0.0
      %3012 = vmatprep.subr.mxu0 0.0
      %3013 = vmatpush1.xpose.msra.mxu0 0.0
      %3014 = vmatprep.subr.mxu0 0.0
      %3015 = vmatpush1.xpose.msra.mxu0 0.0
      %3016 = vmatprep.subr.mxu0 0.0
      %3017 = vmatpush1.xpose.msra.mxu0 0.0
      %3018 = vmatprep.subr.mxu0 0.0
      %3019 = vmatpush1.xpose.msra.mxu0 0.0
      %3020 = vmatprep.subr.mxu0 0.0
      %3021 = vmatpush1.xpose.msra.mxu0 0.0
      %3022 = vmatprep.subr.mxu0 0.0
      %3023 = vmatpush1.xpose.msra.mxu0 0.0
      %3024 = vmatprep.subr.mxu0 0.0
      %3025 = vmatpush1.xpose.msra.mxu0 0.0
      %3026 = vmatprep.subr.mxu0 0.0
      %3027 = vmatpush1.xpose.msra.mxu0 0.0
      %3028 = vmatprep.subr.mxu0 0.0
      %3029 = vmatpush1.xpose.msra.mxu0 0.0
      %3030 = vmatprep.subr.mxu0 0.0
      %3031 = vmatpush1.xpose.msra.mxu0 0.0
      %3032 = vmatprep.subr.mxu0 0.0
      %3033 = vmatpush1.xpose.msra.mxu0 0.0
      %3034 = vmatprep.subr.mxu0 0.0
      %3035 = vmatpush1.xpose.msra.mxu0 0.0
      %3036 = vmatprep.subr.mxu0 0.0
      %3037 = vmatpush1.xpose.msra.mxu0 0.0
      %3038 = vmatprep.subr.mxu0 0.0
      %3039 = vmatpush1.xpose.msra.mxu0 %v3006
      %3040 = vmatprep.subr.mxu0 0.0
      %3041 = vmatpush2.xpose.msra.mxu0 0.0
      %3042 = vmatprep.subr.mxu0 0.0
      %3043 = vmatpush2.xpose.msra.mxu0 0.0
      %3044 = vmatprep.subr.mxu0 0.0
      %3045 = vmatpush2.xpose.msra.mxu0 0.0
      %3046 = vmatprep.subr.mxu0 0.0
      %3047 = vmatpush2.xpose.msra.mxu0 0.0
      %3048 = vmatprep.subr.mxu0 0.0
      %3049 = vmatpush2.xpose.msra.mxu0 0.0
      %3050 = vmatprep.subr.mxu0 0.0
      %3051 = vmatpush2.xpose.msra.mxu0 0.0
      %3052 = vmatprep.subr.mxu0 0.0
      %3053 = vmatpush2.xpose.msra.mxu0 0.0
      %3054 = vmatprep.subr.mxu0 0.0
      %3055 = vmatpush2.xpose.msra.mxu0 0.0
      %3056 = vmatprep.subr.mxu0 0.0
      %3057 = vmatpush2.xpose.msra.mxu0 0.0
      %3058 = vmatprep.subr.mxu0 0.0
      %3059 = vmatpush2.xpose.msra.mxu0 0.0
      %3060 = vmatprep.subr.mxu0 0.0
      %3061 = vmatpush2.xpose.msra.mxu0 0.0
      %3062 = vmatprep.subr.mxu0 0.0
      %3063 = vmatpush2.xpose.msra.mxu0 0.0
      %3064 = vmatprep.subr.mxu0 0.0
      %3065 = vmatpush2.xpose.msra.mxu0 0.0
      %3066 = vmatprep.subr.mxu0 0.0
      %3067 = vmatpush2.xpose.msra.mxu0 0.0
      %3068 = vmatprep.subr.mxu0 0.0
      %3069 = vmatpush2.xpose.msra.mxu0 0.0
      %3070 = vmatprep.subr.mxu0 0.0
      %3071 = vmatpush2.xpose.msra.mxu0 0.0
      %3072 = vmatprep.mubr.f32.mxu0 0.0
      %3073 = vmatmul.mubr.f32.gmra.mxu0 %v3004
      %v3074 = vpop.f32.mrf.mxu0
      %v3075 = vadd.f32 0.0, %v3074
      %v3076 = vpop.f32.mrf.mxu0
      %3077 = vdwg.mxu0
      %3078 = vrot.lane.b32.xlu0 %v1207, 120
      %v3079 = vpop.permute.xlu0 %3078
      %3080 = vrot.lane.b32.xlu0 %v1207, 88
      %v3081 = vpop.permute.xlu0 %3080
      %v3082 = vsel %vm1213, %v3079, 0
      %v3084 = vsel %vm1213, %v3081, 0
      %3086 = vmatprep.subr.mxu0 0.0
      %3087 = vmatpush1.xpose.msra.mxu0 0.0
      %3088 = vmatprep.subr.mxu0 0.0
      %3089 = vmatpush1.xpose.msra.mxu0 0.0
      %3090 = vmatprep.subr.mxu0 0.0
      %3091 = vmatpush1.xpose.msra.mxu0 0.0
      %3092 = vmatprep.subr.mxu0 0.0
      %3093 = vmatpush1.xpose.msra.mxu0 0.0
      %3094 = vmatprep.subr.mxu0 0.0
      %3095 = vmatpush1.xpose.msra.mxu0 0.0
      %3096 = vmatprep.subr.mxu0 0.0
      %3097 = vmatpush1.xpose.msra.mxu0 0.0
      %3098 = vmatprep.subr.mxu0 0.0
      %3099 = vmatpush1.xpose.msra.mxu0 0.0
      %3100 = vmatprep.subr.mxu0 0.0
      %3101 = vmatpush1.xpose.msra.mxu0 0.0
      %3102 = vmatprep.subr.mxu0 0.0
      %3103 = vmatpush1.xpose.msra.mxu0 0.0
      %3104 = vmatprep.subr.mxu0 0.0
      %3105 = vmatpush1.xpose.msra.mxu0 0.0
      %3106 = vmatprep.subr.mxu0 0.0
      %3107 = vmatpush1.xpose.msra.mxu0 0.0
      %3108 = vmatprep.subr.mxu0 0.0
      %3109 = vmatpush1.xpose.msra.mxu0 0.0
      %3110 = vmatprep.subr.mxu0 0.0
      %3111 = vmatpush1.xpose.msra.mxu0 0.0
      %3112 = vmatprep.subr.mxu0 0.0
      %3113 = vmatpush1.xpose.msra.mxu0 0.0
      %3114 = vmatprep.subr.mxu0 0.0
      %3115 = vmatpush1.xpose.msra.mxu0 0.0
      %3116 = vmatprep.subr.mxu0 0.0
      %3117 = vmatpush1.xpose.msra.mxu0 %v3084
      %3118 = vmatprep.subr.mxu0 0.0
      %3119 = vmatpush2.xpose.msra.mxu0 0.0
      %3120 = vmatprep.subr.mxu0 0.0
      %3121 = vmatpush2.xpose.msra.mxu0 0.0
      %3122 = vmatprep.subr.mxu0 0.0
      %3123 = vmatpush2.xpose.msra.mxu0 0.0
      %3124 = vmatprep.subr.mxu0 0.0
      %3125 = vmatpush2.xpose.msra.mxu0 0.0
      %3126 = vmatprep.subr.mxu0 0.0
      %3127 = vmatpush2.xpose.msra.mxu0 0.0
      %3128 = vmatprep.subr.mxu0 0.0
      %3129 = vmatpush2.xpose.msra.mxu0 0.0
      %3130 = vmatprep.subr.mxu0 0.0
      %3131 = vmatpush2.xpose.msra.mxu0 0.0
      %3132 = vmatprep.subr.mxu0 0.0
      %3133 = vmatpush2.xpose.msra.mxu0 0.0
      %3134 = vmatprep.subr.mxu0 0.0
      %3135 = vmatpush2.xpose.msra.mxu0 0.0
      %3136 = vmatprep.subr.mxu0 0.0
      %3137 = vmatpush2.xpose.msra.mxu0 0.0
      %3138 = vmatprep.subr.mxu0 0.0
      %3139 = vmatpush2.xpose.msra.mxu0 0.0
      %3140 = vmatprep.subr.mxu0 0.0
      %3141 = vmatpush2.xpose.msra.mxu0 0.0
      %3142 = vmatprep.subr.mxu0 0.0
      %3143 = vmatpush2.xpose.msra.mxu0 0.0
      %3144 = vmatprep.subr.mxu0 0.0
      %3145 = vmatpush2.xpose.msra.mxu0 0.0
      %3146 = vmatprep.subr.mxu0 0.0
      %3147 = vmatpush2.xpose.msra.mxu0 0.0
      %3148 = vmatprep.subr.mxu0 0.0
      %3149 = vmatpush2.xpose.msra.mxu0 0.0
      %3150 = vmatprep.mubr.f32.mxu0 0.0
      %3151 = vmatmul.mubr.f32.gmra.mxu0 %v3082
      %v3152 = vpop.f32.mrf.mxu0
      %v3153 = vadd.f32 0.0, %v3152
      %v3154 = vpop.f32.mrf.mxu0
      %3155 = vdwg.mxu0
      %v3156 = vmul.f32 %v2607, 0.35355338
      %v3157 = vmul.f32 %v2685, 0.35355338
      %v3158 = vmul.f32 %v2763, 0.35355338
      %v3159 = vmul.f32 %v2841, 0.35355338
      %v3160 = vmul.f32 %v2919, 0.35355338
      %v3161 = vmul.f32 %v2997, 0.35355338
      %v3162 = vmul.f32 %v3075, 0.35355338
      %v3163 = vmul.f32 %v3153, 0.35355338
      %v3164 = vsel %vm1213, %v3156, -inf
      %3165 = vmax.xlane.f32.xlu0 %v3164
      %v3166 = vpop.xlane.xlu0 %3165
      %v3167 = vsel %vm1213, %v3157, -inf
      %3168 = vmax.xlane.f32.xlu0 %v3167
      %v3169 = vpop.xlane.xlu0 %3168
      %v3170 = vsel %vm1213, %v3158, -inf
      %3171 = vmax.xlane.f32.xlu0 %v3170
      %v3172 = vpop.xlane.xlu0 %3171
      %v3173 = vsel %vm1213, %v3159, -inf
      %3174 = vmax.xlane.f32.xlu0 %v3173
      %v3175 = vpop.xlane.xlu0 %3174
      %v3176 = vsel %vm1213, %v3160, -inf
      %3177 = vmax.xlane.f32.xlu0 %v3176
      %v3178 = vpop.xlane.xlu0 %3177
      %v3179 = vsel %vm1213, %v3161, -inf
      %3180 = vmax.xlane.f32.xlu0 %v3179
      %v3181 = vpop.xlane.xlu0 %3180
      %v3182 = vsel %vm1213, %v3162, -inf
      %3183 = vmax.xlane.f32.xlu0 %v3182
      %v3184 = vpop.xlane.xlu0 %3183
      %v3185 = vsel %vm1213, %v3163, -inf
      %3186 = vmax.xlane.f32.xlu0 %v3185
      %v3187 = vpop.xlane.xlu0 %3186
      %v3188 = vsub.f32 %v3156, %v3166
      %v3189 = vsub.f32 %v3157, %v3169
      %v3190 = vsub.f32 %v3158, %v3172
      %v3191 = vsub.f32 %v3159, %v3175
      %v3192 = vsub.f32 %v3160, %v3178
      %v3193 = vsub.f32 %v3161, %v3181
      %v3194 = vsub.f32 %v3162, %v3184
      %v3195 = vsub.f32 %v3163, %v3187
      %v3196 = vmul.f32 %v3188, 1.442695
      %v3197 = vpow.pop %v3196
      %v3198 = vmul.f32 %v3189, 1.442695
      %v3199 = vpow.pop %v3198
      %v3200 = vmul.f32 %v3190, 1.442695
      %v3201 = vpow.pop %v3200
      %v3202 = vmul.f32 %v3191, 1.442695
      %v3203 = vpow.pop %v3202
      %v3204 = vmul.f32 %v3192, 1.442695
      %v3205 = vpow.pop %v3204
      %v3206 = vmul.f32 %v3193, 1.442695
      %v3207 = vpow.pop %v3206
      %v3208 = vmul.f32 %v3194, 1.442695
      %v3209 = vpow.pop %v3208
      %v3210 = vmul.f32 %v3195, 1.442695
      %v3211 = vpow.pop %v3210
      %v3212 = vsel %vm1213, %v3197, 0.0
      %3213 = vadd.xlane.f32.xlu0 %v3212
      %v3214 = vpop.xlane.xlu0 %3213
      %v3215 = vsel %vm1213, %v3199, 0.0
      %3216 = vadd.xlane.f32.xlu0 %v3215
      %v3217 = vpop.xlane.xlu0 %3216
      %v3218 = vsel %vm1213, %v3201, 0.0
      %3219 = vadd.xlane.f32.xlu0 %v3218
      %v3220 = vpop.xlane.xlu0 %3219
      %v3221 = vsel %vm1213, %v3203, 0.0
      %3222 = vadd.xlane.f32.xlu0 %v3221
      %v3223 = vpop.xlane.xlu0 %3222
      %v3224 = vsel %vm1213, %v3205, 0.0
      %3225 = vadd.xlane.f32.xlu0 %v3224
      %v3226 = vpop.xlane.xlu0 %3225
      %v3227 = vsel %vm1213, %v3207, 0.0
      %3228 = vadd.xlane.f32.xlu0 %v3227
      %v3229 = vpop.xlane.xlu0 %3228
      %v3230 = vsel %vm1213, %v3209, 0.0
      %3231 = vadd.xlane.f32.xlu0 %v3230
      %v3232 = vpop.xlane.xlu0 %3231
      %v3233 = vsel %vm1213, %v3211, 0.0
      %3234 = vadd.xlane.f32.xlu0 %v3233
      %v3235 = vpop.xlane.xlu0 %3234
      %v3236 = vrcp.pop %v3214
      %v3237 = vmul.f32 %v3197, %v3236
      %v3238 = vrcp.pop %v3217
      %v3239 = vmul.f32 %v3199, %v3238
      %v3240 = vrcp.pop %v3220
      %v3241 = vmul.f32 %v3201, %v3240
      %v3242 = vrcp.pop %v3223
      %v3243 = vmul.f32 %v3203, %v3242
      %v3244 = vrcp.pop %v3226
      %v3245 = vmul.f32 %v3205, %v3244
      %v3246 = vrcp.pop %v3229
      %v3247 = vmul.f32 %v3207, %v3246
      %v3248 = vrcp.pop %v3232
      %v3249 = vmul.f32 %v3209, %v3248
      %v3250 = vrcp.pop %v3235
      %v3251 = vmul.f32 %v3211, %v3250
      %3252 = vrot.lane.b32.xlu0 %v1172, 56
      %v3253 = vpop.permute.xlu0 %3252
      %v3256 = vsel %vm1213, %v3237, 0
      %3258 = vmatprep.subr.mxu0 0.0
      %3259 = vmatpush1.msra.mxu0 0.0
      %3260 = vmatprep.subr.mxu0 0.0
      %3261 = vmatpush1.msra.mxu0 0.0
      %3262 = vmatprep.subr.mxu0 0.0
      %3263 = vmatpush1.msra.mxu0 0.0
      %3264 = vmatprep.subr.mxu0 0.0
      %3265 = vmatpush1.msra.mxu0 0.0
      %3266 = vmatprep.subr.mxu0 0.0
      %3267 = vmatpush1.msra.mxu0 0.0
      %3268 = vmatprep.subr.mxu0 0.0
      %3269 = vmatpush1.msra.mxu0 0.0
      %3270 = vmatprep.subr.mxu0 0.0
      %3271 = vmatpush1.msra.mxu0 0.0
      %3272 = vmatprep.subr.mxu0 0.0
      %3273 = vmatpush1.msra.mxu0 0.0
      %3274 = vmatprep.subr.mxu0 0.0
      %3275 = vmatpush1.msra.mxu0 0.0
      %3276 = vmatprep.subr.mxu0 0.0
      %3277 = vmatpush1.msra.mxu0 0.0
      %3278 = vmatprep.subr.mxu0 0.0
      %3279 = vmatpush1.msra.mxu0 0.0
      %3280 = vmatprep.subr.mxu0 0.0
      %3281 = vmatpush1.msra.mxu0 0.0
      %3282 = vmatprep.subr.mxu0 0.0
      %3283 = vmatpush1.msra.mxu0 0.0
      %3284 = vmatprep.subr.mxu0 0.0
      %3285 = vmatpush1.msra.mxu0 0.0
      %3286 = vmatprep.subr.mxu0 0.0
      %3287 = vmatpush1.msra.mxu0 0.0
      %3288 = vmatprep.subr.mxu0 0.0
      %3289 = vmatpush1.msra.mxu0 %v3253
      %3290 = vmatprep.subr.mxu0 0.0
      %3291 = vmatpush2.msra.mxu0 0.0
      %3292 = vmatprep.subr.mxu0 0.0
      %3293 = vmatpush2.msra.mxu0 0.0
      %3294 = vmatprep.subr.mxu0 0.0
      %3295 = vmatpush2.msra.mxu0 0.0
      %3296 = vmatprep.subr.mxu0 0.0
      %3297 = vmatpush2.msra.mxu0 0.0
      %3298 = vmatprep.subr.mxu0 0.0
      %3299 = vmatpush2.msra.mxu0 0.0
      %3300 = vmatprep.subr.mxu0 0.0
      %3301 = vmatpush2.msra.mxu0 0.0
      %3302 = vmatprep.subr.mxu0 0.0
      %3303 = vmatpush2.msra.mxu0 0.0
      %3304 = vmatprep.subr.mxu0 0.0
      %3305 = vmatpush2.msra.mxu0 0.0
      %3306 = vmatprep.subr.mxu0 0.0
      %3307 = vmatpush2.msra.mxu0 0.0
      %3308 = vmatprep.subr.mxu0 0.0
      %3309 = vmatpush2.msra.mxu0 0.0
      %3310 = vmatprep.subr.mxu0 0.0
      %3311 = vmatpush2.msra.mxu0 0.0
      %3312 = vmatprep.subr.mxu0 0.0
      %3313 = vmatpush2.msra.mxu0 0.0
      %3314 = vmatprep.subr.mxu0 0.0
      %3315 = vmatpush2.msra.mxu0 0.0
      %3316 = vmatprep.subr.mxu0 0.0
      %3317 = vmatpush2.msra.mxu0 0.0
      %3318 = vmatprep.subr.mxu0 0.0
      %3319 = vmatpush2.msra.mxu0 0.0
      %3320 = vmatprep.subr.mxu0 0.0
      %3321 = vmatpush2.msra.mxu0 0.0
      %3322 = vmatprep.mubr.f32.mxu0 0.0
      %3323 = vmatmul.mubr.f32.gmra.mxu0 %v3256
      %v3324 = vpop.f32.mrf.mxu0
      %v3325 = vadd.f32 0.0, %v3324
      %v3326 = vpop.f32.mrf.mxu0
      %3327 = vdwg.mxu0
      %3328 = vrot.lane.b32.xlu0 %v1177, 56
      %v3329 = vpop.permute.xlu0 %3328
      %v3332 = vsel %vm1213, %v3239, 0
      %3334 = vmatprep.subr.mxu0 0.0
      %3335 = vmatpush1.msra.mxu0 0.0
      %3336 = vmatprep.subr.mxu0 0.0
      %3337 = vmatpush1.msra.mxu0 0.0
      %3338 = vmatprep.subr.mxu0 0.0
      %3339 = vmatpush1.msra.mxu0 0.0
      %3340 = vmatprep.subr.mxu0 0.0
      %3341 = vmatpush1.msra.mxu0 0.0
      %3342 = vmatprep.subr.mxu0 0.0
      %3343 = vmatpush1.msra.mxu0 0.0
      %3344 = vmatprep.subr.mxu0 0.0
      %3345 = vmatpush1.msra.mxu0 0.0
      %3346 = vmatprep.subr.mxu0 0.0
      %3347 = vmatpush1.msra.mxu0 0.0
      %3348 = vmatprep.subr.mxu0 0.0
      %3349 = vmatpush1.msra.mxu0 0.0
      %3350 = vmatprep.subr.mxu0 0.0
      %3351 = vmatpush1.msra.mxu0 0.0
      %3352 = vmatprep.subr.mxu0 0.0
      %3353 = vmatpush1.msra.mxu0 0.0
      %3354 = vmatprep.subr.mxu0 0.0
      %3355 = vmatpush1.msra.mxu0 0.0
      %3356 = vmatprep.subr.mxu0 0.0
      %3357 = vmatpush1.msra.mxu0 0.0
      %3358 = vmatprep.subr.mxu0 0.0
      %3359 = vmatpush1.msra.mxu0 0.0
      %3360 = vmatprep.subr.mxu0 0.0
      %3361 = vmatpush1.msra.mxu0 0.0
      %3362 = vmatprep.subr.mxu0 0.0
      %3363 = vmatpush1.msra.mxu0 0.0
      %3364 = vmatprep.subr.mxu0 0.0
      %3365 = vmatpush1.msra.mxu0 %v3329
      %3366 = vmatprep.subr.mxu0 0.0
      %3367 = vmatpush2.msra.mxu0 0.0
      %3368 = vmatprep.subr.mxu0 0.0
      %3369 = vmatpush2.msra.mxu0 0.0
      %3370 = vmatprep.subr.mxu0 0.0
      %3371 = vmatpush2.msra.mxu0 0.0
      %3372 = vmatprep.subr.mxu0 0.0
      %3373 = vmatpush2.msra.mxu0 0.0
      %3374 = vmatprep.subr.mxu0 0.0
      %3375 = vmatpush2.msra.mxu0 0.0
      %3376 = vmatprep.subr.mxu0 0.0
      %3377 = vmatpush2.msra.mxu0 0.0
      %3378 = vmatprep.subr.mxu0 0.0
      %3379 = vmatpush2.msra.mxu0 0.0
      %3380 = vmatprep.subr.mxu0 0.0
      %3381 = vmatpush2.msra.mxu0 0.0
      %3382 = vmatprep.subr.mxu0 0.0
      %3383 = vmatpush2.msra.mxu0 0.0
      %3384 = vmatprep.subr.mxu0 0.0
      %3385 = vmatpush2.msra.mxu0 0.0
      %3386 = vmatprep.subr.mxu0 0.0
      %3387 = vmatpush2.msra.mxu0 0.0
      %3388 = vmatprep.subr.mxu0 0.0
      %3389 = vmatpush2.msra.mxu0 0.0
      %3390 = vmatprep.subr.mxu0 0.0
      %3391 = vmatpush2.msra.mxu0 0.0
      %3392 = vmatprep.subr.mxu0 0.0
      %3393 = vmatpush2.msra.mxu0 0.0
      %3394 = vmatprep.subr.mxu0 0.0
      %3395 = vmatpush2.msra.mxu0 0.0
      %3396 = vmatprep.subr.mxu0 0.0
      %3397 = vmatpush2.msra.mxu0 0.0
      %3398 = vmatprep.mubr.f32.mxu0 0.0
      %3399 = vmatmul.mubr.f32.gmra.mxu0 %v3332
      %v3400 = vpop.f32.mrf.mxu0
      %v3401 = vadd.f32 0.0, %v3400
      %v3402 = vpop.f32.mrf.mxu0
      %3403 = vdwg.mxu0
      %3404 = vrot.lane.b32.xlu0 %v1182, 56
      %v3405 = vpop.permute.xlu0 %3404
      %v3408 = vsel %vm1213, %v3241, 0
      %3410 = vmatprep.subr.mxu0 0.0
      %3411 = vmatpush1.msra.mxu0 0.0
      %3412 = vmatprep.subr.mxu0 0.0
      %3413 = vmatpush1.msra.mxu0 0.0
      %3414 = vmatprep.subr.mxu0 0.0
      %3415 = vmatpush1.msra.mxu0 0.0
      %3416 = vmatprep.subr.mxu0 0.0
      %3417 = vmatpush1.msra.mxu0 0.0
      %3418 = vmatprep.subr.mxu0 0.0
      %3419 = vmatpush1.msra.mxu0 0.0
      %3420 = vmatprep.subr.mxu0 0.0
      %3421 = vmatpush1.msra.mxu0 0.0
      %3422 = vmatprep.subr.mxu0 0.0
      %3423 = vmatpush1.msra.mxu0 0.0
      %3424 = vmatprep.subr.mxu0 0.0
      %3425 = vmatpush1.msra.mxu0 0.0
      %3426 = vmatprep.subr.mxu0 0.0
      %3427 = vmatpush1.msra.mxu0 0.0
      %3428 = vmatprep.subr.mxu0 0.0
      %3429 = vmatpush1.msra.mxu0 0.0
      %3430 = vmatprep.subr.mxu0 0.0
      %3431 = vmatpush1.msra.mxu0 0.0
      %3432 = vmatprep.subr.mxu0 0.0
      %3433 = vmatpush1.msra.mxu0 0.0
      %3434 = vmatprep.subr.mxu0 0.0
      %3435 = vmatpush1.msra.mxu0 0.0
      %3436 = vmatprep.subr.mxu0 0.0
      %3437 = vmatpush1.msra.mxu0 0.0
      %3438 = vmatprep.subr.mxu0 0.0
      %3439 = vmatpush1.msra.mxu0 0.0
      %3440 = vmatprep.subr.mxu0 0.0
      %3441 = vmatpush1.msra.mxu0 %v3405
      %3442 = vmatprep.subr.mxu0 0.0
      %3443 = vmatpush2.msra.mxu0 0.0
      %3444 = vmatprep.subr.mxu0 0.0
      %3445 = vmatpush2.msra.mxu0 0.0
      %3446 = vmatprep.subr.mxu0 0.0
      %3447 = vmatpush2.msra.mxu0 0.0
      %3448 = vmatprep.subr.mxu0 0.0
      %3449 = vmatpush2.msra.mxu0 0.0
      %3450 = vmatprep.subr.mxu0 0.0
      %3451 = vmatpush2.msra.mxu0 0.0
      %3452 = vmatprep.subr.mxu0 0.0
      %3453 = vmatpush2.msra.mxu0 0.0
      %3454 = vmatprep.subr.mxu0 0.0
      %3455 = vmatpush2.msra.mxu0 0.0
      %3456 = vmatprep.subr.mxu0 0.0
      %3457 = vmatpush2.msra.mxu0 0.0
      %3458 = vmatprep.subr.mxu0 0.0
      %3459 = vmatpush2.msra.mxu0 0.0
      %3460 = vmatprep.subr.mxu0 0.0
      %3461 = vmatpush2.msra.mxu0 0.0
      %3462 = vmatprep.subr.mxu0 0.0
      %3463 = vmatpush2.msra.mxu0 0.0
      %3464 = vmatprep.subr.mxu0 0.0
      %3465 = vmatpush2.msra.mxu0 0.0
      %3466 = vmatprep.subr.mxu0 0.0
      %3467 = vmatpush2.msra.mxu0 0.0
      %3468 = vmatprep.subr.mxu0 0.0
      %3469 = vmatpush2.msra.mxu0 0.0
      %3470 = vmatprep.subr.mxu0 0.0
      %3471 = vmatpush2.msra.mxu0 0.0
      %3472 = vmatprep.subr.mxu0 0.0
      %3473 = vmatpush2.msra.mxu0 0.0
      %3474 = vmatprep.mubr.f32.mxu0 0.0
      %3475 = vmatmul.mubr.f32.gmra.mxu0 %v3408
      %v3476 = vpop.f32.mrf.mxu0
      %v3477 = vadd.f32 0.0, %v3476
      %v3478 = vpop.f32.mrf.mxu0
      %3479 = vdwg.mxu0
      %3480 = vrot.lane.b32.xlu0 %v1187, 56
      %v3481 = vpop.permute.xlu0 %3480
      %v3484 = vsel %vm1213, %v3243, 0
      %3486 = vmatprep.subr.mxu0 0.0
      %3487 = vmatpush1.msra.mxu0 0.0
      %3488 = vmatprep.subr.mxu0 0.0
      %3489 = vmatpush1.msra.mxu0 0.0
      %3490 = vmatprep.subr.mxu0 0.0
      %3491 = vmatpush1.msra.mxu0 0.0
      %3492 = vmatprep.subr.mxu0 0.0
      %3493 = vmatpush1.msra.mxu0 0.0
      %3494 = vmatprep.subr.mxu0 0.0
      %3495 = vmatpush1.msra.mxu0 0.0
      %3496 = vmatprep.subr.mxu0 0.0
      %3497 = vmatpush1.msra.mxu0 0.0
      %3498 = vmatprep.subr.mxu0 0.0
      %3499 = vmatpush1.msra.mxu0 0.0
      %3500 = vmatprep.subr.mxu0 0.0
      %3501 = vmatpush1.msra.mxu0 0.0
      %3502 = vmatprep.subr.mxu0 0.0
      %3503 = vmatpush1.msra.mxu0 0.0
      %3504 = vmatprep.subr.mxu0 0.0
      %3505 = vmatpush1.msra.mxu0 0.0
      %3506 = vmatprep.subr.mxu0 0.0
      %3507 = vmatpush1.msra.mxu0 0.0
      %3508 = vmatprep.subr.mxu0 0.0
      %3509 = vmatpush1.msra.mxu0 0.0
      %3510 = vmatprep.subr.mxu0 0.0
      %3511 = vmatpush1.msra.mxu0 0.0
      %3512 = vmatprep.subr.mxu0 0.0
      %3513 = vmatpush1.msra.mxu0 0.0
      %3514 = vmatprep.subr.mxu0 0.0
      %3515 = vmatpush1.msra.mxu0 0.0
      %3516 = vmatprep.subr.mxu0 0.0
      %3517 = vmatpush1.msra.mxu0 %v3481
      %3518 = vmatprep.subr.mxu0 0.0
      %3519 = vmatpush2.msra.mxu0 0.0
      %3520 = vmatprep.subr.mxu0 0.0
      %3521 = vmatpush2.msra.mxu0 0.0
      %3522 = vmatprep.subr.mxu0 0.0
      %3523 = vmatpush2.msra.mxu0 0.0
      %3524 = vmatprep.subr.mxu0 0.0
      %3525 = vmatpush2.msra.mxu0 0.0
      %3526 = vmatprep.subr.mxu0 0.0
      %3527 = vmatpush2.msra.mxu0 0.0
      %3528 = vmatprep.subr.mxu0 0.0
      %3529 = vmatpush2.msra.mxu0 0.0
      %3530 = vmatprep.subr.mxu0 0.0
      %3531 = vmatpush2.msra.mxu0 0.0
      %3532 = vmatprep.subr.mxu0 0.0
      %3533 = vmatpush2.msra.mxu0 0.0
      %3534 = vmatprep.subr.mxu0 0.0
      %3535 = vmatpush2.msra.mxu0 0.0
      %3536 = vmatprep.subr.mxu0 0.0
      %3537 = vmatpush2.msra.mxu0 0.0
      %3538 = vmatprep.subr.mxu0 0.0
      %3539 = vmatpush2.msra.mxu0 0.0
      %3540 = vmatprep.subr.mxu0 0.0
      %3541 = vmatpush2.msra.mxu0 0.0
      %3542 = vmatprep.subr.mxu0 0.0
      %3543 = vmatpush2.msra.mxu0 0.0
      %3544 = vmatprep.subr.mxu0 0.0
      %3545 = vmatpush2.msra.mxu0 0.0
      %3546 = vmatprep.subr.mxu0 0.0
      %3547 = vmatpush2.msra.mxu0 0.0
      %3548 = vmatprep.subr.mxu0 0.0
      %3549 = vmatpush2.msra.mxu0 0.0
      %3550 = vmatprep.mubr.f32.mxu0 0.0
      %3551 = vmatmul.mubr.f32.gmra.mxu0 %v3484
      %v3552 = vpop.f32.mrf.mxu0
      %v3553 = vadd.f32 0.0, %v3552
      %v3554 = vpop.f32.mrf.mxu0
      %3555 = vdwg.mxu0
      %3556 = vrot.lane.b32.xlu0 %v1192, 56
      %v3557 = vpop.permute.xlu0 %3556
      %v3560 = vsel %vm1213, %v3245, 0
      %3562 = vmatprep.subr.mxu0 0.0
      %3563 = vmatpush1.msra.mxu0 0.0
      %3564 = vmatprep.subr.mxu0 0.0
      %3565 = vmatpush1.msra.mxu0 0.0
      %3566 = vmatprep.subr.mxu0 0.0
      %3567 = vmatpush1.msra.mxu0 0.0
      %3568 = vmatprep.subr.mxu0 0.0
      %3569 = vmatpush1.msra.mxu0 0.0
      %3570 = vmatprep.subr.mxu0 0.0
      %3571 = vmatpush1.msra.mxu0 0.0
      %3572 = vmatprep.subr.mxu0 0.0
      %3573 = vmatpush1.msra.mxu0 0.0
      %3574 = vmatprep.subr.mxu0 0.0
      %3575 = vmatpush1.msra.mxu0 0.0
      %3576 = vmatprep.subr.mxu0 0.0
      %3577 = vmatpush1.msra.mxu0 0.0
      %3578 = vmatprep.subr.mxu0 0.0
      %3579 = vmatpush1.msra.mxu0 0.0
      %3580 = vmatprep.subr.mxu0 0.0
      %3581 = vmatpush1.msra.mxu0 0.0
      %3582 = vmatprep.subr.mxu0 0.0
      %3583 = vmatpush1.msra.mxu0 0.0
      %3584 = vmatprep.subr.mxu0 0.0
      %3585 = vmatpush1.msra.mxu0 0.0
      %3586 = vmatprep.subr.mxu0 0.0
      %3587 = vmatpush1.msra.mxu0 0.0
      %3588 = vmatprep.subr.mxu0 0.0
      %3589 = vmatpush1.msra.mxu0 0.0
      %3590 = vmatprep.subr.mxu0 0.0
      %3591 = vmatpush1.msra.mxu0 0.0
      %3592 = vmatprep.subr.mxu0 0.0
      %3593 = vmatpush1.msra.mxu0 %v3557
      %3594 = vmatprep.subr.mxu0 0.0
      %3595 = vmatpush2.msra.mxu0 0.0
      %3596 = vmatprep.subr.mxu0 0.0
      %3597 = vmatpush2.msra.mxu0 0.0
      %3598 = vmatprep.subr.mxu0 0.0
      %3599 = vmatpush2.msra.mxu0 0.0
      %3600 = vmatprep.subr.mxu0 0.0
      %3601 = vmatpush2.msra.mxu0 0.0
      %3602 = vmatprep.subr.mxu0 0.0
      %3603 = vmatpush2.msra.mxu0 0.0
      %3604 = vmatprep.subr.mxu0 0.0
      %3605 = vmatpush2.msra.mxu0 0.0
      %3606 = vmatprep.subr.mxu0 0.0
      %3607 = vmatpush2.msra.mxu0 0.0
      %3608 = vmatprep.subr.mxu0 0.0
      %3609 = vmatpush2.msra.mxu0 0.0
      %3610 = vmatprep.subr.mxu0 0.0
      %3611 = vmatpush2.msra.mxu0 0.0
      %3612 = vmatprep.subr.mxu0 0.0
      %3613 = vmatpush2.msra.mxu0 0.0
      %3614 = vmatprep.subr.mxu0 0.0
      %3615 = vmatpush2.msra.mxu0 0.0
      %3616 = vmatprep.subr.mxu0 0.0
      %3617 = vmatpush2.msra.mxu0 0.0
      %3618 = vmatprep.subr.mxu0 0.0
      %3619 = vmatpush2.msra.mxu0 0.0
      %3620 = vmatprep.subr.mxu0 0.0
      %3621 = vmatpush2.msra.mxu0 0.0
      %3622 = vmatprep.subr.mxu0 0.0
      %3623 = vmatpush2.msra.mxu0 0.0
      %3624 = vmatprep.subr.mxu0 0.0
      %3625 = vmatpush2.msra.mxu0 0.0
      %3626 = vmatprep.mubr.f32.mxu0 0.0
      %3627 = vmatmul.mubr.f32.gmra.mxu0 %v3560
      %v3628 = vpop.f32.mrf.mxu0
      %v3629 = vadd.f32 0.0, %v3628
      %v3630 = vpop.f32.mrf.mxu0
      %3631 = vdwg.mxu0
      %3632 = vrot.lane.b32.xlu0 %v1197, 56
      %v3633 = vpop.permute.xlu0 %3632
      %v3636 = vsel %vm1213, %v3247, 0
      %3638 = vmatprep.subr.mxu0 0.0
      %3639 = vmatpush1.msra.mxu0 0.0
      %3640 = vmatprep.subr.mxu0 0.0
      %3641 = vmatpush1.msra.mxu0 0.0
      %3642 = vmatprep.subr.mxu0 0.0
      %3643 = vmatpush1.msra.mxu0 0.0
      %3644 = vmatprep.subr.mxu0 0.0
      %3645 = vmatpush1.msra.mxu0 0.0
      %3646 = vmatprep.subr.mxu0 0.0
      %3647 = vmatpush1.msra.mxu0 0.0
      %3648 = vmatprep.subr.mxu0 0.0
      %3649 = vmatpush1.msra.mxu0 0.0
      %3650 = vmatprep.subr.mxu0 0.0
      %3651 = vmatpush1.msra.mxu0 0.0
      %3652 = vmatprep.subr.mxu0 0.0
      %3653 = vmatpush1.msra.mxu0 0.0
      %3654 = vmatprep.subr.mxu0 0.0
      %3655 = vmatpush1.msra.mxu0 0.0
      %3656 = vmatprep.subr.mxu0 0.0
      %3657 = vmatpush1.msra.mxu0 0.0
      %3658 = vmatprep.subr.mxu0 0.0
      %3659 = vmatpush1.msra.mxu0 0.0
      %3660 = vmatprep.subr.mxu0 0.0
      %3661 = vmatpush1.msra.mxu0 0.0
      %3662 = vmatprep.subr.mxu0 0.0
      %3663 = vmatpush1.msra.mxu0 0.0
      %3664 = vmatprep.subr.mxu0 0.0
      %3665 = vmatpush1.msra.mxu0 0.0
      %3666 = vmatprep.subr.mxu0 0.0
      %3667 = vmatpush1.msra.mxu0 0.0
      %3668 = vmatprep.subr.mxu0 0.0
      %3669 = vmatpush1.msra.mxu0 %v3633
      %3670 = vmatprep.subr.mxu0 0.0
      %3671 = vmatpush2.msra.mxu0 0.0
      %3672 = vmatprep.subr.mxu0 0.0
      %3673 = vmatpush2.msra.mxu0 0.0
      %3674 = vmatprep.subr.mxu0 0.0
      %3675 = vmatpush2.msra.mxu0 0.0
      %3676 = vmatprep.subr.mxu0 0.0
      %3677 = vmatpush2.msra.mxu0 0.0
      %3678 = vmatprep.subr.mxu0 0.0
      %3679 = vmatpush2.msra.mxu0 0.0
      %3680 = vmatprep.subr.mxu0 0.0
      %3681 = vmatpush2.msra.mxu0 0.0
      %3682 = vmatprep.subr.mxu0 0.0
      %3683 = vmatpush2.msra.mxu0 0.0
      %3684 = vmatprep.subr.mxu0 0.0
      %3685 = vmatpush2.msra.mxu0 0.0
      %3686 = vmatprep.subr.mxu0 0.0
      %3687 = vmatpush2.msra.mxu0 0.0
      %3688 = vmatprep.subr.mxu0 0.0
      %3689 = vmatpush2.msra.mxu0 0.0
      %3690 = vmatprep.subr.mxu0 0.0
      %3691 = vmatpush2.msra.mxu0 0.0
      %3692 = vmatprep.subr.mxu0 0.0
      %3693 = vmatpush2.msra.mxu0 0.0
      %3694 = vmatprep.subr.mxu0 0.0
      %3695 = vmatpush2.msra.mxu0 0.0
      %3696 = vmatprep.subr.mxu0 0.0
      %3697 = vmatpush2.msra.mxu0 0.0
      %3698 = vmatprep.subr.mxu0 0.0
      %3699 = vmatpush2.msra.mxu0 0.0
      %3700 = vmatprep.subr.mxu0 0.0
      %3701 = vmatpush2.msra.mxu0 0.0
      %3702 = vmatprep.mubr.f32.mxu0 0.0
      %3703 = vmatmul.mubr.f32.gmra.mxu0 %v3636
      %v3704 = vpop.f32.mrf.mxu0
      %v3705 = vadd.f32 0.0, %v3704
      %v3706 = vpop.f32.mrf.mxu0
      %3707 = vdwg.mxu0
      %3708 = vrot.lane.b32.xlu0 %v1202, 56
      %v3709 = vpop.permute.xlu0 %3708
      %v3712 = vsel %vm1213, %v3249, 0
      %3714 = vmatprep.subr.mxu0 0.0
      %3715 = vmatpush1.msra.mxu0 0.0
      %3716 = vmatprep.subr.mxu0 0.0
      %3717 = vmatpush1.msra.mxu0 0.0
      %3718 = vmatprep.subr.mxu0 0.0
      %3719 = vmatpush1.msra.mxu0 0.0
      %3720 = vmatprep.subr.mxu0 0.0
      %3721 = vmatpush1.msra.mxu0 0.0
      %3722 = vmatprep.subr.mxu0 0.0
      %3723 = vmatpush1.msra.mxu0 0.0
      %3724 = vmatprep.subr.mxu0 0.0
      %3725 = vmatpush1.msra.mxu0 0.0
      %3726 = vmatprep.subr.mxu0 0.0
      %3727 = vmatpush1.msra.mxu0 0.0
      %3728 = vmatprep.subr.mxu0 0.0
      %3729 = vmatpush1.msra.mxu0 0.0
      %3730 = vmatprep.subr.mxu0 0.0
      %3731 = vmatpush1.msra.mxu0 0.0
      %3732 = vmatprep.subr.mxu0 0.0
      %3733 = vmatpush1.msra.mxu0 0.0
      %3734 = vmatprep.subr.mxu0 0.0
      %3735 = vmatpush1.msra.mxu0 0.0
      %3736 = vmatprep.subr.mxu0 0.0
      %3737 = vmatpush1.msra.mxu0 0.0
      %3738 = vmatprep.subr.mxu0 0.0
      %3739 = vmatpush1.msra.mxu0 0.0
      %3740 = vmatprep.subr.mxu0 0.0
      %3741 = vmatpush1.msra.mxu0 0.0
      %3742 = vmatprep.subr.mxu0 0.0
      %3743 = vmatpush1.msra.mxu0 0.0
      %3744 = vmatprep.subr.mxu0 0.0
      %3745 = vmatpush1.msra.mxu0 %v3709
      %3746 = vmatprep.subr.mxu0 0.0
      %3747 = vmatpush2.msra.mxu0 0.0
      %3748 = vmatprep.subr.mxu0 0.0
      %3749 = vmatpush2.msra.mxu0 0.0
      %3750 = vmatprep.subr.mxu0 0.0
      %3751 = vmatpush2.msra.mxu0 0.0
      %3752 = vmatprep.subr.mxu0 0.0
      %3753 = vmatpush2.msra.mxu0 0.0
      %3754 = vmatprep.subr.mxu0 0.0
      %3755 = vmatpush2.msra.mxu0 0.0
      %3756 = vmatprep.subr.mxu0 0.0
      %3757 = vmatpush2.msra.mxu0 0.0
      %3758 = vmatprep.subr.mxu0 0.0
      %3759 = vmatpush2.msra.mxu0 0.0
      %3760 = vmatprep.subr.mxu0 0.0
      %3761 = vmatpush2.msra.mxu0 0.0
      %3762 = vmatprep.subr.mxu0 0.0
      %3763 = vmatpush2.msra.mxu0 0.0
      %3764 = vmatprep.subr.mxu0 0.0
      %3765 = vmatpush2.msra.mxu0 0.0
      %3766 = vmatprep.subr.mxu0 0.0
      %3767 = vmatpush2.msra.mxu0 0.0
      %3768 = vmatprep.subr.mxu0 0.0
      %3769 = vmatpush2.msra.mxu0 0.0
      %3770 = vmatprep.subr.mxu0 0.0
      %3771 = vmatpush2.msra.mxu0 0.0
      %3772 = vmatprep.subr.mxu0 0.0
      %3773 = vmatpush2.msra.mxu0 0.0
      %3774 = vmatprep.subr.mxu0 0.0
      %3775 = vmatpush2.msra.mxu0 0.0
      %3776 = vmatprep.subr.mxu0 0.0
      %3777 = vmatpush2.msra.mxu0 0.0
      %3778 = vmatprep.mubr.f32.mxu0 0.0
      %3779 = vmatmul.mubr.f32.gmra.mxu0 %v3712
      %v3780 = vpop.f32.mrf.mxu0
      %v3781 = vadd.f32 0.0, %v3780
      %v3782 = vpop.f32.mrf.mxu0
      %3783 = vdwg.mxu0
      %3784 = vrot.lane.b32.xlu0 %v1207, 56
      %v3785 = vpop.permute.xlu0 %3784
      %v3788 = vsel %vm1213, %v3251, 0
      %3790 = vmatprep.subr.mxu0 0.0
      %3791 = vmatpush1.msra.mxu0 0.0
      %3792 = vmatprep.subr.mxu0 0.0
      %3793 = vmatpush1.msra.mxu0 0.0
      %3794 = vmatprep.subr.mxu0 0.0
      %3795 = vmatpush1.msra.mxu0 0.0
      %3796 = vmatprep.subr.mxu0 0.0
      %3797 = vmatpush1.msra.mxu0 0.0
      %3798 = vmatprep.subr.mxu0 0.0
      %3799 = vmatpush1.msra.mxu0 0.0
      %3800 = vmatprep.subr.mxu0 0.0
      %3801 = vmatpush1.msra.mxu0 0.0
      %3802 = vmatprep.subr.mxu0 0.0
      %3803 = vmatpush1.msra.mxu0 0.0
      %3804 = vmatprep.subr.mxu0 0.0
      %3805 = vmatpush1.msra.mxu0 0.0
      %3806 = vmatprep.subr.mxu0 0.0
      %3807 = vmatpush1.msra.mxu0 0.0
      %3808 = vmatprep.subr.mxu0 0.0
      %3809 = vmatpush1.msra.mxu0 0.0
      %3810 = vmatprep.subr.mxu0 0.0
      %3811 = vmatpush1.msra.mxu0 0.0
      %3812 = vmatprep.subr.mxu0 0.0
      %3813 = vmatpush1.msra.mxu0 0.0
      %3814 = vmatprep.subr.mxu0 0.0
      %3815 = vmatpush1.msra.mxu0 0.0
      %3816 = vmatprep.subr.mxu0 0.0
      %3817 = vmatpush1.msra.mxu0 0.0
      %3818 = vmatprep.subr.mxu0 0.0
      %3819 = vmatpush1.msra.mxu0 0.0
      %3820 = vmatprep.subr.mxu0 0.0
      %3821 = vmatpush1.msra.mxu0 %v3785
      %3822 = vmatprep.subr.mxu0 0.0
      %3823 = vmatpush2.msra.mxu0 0.0
      %3824 = vmatprep.subr.mxu0 0.0
      %3825 = vmatpush2.msra.mxu0 0.0
      %3826 = vmatprep.subr.mxu0 0.0
      %3827 = vmatpush2.msra.mxu0 0.0
      %3828 = vmatprep.subr.mxu0 0.0
      %3829 = vmatpush2.msra.mxu0 0.0
      %3830 = vmatprep.subr.mxu0 0.0
      %3831 = vmatpush2.msra.mxu0 0.0
      %3832 = vmatprep.subr.mxu0 0.0
      %3833 = vmatpush2.msra.mxu0 0.0
      %3834 = vmatprep.subr.mxu0 0.0
      %3835 = vmatpush2.msra.mxu0 0.0
      %3836 = vmatprep.subr.mxu0 0.0
      %3837 = vmatpush2.msra.mxu0 0.0
      %3838 = vmatprep.subr.mxu0 0.0
      %3839 = vmatpush2.msra.mxu0 0.0
      %3840 = vmatprep.subr.mxu0 0.0
      %3841 = vmatpush2.msra.mxu0 0.0
      %3842 = vmatprep.subr.mxu0 0.0
      %3843 = vmatpush2.msra.mxu0 0.0
      %3844 = vmatprep.subr.mxu0 0.0
      %3845 = vmatpush2.msra.mxu0 0.0
      %3846 = vmatprep.subr.mxu0 0.0
      %3847 = vmatpush2.msra.mxu0 0.0
      %3848 = vmatprep.subr.mxu0 0.0
      %3849 = vmatpush2.msra.mxu0 0.0
      %3850 = vmatprep.subr.mxu0 0.0
      %3851 = vmatpush2.msra.mxu0 0.0
      %3852 = vmatprep.subr.mxu0 0.0
      %3853 = vmatpush2.msra.mxu0 0.0
      %3854 = vmatprep.mubr.f32.mxu0 0.0
      %3855 = vmatmul.mubr.f32.gmra.mxu0 %v3788
      %v3856 = vpop.f32.mrf.mxu0
      %v3857 = vadd.f32 0.0, %v3856
      %v3858 = vpop.f32.mrf.mxu0
      %3859 = vdwg.mxu0
      %v3860 = vld [vmem:[%s8 + $0x8] sm:$0xff]
      %v3862 = vsel %vm1213, %v3325, 0
      %v3865 = vsel %vm1213, %v3401, 0
      %v3868 = vsel %vm1213, %v3477, 0
      %v3871 = vsel %vm1213, %v3553, 0
      %v3874 = vsel %vm1213, %v3629, 0
      %v3877 = vsel %vm1213, %v3705, 0
      %v3880 = vsel %vm1213, %v3781, 0
      %v3883 = vsel %vm1213, %v3857, 0
      %3885 = vmatprep.subr.mxu0 0.0
      %3886 = vmatpush1.msra.mxu0 0.0
      %3887 = vmatprep.subr.mxu0 0.0
      %3888 = vmatpush1.msra.mxu0 0.0
      %3889 = vmatprep.subr.mxu0 0.0
      %3890 = vmatpush1.msra.mxu0 0.0
      %3891 = vmatprep.subr.mxu0 0.0
      %3892 = vmatpush1.msra.mxu0 0.0
      %3893 = vmatprep.subr.mxu0 0.0
      %3894 = vmatpush1.msra.mxu0 0.0
      %3895 = vmatprep.subr.mxu0 0.0
      %3896 = vmatpush1.msra.mxu0 0.0
      %3897 = vmatprep.subr.mxu0 0.0
      %3898 = vmatpush1.msra.mxu0 0.0
      %3899 = vmatprep.subr.mxu0 0.0
      %3900 = vmatpush1.msra.mxu0 0.0
      %3901 = vmatprep.subr.mxu0 0.0
      %3902 = vmatpush1.msra.mxu0 0.0
      %3903 = vmatprep.subr.mxu0 0.0
      %3904 = vmatpush1.msra.mxu0 0.0
      %3905 = vmatprep.subr.mxu0 0.0
      %3906 = vmatpush1.msra.mxu0 0.0
      %3907 = vmatprep.subr.mxu0 0.0
      %3908 = vmatpush1.msra.mxu0 0.0
      %3909 = vmatprep.subr.mxu0 0.0
      %3910 = vmatpush1.msra.mxu0 0.0
      %3911 = vmatprep.subr.mxu0 0.0
      %3912 = vmatpush1.msra.mxu0 0.0
      %3913 = vmatprep.subr.mxu0 0.0
      %3914 = vmatpush1.msra.mxu0 0.0
      %3915 = vmatprep.subr.mxu0 0.0
      %3916 = vmatpush1.msra.mxu0 %v3860
      %3917 = vmatprep.subr.mxu0 0.0
      %3918 = vmatpush2.msra.mxu0 0.0
      %3919 = vmatprep.subr.mxu0 0.0
      %3920 = vmatpush2.msra.mxu0 0.0
      %3921 = vmatprep.subr.mxu0 0.0
      %3922 = vmatpush2.msra.mxu0 0.0
      %3923 = vmatprep.subr.mxu0 0.0
      %3924 = vmatpush2.msra.mxu0 0.0
      %3925 = vmatprep.subr.mxu0 0.0
      %3926 = vmatpush2.msra.mxu0 0.0
      %3927 = vmatprep.subr.mxu0 0.0
      %3928 = vmatpush2.msra.mxu0 0.0
      %3929 = vmatprep.subr.mxu0 0.0
      %3930 = vmatpush2.msra.mxu0 0.0
      %3931 = vmatprep.subr.mxu0 0.0
      %3932 = vmatpush2.msra.mxu0 0.0
      %3933 = vmatprep.subr.mxu0 0.0
      %3934 = vmatpush2.msra.mxu0 0.0
      %3935 = vmatprep.subr.mxu0 0.0
      %3936 = vmatpush2.msra.mxu0 0.0
      %3937 = vmatprep.subr.mxu0 0.0
      %3938 = vmatpush2.msra.mxu0 0.0
      %3939 = vmatprep.subr.mxu0 0.0
      %3940 = vmatpush2.msra.mxu0 0.0
      %3941 = vmatprep.subr.mxu0 0.0
      %3942 = vmatpush2.msra.mxu0 0.0
      %3943 = vmatprep.subr.mxu0 0.0
      %3944 = vmatpush2.msra.mxu0 0.0
      %3945 = vmatprep.subr.mxu0 0.0
      %3946 = vmatpush2.msra.mxu0 0.0
      %3947 = vmatprep.subr.mxu0 0.0
      %3948 = vmatpush2.msra.mxu0 0.0
      %3949 = vmatprep.mubr.f32.mxu0 0.0
      %3950 = vmatmul.mubr.f32.gmra.mxu0 %v3862
      %v3951 = vpop.f32.mrf.mxu0
      %v3952 = vadd.f32 0.0, %v3951
      %v3953 = vpop.f32.mrf.mxu0
      %3954 = vmatprep.mubr.f32.mxu0 0.0
      %3955 = vmatmul.mubr.f32.gmra.mxu0 %v3865
      %v3956 = vpop.f32.mrf.mxu0
      %v3957 = vadd.f32 0.0, %v3956
      %v3958 = vpop.f32.mrf.mxu0
      %3959 = vmatprep.mubr.f32.mxu0 0.0
      %3960 = vmatmul.mubr.f32.gmra.mxu0 %v3868
      %v3961 = vpop.f32.mrf.mxu0
      %v3962 = vadd.f32 0.0, %v3961
      %v3963 = vpop.f32.mrf.mxu0
      %3964 = vmatprep.mubr.f32.mxu0 0.0
      %3965 = vmatmul.mubr.f32.gmra.mxu0 %v3871
      %v3966 = vpop.f32.mrf.mxu0
      %v3967 = vadd.f32 0.0, %v3966
      %v3968 = vpop.f32.mrf.mxu0
      %3969 = vmatprep.mubr.f32.mxu0 0.0
      %3970 = vmatmul.mubr.f32.gmra.mxu0 %v3874
      %v3971 = vpop.f32.mrf.mxu0
      %v3972 = vadd.f32 0.0, %v3971
      %v3973 = vpop.f32.mrf.mxu0
      %3974 = vmatprep.mubr.f32.mxu0 0.0
      %3975 = vmatmul.mubr.f32.gmra.mxu0 %v3877
      %v3976 = vpop.f32.mrf.mxu0
      %v3977 = vadd.f32 0.0, %v3976
      %v3978 = vpop.f32.mrf.mxu0
      %3979 = vmatprep.mubr.f32.mxu0 0.0
      %3980 = vmatmul.mubr.f32.gmra.mxu0 %v3880
      %v3981 = vpop.f32.mrf.mxu0
      %v3982 = vadd.f32 0.0, %v3981
      %v3983 = vpop.f32.mrf.mxu0
      %3984 = vmatprep.mubr.f32.mxu0 0.0
      %3985 = vmatmul.mubr.f32.gmra.mxu0 %v3883
      %v3986 = vpop.f32.mrf.mxu0
      %v3987 = vadd.f32 0.0, %v3986
      %v3988 = vpop.f32.mrf.mxu0
      %3989 = vdwg.mxu0
      %v3991 = vsel %vm1213, %v1996, 0
      %v3994 = vsel %vm1213, %v2072, 0
      %v3997 = vsel %vm1213, %v2148, 0
      %v4000 = vsel %vm1213, %v2224, 0
      %v4003 = vsel %vm1213, %v2300, 0
      %v4006 = vsel %vm1213, %v2376, 0
      %v4009 = vsel %vm1213, %v2452, 0
      %v4012 = vsel %vm1213, %v2528, 0
      %4014 = vmatprep.subr.mxu0 0.0
      %4015 = vmatpush1.msra.mxu0 0.0
      %4016 = vmatprep.subr.mxu0 0.0
      %4017 = vmatpush1.msra.mxu0 0.0
      %4018 = vmatprep.subr.mxu0 0.0
      %4019 = vmatpush1.msra.mxu0 0.0
      %4020 = vmatprep.subr.mxu0 0.0
      %4021 = vmatpush1.msra.mxu0 0.0
      %4022 = vmatprep.subr.mxu0 0.0
      %4023 = vmatpush1.msra.mxu0 0.0
      %4024 = vmatprep.subr.mxu0 0.0
      %4025 = vmatpush1.msra.mxu0 0.0
      %4026 = vmatprep.subr.mxu0 0.0
      %4027 = vmatpush1.msra.mxu0 0.0
      %4028 = vmatprep.subr.mxu0 0.0
      %4029 = vmatpush1.msra.mxu0 0.0
      %4030 = vmatprep.subr.mxu0 0.0
      %4031 = vmatpush1.msra.mxu0 0.0
      %4032 = vmatprep.subr.mxu0 0.0
      %4033 = vmatpush1.msra.mxu0 0.0
      %4034 = vmatprep.subr.mxu0 0.0
      %4035 = vmatpush1.msra.mxu0 0.0
      %4036 = vmatprep.subr.mxu0 0.0
      %4037 = vmatpush1.msra.mxu0 0.0
      %4038 = vmatprep.subr.mxu0 0.0
      %4039 = vmatpush1.msra.mxu0 0.0
      %4040 = vmatprep.subr.mxu0 0.0
      %4041 = vmatpush1.msra.mxu0 0.0
      %4042 = vmatprep.subr.mxu0 0.0
      %4043 = vmatpush1.msra.mxu0 0.0
      %4044 = vmatprep.subr.mxu0 0.0
      %4045 = vmatpush1.msra.mxu0 %v2531
      %4046 = vmatprep.subr.mxu0 0.0
      %4047 = vmatpush2.msra.mxu0 0.0
      %4048 = vmatprep.subr.mxu0 0.0
      %4049 = vmatpush2.msra.mxu0 0.0
      %4050 = vmatprep.subr.mxu0 0.0
      %4051 = vmatpush2.msra.mxu0 0.0
      %4052 = vmatprep.subr.mxu0 0.0
      %4053 = vmatpush2.msra.mxu0 0.0
      %4054 = vmatprep.subr.mxu0 0.0
      %4055 = vmatpush2.msra.mxu0 0.0
      %4056 = vmatprep.subr.mxu0 0.0
      %4057 = vmatpush2.msra.mxu0 0.0
      %4058 = vmatprep.subr.mxu0 0.0
      %4059 = vmatpush2.msra.mxu0 0.0
      %4060 = vmatprep.subr.mxu0 0.0
      %4061 = vmatpush2.msra.mxu0 0.0
      %4062 = vmatprep.subr.mxu0 0.0
      %4063 = vmatpush2.msra.mxu0 0.0
      %4064 = vmatprep.subr.mxu0 0.0
      %4065 = vmatpush2.msra.mxu0 0.0
      %4066 = vmatprep.subr.mxu0 0.0
      %4067 = vmatpush2.msra.mxu0 0.0
      %4068 = vmatprep.subr.mxu0 0.0
      %4069 = vmatpush2.msra.mxu0 0.0
      %4070 = vmatprep.subr.mxu0 0.0
      %4071 = vmatpush2.msra.mxu0 0.0
      %4072 = vmatprep.subr.mxu0 0.0
      %4073 = vmatpush2.msra.mxu0 0.0
      %4074 = vmatprep.subr.mxu0 0.0
      %4075 = vmatpush2.msra.mxu0 0.0
      %4076 = vmatprep.subr.mxu0 0.0
      %4077 = vmatpush2.msra.mxu0 0.0
      %4078 = vmatprep.mubr.f32.mxu0 0.0
      %4079 = vmatmul.mubr.f32.gmra.mxu0 %v3991
      %v4080 = vpop.f32.mrf.mxu0
      %v4081 = vadd.f32 %v3952, %v4080
      %v4082 = vpop.f32.mrf.mxu0
      %4083 = vmatprep.mubr.f32.mxu0 0.0
      %4084 = vmatmul.mubr.f32.gmra.mxu0 %v3994
      %v4085 = vpop.f32.mrf.mxu0
      %v4086 = vadd.f32 %v3957, %v4085
      %v4087 = vpop.f32.mrf.mxu0
      %4088 = vmatprep.mubr.f32.mxu0 0.0
      %4089 = vmatmul.mubr.f32.gmra.mxu0 %v3997
      %v4090 = vpop.f32.mrf.mxu0
      %v4091 = vadd.f32 %v3962, %v4090
      %v4092 = vpop.f32.mrf.mxu0
      %4093 = vmatprep.mubr.f32.mxu0 0.0
      %4094 = vmatmul.mubr.f32.gmra.mxu0 %v4000
      %v4095 = vpop.f32.mrf.mxu0
      %v4096 = vadd.f32 %v3967, %v4095
      %v4097 = vpop.f32.mrf.mxu0
      %4098 = vmatprep.mubr.f32.mxu0 0.0
      %4099 = vmatmul.mubr.f32.gmra.mxu0 %v4003
      %v4100 = vpop.f32.mrf.mxu0
      %v4101 = vadd.f32 %v3972, %v4100
      %v4102 = vpop.f32.mrf.mxu0
      %4103 = vmatprep.mubr.f32.mxu0 0.0
      %4104 = vmatmul.mubr.f32.gmra.mxu0 %v4006
      %v4105 = vpop.f32.mrf.mxu0
      %v4106 = vadd.f32 %v3977, %v4105
      %v4107 = vpop.f32.mrf.mxu0
      %4108 = vmatprep.mubr.f32.mxu0 0.0
      %4109 = vmatmul.mubr.f32.gmra.mxu0 %v4009
      %v4110 = vpop.f32.mrf.mxu0
      %v4111 = vadd.f32 %v3982, %v4110
      %v4112 = vpop.f32.mrf.mxu0
      %4113 = vmatprep.mubr.f32.mxu0 0.0
      %4114 = vmatmul.mubr.f32.gmra.mxu0 %v4012
      %v4115 = vpop.f32.mrf.mxu0
      %v4116 = vadd.f32 %v3987, %v4115
      %v4117 = vpop.f32.mrf.mxu0
      %4118 = vdwg.mxu0
      %4119 = vrot.lane.b32.xlu0 %v1172, 112
      %v4120 = vpop.permute.xlu0 %4119
      %4121 = vrot.lane.b32.xlu0 %v1172, 80
      %v4122 = vpop.permute.xlu0 %4121
      %v4123 = vsel %vm1213, %v4120, 0
      %v4125 = vsel %vm1213, %v4122, 0
      %4127 = vmatprep.subr.mxu0 0.0
      %4128 = vmatpush1.xpose.msra.mxu0 0.0
      %4129 = vmatprep.subr.mxu0 0.0
      %4130 = vmatpush1.xpose.msra.mxu0 0.0
      %4131 = vmatprep.subr.mxu0 0.0
      %4132 = vmatpush1.xpose.msra.mxu0 0.0
      %4133 = vmatprep.subr.mxu0 0.0
      %4134 = vmatpush1.xpose.msra.mxu0 0.0
      %4135 = vmatprep.subr.mxu0 0.0
      %4136 = vmatpush1.xpose.msra.mxu0 0.0
      %4137 = vmatprep.subr.mxu0 0.0
      %4138 = vmatpush1.xpose.msra.mxu0 0.0
      %4139 = vmatprep.subr.mxu0 0.0
      %4140 = vmatpush1.xpose.msra.mxu0 0.0
      %4141 = vmatprep.subr.mxu0 0.0
      %4142 = vmatpush1.xpose.msra.mxu0 0.0
      %4143 = vmatprep.subr.mxu0 0.0
      %4144 = vmatpush1.xpose.msra.mxu0 0.0
      %4145 = vmatprep.subr.mxu0 0.0
      %4146 = vmatpush1.xpose.msra.mxu0 0.0
      %4147 = vmatprep.subr.mxu0 0.0
      %4148 = vmatpush1.xpose.msra.mxu0 0.0
      %4149 = vmatprep.subr.mxu0 0.0
      %4150 = vmatpush1.xpose.msra.mxu0 0.0
      %4151 = vmatprep.subr.mxu0 0.0
      %4152 = vmatpush1.xpose.msra.mxu0 0.0
      %4153 = vmatprep.subr.mxu0 0.0
      %4154 = vmatpush1.xpose.msra.mxu0 0.0
      %4155 = vmatprep.subr.mxu0 0.0
      %4156 = vmatpush1.xpose.msra.mxu0 0.0
      %4157 = vmatprep.subr.mxu0 0.0
      %4158 = vmatpush1.xpose.msra.mxu0 %v4125
      %4159 = vmatprep.subr.mxu0 0.0
      %4160 = vmatpush2.xpose.msra.mxu0 0.0
      %4161 = vmatprep.subr.mxu0 0.0
      %4162 = vmatpush2.xpose.msra.mxu0 0.0
      %4163 = vmatprep.subr.mxu0 0.0
      %4164 = vmatpush2.xpose.msra.mxu0 0.0
      %4165 = vmatprep.subr.mxu0 0.0
      %4166 = vmatpush2.xpose.msra.mxu0 0.0
      %4167 = vmatprep.subr.mxu0 0.0
      %4168 = vmatpush2.xpose.msra.mxu0 0.0
      %4169 = vmatprep.subr.mxu0 0.0
      %4170 = vmatpush2.xpose.msra.mxu0 0.0
      %4171 = vmatprep.subr.mxu0 0.0
      %4172 = vmatpush2.xpose.msra.mxu0 0.0
      %4173 = vmatprep.subr.mxu0 0.0
      %4174 = vmatpush2.xpose.msra.mxu0 0.0
      %4175 = vmatprep.subr.mxu0 0.0
      %4176 = vmatpush2.xpose.msra.mxu0 0.0
      %4177 = vmatprep.subr.mxu0 0.0
      %4178 = vmatpush2.xpose.msra.mxu0 0.0
      %4179 = vmatprep.subr.mxu0 0.0
      %4180 = vmatpush2.xpose.msra.mxu0 0.0
      %4181 = vmatprep.subr.mxu0 0.0
      %4182 = vmatpush2.xpose.msra.mxu0 0.0
      %4183 = vmatprep.subr.mxu0 0.0
      %4184 = vmatpush2.xpose.msra.mxu0 0.0
      %4185 = vmatprep.subr.mxu0 0.0
      %4186 = vmatpush2.xpose.msra.mxu0 0.0
      %4187 = vmatprep.subr.mxu0 0.0
      %4188 = vmatpush2.xpose.msra.mxu0 0.0
      %4189 = vmatprep.subr.mxu0 0.0
      %4190 = vmatpush2.xpose.msra.mxu0 0.0
      %4191 = vmatprep.mubr.f32.mxu0 0.0
      %4192 = vmatmul.mubr.f32.gmra.mxu0 %v4123
      %v4193 = vpop.f32.mrf.mxu0
      %v4194 = vadd.f32 0.0, %v4193
      %v4195 = vpop.f32.mrf.mxu0
      %4196 = vdwg.mxu0
      %4197 = vrot.lane.b32.xlu0 %v1177, 112
      %v4198 = vpop.permute.xlu0 %4197
      %4199 = vrot.lane.b32.xlu0 %v1177, 80
      %v4200 = vpop.permute.xlu0 %4199
      %v4201 = vsel %vm1213, %v4198, 0
      %v4203 = vsel %vm1213, %v4200, 0
      %4205 = vmatprep.subr.mxu0 0.0
      %4206 = vmatpush1.xpose.msra.mxu0 0.0
      %4207 = vmatprep.subr.mxu0 0.0
      %4208 = vmatpush1.xpose.msra.mxu0 0.0
      %4209 = vmatprep.subr.mxu0 0.0
      %4210 = vmatpush1.xpose.msra.mxu0 0.0
      %4211 = vmatprep.subr.mxu0 0.0
      %4212 = vmatpush1.xpose.msra.mxu0 0.0
      %4213 = vmatprep.subr.mxu0 0.0
      %4214 = vmatpush1.xpose.msra.mxu0 0.0
      %4215 = vmatprep.subr.mxu0 0.0
      %4216 = vmatpush1.xpose.msra.mxu0 0.0
      %4217 = vmatprep.subr.mxu0 0.0
      %4218 = vmatpush1.xpose.msra.mxu0 0.0
      %4219 = vmatprep.subr.mxu0 0.0
      %4220 = vmatpush1.xpose.msra.mxu0 0.0
      %4221 = vmatprep.subr.mxu0 0.0
      %4222 = vmatpush1.xpose.msra.mxu0 0.0
      %4223 = vmatprep.subr.mxu0 0.0
      %4224 = vmatpush1.xpose.msra.mxu0 0.0
      %4225 = vmatprep.subr.mxu0 0.0
      %4226 = vmatpush1.xpose.msra.mxu0 0.0
      %4227 = vmatprep.subr.mxu0 0.0
      %4228 = vmatpush1.xpose.msra.mxu0 0.0
      %4229 = vmatprep.subr.mxu0 0.0
      %4230 = vmatpush1.xpose.msra.mxu0 0.0
      %4231 = vmatprep.subr.mxu0 0.0
      %4232 = vmatpush1.xpose.msra.mxu0 0.0
      %4233 = vmatprep.subr.mxu0 0.0
      %4234 = vmatpush1.xpose.msra.mxu0 0.0
      %4235 = vmatprep.subr.mxu0 0.0
      %4236 = vmatpush1.xpose.msra.mxu0 %v4203
      %4237 = vmatprep.subr.mxu0 0.0
      %4238 = vmatpush2.xpose.msra.mxu0 0.0
      %4239 = vmatprep.subr.mxu0 0.0
      %4240 = vmatpush2.xpose.msra.mxu0 0.0
      %4241 = vmatprep.subr.mxu0 0.0
      %4242 = vmatpush2.xpose.msra.mxu0 0.0
      %4243 = vmatprep.subr.mxu0 0.0
      %4244 = vmatpush2.xpose.msra.mxu0 0.0
      %4245 = vmatprep.subr.mxu0 0.0
      %4246 = vmatpush2.xpose.msra.mxu0 0.0
      %4247 = vmatprep.subr.mxu0 0.0
      %4248 = vmatpush2.xpose.msra.mxu0 0.0
      %4249 = vmatprep.subr.mxu0 0.0
      %4250 = vmatpush2.xpose.msra.mxu0 0.0
      %4251 = vmatprep.subr.mxu0 0.0
      %4252 = vmatpush2.xpose.msra.mxu0 0.0
      %4253 = vmatprep.subr.mxu0 0.0
      %4254 = vmatpush2.xpose.msra.mxu0 0.0
      %4255 = vmatprep.subr.mxu0 0.0
      %4256 = vmatpush2.xpose.msra.mxu0 0.0
      %4257 = vmatprep.subr.mxu0 0.0
      %4258 = vmatpush2.xpose.msra.mxu0 0.0
      %4259 = vmatprep.subr.mxu0 0.0
      %4260 = vmatpush2.xpose.msra.mxu0 0.0
      %4261 = vmatprep.subr.mxu0 0.0
      %4262 = vmatpush2.xpose.msra.mxu0 0.0
      %4263 = vmatprep.subr.mxu0 0.0
      %4264 = vmatpush2.xpose.msra.mxu0 0.0
      %4265 = vmatprep.subr.mxu0 0.0
      %4266 = vmatpush2.xpose.msra.mxu0 0.0
      %4267 = vmatprep.subr.mxu0 0.0
      %4268 = vmatpush2.xpose.msra.mxu0 0.0
      %4269 = vmatprep.mubr.f32.mxu0 0.0
      %4270 = vmatmul.mubr.f32.gmra.mxu0 %v4201
      %v4271 = vpop.f32.mrf.mxu0
      %v4272 = vadd.f32 0.0, %v4271
      %v4273 = vpop.f32.mrf.mxu0
      %4274 = vdwg.mxu0
      %4275 = vrot.lane.b32.xlu0 %v1182, 112
      %v4276 = vpop.permute.xlu0 %4275
      %4277 = vrot.lane.b32.xlu0 %v1182, 80
      %v4278 = vpop.permute.xlu0 %4277
      %v4279 = vsel %vm1213, %v4276, 0
      %v4281 = vsel %vm1213, %v4278, 0
      %4283 = vmatprep.subr.mxu0 0.0
      %4284 = vmatpush1.xpose.msra.mxu0 0.0
      %4285 = vmatprep.subr.mxu0 0.0
      %4286 = vmatpush1.xpose.msra.mxu0 0.0
      %4287 = vmatprep.subr.mxu0 0.0
      %4288 = vmatpush1.xpose.msra.mxu0 0.0
      %4289 = vmatprep.subr.mxu0 0.0
      %4290 = vmatpush1.xpose.msra.mxu0 0.0
      %4291 = vmatprep.subr.mxu0 0.0
      %4292 = vmatpush1.xpose.msra.mxu0 0.0
      %4293 = vmatprep.subr.mxu0 0.0
      %4294 = vmatpush1.xpose.msra.mxu0 0.0
      %4295 = vmatprep.subr.mxu0 0.0
      %4296 = vmatpush1.xpose.msra.mxu0 0.0
      %4297 = vmatprep.subr.mxu0 0.0
      %4298 = vmatpush1.xpose.msra.mxu0 0.0
      %4299 = vmatprep.subr.mxu0 0.0
      %4300 = vmatpush1.xpose.msra.mxu0 0.0
      %4301 = vmatprep.subr.mxu0 0.0
      %4302 = vmatpush1.xpose.msra.mxu0 0.0
      %4303 = vmatprep.subr.mxu0 0.0
      %4304 = vmatpush1.xpose.msra.mxu0 0.0
      %4305 = vmatprep.subr.mxu0 0.0
      %4306 = vmatpush1.xpose.msra.mxu0 0.0
      %4307 = vmatprep.subr.mxu0 0.0
      %4308 = vmatpush1.xpose.msra.mxu0 0.0
      %4309 = vmatprep.subr.mxu0 0.0
      %4310 = vmatpush1.xpose.msra.mxu0 0.0
      %4311 = vmatprep.subr.mxu0 0.0
      %4312 = vmatpush1.xpose.msra.mxu0 0.0
      %4313 = vmatprep.subr.mxu0 0.0
      %4314 = vmatpush1.xpose.msra.mxu0 %v4281
      %4315 = vmatprep.subr.mxu0 0.0
      %4316 = vmatpush2.xpose.msra.mxu0 0.0
      %4317 = vmatprep.subr.mxu0 0.0
      %4318 = vmatpush2.xpose.msra.mxu0 0.0
      %4319 = vmatprep.subr.mxu0 0.0
      %4320 = vmatpush2.xpose.msra.mxu0 0.0
      %4321 = vmatprep.subr.mxu0 0.0
      %4322 = vmatpush2.xpose.msra.mxu0 0.0
      %4323 = vmatprep.subr.mxu0 0.0
      %4324 = vmatpush2.xpose.msra.mxu0 0.0
      %4325 = vmatprep.subr.mxu0 0.0
      %4326 = vmatpush2.xpose.msra.mxu0 0.0
      %4327 = vmatprep.subr.mxu0 0.0
      %4328 = vmatpush2.xpose.msra.mxu0 0.0
      %4329 = vmatprep.subr.mxu0 0.0
      %4330 = vmatpush2.xpose.msra.mxu0 0.0
      %4331 = vmatprep.subr.mxu0 0.0
      %4332 = vmatpush2.xpose.msra.mxu0 0.0
      %4333 = vmatprep.subr.mxu0 0.0
      %4334 = vmatpush2.xpose.msra.mxu0 0.0
      %4335 = vmatprep.subr.mxu0 0.0
      %4336 = vmatpush2.xpose.msra.mxu0 0.0
      %4337 = vmatprep.subr.mxu0 0.0
      %4338 = vmatpush2.xpose.msra.mxu0 0.0
      %4339 = vmatprep.subr.mxu0 0.0
      %4340 = vmatpush2.xpose.msra.mxu0 0.0
      %4341 = vmatprep.subr.mxu0 0.0
      %4342 = vmatpush2.xpose.msra.mxu0 0.0
      %4343 = vmatprep.subr.mxu0 0.0
      %4344 = vmatpush2.xpose.msra.mxu0 0.0
      %4345 = vmatprep.subr.mxu0 0.0
      %4346 = vmatpush2.xpose.msra.mxu0 0.0
      %4347 = vmatprep.mubr.f32.mxu0 0.0
      %4348 = vmatmul.mubr.f32.gmra.mxu0 %v4279
      %v4349 = vpop.f32.mrf.mxu0
      %v4350 = vadd.f32 0.0, %v4349
      %v4351 = vpop.f32.mrf.mxu0
      %4352 = vdwg.mxu0
      %4353 = vrot.lane.b32.xlu0 %v1187, 112
      %v4354 = vpop.permute.xlu0 %4353
      %4355 = vrot.lane.b32.xlu0 %v1187, 80
      %v4356 = vpop.permute.xlu0 %4355
      %v4357 = vsel %vm1213, %v4354, 0
      %v4359 = vsel %vm1213, %v4356, 0
      %4361 = vmatprep.subr.mxu0 0.0
      %4362 = vmatpush1.xpose.msra.mxu0 0.0
      %4363 = vmatprep.subr.mxu0 0.0
      %4364 = vmatpush1.xpose.msra.mxu0 0.0
      %4365 = vmatprep.subr.mxu0 0.0
      %4366 = vmatpush1.xpose.msra.mxu0 0.0
      %4367 = vmatprep.subr.mxu0 0.0
      %4368 = vmatpush1.xpose.msra.mxu0 0.0
      %4369 = vmatprep.subr.mxu0 0.0
      %4370 = vmatpush1.xpose.msra.mxu0 0.0
      %4371 = vmatprep.subr.mxu0 0.0
      %4372 = vmatpush1.xpose.msra.mxu0 0.0
      %4373 = vmatprep.subr.mxu0 0.0
      %4374 = vmatpush1.xpose.msra.mxu0 0.0
      %4375 = vmatprep.subr.mxu0 0.0
      %4376 = vmatpush1.xpose.msra.mxu0 0.0
      %4377 = vmatprep.subr.mxu0 0.0
      %4378 = vmatpush1.xpose.msra.mxu0 0.0
      %4379 = vmatprep.subr.mxu0 0.0
      %4380 = vmatpush1.xpose.msra.mxu0 0.0
      %4381 = vmatprep.subr.mxu0 0.0
      %4382 = vmatpush1.xpose.msra.mxu0 0.0
      %4383 = vmatprep.subr.mxu0 0.0
      %4384 = vmatpush1.xpose.msra.mxu0 0.0
      %4385 = vmatprep.subr.mxu0 0.0
      %4386 = vmatpush1.xpose.msra.mxu0 0.0
      %4387 = vmatprep.subr.mxu0 0.0
      %4388 = vmatpush1.xpose.msra.mxu0 0.0
      %4389 = vmatprep.subr.mxu0 0.0
      %4390 = vmatpush1.xpose.msra.mxu0 0.0
      %4391 = vmatprep.subr.mxu0 0.0
      %4392 = vmatpush1.xpose.msra.mxu0 %v4359
      %4393 = vmatprep.subr.mxu0 0.0
      %4394 = vmatpush2.xpose.msra.mxu0 0.0
      %4395 = vmatprep.subr.mxu0 0.0
      %4396 = vmatpush2.xpose.msra.mxu0 0.0
      %4397 = vmatprep.subr.mxu0 0.0
      %4398 = vmatpush2.xpose.msra.mxu0 0.0
      %4399 = vmatprep.subr.mxu0 0.0
      %4400 = vmatpush2.xpose.msra.mxu0 0.0
      %4401 = vmatprep.subr.mxu0 0.0
      %4402 = vmatpush2.xpose.msra.mxu0 0.0
      %4403 = vmatprep.subr.mxu0 0.0
      %4404 = vmatpush2.xpose.msra.mxu0 0.0
      %4405 = vmatprep.subr.mxu0 0.0
      %4406 = vmatpush2.xpose.msra.mxu0 0.0
      %4407 = vmatprep.subr.mxu0 0.0
      %4408 = vmatpush2.xpose.msra.mxu0 0.0
      %4409 = vmatprep.subr.mxu0 0.0
      %4410 = vmatpush2.xpose.msra.mxu0 0.0
      %4411 = vmatprep.subr.mxu0 0.0
      %4412 = vmatpush2.xpose.msra.mxu0 0.0
      %4413 = vmatprep.subr.mxu0 0.0
      %4414 = vmatpush2.xpose.msra.mxu0 0.0
      %4415 = vmatprep.subr.mxu0 0.0
      %4416 = vmatpush2.xpose.msra.mxu0 0.0
      %4417 = vmatprep.subr.mxu0 0.0
      %4418 = vmatpush2.xpose.msra.mxu0 0.0
      %4419 = vmatprep.subr.mxu0 0.0
      %4420 = vmatpush2.xpose.msra.mxu0 0.0
      %4421 = vmatprep.subr.mxu0 0.0
      %4422 = vmatpush2.xpose.msra.mxu0 0.0
      %4423 = vmatprep.subr.mxu0 0.0
      %4424 = vmatpush2.xpose.msra.mxu0 0.0
      %4425 = vmatprep.mubr.f32.mxu0 0.0
      %4426 = vmatmul.mubr.f32.gmra.mxu0 %v4357
      %v4427 = vpop.f32.mrf.mxu0
      %v4428 = vadd.f32 0.0, %v4427
      %v4429 = vpop.f32.mrf.mxu0
      %4430 = vdwg.mxu0
      %4431 = vrot.lane.b32.xlu0 %v1192, 112
      %v4432 = vpop.permute.xlu0 %4431
      %4433 = vrot.lane.b32.xlu0 %v1192, 80
      %v4434 = vpop.permute.xlu0 %4433
      %v4435 = vsel %vm1213, %v4432, 0
      %v4437 = vsel %vm1213, %v4434, 0
      %4439 = vmatprep.subr.mxu0 0.0
      %4440 = vmatpush1.xpose.msra.mxu0 0.0
      %4441 = vmatprep.subr.mxu0 0.0
      %4442 = vmatpush1.xpose.msra.mxu0 0.0
      %4443 = vmatprep.subr.mxu0 0.0
      %4444 = vmatpush1.xpose.msra.mxu0 0.0
      %4445 = vmatprep.subr.mxu0 0.0
      %4446 = vmatpush1.xpose.msra.mxu0 0.0
      %4447 = vmatprep.subr.mxu0 0.0
      %4448 = vmatpush1.xpose.msra.mxu0 0.0
      %4449 = vmatprep.subr.mxu0 0.0
      %4450 = vmatpush1.xpose.msra.mxu0 0.0
      %4451 = vmatprep.subr.mxu0 0.0
      %4452 = vmatpush1.xpose.msra.mxu0 0.0
      %4453 = vmatprep.subr.mxu0 0.0
      %4454 = vmatpush1.xpose.msra.mxu0 0.0
      %4455 = vmatprep.subr.mxu0 0.0
      %4456 = vmatpush1.xpose.msra.mxu0 0.0
      %4457 = vmatprep.subr.mxu0 0.0
      %4458 = vmatpush1.xpose.msra.mxu0 0.0
      %4459 = vmatprep.subr.mxu0 0.0
      %4460 = vmatpush1.xpose.msra.mxu0 0.0
      %4461 = vmatprep.subr.mxu0 0.0
      %4462 = vmatpush1.xpose.msra.mxu0 0.0
      %4463 = vmatprep.subr.mxu0 0.0
      %4464 = vmatpush1.xpose.msra.mxu0 0.0
      %4465 = vmatprep.subr.mxu0 0.0
      %4466 = vmatpush1.xpose.msra.mxu0 0.0
      %4467 = vmatprep.subr.mxu0 0.0
      %4468 = vmatpush1.xpose.msra.mxu0 0.0
      %4469 = vmatprep.subr.mxu0 0.0
      %4470 = vmatpush1.xpose.msra.mxu0 %v4437
      %4471 = vmatprep.subr.mxu0 0.0
      %4472 = vmatpush2.xpose.msra.mxu0 0.0
      %4473 = vmatprep.subr.mxu0 0.0
      %4474 = vmatpush2.xpose.msra.mxu0 0.0
      %4475 = vmatprep.subr.mxu0 0.0
      %4476 = vmatpush2.xpose.msra.mxu0 0.0
      %4477 = vmatprep.subr.mxu0 0.0
      %4478 = vmatpush2.xpose.msra.mxu0 0.0
      %4479 = vmatprep.subr.mxu0 0.0
      %4480 = vmatpush2.xpose.msra.mxu0 0.0
      %4481 = vmatprep.subr.mxu0 0.0
      %4482 = vmatpush2.xpose.msra.mxu0 0.0
      %4483 = vmatprep.subr.mxu0 0.0
      %4484 = vmatpush2.xpose.msra.mxu0 0.0
      %4485 = vmatprep.subr.mxu0 0.0
      %4486 = vmatpush2.xpose.msra.mxu0 0.0
      %4487 = vmatprep.subr.mxu0 0.0
      %4488 = vmatpush2.xpose.msra.mxu0 0.0
      %4489 = vmatprep.subr.mxu0 0.0
      %4490 = vmatpush2.xpose.msra.mxu0 0.0
      %4491 = vmatprep.subr.mxu0 0.0
      %4492 = vmatpush2.xpose.msra.mxu0 0.0
      %4493 = vmatprep.subr.mxu0 0.0
      %4494 = vmatpush2.xpose.msra.mxu0 0.0
      %4495 = vmatprep.subr.mxu0 0.0
      %4496 = vmatpush2.xpose.msra.mxu0 0.0
      %4497 = vmatprep.subr.mxu0 0.0
      %4498 = vmatpush2.xpose.msra.mxu0 0.0
      %4499 = vmatprep.subr.mxu0 0.0
      %4500 = vmatpush2.xpose.msra.mxu0 0.0
      %4501 = vmatprep.subr.mxu0 0.0
      %4502 = vmatpush2.xpose.msra.mxu0 0.0
      %4503 = vmatprep.mubr.f32.mxu0 0.0
      %4504 = vmatmul.mubr.f32.gmra.mxu0 %v4435
      %v4505 = vpop.f32.mrf.mxu0
      %v4506 = vadd.f32 0.0, %v4505
      %v4507 = vpop.f32.mrf.mxu0
      %4508 = vdwg.mxu0
      %4509 = vrot.lane.b32.xlu0 %v1197, 112
      %v4510 = vpop.permute.xlu0 %4509
      %4511 = vrot.lane.b32.xlu0 %v1197, 80
      %v4512 = vpop.permute.xlu0 %4511
      %v4513 = vsel %vm1213, %v4510, 0
      %v4515 = vsel %vm1213, %v4512, 0
      %4517 = vmatprep.subr.mxu0 0.0
      %4518 = vmatpush1.xpose.msra.mxu0 0.0
      %4519 = vmatprep.subr.mxu0 0.0
      %4520 = vmatpush1.xpose.msra.mxu0 0.0
      %4521 = vmatprep.subr.mxu0 0.0
      %4522 = vmatpush1.xpose.msra.mxu0 0.0
      %4523 = vmatprep.subr.mxu0 0.0
      %4524 = vmatpush1.xpose.msra.mxu0 0.0
      %4525 = vmatprep.subr.mxu0 0.0
      %4526 = vmatpush1.xpose.msra.mxu0 0.0
      %4527 = vmatprep.subr.mxu0 0.0
      %4528 = vmatpush1.xpose.msra.mxu0 0.0
      %4529 = vmatprep.subr.mxu0 0.0
      %4530 = vmatpush1.xpose.msra.mxu0 0.0
      %4531 = vmatprep.subr.mxu0 0.0
      %4532 = vmatpush1.xpose.msra.mxu0 0.0
      %4533 = vmatprep.subr.mxu0 0.0
      %4534 = vmatpush1.xpose.msra.mxu0 0.0
      %4535 = vmatprep.subr.mxu0 0.0
      %4536 = vmatpush1.xpose.msra.mxu0 0.0
      %4537 = vmatprep.subr.mxu0 0.0
      %4538 = vmatpush1.xpose.msra.mxu0 0.0
      %4539 = vmatprep.subr.mxu0 0.0
      %4540 = vmatpush1.xpose.msra.mxu0 0.0
      %4541 = vmatprep.subr.mxu0 0.0
      %4542 = vmatpush1.xpose.msra.mxu0 0.0
      %4543 = vmatprep.subr.mxu0 0.0
      %4544 = vmatpush1.xpose.msra.mxu0 0.0
      %4545 = vmatprep.subr.mxu0 0.0
      %4546 = vmatpush1.xpose.msra.mxu0 0.0
      %4547 = vmatprep.subr.mxu0 0.0
      %4548 = vmatpush1.xpose.msra.mxu0 %v4515
      %4549 = vmatprep.subr.mxu0 0.0
      %4550 = vmatpush2.xpose.msra.mxu0 0.0
      %4551 = vmatprep.subr.mxu0 0.0
      %4552 = vmatpush2.xpose.msra.mxu0 0.0
      %4553 = vmatprep.subr.mxu0 0.0
      %4554 = vmatpush2.xpose.msra.mxu0 0.0
      %4555 = vmatprep.subr.mxu0 0.0
      %4556 = vmatpush2.xpose.msra.mxu0 0.0
      %4557 = vmatprep.subr.mxu0 0.0
      %4558 = vmatpush2.xpose.msra.mxu0 0.0
      %4559 = vmatprep.subr.mxu0 0.0
      %4560 = vmatpush2.xpose.msra.mxu0 0.0
      %4561 = vmatprep.subr.mxu0 0.0
      %4562 = vmatpush2.xpose.msra.mxu0 0.0
      %4563 = vmatprep.subr.mxu0 0.0
      %4564 = vmatpush2.xpose.msra.mxu0 0.0
      %4565 = vmatprep.subr.mxu0 0.0
      %4566 = vmatpush2.xpose.msra.mxu0 0.0
      %4567 = vmatprep.subr.mxu0 0.0
      %4568 = vmatpush2.xpose.msra.mxu0 0.0
      %4569 = vmatprep.subr.mxu0 0.0
      %4570 = vmatpush2.xpose.msra.mxu0 0.0
      %4571 = vmatprep.subr.mxu0 0.0
      %4572 = vmatpush2.xpose.msra.mxu0 0.0
      %4573 = vmatprep.subr.mxu0 0.0
      %4574 = vmatpush2.xpose.msra.mxu0 0.0
      %4575 = vmatprep.subr.mxu0 0.0
      %4576 = vmatpush2.xpose.msra.mxu0 0.0
      %4577 = vmatprep.subr.mxu0 0.0
      %4578 = vmatpush2.xpose.msra.mxu0 0.0
      %4579 = vmatprep.subr.mxu0 0.0
      %4580 = vmatpush2.xpose.msra.mxu0 0.0
      %4581 = vmatprep.mubr.f32.mxu0 0.0
      %4582 = vmatmul.mubr.f32.gmra.mxu0 %v4513
      %v4583 = vpop.f32.mrf.mxu0
      %v4584 = vadd.f32 0.0, %v4583
      %v4585 = vpop.f32.mrf.mxu0
      %4586 = vdwg.mxu0
      %4587 = vrot.lane.b32.xlu0 %v1202, 112
      %v4588 = vpop.permute.xlu0 %4587
      %4589 = vrot.lane.b32.xlu0 %v1202, 80
      %v4590 = vpop.permute.xlu0 %4589
      %v4591 = vsel %vm1213, %v4588, 0
      %v4593 = vsel %vm1213, %v4590, 0
      %4595 = vmatprep.subr.mxu0 0.0
      %4596 = vmatpush1.xpose.msra.mxu0 0.0
      %4597 = vmatprep.subr.mxu0 0.0
      %4598 = vmatpush1.xpose.msra.mxu0 0.0
      %4599 = vmatprep.subr.mxu0 0.0
      %4600 = vmatpush1.xpose.msra.mxu0 0.0
      %4601 = vmatprep.subr.mxu0 0.0
      %4602 = vmatpush1.xpose.msra.mxu0 0.0
      %4603 = vmatprep.subr.mxu0 0.0
      %4604 = vmatpush1.xpose.msra.mxu0 0.0
      %4605 = vmatprep.subr.mxu0 0.0
      %4606 = vmatpush1.xpose.msra.mxu0 0.0
      %4607 = vmatprep.subr.mxu0 0.0
      %4608 = vmatpush1.xpose.msra.mxu0 0.0
      %4609 = vmatprep.subr.mxu0 0.0
      %4610 = vmatpush1.xpose.msra.mxu0 0.0
      %4611 = vmatprep.subr.mxu0 0.0
      %4612 = vmatpush1.xpose.msra.mxu0 0.0
      %4613 = vmatprep.subr.mxu0 0.0
      %4614 = vmatpush1.xpose.msra.mxu0 0.0
      %4615 = vmatprep.subr.mxu0 0.0
      %4616 = vmatpush1.xpose.msra.mxu0 0.0
      %4617 = vmatprep.subr.mxu0 0.0
      %4618 = vmatpush1.xpose.msra.mxu0 0.0
      %4619 = vmatprep.subr.mxu0 0.0
      %4620 = vmatpush1.xpose.msra.mxu0 0.0
      %4621 = vmatprep.subr.mxu0 0.0
      %4622 = vmatpush1.xpose.msra.mxu0 0.0
      %4623 = vmatprep.subr.mxu0 0.0
      %4624 = vmatpush1.xpose.msra.mxu0 0.0
      %4625 = vmatprep.subr.mxu0 0.0
      %4626 = vmatpush1.xpose.msra.mxu0 %v4593
      %4627 = vmatprep.subr.mxu0 0.0
      %4628 = vmatpush2.xpose.msra.mxu0 0.0
      %4629 = vmatprep.subr.mxu0 0.0
      %4630 = vmatpush2.xpose.msra.mxu0 0.0
      %4631 = vmatprep.subr.mxu0 0.0
      %4632 = vmatpush2.xpose.msra.mxu0 0.0
      %4633 = vmatprep.subr.mxu0 0.0
      %4634 = vmatpush2.xpose.msra.mxu0 0.0
      %4635 = vmatprep.subr.mxu0 0.0
      %4636 = vmatpush2.xpose.msra.mxu0 0.0
      %4637 = vmatprep.subr.mxu0 0.0
      %4638 = vmatpush2.xpose.msra.mxu0 0.0
      %4639 = vmatprep.subr.mxu0 0.0
      %4640 = vmatpush2.xpose.msra.mxu0 0.0
      %4641 = vmatprep.subr.mxu0 0.0
      %4642 = vmatpush2.xpose.msra.mxu0 0.0
      %4643 = vmatprep.subr.mxu0 0.0
      %4644 = vmatpush2.xpose.msra.mxu0 0.0
      %4645 = vmatprep.subr.mxu0 0.0
      %4646 = vmatpush2.xpose.msra.mxu0 0.0
      %4647 = vmatprep.subr.mxu0 0.0
      %4648 = vmatpush2.xpose.msra.mxu0 0.0
      %4649 = vmatprep.subr.mxu0 0.0
      %4650 = vmatpush2.xpose.msra.mxu0 0.0
      %4651 = vmatprep.subr.mxu0 0.0
      %4652 = vmatpush2.xpose.msra.mxu0 0.0
      %4653 = vmatprep.subr.mxu0 0.0
      %4654 = vmatpush2.xpose.msra.mxu0 0.0
      %4655 = vmatprep.subr.mxu0 0.0
      %4656 = vmatpush2.xpose.msra.mxu0 0.0
      %4657 = vmatprep.subr.mxu0 0.0
      %4658 = vmatpush2.xpose.msra.mxu0 0.0
      %4659 = vmatprep.mubr.f32.mxu0 0.0
      %4660 = vmatmul.mubr.f32.gmra.mxu0 %v4591
      %v4661 = vpop.f32.mrf.mxu0
      %v4662 = vadd.f32 0.0, %v4661
      %v4663 = vpop.f32.mrf.mxu0
      %4664 = vdwg.mxu0
      %4665 = vrot.lane.b32.xlu0 %v1207, 112
      %v4666 = vpop.permute.xlu0 %4665
      %4667 = vrot.lane.b32.xlu0 %v1207, 80
      %v4668 = vpop.permute.xlu0 %4667
      %v4669 = vsel %vm1213, %v4666, 0
      %v4671 = vsel %vm1213, %v4668, 0
      %4673 = vmatprep.subr.mxu0 0.0
      %4674 = vmatpush1.xpose.msra.mxu0 0.0
      %4675 = vmatprep.subr.mxu0 0.0
      %4676 = vmatpush1.xpose.msra.mxu0 0.0
      %4677 = vmatprep.subr.mxu0 0.0
      %4678 = vmatpush1.xpose.msra.mxu0 0.0
      %4679 = vmatprep.subr.mxu0 0.0
      %4680 = vmatpush1.xpose.msra.mxu0 0.0
      %4681 = vmatprep.subr.mxu0 0.0
      %4682 = vmatpush1.xpose.msra.mxu0 0.0
      %4683 = vmatprep.subr.mxu0 0.0
      %4684 = vmatpush1.xpose.msra.mxu0 0.0
      %4685 = vmatprep.subr.mxu0 0.0
      %4686 = vmatpush1.xpose.msra.mxu0 0.0
      %4687 = vmatprep.subr.mxu0 0.0
      %4688 = vmatpush1.xpose.msra.mxu0 0.0
      %4689 = vmatprep.subr.mxu0 0.0
      %4690 = vmatpush1.xpose.msra.mxu0 0.0
      %4691 = vmatprep.subr.mxu0 0.0
      %4692 = vmatpush1.xpose.msra.mxu0 0.0
      %4693 = vmatprep.subr.mxu0 0.0
      %4694 = vmatpush1.xpose.msra.mxu0 0.0
      %4695 = vmatprep.subr.mxu0 0.0
      %4696 = vmatpush1.xpose.msra.mxu0 0.0
      %4697 = vmatprep.subr.mxu0 0.0
      %4698 = vmatpush1.xpose.msra.mxu0 0.0
      %4699 = vmatprep.subr.mxu0 0.0
      %4700 = vmatpush1.xpose.msra.mxu0 0.0
      %4701 = vmatprep.subr.mxu0 0.0
      %4702 = vmatpush1.xpose.msra.mxu0 0.0
      %4703 = vmatprep.subr.mxu0 0.0
      %4704 = vmatpush1.xpose.msra.mxu0 %v4671
      %4705 = vmatprep.subr.mxu0 0.0
      %4706 = vmatpush2.xpose.msra.mxu0 0.0
      %4707 = vmatprep.subr.mxu0 0.0
      %4708 = vmatpush2.xpose.msra.mxu0 0.0
      %4709 = vmatprep.subr.mxu0 0.0
      %4710 = vmatpush2.xpose.msra.mxu0 0.0
      %4711 = vmatprep.subr.mxu0 0.0
      %4712 = vmatpush2.xpose.msra.mxu0 0.0
      %4713 = vmatprep.subr.mxu0 0.0
      %4714 = vmatpush2.xpose.msra.mxu0 0.0
      %4715 = vmatprep.subr.mxu0 0.0
      %4716 = vmatpush2.xpose.msra.mxu0 0.0
      %4717 = vmatprep.subr.mxu0 0.0
      %4718 = vmatpush2.xpose.msra.mxu0 0.0
      %4719 = vmatprep.subr.mxu0 0.0
      %4720 = vmatpush2.xpose.msra.mxu0 0.0
      %4721 = vmatprep.subr.mxu0 0.0
      %4722 = vmatpush2.xpose.msra.mxu0 0.0
      %4723 = vmatprep.subr.mxu0 0.0
      %4724 = vmatpush2.xpose.msra.mxu0 0.0
      %4725 = vmatprep.subr.mxu0 0.0
      %4726 = vmatpush2.xpose.msra.mxu0 0.0
      %4727 = vmatprep.subr.mxu0 0.0
      %4728 = vmatpush2.xpose.msra.mxu0 0.0
      %4729 = vmatprep.subr.mxu0 0.0
      %4730 = vmatpush2.xpose.msra.mxu0 0.0
      %4731 = vmatprep.subr.mxu0 0.0
      %4732 = vmatpush2.xpose.msra.mxu0 0.0
      %4733 = vmatprep.subr.mxu0 0.0
      %4734 = vmatpush2.xpose.msra.mxu0 0.0
      %4735 = vmatprep.subr.mxu0 0.0
      %4736 = vmatpush2.xpose.msra.mxu0 0.0
      %4737 = vmatprep.mubr.f32.mxu0 0.0
      %4738 = vmatmul.mubr.f32.gmra.mxu0 %v4669
      %v4739 = vpop.f32.mrf.mxu0
      %v4740 = vadd.f32 0.0, %v4739
      %v4741 = vpop.f32.mrf.mxu0
      %4742 = vdwg.mxu0
      %v4743 = vmul.f32 %v4194, 0.35355338
      %v4744 = vmul.f32 %v4272, 0.35355338
      %v4745 = vmul.f32 %v4350, 0.35355338
      %v4746 = vmul.f32 %v4428, 0.35355338
      %v4747 = vmul.f32 %v4506, 0.35355338
      %v4748 = vmul.f32 %v4584, 0.35355338
      %v4749 = vmul.f32 %v4662, 0.35355338
      %v4750 = vmul.f32 %v4740, 0.35355338
      %v4751 = vsel %vm1213, %v4743, -inf
      %4752 = vmax.xlane.f32.xlu0 %v4751
      %v4753 = vpop.xlane.xlu0 %4752
      %v4754 = vsel %vm1213, %v4744, -inf
      %4755 = vmax.xlane.f32.xlu0 %v4754
      %v4756 = vpop.xlane.xlu0 %4755
      %v4757 = vsel %vm1213, %v4745, -inf
      %4758 = vmax.xlane.f32.xlu0 %v4757
      %v4759 = vpop.xlane.xlu0 %4758
      %v4760 = vsel %vm1213, %v4746, -inf
      %4761 = vmax.xlane.f32.xlu0 %v4760
      %v4762 = vpop.xlane.xlu0 %4761
      %v4763 = vsel %vm1213, %v4747, -inf
      %4764 = vmax.xlane.f32.xlu0 %v4763
      %v4765 = vpop.xlane.xlu0 %4764
      %v4766 = vsel %vm1213, %v4748, -inf
      %4767 = vmax.xlane.f32.xlu0 %v4766
      %v4768 = vpop.xlane.xlu0 %4767
      %v4769 = vsel %vm1213, %v4749, -inf
      %4770 = vmax.xlane.f32.xlu0 %v4769
      %v4771 = vpop.xlane.xlu0 %4770
      %v4772 = vsel %vm1213, %v4750, -inf
      %4773 = vmax.xlane.f32.xlu0 %v4772
      %v4774 = vpop.xlane.xlu0 %4773
      %v4775 = vsub.f32 %v4743, %v4753
      %v4776 = vsub.f32 %v4744, %v4756
      %v4777 = vsub.f32 %v4745, %v4759
      %v4778 = vsub.f32 %v4746, %v4762
      %v4779 = vsub.f32 %v4747, %v4765
      %v4780 = vsub.f32 %v4748, %v4768
      %v4781 = vsub.f32 %v4749, %v4771
      %v4782 = vsub.f32 %v4750, %v4774
      %v4783 = vmul.f32 %v4775, 1.442695
      %v4784 = vpow.pop %v4783
      %v4785 = vmul.f32 %v4776, 1.442695
      %v4786 = vpow.pop %v4785
      %v4787 = vmul.f32 %v4777, 1.442695
      %v4788 = vpow.pop %v4787
      %v4789 = vmul.f32 %v4778, 1.442695
      %v4790 = vpow.pop %v4789
      %v4791 = vmul.f32 %v4779, 1.442695
      %v4792 = vpow.pop %v4791
      %v4793 = vmul.f32 %v4780, 1.442695
      %v4794 = vpow.pop %v4793
      %v4795 = vmul.f32 %v4781, 1.442695
      %v4796 = vpow.pop %v4795
      %v4797 = vmul.f32 %v4782, 1.442695
      %v4798 = vpow.pop %v4797
      %v4799 = vsel %vm1213, %v4784, 0.0
      %4800 = vadd.xlane.f32.xlu0 %v4799
      %v4801 = vpop.xlane.xlu0 %4800
      %v4802 = vsel %vm1213, %v4786, 0.0
      %4803 = vadd.xlane.f32.xlu0 %v4802
      %v4804 = vpop.xlane.xlu0 %4803
      %v4805 = vsel %vm1213, %v4788, 0.0
      %4806 = vadd.xlane.f32.xlu0 %v4805
      %v4807 = vpop.xlane.xlu0 %4806
      %v4808 = vsel %vm1213, %v4790, 0.0
      %4809 = vadd.xlane.f32.xlu0 %v4808
      %v4810 = vpop.xlane.xlu0 %4809
      %v4811 = vsel %vm1213, %v4792, 0.0
      %4812 = vadd.xlane.f32.xlu0 %v4811
      %v4813 = vpop.xlane.xlu0 %4812
      %v4814 = vsel %vm1213, %v4794, 0.0
      %4815 = vadd.xlane.f32.xlu0 %v4814
      %v4816 = vpop.xlane.xlu0 %4815
      %v4817 = vsel %vm1213, %v4796, 0.0
      %4818 = vadd.xlane.f32.xlu0 %v4817
      %v4819 = vpop.xlane.xlu0 %4818
      %v4820 = vsel %vm1213, %v4798, 0.0
      %4821 = vadd.xlane.f32.xlu0 %v4820
      %v4822 = vpop.xlane.xlu0 %4821
      %v4823 = vrcp.pop %v4801
      %v4824 = vmul.f32 %v4784, %v4823
      %v4825 = vrcp.pop %v4804
      %v4826 = vmul.f32 %v4786, %v4825
      %v4827 = vrcp.pop %v4807
      %v4828 = vmul.f32 %v4788, %v4827
      %v4829 = vrcp.pop %v4810
      %v4830 = vmul.f32 %v4790, %v4829
      %v4831 = vrcp.pop %v4813
      %v4832 = vmul.f32 %v4792, %v4831
      %v4833 = vrcp.pop %v4816
      %v4834 = vmul.f32 %v4794, %v4833
      %v4835 = vrcp.pop %v4819
      %v4836 = vmul.f32 %v4796, %v4835
      %v4837 = vrcp.pop %v4822
      %v4838 = vmul.f32 %v4798, %v4837
      %4839 = vrot.lane.b32.xlu0 %v1172, 48
      %v4840 = vpop.permute.xlu0 %4839
      %v4843 = vsel %vm1213, %v4824, 0
      %4845 = vmatprep.subr.mxu0 0.0
      %4846 = vmatpush1.msra.mxu0 0.0
      %4847 = vmatprep.subr.mxu0 0.0
      %4848 = vmatpush1.msra.mxu0 0.0
      %4849 = vmatprep.subr.mxu0 0.0
      %4850 = vmatpush1.msra.mxu0 0.0
      %4851 = vmatprep.subr.mxu0 0.0
      %4852 = vmatpush1.msra.mxu0 0.0
      %4853 = vmatprep.subr.mxu0 0.0
      %4854 = vmatpush1.msra.mxu0 0.0
      %4855 = vmatprep.subr.mxu0 0.0
      %4856 = vmatpush1.msra.mxu0 0.0
      %4857 = vmatprep.subr.mxu0 0.0
      %4858 = vmatpush1.msra.mxu0 0.0
      %4859 = vmatprep.subr.mxu0 0.0
      %4860 = vmatpush1.msra.mxu0 0.0
      %4861 = vmatprep.subr.mxu0 0.0
      %4862 = vmatpush1.msra.mxu0 0.0
      %4863 = vmatprep.subr.mxu0 0.0
      %4864 = vmatpush1.msra.mxu0 0.0
      %4865 = vmatprep.subr.mxu0 0.0
      %4866 = vmatpush1.msra.mxu0 0.0
      %4867 = vmatprep.subr.mxu0 0.0
      %4868 = vmatpush1.msra.mxu0 0.0
      %4869 = vmatprep.subr.mxu0 0.0
      %4870 = vmatpush1.msra.mxu0 0.0
      %4871 = vmatprep.subr.mxu0 0.0
      %4872 = vmatpush1.msra.mxu0 0.0
      %4873 = vmatprep.subr.mxu0 0.0
      %4874 = vmatpush1.msra.mxu0 0.0
      %4875 = vmatprep.subr.mxu0 0.0
      %4876 = vmatpush1.msra.mxu0 %v4840
      %4877 = vmatprep.subr.mxu0 0.0
      %4878 = vmatpush2.msra.mxu0 0.0
      %4879 = vmatprep.subr.mxu0 0.0
      %4880 = vmatpush2.msra.mxu0 0.0
      %4881 = vmatprep.subr.mxu0 0.0
      %4882 = vmatpush2.msra.mxu0 0.0
      %4883 = vmatprep.subr.mxu0 0.0
      %4884 = vmatpush2.msra.mxu0 0.0
      %4885 = vmatprep.subr.mxu0 0.0
      %4886 = vmatpush2.msra.mxu0 0.0
      %4887 = vmatprep.subr.mxu0 0.0
      %4888 = vmatpush2.msra.mxu0 0.0
      %4889 = vmatprep.subr.mxu0 0.0
      %4890 = vmatpush2.msra.mxu0 0.0
      %4891 = vmatprep.subr.mxu0 0.0
      %4892 = vmatpush2.msra.mxu0 0.0
      %4893 = vmatprep.subr.mxu0 0.0
      %4894 = vmatpush2.msra.mxu0 0.0
      %4895 = vmatprep.subr.mxu0 0.0
      %4896 = vmatpush2.msra.mxu0 0.0
      %4897 = vmatprep.subr.mxu0 0.0
      %4898 = vmatpush2.msra.mxu0 0.0
      %4899 = vmatprep.subr.mxu0 0.0
      %4900 = vmatpush2.msra.mxu0 0.0
      %4901 = vmatprep.subr.mxu0 0.0
      %4902 = vmatpush2.msra.mxu0 0.0
      %4903 = vmatprep.subr.mxu0 0.0
      %4904 = vmatpush2.msra.mxu0 0.0
      %4905 = vmatprep.subr.mxu0 0.0
      %4906 = vmatpush2.msra.mxu0 0.0
      %4907 = vmatprep.subr.mxu0 0.0
      %4908 = vmatpush2.msra.mxu0 0.0
      %4909 = vmatprep.mubr.f32.mxu0 0.0
      %4910 = vmatmul.mubr.f32.gmra.mxu0 %v4843
      %v4911 = vpop.f32.mrf.mxu0
      %v4912 = vadd.f32 0.0, %v4911
      %v4913 = vpop.f32.mrf.mxu0
      %4914 = vdwg.mxu0
      %4915 = vrot.lane.b32.xlu0 %v1177, 48
      %v4916 = vpop.permute.xlu0 %4915
      %v4919 = vsel %vm1213, %v4826, 0
      %4921 = vmatprep.subr.mxu0 0.0
      %4922 = vmatpush1.msra.mxu0 0.0
      %4923 = vmatprep.subr.mxu0 0.0
      %4924 = vmatpush1.msra.mxu0 0.0
      %4925 = vmatprep.subr.mxu0 0.0
      %4926 = vmatpush1.msra.mxu0 0.0
      %4927 = vmatprep.subr.mxu0 0.0
      %4928 = vmatpush1.msra.mxu0 0.0
      %4929 = vmatprep.subr.mxu0 0.0
      %4930 = vmatpush1.msra.mxu0 0.0
      %4931 = vmatprep.subr.mxu0 0.0
      %4932 = vmatpush1.msra.mxu0 0.0
      %4933 = vmatprep.subr.mxu0 0.0
      %4934 = vmatpush1.msra.mxu0 0.0
      %4935 = vmatprep.subr.mxu0 0.0
      %4936 = vmatpush1.msra.mxu0 0.0
      %4937 = vmatprep.subr.mxu0 0.0
      %4938 = vmatpush1.msra.mxu0 0.0
      %4939 = vmatprep.subr.mxu0 0.0
      %4940 = vmatpush1.msra.mxu0 0.0
      %4941 = vmatprep.subr.mxu0 0.0
      %4942 = vmatpush1.msra.mxu0 0.0
      %4943 = vmatprep.subr.mxu0 0.0
      %4944 = vmatpush1.msra.mxu0 0.0
      %4945 = vmatprep.subr.mxu0 0.0
      %4946 = vmatpush1.msra.mxu0 0.0
      %4947 = vmatprep.subr.mxu0 0.0
      %4948 = vmatpush1.msra.mxu0 0.0
      %4949 = vmatprep.subr.mxu0 0.0
      %4950 = vmatpush1.msra.mxu0 0.0
      %4951 = vmatprep.subr.mxu0 0.0
      %4952 = vmatpush1.msra.mxu0 %v4916
      %4953 = vmatprep.subr.mxu0 0.0
      %4954 = vmatpush2.msra.mxu0 0.0
      %4955 = vmatprep.subr.mxu0 0.0
      %4956 = vmatpush2.msra.mxu0 0.0
      %4957 = vmatprep.subr.mxu0 0.0
      %4958 = vmatpush2.msra.mxu0 0.0
      %4959 = vmatprep.subr.mxu0 0.0
      %4960 = vmatpush2.msra.mxu0 0.0
      %4961 = vmatprep.subr.mxu0 0.0
      %4962 = vmatpush2.msra.mxu0 0.0
      %4963 = vmatprep.subr.mxu0 0.0
      %4964 = vmatpush2.msra.mxu0 0.0
      %4965 = vmatprep.subr.mxu0 0.0
      %4966 = vmatpush2.msra.mxu0 0.0
      %4967 = vmatprep.subr.mxu0 0.0
      %4968 = vmatpush2.msra.mxu0 0.0
      %4969 = vmatprep.subr.mxu0 0.0
      %4970 = vmatpush2.msra.mxu0 0.0
      %4971 = vmatprep.subr.mxu0 0.0
      %4972 = vmatpush2.msra.mxu0 0.0
      %4973 = vmatprep.subr.mxu0 0.0
      %4974 = vmatpush2.msra.mxu0 0.0
      %4975 = vmatprep.subr.mxu0 0.0
      %4976 = vmatpush2.msra.mxu0 0.0
      %4977 = vmatprep.subr.mxu0 0.0
      %4978 = vmatpush2.msra.mxu0 0.0
      %4979 = vmatprep.subr.mxu0 0.0
      %4980 = vmatpush2.msra.mxu0 0.0
      %4981 = vmatprep.subr.mxu0 0.0
      %4982 = vmatpush2.msra.mxu0 0.0
      %4983 = vmatprep.subr.mxu0 0.0
      %4984 = vmatpush2.msra.mxu0 0.0
      %4985 = vmatprep.mubr.f32.mxu0 0.0
      %4986 = vmatmul.mubr.f32.gmra.mxu0 %v4919
      %v4987 = vpop.f32.mrf.mxu0
      %v4988 = vadd.f32 0.0, %v4987
      %v4989 = vpop.f32.mrf.mxu0
      %4990 = vdwg.mxu0
      %4991 = vrot.lane.b32.xlu0 %v1182, 48
      %v4992 = vpop.permute.xlu0 %4991
      %v4995 = vsel %vm1213, %v4828, 0
      %4997 = vmatprep.subr.mxu0 0.0
      %4998 = vmatpush1.msra.mxu0 0.0
      %4999 = vmatprep.subr.mxu0 0.0
      %5000 = vmatpush1.msra.mxu0 0.0
      %5001 = vmatprep.subr.mxu0 0.0
      %5002 = vmatpush1.msra.mxu0 0.0
      %5003 = vmatprep.subr.mxu0 0.0
      %5004 = vmatpush1.msra.mxu0 0.0
      %5005 = vmatprep.subr.mxu0 0.0
      %5006 = vmatpush1.msra.mxu0 0.0
      %5007 = vmatprep.subr.mxu0 0.0
      %5008 = vmatpush1.msra.mxu0 0.0
      %5009 = vmatprep.subr.mxu0 0.0
      %5010 = vmatpush1.msra.mxu0 0.0
      %5011 = vmatprep.subr.mxu0 0.0
      %5012 = vmatpush1.msra.mxu0 0.0
      %5013 = vmatprep.subr.mxu0 0.0
      %5014 = vmatpush1.msra.mxu0 0.0
      %5015 = vmatprep.subr.mxu0 0.0
      %5016 = vmatpush1.msra.mxu0 0.0
      %5017 = vmatprep.subr.mxu0 0.0
      %5018 = vmatpush1.msra.mxu0 0.0
      %5019 = vmatprep.subr.mxu0 0.0
      %5020 = vmatpush1.msra.mxu0 0.0
      %5021 = vmatprep.subr.mxu0 0.0
      %5022 = vmatpush1.msra.mxu0 0.0
      %5023 = vmatprep.subr.mxu0 0.0
      %5024 = vmatpush1.msra.mxu0 0.0
      %5025 = vmatprep.subr.mxu0 0.0
      %5026 = vmatpush1.msra.mxu0 0.0
      %5027 = vmatprep.subr.mxu0 0.0
      %5028 = vmatpush1.msra.mxu0 %v4992
      %5029 = vmatprep.subr.mxu0 0.0
      %5030 = vmatpush2.msra.mxu0 0.0
      %5031 = vmatprep.subr.mxu0 0.0
      %5032 = vmatpush2.msra.mxu0 0.0
      %5033 = vmatprep.subr.mxu0 0.0
      %5034 = vmatpush2.msra.mxu0 0.0
      %5035 = vmatprep.subr.mxu0 0.0
      %5036 = vmatpush2.msra.mxu0 0.0
      %5037 = vmatprep.subr.mxu0 0.0
      %5038 = vmatpush2.msra.mxu0 0.0
      %5039 = vmatprep.subr.mxu0 0.0
      %5040 = vmatpush2.msra.mxu0 0.0
      %5041 = vmatprep.subr.mxu0 0.0
      %5042 = vmatpush2.msra.mxu0 0.0
      %5043 = vmatprep.subr.mxu0 0.0
      %5044 = vmatpush2.msra.mxu0 0.0
      %5045 = vmatprep.subr.mxu0 0.0
      %5046 = vmatpush2.msra.mxu0 0.0
      %5047 = vmatprep.subr.mxu0 0.0
      %5048 = vmatpush2.msra.mxu0 0.0
      %5049 = vmatprep.subr.mxu0 0.0
      %5050 = vmatpush2.msra.mxu0 0.0
      %5051 = vmatprep.subr.mxu0 0.0
      %5052 = vmatpush2.msra.mxu0 0.0
      %5053 = vmatprep.subr.mxu0 0.0
      %5054 = vmatpush2.msra.mxu0 0.0
      %5055 = vmatprep.subr.mxu0 0.0
      %5056 = vmatpush2.msra.mxu0 0.0
      %5057 = vmatprep.subr.mxu0 0.0
      %5058 = vmatpush2.msra.mxu0 0.0
      %5059 = vmatprep.subr.mxu0 0.0
      %5060 = vmatpush2.msra.mxu0 0.0
      %5061 = vmatprep.mubr.f32.mxu0 0.0
      %5062 = vmatmul.mubr.f32.gmra.mxu0 %v4995
      %v5063 = vpop.f32.mrf.mxu0
      %v5064 = vadd.f32 0.0, %v5063
      %v5065 = vpop.f32.mrf.mxu0
      %5066 = vdwg.mxu0
      %5067 = vrot.lane.b32.xlu0 %v1187, 48
      %v5068 = vpop.permute.xlu0 %5067
      %v5071 = vsel %vm1213, %v4830, 0
      %5073 = vmatprep.subr.mxu0 0.0
      %5074 = vmatpush1.msra.mxu0 0.0
      %5075 = vmatprep.subr.mxu0 0.0
      %5076 = vmatpush1.msra.mxu0 0.0
      %5077 = vmatprep.subr.mxu0 0.0
      %5078 = vmatpush1.msra.mxu0 0.0
      %5079 = vmatprep.subr.mxu0 0.0
      %5080 = vmatpush1.msra.mxu0 0.0
      %5081 = vmatprep.subr.mxu0 0.0
      %5082 = vmatpush1.msra.mxu0 0.0
      %5083 = vmatprep.subr.mxu0 0.0
      %5084 = vmatpush1.msra.mxu0 0.0
      %5085 = vmatprep.subr.mxu0 0.0
      %5086 = vmatpush1.msra.mxu0 0.0
      %5087 = vmatprep.subr.mxu0 0.0
      %5088 = vmatpush1.msra.mxu0 0.0
      %5089 = vmatprep.subr.mxu0 0.0
      %5090 = vmatpush1.msra.mxu0 0.0
      %5091 = vmatprep.subr.mxu0 0.0
      %5092 = vmatpush1.msra.mxu0 0.0
      %5093 = vmatprep.subr.mxu0 0.0
      %5094 = vmatpush1.msra.mxu0 0.0
      %5095 = vmatprep.subr.mxu0 0.0
      %5096 = vmatpush1.msra.mxu0 0.0
      %5097 = vmatprep.subr.mxu0 0.0
      %5098 = vmatpush1.msra.mxu0 0.0
      %5099 = vmatprep.subr.mxu0 0.0
      %5100 = vmatpush1.msra.mxu0 0.0
      %5101 = vmatprep.subr.mxu0 0.0
      %5102 = vmatpush1.msra.mxu0 0.0
      %5103 = vmatprep.subr.mxu0 0.0
      %5104 = vmatpush1.msra.mxu0 %v5068
      %5105 = vmatprep.subr.mxu0 0.0
      %5106 = vmatpush2.msra.mxu0 0.0
      %5107 = vmatprep.subr.mxu0 0.0
      %5108 = vmatpush2.msra.mxu0 0.0
      %5109 = vmatprep.subr.mxu0 0.0
      %5110 = vmatpush2.msra.mxu0 0.0
      %5111 = vmatprep.subr.mxu0 0.0
      %5112 = vmatpush2.msra.mxu0 0.0
      %5113 = vmatprep.subr.mxu0 0.0
      %5114 = vmatpush2.msra.mxu0 0.0
      %5115 = vmatprep.subr.mxu0 0.0
      %5116 = vmatpush2.msra.mxu0 0.0
      %5117 = vmatprep.subr.mxu0 0.0
      %5118 = vmatpush2.msra.mxu0 0.0
      %5119 = vmatprep.subr.mxu0 0.0
      %5120 = vmatpush2.msra.mxu0 0.0
      %5121 = vmatprep.subr.mxu0 0.0
      %5122 = vmatpush2.msra.mxu0 0.0
      %5123 = vmatprep.subr.mxu0 0.0
      %5124 = vmatpush2.msra.mxu0 0.0
      %5125 = vmatprep.subr.mxu0 0.0
      %5126 = vmatpush2.msra.mxu0 0.0
      %5127 = vmatprep.subr.mxu0 0.0
      %5128 = vmatpush2.msra.mxu0 0.0
      %5129 = vmatprep.subr.mxu0 0.0
      %5130 = vmatpush2.msra.mxu0 0.0
      %5131 = vmatprep.subr.mxu0 0.0
      %5132 = vmatpush2.msra.mxu0 0.0
      %5133 = vmatprep.subr.mxu0 0.0
      %5134 = vmatpush2.msra.mxu0 0.0
      %5135 = vmatprep.subr.mxu0 0.0
      %5136 = vmatpush2.msra.mxu0 0.0
      %5137 = vmatprep.mubr.f32.mxu0 0.0
      %5138 = vmatmul.mubr.f32.gmra.mxu0 %v5071
      %v5139 = vpop.f32.mrf.mxu0
      %v5140 = vadd.f32 0.0, %v5139
      %v5141 = vpop.f32.mrf.mxu0
      %5142 = vdwg.mxu0
      %5143 = vrot.lane.b32.xlu0 %v1192, 48
      %v5144 = vpop.permute.xlu0 %5143
      %v5147 = vsel %vm1213, %v4832, 0
      %5149 = vmatprep.subr.mxu0 0.0
      %5150 = vmatpush1.msra.mxu0 0.0
      %5151 = vmatprep.subr.mxu0 0.0
      %5152 = vmatpush1.msra.mxu0 0.0
      %5153 = vmatprep.subr.mxu0 0.0
      %5154 = vmatpush1.msra.mxu0 0.0
      %5155 = vmatprep.subr.mxu0 0.0
      %5156 = vmatpush1.msra.mxu0 0.0
      %5157 = vmatprep.subr.mxu0 0.0
      %5158 = vmatpush1.msra.mxu0 0.0
      %5159 = vmatprep.subr.mxu0 0.0
      %5160 = vmatpush1.msra.mxu0 0.0
      %5161 = vmatprep.subr.mxu0 0.0
      %5162 = vmatpush1.msra.mxu0 0.0
      %5163 = vmatprep.subr.mxu0 0.0
      %5164 = vmatpush1.msra.mxu0 0.0
      %5165 = vmatprep.subr.mxu0 0.0
      %5166 = vmatpush1.msra.mxu0 0.0
      %5167 = vmatprep.subr.mxu0 0.0
      %5168 = vmatpush1.msra.mxu0 0.0
      %5169 = vmatprep.subr.mxu0 0.0
      %5170 = vmatpush1.msra.mxu0 0.0
      %5171 = vmatprep.subr.mxu0 0.0
      %5172 = vmatpush1.msra.mxu0 0.0
      %5173 = vmatprep.subr.mxu0 0.0
      %5174 = vmatpush1.msra.mxu0 0.0
      %5175 = vmatprep.subr.mxu0 0.0
      %5176 = vmatpush1.msra.mxu0 0.0
      %5177 = vmatprep.subr.mxu0 0.0
      %5178 = vmatpush1.msra.mxu0 0.0
      %5179 = vmatprep.subr.mxu0 0.0
      %5180 = vmatpush1.msra.mxu0 %v5144
      %5181 = vmatprep.subr.mxu0 0.0
      %5182 = vmatpush2.msra.mxu0 0.0
      %5183 = vmatprep.subr.mxu0 0.0
      %5184 = vmatpush2.msra.mxu0 0.0
      %5185 = vmatprep.subr.mxu0 0.0
      %5186 = vmatpush2.msra.mxu0 0.0
      %5187 = vmatprep.subr.mxu0 0.0
      %5188 = vmatpush2.msra.mxu0 0.0
      %5189 = vmatprep.subr.mxu0 0.0
      %5190 = vmatpush2.msra.mxu0 0.0
      %5191 = vmatprep.subr.mxu0 0.0
      %5192 = vmatpush2.msra.mxu0 0.0
      %5193 = vmatprep.subr.mxu0 0.0
      %5194 = vmatpush2.msra.mxu0 0.0
      %5195 = vmatprep.subr.mxu0 0.0
      %5196 = vmatpush2.msra.mxu0 0.0
      %5197 = vmatprep.subr.mxu0 0.0
      %5198 = vmatpush2.msra.mxu0 0.0
      %5199 = vmatprep.subr.mxu0 0.0
      %5200 = vmatpush2.msra.mxu0 0.0
      %5201 = vmatprep.subr.mxu0 0.0
      %5202 = vmatpush2.msra.mxu0 0.0
      %5203 = vmatprep.subr.mxu0 0.0
      %5204 = vmatpush2.msra.mxu0 0.0
      %5205 = vmatprep.subr.mxu0 0.0
      %5206 = vmatpush2.msra.mxu0 0.0
      %5207 = vmatprep.subr.mxu0 0.0
      %5208 = vmatpush2.msra.mxu0 0.0
      %5209 = vmatprep.subr.mxu0 0.0
      %5210 = vmatpush2.msra.mxu0 0.0
      %5211 = vmatprep.subr.mxu0 0.0
      %5212 = vmatpush2.msra.mxu0 0.0
      %5213 = vmatprep.mubr.f32.mxu0 0.0
      %5214 = vmatmul.mubr.f32.gmra.mxu0 %v5147
      %v5215 = vpop.f32.mrf.mxu0
      %v5216 = vadd.f32 0.0, %v5215
      %v5217 = vpop.f32.mrf.mxu0
      %5218 = vdwg.mxu0
      %5219 = vrot.lane.b32.xlu0 %v1197, 48
      %v5220 = vpop.permute.xlu0 %5219
      %v5223 = vsel %vm1213, %v4834, 0
      %5225 = vmatprep.subr.mxu0 0.0
      %5226 = vmatpush1.msra.mxu0 0.0
      %5227 = vmatprep.subr.mxu0 0.0
      %5228 = vmatpush1.msra.mxu0 0.0
      %5229 = vmatprep.subr.mxu0 0.0
      %5230 = vmatpush1.msra.mxu0 0.0
      %5231 = vmatprep.subr.mxu0 0.0
      %5232 = vmatpush1.msra.mxu0 0.0
      %5233 = vmatprep.subr.mxu0 0.0
      %5234 = vmatpush1.msra.mxu0 0.0
      %5235 = vmatprep.subr.mxu0 0.0
      %5236 = vmatpush1.msra.mxu0 0.0
      %5237 = vmatprep.subr.mxu0 0.0
      %5238 = vmatpush1.msra.mxu0 0.0
      %5239 = vmatprep.subr.mxu0 0.0
      %5240 = vmatpush1.msra.mxu0 0.0
      %5241 = vmatprep.subr.mxu0 0.0
      %5242 = vmatpush1.msra.mxu0 0.0
      %5243 = vmatprep.subr.mxu0 0.0
      %5244 = vmatpush1.msra.mxu0 0.0
      %5245 = vmatprep.subr.mxu0 0.0
      %5246 = vmatpush1.msra.mxu0 0.0
      %5247 = vmatprep.subr.mxu0 0.0
      %5248 = vmatpush1.msra.mxu0 0.0
      %5249 = vmatprep.subr.mxu0 0.0
      %5250 = vmatpush1.msra.mxu0 0.0
      %5251 = vmatprep.subr.mxu0 0.0
      %5252 = vmatpush1.msra.mxu0 0.0
      %5253 = vmatprep.subr.mxu0 0.0
      %5254 = vmatpush1.msra.mxu0 0.0
      %5255 = vmatprep.subr.mxu0 0.0
      %5256 = vmatpush1.msra.mxu0 %v5220
      %5257 = vmatprep.subr.mxu0 0.0
      %5258 = vmatpush2.msra.mxu0 0.0
      %5259 = vmatprep.subr.mxu0 0.0
      %5260 = vmatpush2.msra.mxu0 0.0
      %5261 = vmatprep.subr.mxu0 0.0
      %5262 = vmatpush2.msra.mxu0 0.0
      %5263 = vmatprep.subr.mxu0 0.0
      %5264 = vmatpush2.msra.mxu0 0.0
      %5265 = vmatprep.subr.mxu0 0.0
      %5266 = vmatpush2.msra.mxu0 0.0
      %5267 = vmatprep.subr.mxu0 0.0
      %5268 = vmatpush2.msra.mxu0 0.0
      %5269 = vmatprep.subr.mxu0 0.0
      %5270 = vmatpush2.msra.mxu0 0.0
      %5271 = vmatprep.subr.mxu0 0.0
      %5272 = vmatpush2.msra.mxu0 0.0
      %5273 = vmatprep.subr.mxu0 0.0
      %5274 = vmatpush2.msra.mxu0 0.0
      %5275 = vmatprep.subr.mxu0 0.0
      %5276 = vmatpush2.msra.mxu0 0.0
      %5277 = vmatprep.subr.mxu0 0.0
      %5278 = vmatpush2.msra.mxu0 0.0
      %5279 = vmatprep.subr.mxu0 0.0
      %5280 = vmatpush2.msra.mxu0 0.0
      %5281 = vmatprep.subr.mxu0 0.0
      %5282 = vmatpush2.msra.mxu0 0.0
      %5283 = vmatprep.subr.mxu0 0.0
      %5284 = vmatpush2.msra.mxu0 0.0
      %5285 = vmatprep.subr.mxu0 0.0
      %5286 = vmatpush2.msra.mxu0 0.0
      %5287 = vmatprep.subr.mxu0 0.0
      %5288 = vmatpush2.msra.mxu0 0.0
      %5289 = vmatprep.mubr.f32.mxu0 0.0
      %5290 = vmatmul.mubr.f32.gmra.mxu0 %v5223
      %v5291 = vpop.f32.mrf.mxu0
      %v5292 = vadd.f32 0.0, %v5291
      %v5293 = vpop.f32.mrf.mxu0
      %5294 = vdwg.mxu0
      %5295 = vrot.lane.b32.xlu0 %v1202, 48
      %v5296 = vpop.permute.xlu0 %5295
      %v5299 = vsel %vm1213, %v4836, 0
      %5301 = vmatprep.subr.mxu0 0.0
      %5302 = vmatpush1.msra.mxu0 0.0
      %5303 = vmatprep.subr.mxu0 0.0
      %5304 = vmatpush1.msra.mxu0 0.0
      %5305 = vmatprep.subr.mxu0 0.0
      %5306 = vmatpush1.msra.mxu0 0.0
      %5307 = vmatprep.subr.mxu0 0.0
      %5308 = vmatpush1.msra.mxu0 0.0
      %5309 = vmatprep.subr.mxu0 0.0
      %5310 = vmatpush1.msra.mxu0 0.0
      %5311 = vmatprep.subr.mxu0 0.0
      %5312 = vmatpush1.msra.mxu0 0.0
      %5313 = vmatprep.subr.mxu0 0.0
      %5314 = vmatpush1.msra.mxu0 0.0
      %5315 = vmatprep.subr.mxu0 0.0
      %5316 = vmatpush1.msra.mxu0 0.0
      %5317 = vmatprep.subr.mxu0 0.0
      %5318 = vmatpush1.msra.mxu0 0.0
      %5319 = vmatprep.subr.mxu0 0.0
      %5320 = vmatpush1.msra.mxu0 0.0
      %5321 = vmatprep.subr.mxu0 0.0
      %5322 = vmatpush1.msra.mxu0 0.0
      %5323 = vmatprep.subr.mxu0 0.0
      %5324 = vmatpush1.msra.mxu0 0.0
      %5325 = vmatprep.subr.mxu0 0.0
      %5326 = vmatpush1.msra.mxu0 0.0
      %5327 = vmatprep.subr.mxu0 0.0
      %5328 = vmatpush1.msra.mxu0 0.0
      %5329 = vmatprep.subr.mxu0 0.0
      %5330 = vmatpush1.msra.mxu0 0.0
      %5331 = vmatprep.subr.mxu0 0.0
      %5332 = vmatpush1.msra.mxu0 %v5296
      %5333 = vmatprep.subr.mxu0 0.0
      %5334 = vmatpush2.msra.mxu0 0.0
      %5335 = vmatprep.subr.mxu0 0.0
      %5336 = vmatpush2.msra.mxu0 0.0
      %5337 = vmatprep.subr.mxu0 0.0
      %5338 = vmatpush2.msra.mxu0 0.0
      %5339 = vmatprep.subr.mxu0 0.0
      %5340 = vmatpush2.msra.mxu0 0.0
      %5341 = vmatprep.subr.mxu0 0.0
      %5342 = vmatpush2.msra.mxu0 0.0
      %5343 = vmatprep.subr.mxu0 0.0
      %5344 = vmatpush2.msra.mxu0 0.0
      %5345 = vmatprep.subr.mxu0 0.0
      %5346 = vmatpush2.msra.mxu0 0.0
      %5347 = vmatprep.subr.mxu0 0.0
      %5348 = vmatpush2.msra.mxu0 0.0
      %5349 = vmatprep.subr.mxu0 0.0
      %5350 = vmatpush2.msra.mxu0 0.0
      %5351 = vmatprep.subr.mxu0 0.0
      %5352 = vmatpush2.msra.mxu0 0.0
      %5353 = vmatprep.subr.mxu0 0.0
      %5354 = vmatpush2.msra.mxu0 0.0
      %5355 = vmatprep.subr.mxu0 0.0
      %5356 = vmatpush2.msra.mxu0 0.0
      %5357 = vmatprep.subr.mxu0 0.0
      %5358 = vmatpush2.msra.mxu0 0.0
      %5359 = vmatprep.subr.mxu0 0.0
      %5360 = vmatpush2.msra.mxu0 0.0
      %5361 = vmatprep.subr.mxu0 0.0
      %5362 = vmatpush2.msra.mxu0 0.0
      %5363 = vmatprep.subr.mxu0 0.0
      %5364 = vmatpush2.msra.mxu0 0.0
      %5365 = vmatprep.mubr.f32.mxu0 0.0
      %5366 = vmatmul.mubr.f32.gmra.mxu0 %v5299
      %v5367 = vpop.f32.mrf.mxu0
      %v5368 = vadd.f32 0.0, %v5367
      %v5369 = vpop.f32.mrf.mxu0
      %5370 = vdwg.mxu0
      %5371 = vrot.lane.b32.xlu0 %v1207, 48
      %v5372 = vpop.permute.xlu0 %5371
      %v5375 = vsel %vm1213, %v4838, 0
      %5377 = vmatprep.subr.mxu0 0.0
      %5378 = vmatpush1.msra.mxu0 0.0
      %5379 = vmatprep.subr.mxu0 0.0
      %5380 = vmatpush1.msra.mxu0 0.0
      %5381 = vmatprep.subr.mxu0 0.0
      %5382 = vmatpush1.msra.mxu0 0.0
      %5383 = vmatprep.subr.mxu0 0.0
      %5384 = vmatpush1.msra.mxu0 0.0
      %5385 = vmatprep.subr.mxu0 0.0
      %5386 = vmatpush1.msra.mxu0 0.0
      %5387 = vmatprep.subr.mxu0 0.0
      %5388 = vmatpush1.msra.mxu0 0.0
      %5389 = vmatprep.subr.mxu0 0.0
      %5390 = vmatpush1.msra.mxu0 0.0
      %5391 = vmatprep.subr.mxu0 0.0
      %5392 = vmatpush1.msra.mxu0 0.0
      %5393 = vmatprep.subr.mxu0 0.0
      %5394 = vmatpush1.msra.mxu0 0.0
      %5395 = vmatprep.subr.mxu0 0.0
      %5396 = vmatpush1.msra.mxu0 0.0
      %5397 = vmatprep.subr.mxu0 0.0
      %5398 = vmatpush1.msra.mxu0 0.0
      %5399 = vmatprep.subr.mxu0 0.0
      %5400 = vmatpush1.msra.mxu0 0.0
      %5401 = vmatprep.subr.mxu0 0.0
      %5402 = vmatpush1.msra.mxu0 0.0
      %5403 = vmatprep.subr.mxu0 0.0
      %5404 = vmatpush1.msra.mxu0 0.0
      %5405 = vmatprep.subr.mxu0 0.0
      %5406 = vmatpush1.msra.mxu0 0.0
      %5407 = vmatprep.subr.mxu0 0.0
      %5408 = vmatpush1.msra.mxu0 %v5372
      %5409 = vmatprep.subr.mxu0 0.0
      %5410 = vmatpush2.msra.mxu0 0.0
      %5411 = vmatprep.subr.mxu0 0.0
      %5412 = vmatpush2.msra.mxu0 0.0
      %5413 = vmatprep.subr.mxu0 0.0
      %5414 = vmatpush2.msra.mxu0 0.0
      %5415 = vmatprep.subr.mxu0 0.0
      %5416 = vmatpush2.msra.mxu0 0.0
      %5417 = vmatprep.subr.mxu0 0.0
      %5418 = vmatpush2.msra.mxu0 0.0
      %5419 = vmatprep.subr.mxu0 0.0
      %5420 = vmatpush2.msra.mxu0 0.0
      %5421 = vmatprep.subr.mxu0 0.0
      %5422 = vmatpush2.msra.mxu0 0.0
      %5423 = vmatprep.subr.mxu0 0.0
      %5424 = vmatpush2.msra.mxu0 0.0
      %5425 = vmatprep.subr.mxu0 0.0
      %5426 = vmatpush2.msra.mxu0 0.0
      %5427 = vmatprep.subr.mxu0 0.0
      %5428 = vmatpush2.msra.mxu0 0.0
      %5429 = vmatprep.subr.mxu0 0.0
      %5430 = vmatpush2.msra.mxu0 0.0
      %5431 = vmatprep.subr.mxu0 0.0
      %5432 = vmatpush2.msra.mxu0 0.0
      %5433 = vmatprep.subr.mxu0 0.0
      %5434 = vmatpush2.msra.mxu0 0.0
      %5435 = vmatprep.subr.mxu0 0.0
      %5436 = vmatpush2.msra.mxu0 0.0
      %5437 = vmatprep.subr.mxu0 0.0
      %5438 = vmatpush2.msra.mxu0 0.0
      %5439 = vmatprep.subr.mxu0 0.0
      %5440 = vmatpush2.msra.mxu0 0.0
      %5441 = vmatprep.mubr.f32.mxu0 0.0
      %5442 = vmatmul.mubr.f32.gmra.mxu0 %v5375
      %v5443 = vpop.f32.mrf.mxu0
      %v5444 = vadd.f32 0.0, %v5443
      %v5445 = vpop.f32.mrf.mxu0
      %5446 = vdwg.mxu0
      %v5447 = vld [vmem:[%s8 + $0x10] sm:$0xff]
      %v5449 = vsel %vm1213, %v4912, 0
      %v5452 = vsel %vm1213, %v4988, 0
      %v5455 = vsel %vm1213, %v5064, 0
      %v5458 = vsel %vm1213, %v5140, 0
      %v5461 = vsel %vm1213, %v5216, 0
      %v5464 = vsel %vm1213, %v5292, 0
      %v5467 = vsel %vm1213, %v5368, 0
      %v5470 = vsel %vm1213, %v5444, 0
      %5472 = vmatprep.subr.mxu0 0.0
      %5473 = vmatpush1.msra.mxu0 0.0
      %5474 = vmatprep.subr.mxu0 0.0
      %5475 = vmatpush1.msra.mxu0 0.0
      %5476 = vmatprep.subr.mxu0 0.0
      %5477 = vmatpush1.msra.mxu0 0.0
      %5478 = vmatprep.subr.mxu0 0.0
      %5479 = vmatpush1.msra.mxu0 0.0
      %5480 = vmatprep.subr.mxu0 0.0
      %5481 = vmatpush1.msra.mxu0 0.0
      %5482 = vmatprep.subr.mxu0 0.0
      %5483 = vmatpush1.msra.mxu0 0.0
      %5484 = vmatprep.subr.mxu0 0.0
      %5485 = vmatpush1.msra.mxu0 0.0
      %5486 = vmatprep.subr.mxu0 0.0
      %5487 = vmatpush1.msra.mxu0 0.0
      %5488 = vmatprep.subr.mxu0 0.0
      %5489 = vmatpush1.msra.mxu0 0.0
      %5490 = vmatprep.subr.mxu0 0.0
      %5491 = vmatpush1.msra.mxu0 0.0
      %5492 = vmatprep.subr.mxu0 0.0
      %5493 = vmatpush1.msra.mxu0 0.0
      %5494 = vmatprep.subr.mxu0 0.0
      %5495 = vmatpush1.msra.mxu0 0.0
      %5496 = vmatprep.subr.mxu0 0.0
      %5497 = vmatpush1.msra.mxu0 0.0
      %5498 = vmatprep.subr.mxu0 0.0
      %5499 = vmatpush1.msra.mxu0 0.0
      %5500 = vmatprep.subr.mxu0 0.0
      %5501 = vmatpush1.msra.mxu0 0.0
      %5502 = vmatprep.subr.mxu0 0.0
      %5503 = vmatpush1.msra.mxu0 %v5447
      %5504 = vmatprep.subr.mxu0 0.0
      %5505 = vmatpush2.msra.mxu0 0.0
      %5506 = vmatprep.subr.mxu0 0.0
      %5507 = vmatpush2.msra.mxu0 0.0
      %5508 = vmatprep.subr.mxu0 0.0
      %5509 = vmatpush2.msra.mxu0 0.0
      %5510 = vmatprep.subr.mxu0 0.0
      %5511 = vmatpush2.msra.mxu0 0.0
      %5512 = vmatprep.subr.mxu0 0.0
      %5513 = vmatpush2.msra.mxu0 0.0
      %5514 = vmatprep.subr.mxu0 0.0
      %5515 = vmatpush2.msra.mxu0 0.0
      %5516 = vmatprep.subr.mxu0 0.0
      %5517 = vmatpush2.msra.mxu0 0.0
      %5518 = vmatprep.subr.mxu0 0.0
      %5519 = vmatpush2.msra.mxu0 0.0
      %5520 = vmatprep.subr.mxu0 0.0
      %5521 = vmatpush2.msra.mxu0 0.0
      %5522 = vmatprep.subr.mxu0 0.0
      %5523 = vmatpush2.msra.mxu0 0.0
      %5524 = vmatprep.subr.mxu0 0.0
      %5525 = vmatpush2.msra.mxu0 0.0
      %5526 = vmatprep.subr.mxu0 0.0
      %5527 = vmatpush2.msra.mxu0 0.0
      %5528 = vmatprep.subr.mxu0 0.0
      %5529 = vmatpush2.msra.mxu0 0.0
      %5530 = vmatprep.subr.mxu0 0.0
      %5531 = vmatpush2.msra.mxu0 0.0
      %5532 = vmatprep.subr.mxu0 0.0
      %5533 = vmatpush2.msra.mxu0 0.0
      %5534 = vmatprep.subr.mxu0 0.0
      %5535 = vmatpush2.msra.mxu0 0.0
      %5536 = vmatprep.mubr.f32.mxu0 0.0
      %5537 = vmatmul.mubr.f32.gmra.mxu0 %v5449
      %v5538 = vpop.f32.mrf.mxu0
      %v5539 = vadd.f32 0.0, %v5538
      %v5540 = vpop.f32.mrf.mxu0
      %5541 = vmatprep.mubr.f32.mxu0 0.0
      %5542 = vmatmul.mubr.f32.gmra.mxu0 %v5452
      %v5543 = vpop.f32.mrf.mxu0
      %v5544 = vadd.f32 0.0, %v5543
      %v5545 = vpop.f32.mrf.mxu0
      %5546 = vmatprep.mubr.f32.mxu0 0.0
      %5547 = vmatmul.mubr.f32.gmra.mxu0 %v5455
      %v5548 = vpop.f32.mrf.mxu0
      %v5549 = vadd.f32 0.0, %v5548
      %v5550 = vpop.f32.mrf.mxu0
      %5551 = vmatprep.mubr.f32.mxu0 0.0
      %5552 = vmatmul.mubr.f32.gmra.mxu0 %v5458
      %v5553 = vpop.f32.mrf.mxu0
      %v5554 = vadd.f32 0.0, %v5553
      %v5555 = vpop.f32.mrf.mxu0
      %5556 = vmatprep.mubr.f32.mxu0 0.0
      %5557 = vmatmul.mubr.f32.gmra.mxu0 %v5461
      %v5558 = vpop.f32.mrf.mxu0
      %v5559 = vadd.f32 0.0, %v5558
      %v5560 = vpop.f32.mrf.mxu0
      %5561 = vmatprep.mubr.f32.mxu0 0.0
      %5562 = vmatmul.mubr.f32.gmra.mxu0 %v5464
      %v5563 = vpop.f32.mrf.mxu0
      %v5564 = vadd.f32 0.0, %v5563
      %v5565 = vpop.f32.mrf.mxu0
      %5566 = vmatprep.mubr.f32.mxu0 0.0
      %5567 = vmatmul.mubr.f32.gmra.mxu0 %v5467
      %v5568 = vpop.f32.mrf.mxu0
      %v5569 = vadd.f32 0.0, %v5568
      %v5570 = vpop.f32.mrf.mxu0
      %5571 = vmatprep.mubr.f32.mxu0 0.0
      %5572 = vmatmul.mubr.f32.gmra.mxu0 %v5470
      %v5573 = vpop.f32.mrf.mxu0
      %v5574 = vadd.f32 0.0, %v5573
      %v5575 = vpop.f32.mrf.mxu0
      %5576 = vdwg.mxu0
      %v5577 = vadd.f32 %v4081, %v5539
      %v5578 = vadd.f32 %v4086, %v5544
      %v5579 = vadd.f32 %v4091, %v5549
      %v5580 = vadd.f32 %v4096, %v5554
      %v5581 = vadd.f32 %v4101, %v5559
      %v5582 = vadd.f32 %v4106, %v5564
      %v5583 = vadd.f32 %v4111, %v5569
      %v5584 = vadd.f32 %v4116, %v5574
      %5585 = vrot.lane.b32.xlu0 %v1172, 104
      %v5586 = vpop.permute.xlu0 %5585
      %5587 = vrot.lane.b32.xlu0 %v1172, 72
      %v5588 = vpop.permute.xlu0 %5587
      %v5589 = vsel %vm1213, %v5586, 0
      %v5591 = vsel %vm1213, %v5588, 0
      %5593 = vmatprep.subr.mxu0 0.0
      %5594 = vmatpush1.xpose.msra.mxu0 0.0
      %5595 = vmatprep.subr.mxu0 0.0
      %5596 = vmatpush1.xpose.msra.mxu0 0.0
      %5597 = vmatprep.subr.mxu0 0.0
      %5598 = vmatpush1.xpose.msra.mxu0 0.0
      %5599 = vmatprep.subr.mxu0 0.0
      %5600 = vmatpush1.xpose.msra.mxu0 0.0
      %5601 = vmatprep.subr.mxu0 0.0
      %5602 = vmatpush1.xpose.msra.mxu0 0.0
      %5603 = vmatprep.subr.mxu0 0.0
      %5604 = vmatpush1.xpose.msra.mxu0 0.0
      %5605 = vmatprep.subr.mxu0 0.0
      %5606 = vmatpush1.xpose.msra.mxu0 0.0
      %5607 = vmatprep.subr.mxu0 0.0
      %5608 = vmatpush1.xpose.msra.mxu0 0.0
      %5609 = vmatprep.subr.mxu0 0.0
      %5610 = vmatpush1.xpose.msra.mxu0 0.0
      %5611 = vmatprep.subr.mxu0 0.0
      %5612 = vmatpush1.xpose.msra.mxu0 0.0
      %5613 = vmatprep.subr.mxu0 0.0
      %5614 = vmatpush1.xpose.msra.mxu0 0.0
      %5615 = vmatprep.subr.mxu0 0.0
      %5616 = vmatpush1.xpose.msra.mxu0 0.0
      %5617 = vmatprep.subr.mxu0 0.0
      %5618 = vmatpush1.xpose.msra.mxu0 0.0
      %5619 = vmatprep.subr.mxu0 0.0
      %5620 = vmatpush1.xpose.msra.mxu0 0.0
      %5621 = vmatprep.subr.mxu0 0.0
      %5622 = vmatpush1.xpose.msra.mxu0 0.0
      %5623 = vmatprep.subr.mxu0 0.0
      %5624 = vmatpush1.xpose.msra.mxu0 %v5591
      %5625 = vmatprep.subr.mxu0 0.0
      %5626 = vmatpush2.xpose.msra.mxu0 0.0
      %5627 = vmatprep.subr.mxu0 0.0
      %5628 = vmatpush2.xpose.msra.mxu0 0.0
      %5629 = vmatprep.subr.mxu0 0.0
      %5630 = vmatpush2.xpose.msra.mxu0 0.0
      %5631 = vmatprep.subr.mxu0 0.0
      %5632 = vmatpush2.xpose.msra.mxu0 0.0
      %5633 = vmatprep.subr.mxu0 0.0
      %5634 = vmatpush2.xpose.msra.mxu0 0.0
      %5635 = vmatprep.subr.mxu0 0.0
      %5636 = vmatpush2.xpose.msra.mxu0 0.0
      %5637 = vmatprep.subr.mxu0 0.0
      %5638 = vmatpush2.xpose.msra.mxu0 0.0
      %5639 = vmatprep.subr.mxu0 0.0
      %5640 = vmatpush2.xpose.msra.mxu0 0.0
      %5641 = vmatprep.subr.mxu0 0.0
      %5642 = vmatpush2.xpose.msra.mxu0 0.0
      %5643 = vmatprep.subr.mxu0 0.0
      %5644 = vmatpush2.xpose.msra.mxu0 0.0
      %5645 = vmatprep.subr.mxu0 0.0
      %5646 = vmatpush2.xpose.msra.mxu0 0.0
      %5647 = vmatprep.subr.mxu0 0.0
      %5648 = vmatpush2.xpose.msra.mxu0 0.0
      %5649 = vmatprep.subr.mxu0 0.0
      %5650 = vmatpush2.xpose.msra.mxu0 0.0
      %5651 = vmatprep.subr.mxu0 0.0
      %5652 = vmatpush2.xpose.msra.mxu0 0.0
      %5653 = vmatprep.subr.mxu0 0.0
      %5654 = vmatpush2.xpose.msra.mxu0 0.0
      %5655 = vmatprep.subr.mxu0 0.0
      %5656 = vmatpush2.xpose.msra.mxu0 0.0
      %5657 = vmatprep.mubr.f32.mxu0 0.0
      %5658 = vmatmul.mubr.f32.gmra.mxu0 %v5589
      %v5659 = vpop.f32.mrf.mxu0
      %v5660 = vadd.f32 0.0, %v5659
      %v5661 = vpop.f32.mrf.mxu0
      %5662 = vdwg.mxu0
      %5663 = vrot.lane.b32.xlu0 %v1177, 104
      %v5664 = vpop.permute.xlu0 %5663
      %5665 = vrot.lane.b32.xlu0 %v1177, 72
      %v5666 = vpop.permute.xlu0 %5665
      %v5667 = vsel %vm1213, %v5664, 0
      %v5669 = vsel %vm1213, %v5666, 0
      %5671 = vmatprep.subr.mxu0 0.0
      %5672 = vmatpush1.xpose.msra.mxu0 0.0
      %5673 = vmatprep.subr.mxu0 0.0
      %5674 = vmatpush1.xpose.msra.mxu0 0.0
      %5675 = vmatprep.subr.mxu0 0.0
      %5676 = vmatpush1.xpose.msra.mxu0 0.0
      %5677 = vmatprep.subr.mxu0 0.0
      %5678 = vmatpush1.xpose.msra.mxu0 0.0
      %5679 = vmatprep.subr.mxu0 0.0
      %5680 = vmatpush1.xpose.msra.mxu0 0.0
      %5681 = vmatprep.subr.mxu0 0.0
      %5682 = vmatpush1.xpose.msra.mxu0 0.0
      %5683 = vmatprep.subr.mxu0 0.0
      %5684 = vmatpush1.xpose.msra.mxu0 0.0
      %5685 = vmatprep.subr.mxu0 0.0
      %5686 = vmatpush1.xpose.msra.mxu0 0.0
      %5687 = vmatprep.subr.mxu0 0.0
      %5688 = vmatpush1.xpose.msra.mxu0 0.0
      %5689 = vmatprep.subr.mxu0 0.0
      %5690 = vmatpush1.xpose.msra.mxu0 0.0
      %5691 = vmatprep.subr.mxu0 0.0
      %5692 = vmatpush1.xpose.msra.mxu0 0.0
      %5693 = vmatprep.subr.mxu0 0.0
      %5694 = vmatpush1.xpose.msra.mxu0 0.0
      %5695 = vmatprep.subr.mxu0 0.0
      %5696 = vmatpush1.xpose.msra.mxu0 0.0
      %5697 = vmatprep.subr.mxu0 0.0
      %5698 = vmatpush1.xpose.msra.mxu0 0.0
      %5699 = vmatprep.subr.mxu0 0.0
      %5700 = vmatpush1.xpose.msra.mxu0 0.0
      %5701 = vmatprep.subr.mxu0 0.0
      %5702 = vmatpush1.xpose.msra.mxu0 %v5669
      %5703 = vmatprep.subr.mxu0 0.0
      %5704 = vmatpush2.xpose.msra.mxu0 0.0
      %5705 = vmatprep.subr.mxu0 0.0
      %5706 = vmatpush2.xpose.msra.mxu0 0.0
      %5707 = vmatprep.subr.mxu0 0.0
      %5708 = vmatpush2.xpose.msra.mxu0 0.0
      %5709 = vmatprep.subr.mxu0 0.0
      %5710 = vmatpush2.xpose.msra.mxu0 0.0
      %5711 = vmatprep.subr.mxu0 0.0
      %5712 = vmatpush2.xpose.msra.mxu0 0.0
      %5713 = vmatprep.subr.mxu0 0.0
      %5714 = vmatpush2.xpose.msra.mxu0 0.0
      %5715 = vmatprep.subr.mxu0 0.0
      %5716 = vmatpush2.xpose.msra.mxu0 0.0
      %5717 = vmatprep.subr.mxu0 0.0
      %5718 = vmatpush2.xpose.msra.mxu0 0.0
      %5719 = vmatprep.subr.mxu0 0.0
      %5720 = vmatpush2.xpose.msra.mxu0 0.0
      %5721 = vmatprep.subr.mxu0 0.0
      %5722 = vmatpush2.xpose.msra.mxu0 0.0
      %5723 = vmatprep.subr.mxu0 0.0
      %5724 = vmatpush2.xpose.msra.mxu0 0.0
      %5725 = vmatprep.subr.mxu0 0.0
      %5726 = vmatpush2.xpose.msra.mxu0 0.0
      %5727 = vmatprep.subr.mxu0 0.0
      %5728 = vmatpush2.xpose.msra.mxu0 0.0
      %5729 = vmatprep.subr.mxu0 0.0
      %5730 = vmatpush2.xpose.msra.mxu0 0.0
      %5731 = vmatprep.subr.mxu0 0.0
      %5732 = vmatpush2.xpose.msra.mxu0 0.0
      %5733 = vmatprep.subr.mxu0 0.0
      %5734 = vmatpush2.xpose.msra.mxu0 0.0
      %5735 = vmatprep.mubr.f32.mxu0 0.0
      %5736 = vmatmul.mubr.f32.gmra.mxu0 %v5667
      %v5737 = vpop.f32.mrf.mxu0
      %v5738 = vadd.f32 0.0, %v5737
      %v5739 = vpop.f32.mrf.mxu0
      %5740 = vdwg.mxu0
      %5741 = vrot.lane.b32.xlu0 %v1182, 104
      %v5742 = vpop.permute.xlu0 %5741
      %5743 = vrot.lane.b32.xlu0 %v1182, 72
      %v5744 = vpop.permute.xlu0 %5743
      %v5745 = vsel %vm1213, %v5742, 0
      %v5747 = vsel %vm1213, %v5744, 0
      %5749 = vmatprep.subr.mxu0 0.0
      %5750 = vmatpush1.xpose.msra.mxu0 0.0
      %5751 = vmatprep.subr.mxu0 0.0
      %5752 = vmatpush1.xpose.msra.mxu0 0.0
      %5753 = vmatprep.subr.mxu0 0.0
      %5754 = vmatpush1.xpose.msra.mxu0 0.0
      %5755 = vmatprep.subr.mxu0 0.0
      %5756 = vmatpush1.xpose.msra.mxu0 0.0
      %5757 = vmatprep.subr.mxu0 0.0
      %5758 = vmatpush1.xpose.msra.mxu0 0.0
      %5759 = vmatprep.subr.mxu0 0.0
      %5760 = vmatpush1.xpose.msra.mxu0 0.0
      %5761 = vmatprep.subr.mxu0 0.0
      %5762 = vmatpush1.xpose.msra.mxu0 0.0
      %5763 = vmatprep.subr.mxu0 0.0
      %5764 = vmatpush1.xpose.msra.mxu0 0.0
      %5765 = vmatprep.subr.mxu0 0.0
      %5766 = vmatpush1.xpose.msra.mxu0 0.0
      %5767 = vmatprep.subr.mxu0 0.0
      %5768 = vmatpush1.xpose.msra.mxu0 0.0
      %5769 = vmatprep.subr.mxu0 0.0
      %5770 = vmatpush1.xpose.msra.mxu0 0.0
      %5771 = vmatprep.subr.mxu0 0.0
      %5772 = vmatpush1.xpose.msra.mxu0 0.0
      %5773 = vmatprep.subr.mxu0 0.0
      %5774 = vmatpush1.xpose.msra.mxu0 0.0
      %5775 = vmatprep.subr.mxu0 0.0
      %5776 = vmatpush1.xpose.msra.mxu0 0.0
      %5777 = vmatprep.subr.mxu0 0.0
      %5778 = vmatpush1.xpose.msra.mxu0 0.0
      %5779 = vmatprep.subr.mxu0 0.0
      %5780 = vmatpush1.xpose.msra.mxu0 %v5747
      %5781 = vmatprep.subr.mxu0 0.0
      %5782 = vmatpush2.xpose.msra.mxu0 0.0
      %5783 = vmatprep.subr.mxu0 0.0
      %5784 = vmatpush2.xpose.msra.mxu0 0.0
      %5785 = vmatprep.subr.mxu0 0.0
      %5786 = vmatpush2.xpose.msra.mxu0 0.0
      %5787 = vmatprep.subr.mxu0 0.0
      %5788 = vmatpush2.xpose.msra.mxu0 0.0
      %5789 = vmatprep.subr.mxu0 0.0
      %5790 = vmatpush2.xpose.msra.mxu0 0.0
      %5791 = vmatprep.subr.mxu0 0.0
      %5792 = vmatpush2.xpose.msra.mxu0 0.0
      %5793 = vmatprep.subr.mxu0 0.0
      %5794 = vmatpush2.xpose.msra.mxu0 0.0
      %5795 = vmatprep.subr.mxu0 0.0
      %5796 = vmatpush2.xpose.msra.mxu0 0.0
      %5797 = vmatprep.subr.mxu0 0.0
      %5798 = vmatpush2.xpose.msra.mxu0 0.0
      %5799 = vmatprep.subr.mxu0 0.0
      %5800 = vmatpush2.xpose.msra.mxu0 0.0
      %5801 = vmatprep.subr.mxu0 0.0
      %5802 = vmatpush2.xpose.msra.mxu0 0.0
      %5803 = vmatprep.subr.mxu0 0.0
      %5804 = vmatpush2.xpose.msra.mxu0 0.0
      %5805 = vmatprep.subr.mxu0 0.0
      %5806 = vmatpush2.xpose.msra.mxu0 0.0
      %5807 = vmatprep.subr.mxu0 0.0
      %5808 = vmatpush2.xpose.msra.mxu0 0.0
      %5809 = vmatprep.subr.mxu0 0.0
      %5810 = vmatpush2.xpose.msra.mxu0 0.0
      %5811 = vmatprep.subr.mxu0 0.0
      %5812 = vmatpush2.xpose.msra.mxu0 0.0
      %5813 = vmatprep.mubr.f32.mxu0 0.0
      %5814 = vmatmul.mubr.f32.gmra.mxu0 %v5745
      %v5815 = vpop.f32.mrf.mxu0
      %v5816 = vadd.f32 0.0, %v5815
      %v5817 = vpop.f32.mrf.mxu0
      %5818 = vdwg.mxu0
      %5819 = vrot.lane.b32.xlu0 %v1187, 104
      %v5820 = vpop.permute.xlu0 %5819
      %5821 = vrot.lane.b32.xlu0 %v1187, 72
      %v5822 = vpop.permute.xlu0 %5821
      %v5823 = vsel %vm1213, %v5820, 0
      %v5825 = vsel %vm1213, %v5822, 0
      %5827 = vmatprep.subr.mxu0 0.0
      %5828 = vmatpush1.xpose.msra.mxu0 0.0
      %5829 = vmatprep.subr.mxu0 0.0
      %5830 = vmatpush1.xpose.msra.mxu0 0.0
      %5831 = vmatprep.subr.mxu0 0.0
      %5832 = vmatpush1.xpose.msra.mxu0 0.0
      %5833 = vmatprep.subr.mxu0 0.0
      %5834 = vmatpush1.xpose.msra.mxu0 0.0
      %5835 = vmatprep.subr.mxu0 0.0
      %5836 = vmatpush1.xpose.msra.mxu0 0.0
      %5837 = vmatprep.subr.mxu0 0.0
      %5838 = vmatpush1.xpose.msra.mxu0 0.0
      %5839 = vmatprep.subr.mxu0 0.0
      %5840 = vmatpush1.xpose.msra.mxu0 0.0
      %5841 = vmatprep.subr.mxu0 0.0
      %5842 = vmatpush1.xpose.msra.mxu0 0.0
      %5843 = vmatprep.subr.mxu0 0.0
      %5844 = vmatpush1.xpose.msra.mxu0 0.0
      %5845 = vmatprep.subr.mxu0 0.0
      %5846 = vmatpush1.xpose.msra.mxu0 0.0
      %5847 = vmatprep.subr.mxu0 0.0
      %5848 = vmatpush1.xpose.msra.mxu0 0.0
      %5849 = vmatprep.subr.mxu0 0.0
      %5850 = vmatpush1.xpose.msra.mxu0 0.0
      %5851 = vmatprep.subr.mxu0 0.0
      %5852 = vmatpush1.xpose.msra.mxu0 0.0
      %5853 = vmatprep.subr.mxu0 0.0
      %5854 = vmatpush1.xpose.msra.mxu0 0.0
      %5855 = vmatprep.subr.mxu0 0.0
      %5856 = vmatpush1.xpose.msra.mxu0 0.0
      %5857 = vmatprep.subr.mxu0 0.0
      %5858 = vmatpush1.xpose.msra.mxu0 %v5825
      %5859 = vmatprep.subr.mxu0 0.0
      %5860 = vmatpush2.xpose.msra.mxu0 0.0
      %5861 = vmatprep.subr.mxu0 0.0
      %5862 = vmatpush2.xpose.msra.mxu0 0.0
      %5863 = vmatprep.subr.mxu0 0.0
      %5864 = vmatpush2.xpose.msra.mxu0 0.0
      %5865 = vmatprep.subr.mxu0 0.0
      %5866 = vmatpush2.xpose.msra.mxu0 0.0
      %5867 = vmatprep.subr.mxu0 0.0
      %5868 = vmatpush2.xpose.msra.mxu0 0.0
      %5869 = vmatprep.subr.mxu0 0.0
      %5870 = vmatpush2.xpose.msra.mxu0 0.0
      %5871 = vmatprep.subr.mxu0 0.0
      %5872 = vmatpush2.xpose.msra.mxu0 0.0
      %5873 = vmatprep.subr.mxu0 0.0
      %5874 = vmatpush2.xpose.msra.mxu0 0.0
      %5875 = vmatprep.subr.mxu0 0.0
      %5876 = vmatpush2.xpose.msra.mxu0 0.0
      %5877 = vmatprep.subr.mxu0 0.0
      %5878 = vmatpush2.xpose.msra.mxu0 0.0
      %5879 = vmatprep.subr.mxu0 0.0
      %5880 = vmatpush2.xpose.msra.mxu0 0.0
      %5881 = vmatprep.subr.mxu0 0.0
      %5882 = vmatpush2.xpose.msra.mxu0 0.0
      %5883 = vmatprep.subr.mxu0 0.0
      %5884 = vmatpush2.xpose.msra.mxu0 0.0
      %5885 = vmatprep.subr.mxu0 0.0
      %5886 = vmatpush2.xpose.msra.mxu0 0.0
      %5887 = vmatprep.subr.mxu0 0.0
      %5888 = vmatpush2.xpose.msra.mxu0 0.0
      %5889 = vmatprep.subr.mxu0 0.0
      %5890 = vmatpush2.xpose.msra.mxu0 0.0
      %5891 = vmatprep.mubr.f32.mxu0 0.0
      %5892 = vmatmul.mubr.f32.gmra.mxu0 %v5823
      %v5893 = vpop.f32.mrf.mxu0
      %v5894 = vadd.f32 0.0, %v5893
      %v5895 = vpop.f32.mrf.mxu0
      %5896 = vdwg.mxu0
      %5897 = vrot.lane.b32.xlu0 %v1192, 104
      %v5898 = vpop.permute.xlu0 %5897
      %5899 = vrot.lane.b32.xlu0 %v1192, 72
      %v5900 = vpop.permute.xlu0 %5899
      %v5901 = vsel %vm1213, %v5898, 0
      %v5903 = vsel %vm1213, %v5900, 0
      %5905 = vmatprep.subr.mxu0 0.0
      %5906 = vmatpush1.xpose.msra.mxu0 0.0
      %5907 = vmatprep.subr.mxu0 0.0
      %5908 = vmatpush1.xpose.msra.mxu0 0.0
      %5909 = vmatprep.subr.mxu0 0.0
      %5910 = vmatpush1.xpose.msra.mxu0 0.0
      %5911 = vmatprep.subr.mxu0 0.0
      %5912 = vmatpush1.xpose.msra.mxu0 0.0
      %5913 = vmatprep.subr.mxu0 0.0
      %5914 = vmatpush1.xpose.msra.mxu0 0.0
      %5915 = vmatprep.subr.mxu0 0.0
      %5916 = vmatpush1.xpose.msra.mxu0 0.0
      %5917 = vmatprep.subr.mxu0 0.0
      %5918 = vmatpush1.xpose.msra.mxu0 0.0
      %5919 = vmatprep.subr.mxu0 0.0
      %5920 = vmatpush1.xpose.msra.mxu0 0.0
      %5921 = vmatprep.subr.mxu0 0.0
      %5922 = vmatpush1.xpose.msra.mxu0 0.0
      %5923 = vmatprep.subr.mxu0 0.0
      %5924 = vmatpush1.xpose.msra.mxu0 0.0
      %5925 = vmatprep.subr.mxu0 0.0
      %5926 = vmatpush1.xpose.msra.mxu0 0.0
      %5927 = vmatprep.subr.mxu0 0.0
      %5928 = vmatpush1.xpose.msra.mxu0 0.0
      %5929 = vmatprep.subr.mxu0 0.0
      %5930 = vmatpush1.xpose.msra.mxu0 0.0
      %5931 = vmatprep.subr.mxu0 0.0
      %5932 = vmatpush1.xpose.msra.mxu0 0.0
      %5933 = vmatprep.subr.mxu0 0.0
      %5934 = vmatpush1.xpose.msra.mxu0 0.0
      %5935 = vmatprep.subr.mxu0 0.0
      %5936 = vmatpush1.xpose.msra.mxu0 %v5903
      %5937 = vmatprep.subr.mxu0 0.0
      %5938 = vmatpush2.xpose.msra.mxu0 0.0
      %5939 = vmatprep.subr.mxu0 0.0
      %5940 = vmatpush2.xpose.msra.mxu0 0.0
      %5941 = vmatprep.subr.mxu0 0.0
      %5942 = vmatpush2.xpose.msra.mxu0 0.0
      %5943 = vmatprep.subr.mxu0 0.0
      %5944 = vmatpush2.xpose.msra.mxu0 0.0
      %5945 = vmatprep.subr.mxu0 0.0
      %5946 = vmatpush2.xpose.msra.mxu0 0.0
      %5947 = vmatprep.subr.mxu0 0.0
      %5948 = vmatpush2.xpose.msra.mxu0 0.0
      %5949 = vmatprep.subr.mxu0 0.0
      %5950 = vmatpush2.xpose.msra.mxu0 0.0
      %5951 = vmatprep.subr.mxu0 0.0
      %5952 = vmatpush2.xpose.msra.mxu0 0.0
      %5953 = vmatprep.subr.mxu0 0.0
      %5954 = vmatpush2.xpose.msra.mxu0 0.0
      %5955 = vmatprep.subr.mxu0 0.0
      %5956 = vmatpush2.xpose.msra.mxu0 0.0
      %5957 = vmatprep.subr.mxu0 0.0
      %5958 = vmatpush2.xpose.msra.mxu0 0.0
      %5959 = vmatprep.subr.mxu0 0.0
      %5960 = vmatpush2.xpose.msra.mxu0 0.0
      %5961 = vmatprep.subr.mxu0 0.0
      %5962 = vmatpush2.xpose.msra.mxu0 0.0
      %5963 = vmatprep.subr.mxu0 0.0
      %5964 = vmatpush2.xpose.msra.mxu0 0.0
      %5965 = vmatprep.subr.mxu0 0.0
      %5966 = vmatpush2.xpose.msra.mxu0 0.0
      %5967 = vmatprep.subr.mxu0 0.0
      %5968 = vmatpush2.xpose.msra.mxu0 0.0
      %5969 = vmatprep.mubr.f32.mxu0 0.0
      %5970 = vmatmul.mubr.f32.gmra.mxu0 %v5901
      %v5971 = vpop.f32.mrf.mxu0
      %v5972 = vadd.f32 0.0, %v5971
      %v5973 = vpop.f32.mrf.mxu0
      %5974 = vdwg.mxu0
      %5975 = vrot.lane.b32.xlu0 %v1197, 104
      %v5976 = vpop.permute.xlu0 %5975
      %5977 = vrot.lane.b32.xlu0 %v1197, 72
      %v5978 = vpop.permute.xlu0 %5977
      %v5979 = vsel %vm1213, %v5976, 0
      %v5981 = vsel %vm1213, %v5978, 0
      %5983 = vmatprep.subr.mxu0 0.0
      %5984 = vmatpush1.xpose.msra.mxu0 0.0
      %5985 = vmatprep.subr.mxu0 0.0
      %5986 = vmatpush1.xpose.msra.mxu0 0.0
      %5987 = vmatprep.subr.mxu0 0.0
      %5988 = vmatpush1.xpose.msra.mxu0 0.0
      %5989 = vmatprep.subr.mxu0 0.0
      %5990 = vmatpush1.xpose.msra.mxu0 0.0
      %5991 = vmatprep.subr.mxu0 0.0
      %5992 = vmatpush1.xpose.msra.mxu0 0.0
      %5993 = vmatprep.subr.mxu0 0.0
      %5994 = vmatpush1.xpose.msra.mxu0 0.0
      %5995 = vmatprep.subr.mxu0 0.0
      %5996 = vmatpush1.xpose.msra.mxu0 0.0
      %5997 = vmatprep.subr.mxu0 0.0
      %5998 = vmatpush1.xpose.msra.mxu0 0.0
      %5999 = vmatprep.subr.mxu0 0.0
      %6000 = vmatpush1.xpose.msra.mxu0 0.0
      %6001 = vmatprep.subr.mxu0 0.0
      %6002 = vmatpush1.xpose.msra.mxu0 0.0
      %6003 = vmatprep.subr.mxu0 0.0
      %6004 = vmatpush1.xpose.msra.mxu0 0.0
      %6005 = vmatprep.subr.mxu0 0.0
      %6006 = vmatpush1.xpose.msra.mxu0 0.0
      %6007 = vmatprep.subr.mxu0 0.0
      %6008 = vmatpush1.xpose.msra.mxu0 0.0
      %6009 = vmatprep.subr.mxu0 0.0
      %6010 = vmatpush1.xpose.msra.mxu0 0.0
      %6011 = vmatprep.subr.mxu0 0.0
      %6012 = vmatpush1.xpose.msra.mxu0 0.0
      %6013 = vmatprep.subr.mxu0 0.0
      %6014 = vmatpush1.xpose.msra.mxu0 %v5981
      %6015 = vmatprep.subr.mxu0 0.0
      %6016 = vmatpush2.xpose.msra.mxu0 0.0
      %6017 = vmatprep.subr.mxu0 0.0
      %6018 = vmatpush2.xpose.msra.mxu0 0.0
      %6019 = vmatprep.subr.mxu0 0.0
      %6020 = vmatpush2.xpose.msra.mxu0 0.0
      %6021 = vmatprep.subr.mxu0 0.0
      %6022 = vmatpush2.xpose.msra.mxu0 0.0
      %6023 = vmatprep.subr.mxu0 0.0
      %6024 = vmatpush2.xpose.msra.mxu0 0.0
      %6025 = vmatprep.subr.mxu0 0.0
      %6026 = vmatpush2.xpose.msra.mxu0 0.0
      %6027 = vmatprep.subr.mxu0 0.0
      %6028 = vmatpush2.xpose.msra.mxu0 0.0
      %6029 = vmatprep.subr.mxu0 0.0
      %6030 = vmatpush2.xpose.msra.mxu0 0.0
      %6031 = vmatprep.subr.mxu0 0.0
      %6032 = vmatpush2.xpose.msra.mxu0 0.0
      %6033 = vmatprep.subr.mxu0 0.0
      %6034 = vmatpush2.xpose.msra.mxu0 0.0
      %6035 = vmatprep.subr.mxu0 0.0
      %6036 = vmatpush2.xpose.msra.mxu0 0.0
      %6037 = vmatprep.subr.mxu0 0.0
      %6038 = vmatpush2.xpose.msra.mxu0 0.0
      %6039 = vmatprep.subr.mxu0 0.0
      %6040 = vmatpush2.xpose.msra.mxu0 0.0
      %6041 = vmatprep.subr.mxu0 0.0
      %6042 = vmatpush2.xpose.msra.mxu0 0.0
      %6043 = vmatprep.subr.mxu0 0.0
      %6044 = vmatpush2.xpose.msra.mxu0 0.0
      %6045 = vmatprep.subr.mxu0 0.0
      %6046 = vmatpush2.xpose.msra.mxu0 0.0
      %6047 = vmatprep.mubr.f32.mxu0 0.0
      %6048 = vmatmul.mubr.f32.gmra.mxu0 %v5979
      %v6049 = vpop.f32.mrf.mxu0
      %v6050 = vadd.f32 0.0, %v6049
      %v6051 = vpop.f32.mrf.mxu0
      %6052 = vdwg.mxu0
      %6053 = vrot.lane.b32.xlu0 %v1202, 104
      %v6054 = vpop.permute.xlu0 %6053
      %6055 = vrot.lane.b32.xlu0 %v1202, 72
      %v6056 = vpop.permute.xlu0 %6055
      %v6057 = vsel %vm1213, %v6054, 0
      %v6059 = vsel %vm1213, %v6056, 0
      %6061 = vmatprep.subr.mxu0 0.0
      %6062 = vmatpush1.xpose.msra.mxu0 0.0
      %6063 = vmatprep.subr.mxu0 0.0
      %6064 = vmatpush1.xpose.msra.mxu0 0.0
      %6065 = vmatprep.subr.mxu0 0.0
      %6066 = vmatpush1.xpose.msra.mxu0 0.0
      %6067 = vmatprep.subr.mxu0 0.0
      %6068 = vmatpush1.xpose.msra.mxu0 0.0
      %6069 = vmatprep.subr.mxu0 0.0
      %6070 = vmatpush1.xpose.msra.mxu0 0.0
      %6071 = vmatprep.subr.mxu0 0.0
      %6072 = vmatpush1.xpose.msra.mxu0 0.0
      %6073 = vmatprep.subr.mxu0 0.0
      %6074 = vmatpush1.xpose.msra.mxu0 0.0
      %6075 = vmatprep.subr.mxu0 0.0
      %6076 = vmatpush1.xpose.msra.mxu0 0.0
      %6077 = vmatprep.subr.mxu0 0.0
      %6078 = vmatpush1.xpose.msra.mxu0 0.0
      %6079 = vmatprep.subr.mxu0 0.0
      %6080 = vmatpush1.xpose.msra.mxu0 0.0
      %6081 = vmatprep.subr.mxu0 0.0
      %6082 = vmatpush1.xpose.msra.mxu0 0.0
      %6083 = vmatprep.subr.mxu0 0.0
      %6084 = vmatpush1.xpose.msra.mxu0 0.0
      %6085 = vmatprep.subr.mxu0 0.0
      %6086 = vmatpush1.xpose.msra.mxu0 0.0
      %6087 = vmatprep.subr.mxu0 0.0
      %6088 = vmatpush1.xpose.msra.mxu0 0.0
      %6089 = vmatprep.subr.mxu0 0.0
      %6090 = vmatpush1.xpose.msra.mxu0 0.0
      %6091 = vmatprep.subr.mxu0 0.0
      %6092 = vmatpush1.xpose.msra.mxu0 %v6059
      %6093 = vmatprep.subr.mxu0 0.0
      %6094 = vmatpush2.xpose.msra.mxu0 0.0
      %6095 = vmatprep.subr.mxu0 0.0
      %6096 = vmatpush2.xpose.msra.mxu0 0.0
      %6097 = vmatprep.subr.mxu0 0.0
      %6098 = vmatpush2.xpose.msra.mxu0 0.0
      %6099 = vmatprep.subr.mxu0 0.0
      %6100 = vmatpush2.xpose.msra.mxu0 0.0
      %6101 = vmatprep.subr.mxu0 0.0
      %6102 = vmatpush2.xpose.msra.mxu0 0.0
      %6103 = vmatprep.subr.mxu0 0.0
      %6104 = vmatpush2.xpose.msra.mxu0 0.0
      %6105 = vmatprep.subr.mxu0 0.0
      %6106 = vmatpush2.xpose.msra.mxu0 0.0
      %6107 = vmatprep.subr.mxu0 0.0
      %6108 = vmatpush2.xpose.msra.mxu0 0.0
      %6109 = vmatprep.subr.mxu0 0.0
      %6110 = vmatpush2.xpose.msra.mxu0 0.0
      %6111 = vmatprep.subr.mxu0 0.0
      %6112 = vmatpush2.xpose.msra.mxu0 0.0
      %6113 = vmatprep.subr.mxu0 0.0
      %6114 = vmatpush2.xpose.msra.mxu0 0.0
      %6115 = vmatprep.subr.mxu0 0.0
      %6116 = vmatpush2.xpose.msra.mxu0 0.0
      %6117 = vmatprep.subr.mxu0 0.0
      %6118 = vmatpush2.xpose.msra.mxu0 0.0
      %6119 = vmatprep.subr.mxu0 0.0
      %6120 = vmatpush2.xpose.msra.mxu0 0.0
      %6121 = vmatprep.subr.mxu0 0.0
      %6122 = vmatpush2.xpose.msra.mxu0 0.0
      %6123 = vmatprep.subr.mxu0 0.0
      %6124 = vmatpush2.xpose.msra.mxu0 0.0
      %6125 = vmatprep.mubr.f32.mxu0 0.0
      %6126 = vmatmul.mubr.f32.gmra.mxu0 %v6057
      %v6127 = vpop.f32.mrf.mxu0
      %v6128 = vadd.f32 0.0, %v6127
      %v6129 = vpop.f32.mrf.mxu0
      %6130 = vdwg.mxu0
      %6131 = vrot.lane.b32.xlu0 %v1207, 104
      %v6132 = vpop.permute.xlu0 %6131
      %6133 = vrot.lane.b32.xlu0 %v1207, 72
      %v6134 = vpop.permute.xlu0 %6133
      %v6135 = vsel %vm1213, %v6132, 0
      %v6137 = vsel %vm1213, %v6134, 0
      %6139 = vmatprep.subr.mxu0 0.0
      %6140 = vmatpush1.xpose.msra.mxu0 0.0
      %6141 = vmatprep.subr.mxu0 0.0
      %6142 = vmatpush1.xpose.msra.mxu0 0.0
      %6143 = vmatprep.subr.mxu0 0.0
      %6144 = vmatpush1.xpose.msra.mxu0 0.0
      %6145 = vmatprep.subr.mxu0 0.0
      %6146 = vmatpush1.xpose.msra.mxu0 0.0
      %6147 = vmatprep.subr.mxu0 0.0
      %6148 = vmatpush1.xpose.msra.mxu0 0.0
      %6149 = vmatprep.subr.mxu0 0.0
      %6150 = vmatpush1.xpose.msra.mxu0 0.0
      %6151 = vmatprep.subr.mxu0 0.0
      %6152 = vmatpush1.xpose.msra.mxu0 0.0
      %6153 = vmatprep.subr.mxu0 0.0
      %6154 = vmatpush1.xpose.msra.mxu0 0.0
      %6155 = vmatprep.subr.mxu0 0.0
      %6156 = vmatpush1.xpose.msra.mxu0 0.0
      %6157 = vmatprep.subr.mxu0 0.0
      %6158 = vmatpush1.xpose.msra.mxu0 0.0
      %6159 = vmatprep.subr.mxu0 0.0
      %6160 = vmatpush1.xpose.msra.mxu0 0.0
      %6161 = vmatprep.subr.mxu0 0.0
      %6162 = vmatpush1.xpose.msra.mxu0 0.0
      %6163 = vmatprep.subr.mxu0 0.0
      %6164 = vmatpush1.xpose.msra.mxu0 0.0
      %6165 = vmatprep.subr.mxu0 0.0
      %6166 = vmatpush1.xpose.msra.mxu0 0.0
      %6167 = vmatprep.subr.mxu0 0.0
      %6168 = vmatpush1.xpose.msra.mxu0 0.0
      %6169 = vmatprep.subr.mxu0 0.0
      %6170 = vmatpush1.xpose.msra.mxu0 %v6137
      %6171 = vmatprep.subr.mxu0 0.0
      %6172 = vmatpush2.xpose.msra.mxu0 0.0
      %6173 = vmatprep.subr.mxu0 0.0
      %6174 = vmatpush2.xpose.msra.mxu0 0.0
      %6175 = vmatprep.subr.mxu0 0.0
      %6176 = vmatpush2.xpose.msra.mxu0 0.0
      %6177 = vmatprep.subr.mxu0 0.0
      %6178 = vmatpush2.xpose.msra.mxu0 0.0
      %6179 = vmatprep.subr.mxu0 0.0
      %6180 = vmatpush2.xpose.msra.mxu0 0.0
      %6181 = vmatprep.subr.mxu0 0.0
      %6182 = vmatpush2.xpose.msra.mxu0 0.0
      %6183 = vmatprep.subr.mxu0 0.0
      %6184 = vmatpush2.xpose.msra.mxu0 0.0
      %6185 = vmatprep.subr.mxu0 0.0
      %6186 = vmatpush2.xpose.msra.mxu0 0.0
      %6187 = vmatprep.subr.mxu0 0.0
      %6188 = vmatpush2.xpose.msra.mxu0 0.0
      %6189 = vmatprep.subr.mxu0 0.0
      %6190 = vmatpush2.xpose.msra.mxu0 0.0
      %6191 = vmatprep.subr.mxu0 0.0
      %6192 = vmatpush2.xpose.msra.mxu0 0.0
      %6193 = vmatprep.subr.mxu0 0.0
      %6194 = vmatpush2.xpose.msra.mxu0 0.0
      %6195 = vmatprep.subr.mxu0 0.0
      %6196 = vmatpush2.xpose.msra.mxu0 0.0
      %6197 = vmatprep.subr.mxu0 0.0
      %6198 = vmatpush2.xpose.msra.mxu0 0.0
      %6199 = vmatprep.subr.mxu0 0.0
      %6200 = vmatpush2.xpose.msra.mxu0 0.0
      %6201 = vmatprep.subr.mxu0 0.0
      %6202 = vmatpush2.xpose.msra.mxu0 0.0
      %6203 = vmatprep.mubr.f32.mxu0 0.0
      %6204 = vmatmul.mubr.f32.gmra.mxu0 %v6135
      %v6205 = vpop.f32.mrf.mxu0
      %v6206 = vadd.f32 0.0, %v6205
      %v6207 = vpop.f32.mrf.mxu0
      %6208 = vdwg.mxu0
      %v6209 = vmul.f32 %v5660, 0.35355338
      %v6210 = vmul.f32 %v5738, 0.35355338
      %v6211 = vmul.f32 %v5816, 0.35355338
      %v6212 = vmul.f32 %v5894, 0.35355338
      %v6213 = vmul.f32 %v5972, 0.35355338
      %v6214 = vmul.f32 %v6050, 0.35355338
      %v6215 = vmul.f32 %v6128, 0.35355338
      %v6216 = vmul.f32 %v6206, 0.35355338
      %v6217 = vsel %vm1213, %v6209, -inf
      %6218 = vmax.xlane.f32.xlu0 %v6217
      %v6219 = vpop.xlane.xlu0 %6218
      %v6220 = vsel %vm1213, %v6210, -inf
      %6221 = vmax.xlane.f32.xlu0 %v6220
      %v6222 = vpop.xlane.xlu0 %6221
      %v6223 = vsel %vm1213, %v6211, -inf
      %6224 = vmax.xlane.f32.xlu0 %v6223
      %v6225 = vpop.xlane.xlu0 %6224
      %v6226 = vsel %vm1213, %v6212, -inf
      %6227 = vmax.xlane.f32.xlu0 %v6226
      %v6228 = vpop.xlane.xlu0 %6227
      %v6229 = vsel %vm1213, %v6213, -inf
      %6230 = vmax.xlane.f32.xlu0 %v6229
      %v6231 = vpop.xlane.xlu0 %6230
      %v6232 = vsel %vm1213, %v6214, -inf
      %6233 = vmax.xlane.f32.xlu0 %v6232
      %v6234 = vpop.xlane.xlu0 %6233
      %v6235 = vsel %vm1213, %v6215, -inf
      %6236 = vmax.xlane.f32.xlu0 %v6235
      %v6237 = vpop.xlane.xlu0 %6236
      %v6238 = vsel %vm1213, %v6216, -inf
      %6239 = vmax.xlane.f32.xlu0 %v6238
      %v6240 = vpop.xlane.xlu0 %6239
      %v6241 = vsub.f32 %v6209, %v6219
      %v6242 = vsub.f32 %v6210, %v6222
      %v6243 = vsub.f32 %v6211, %v6225
      %v6244 = vsub.f32 %v6212, %v6228
      %v6245 = vsub.f32 %v6213, %v6231
      %v6246 = vsub.f32 %v6214, %v6234
      %v6247 = vsub.f32 %v6215, %v6237
      %v6248 = vsub.f32 %v6216, %v6240
      %v6249 = vmul.f32 %v6241, 1.442695
      %v6250 = vpow.pop %v6249
      %v6251 = vmul.f32 %v6242, 1.442695
      %v6252 = vpow.pop %v6251
      %v6253 = vmul.f32 %v6243, 1.442695
      %v6254 = vpow.pop %v6253
      %v6255 = vmul.f32 %v6244, 1.442695
      %v6256 = vpow.pop %v6255
      %v6257 = vmul.f32 %v6245, 1.442695
      %v6258 = vpow.pop %v6257
      %v6259 = vmul.f32 %v6246, 1.442695
      %v6260 = vpow.pop %v6259
      %v6261 = vmul.f32 %v6247, 1.442695
      %v6262 = vpow.pop %v6261
      %v6263 = vmul.f32 %v6248, 1.442695
      %v6264 = vpow.pop %v6263
      %v6265 = vsel %vm1213, %v6250, 0.0
      %6266 = vadd.xlane.f32.xlu0 %v6265
      %v6267 = vpop.xlane.xlu0 %6266
      %v6268 = vsel %vm1213, %v6252, 0.0
      %6269 = vadd.xlane.f32.xlu0 %v6268
      %v6270 = vpop.xlane.xlu0 %6269
      %v6271 = vsel %vm1213, %v6254, 0.0
      %6272 = vadd.xlane.f32.xlu0 %v6271
      %v6273 = vpop.xlane.xlu0 %6272
      %v6274 = vsel %vm1213, %v6256, 0.0
      %6275 = vadd.xlane.f32.xlu0 %v6274
      %v6276 = vpop.xlane.xlu0 %6275
      %v6277 = vsel %vm1213, %v6258, 0.0
      %6278 = vadd.xlane.f32.xlu0 %v6277
      %v6279 = vpop.xlane.xlu0 %6278
      %v6280 = vsel %vm1213, %v6260, 0.0
      %6281 = vadd.xlane.f32.xlu0 %v6280
      %v6282 = vpop.xlane.xlu0 %6281
      %v6283 = vsel %vm1213, %v6262, 0.0
      %6284 = vadd.xlane.f32.xlu0 %v6283
      %v6285 = vpop.xlane.xlu0 %6284
      %v6286 = vsel %vm1213, %v6264, 0.0
      %6287 = vadd.xlane.f32.xlu0 %v6286
      %v6288 = vpop.xlane.xlu0 %6287
      %v6289 = vrcp.pop %v6267
      %v6290 = vmul.f32 %v6250, %v6289
      %v6291 = vrcp.pop %v6270
      %v6292 = vmul.f32 %v6252, %v6291
      %v6293 = vrcp.pop %v6273
      %v6294 = vmul.f32 %v6254, %v6293
      %v6295 = vrcp.pop %v6276
      %v6296 = vmul.f32 %v6256, %v6295
      %v6297 = vrcp.pop %v6279
      %v6298 = vmul.f32 %v6258, %v6297
      %v6299 = vrcp.pop %v6282
      %v6300 = vmul.f32 %v6260, %v6299
      %v6301 = vrcp.pop %v6285
      %v6302 = vmul.f32 %v6262, %v6301
      %v6303 = vrcp.pop %v6288
      %v6304 = vmul.f32 %v6264, %v6303
      %6305 = vrot.lane.b32.xlu0 %v1172, 40
      %v6306 = vpop.permute.xlu0 %6305
      %v6309 = vsel %vm1213, %v6290, 0
      %6311 = vmatprep.subr.mxu0 0.0
      %6312 = vmatpush1.msra.mxu0 0.0
      %6313 = vmatprep.subr.mxu0 0.0
      %6314 = vmatpush1.msra.mxu0 0.0
      %6315 = vmatprep.subr.mxu0 0.0
      %6316 = vmatpush1.msra.mxu0 0.0
      %6317 = vmatprep.subr.mxu0 0.0
      %6318 = vmatpush1.msra.mxu0 0.0
      %6319 = vmatprep.subr.mxu0 0.0
      %6320 = vmatpush1.msra.mxu0 0.0
      %6321 = vmatprep.subr.mxu0 0.0
      %6322 = vmatpush1.msra.mxu0 0.0
      %6323 = vmatprep.subr.mxu0 0.0
      %6324 = vmatpush1.msra.mxu0 0.0
      %6325 = vmatprep.subr.mxu0 0.0
      %6326 = vmatpush1.msra.mxu0 0.0
      %6327 = vmatprep.subr.mxu0 0.0
      %6328 = vmatpush1.msra.mxu0 0.0
      %6329 = vmatprep.subr.mxu0 0.0
      %6330 = vmatpush1.msra.mxu0 0.0
      %6331 = vmatprep.subr.mxu0 0.0
      %6332 = vmatpush1.msra.mxu0 0.0
      %6333 = vmatprep.subr.mxu0 0.0
      %6334 = vmatpush1.msra.mxu0 0.0
      %6335 = vmatprep.subr.mxu0 0.0
      %6336 = vmatpush1.msra.mxu0 0.0
      %6337 = vmatprep.subr.mxu0 0.0
      %6338 = vmatpush1.msra.mxu0 0.0
      %6339 = vmatprep.subr.mxu0 0.0
      %6340 = vmatpush1.msra.mxu0 0.0
      %6341 = vmatprep.subr.mxu0 0.0
      %6342 = vmatpush1.msra.mxu0 %v6306
      %6343 = vmatprep.subr.mxu0 0.0
      %6344 = vmatpush2.msra.mxu0 0.0
      %6345 = vmatprep.subr.mxu0 0.0
      %6346 = vmatpush2.msra.mxu0 0.0
      %6347 = vmatprep.subr.mxu0 0.0
      %6348 = vmatpush2.msra.mxu0 0.0
      %6349 = vmatprep.subr.mxu0 0.0
      %6350 = vmatpush2.msra.mxu0 0.0
      %6351 = vmatprep.subr.mxu0 0.0
      %6352 = vmatpush2.msra.mxu0 0.0
      %6353 = vmatprep.subr.mxu0 0.0
      %6354 = vmatpush2.msra.mxu0 0.0
      %6355 = vmatprep.subr.mxu0 0.0
      %6356 = vmatpush2.msra.mxu0 0.0
      %6357 = vmatprep.subr.mxu0 0.0
      %6358 = vmatpush2.msra.mxu0 0.0
      %6359 = vmatprep.subr.mxu0 0.0
      %6360 = vmatpush2.msra.mxu0 0.0
      %6361 = vmatprep.subr.mxu0 0.0
      %6362 = vmatpush2.msra.mxu0 0.0
      %6363 = vmatprep.subr.mxu0 0.0
      %6364 = vmatpush2.msra.mxu0 0.0
      %6365 = vmatprep.subr.mxu0 0.0
      %6366 = vmatpush2.msra.mxu0 0.0
      %6367 = vmatprep.subr.mxu0 0.0
      %6368 = vmatpush2.msra.mxu0 0.0
      %6369 = vmatprep.subr.mxu0 0.0
      %6370 = vmatpush2.msra.mxu0 0.0
      %6371 = vmatprep.subr.mxu0 0.0
      %6372 = vmatpush2.msra.mxu0 0.0
      %6373 = vmatprep.subr.mxu0 0.0
      %6374 = vmatpush2.msra.mxu0 0.0
      %6375 = vmatprep.mubr.f32.mxu0 0.0
      %6376 = vmatmul.mubr.f32.gmra.mxu0 %v6309
      %v6377 = vpop.f32.mrf.mxu0
      %v6378 = vadd.f32 0.0, %v6377
      %v6379 = vpop.f32.mrf.mxu0
      %6380 = vdwg.mxu0
      %6381 = vrot.lane.b32.xlu0 %v1177, 40
      %v6382 = vpop.permute.xlu0 %6381
      %v6385 = vsel %vm1213, %v6292, 0
      %6387 = vmatprep.subr.mxu0 0.0
      %6388 = vmatpush1.msra.mxu0 0.0
      %6389 = vmatprep.subr.mxu0 0.0
      %6390 = vmatpush1.msra.mxu0 0.0
      %6391 = vmatprep.subr.mxu0 0.0
      %6392 = vmatpush1.msra.mxu0 0.0
      %6393 = vmatprep.subr.mxu0 0.0
      %6394 = vmatpush1.msra.mxu0 0.0
      %6395 = vmatprep.subr.mxu0 0.0
      %6396 = vmatpush1.msra.mxu0 0.0
      %6397 = vmatprep.subr.mxu0 0.0
      %6398 = vmatpush1.msra.mxu0 0.0
      %6399 = vmatprep.subr.mxu0 0.0
      %6400 = vmatpush1.msra.mxu0 0.0
      %6401 = vmatprep.subr.mxu0 0.0
      %6402 = vmatpush1.msra.mxu0 0.0
      %6403 = vmatprep.subr.mxu0 0.0
      %6404 = vmatpush1.msra.mxu0 0.0
      %6405 = vmatprep.subr.mxu0 0.0
      %6406 = vmatpush1.msra.mxu0 0.0
      %6407 = vmatprep.subr.mxu0 0.0
      %6408 = vmatpush1.msra.mxu0 0.0
      %6409 = vmatprep.subr.mxu0 0.0
      %6410 = vmatpush1.msra.mxu0 0.0
      %6411 = vmatprep.subr.mxu0 0.0
      %6412 = vmatpush1.msra.mxu0 0.0
      %6413 = vmatprep.subr.mxu0 0.0
      %6414 = vmatpush1.msra.mxu0 0.0
      %6415 = vmatprep.subr.mxu0 0.0
      %6416 = vmatpush1.msra.mxu0 0.0
      %6417 = vmatprep.subr.mxu0 0.0
      %6418 = vmatpush1.msra.mxu0 %v6382
      %6419 = vmatprep.subr.mxu0 0.0
      %6420 = vmatpush2.msra.mxu0 0.0
      %6421 = vmatprep.subr.mxu0 0.0
      %6422 = vmatpush2.msra.mxu0 0.0
      %6423 = vmatprep.subr.mxu0 0.0
      %6424 = vmatpush2.msra.mxu0 0.0
      %6425 = vmatprep.subr.mxu0 0.0
      %6426 = vmatpush2.msra.mxu0 0.0
      %6427 = vmatprep.subr.mxu0 0.0
      %6428 = vmatpush2.msra.mxu0 0.0
      %6429 = vmatprep.subr.mxu0 0.0
      %6430 = vmatpush2.msra.mxu0 0.0
      %6431 = vmatprep.subr.mxu0 0.0
      %6432 = vmatpush2.msra.mxu0 0.0
      %6433 = vmatprep.subr.mxu0 0.0
      %6434 = vmatpush2.msra.mxu0 0.0
      %6435 = vmatprep.subr.mxu0 0.0
      %6436 = vmatpush2.msra.mxu0 0.0
      %6437 = vmatprep.subr.mxu0 0.0
      %6438 = vmatpush2.msra.mxu0 0.0
      %6439 = vmatprep.subr.mxu0 0.0
      %6440 = vmatpush2.msra.mxu0 0.0
      %6441 = vmatprep.subr.mxu0 0.0
      %6442 = vmatpush2.msra.mxu0 0.0
      %6443 = vmatprep.subr.mxu0 0.0
      %6444 = vmatpush2.msra.mxu0 0.0
      %6445 = vmatprep.subr.mxu0 0.0
      %6446 = vmatpush2.msra.mxu0 0.0
      %6447 = vmatprep.subr.mxu0 0.0
      %6448 = vmatpush2.msra.mxu0 0.0
      %6449 = vmatprep.subr.mxu0 0.0
      %6450 = vmatpush2.msra.mxu0 0.0
      %6451 = vmatprep.mubr.f32.mxu0 0.0
      %6452 = vmatmul.mubr.f32.gmra.mxu0 %v6385
      %v6453 = vpop.f32.mrf.mxu0
      %v6454 = vadd.f32 0.0, %v6453
      %v6455 = vpop.f32.mrf.mxu0
      %6456 = vdwg.mxu0
      %6457 = vrot.lane.b32.xlu0 %v1182, 40
      %v6458 = vpop.permute.xlu0 %6457
      %v6461 = vsel %vm1213, %v6294, 0
      %6463 = vmatprep.subr.mxu0 0.0
      %6464 = vmatpush1.msra.mxu0 0.0
      %6465 = vmatprep.subr.mxu0 0.0
      %6466 = vmatpush1.msra.mxu0 0.0
      %6467 = vmatprep.subr.mxu0 0.0
      %6468 = vmatpush1.msra.mxu0 0.0
      %6469 = vmatprep.subr.mxu0 0.0
      %6470 = vmatpush1.msra.mxu0 0.0
      %6471 = vmatprep.subr.mxu0 0.0
      %6472 = vmatpush1.msra.mxu0 0.0
      %6473 = vmatprep.subr.mxu0 0.0
      %6474 = vmatpush1.msra.mxu0 0.0
      %6475 = vmatprep.subr.mxu0 0.0
      %6476 = vmatpush1.msra.mxu0 0.0
      %6477 = vmatprep.subr.mxu0 0.0
      %6478 = vmatpush1.msra.mxu0 0.0
      %6479 = vmatprep.subr.mxu0 0.0
      %6480 = vmatpush1.msra.mxu0 0.0
      %6481 = vmatprep.subr.mxu0 0.0
      %6482 = vmatpush1.msra.mxu0 0.0
      %6483 = vmatprep.subr.mxu0 0.0
      %6484 = vmatpush1.msra.mxu0 0.0
      %6485 = vmatprep.subr.mxu0 0.0
      %6486 = vmatpush1.msra.mxu0 0.0
      %6487 = vmatprep.subr.mxu0 0.0
      %6488 = vmatpush1.msra.mxu0 0.0
      %6489 = vmatprep.subr.mxu0 0.0
      %6490 = vmatpush1.msra.mxu0 0.0
      %6491 = vmatprep.subr.mxu0 0.0
      %6492 = vmatpush1.msra.mxu0 0.0
      %6493 = vmatprep.subr.mxu0 0.0
      %6494 = vmatpush1.msra.mxu0 %v6458
      %6495 = vmatprep.subr.mxu0 0.0
      %6496 = vmatpush2.msra.mxu0 0.0
      %6497 = vmatprep.subr.mxu0 0.0
      %6498 = vmatpush2.msra.mxu0 0.0
      %6499 = vmatprep.subr.mxu0 0.0
      %6500 = vmatpush2.msra.mxu0 0.0
      %6501 = vmatprep.subr.mxu0 0.0
      %6502 = vmatpush2.msra.mxu0 0.0
      %6503 = vmatprep.subr.mxu0 0.0
      %6504 = vmatpush2.msra.mxu0 0.0
      %6505 = vmatprep.subr.mxu0 0.0
      %6506 = vmatpush2.msra.mxu0 0.0
      %6507 = vmatprep.subr.mxu0 0.0
      %6508 = vmatpush2.msra.mxu0 0.0
      %6509 = vmatprep.subr.mxu0 0.0
      %6510 = vmatpush2.msra.mxu0 0.0
      %6511 = vmatprep.subr.mxu0 0.0
      %6512 = vmatpush2.msra.mxu0 0.0
      %6513 = vmatprep.subr.mxu0 0.0
      %6514 = vmatpush2.msra.mxu0 0.0
      %6515 = vmatprep.subr.mxu0 0.0
      %6516 = vmatpush2.msra.mxu0 0.0
      %6517 = vmatprep.subr.mxu0 0.0
      %6518 = vmatpush2.msra.mxu0 0.0
      %6519 = vmatprep.subr.mxu0 0.0
      %6520 = vmatpush2.msra.mxu0 0.0
      %6521 = vmatprep.subr.mxu0 0.0
      %6522 = vmatpush2.msra.mxu0 0.0
      %6523 = vmatprep.subr.mxu0 0.0
      %6524 = vmatpush2.msra.mxu0 0.0
      %6525 = vmatprep.subr.mxu0 0.0
      %6526 = vmatpush2.msra.mxu0 0.0
      %6527 = vmatprep.mubr.f32.mxu0 0.0
      %6528 = vmatmul.mubr.f32.gmra.mxu0 %v6461
      %v6529 = vpop.f32.mrf.mxu0
      %v6530 = vadd.f32 0.0, %v6529
      %v6531 = vpop.f32.mrf.mxu0
      %6532 = vdwg.mxu0
      %6533 = vrot.lane.b32.xlu0 %v1187, 40
      %v6534 = vpop.permute.xlu0 %6533
      %v6537 = vsel %vm1213, %v6296, 0
      %6539 = vmatprep.subr.mxu0 0.0
      %6540 = vmatpush1.msra.mxu0 0.0
      %6541 = vmatprep.subr.mxu0 0.0
      %6542 = vmatpush1.msra.mxu0 0.0
      %6543 = vmatprep.subr.mxu0 0.0
      %6544 = vmatpush1.msra.mxu0 0.0
      %6545 = vmatprep.subr.mxu0 0.0
      %6546 = vmatpush1.msra.mxu0 0.0
      %6547 = vmatprep.subr.mxu0 0.0
      %6548 = vmatpush1.msra.mxu0 0.0
      %6549 = vmatprep.subr.mxu0 0.0
      %6550 = vmatpush1.msra.mxu0 0.0
      %6551 = vmatprep.subr.mxu0 0.0
      %6552 = vmatpush1.msra.mxu0 0.0
      %6553 = vmatprep.subr.mxu0 0.0
      %6554 = vmatpush1.msra.mxu0 0.0
      %6555 = vmatprep.subr.mxu0 0.0
      %6556 = vmatpush1.msra.mxu0 0.0
      %6557 = vmatprep.subr.mxu0 0.0
      %6558 = vmatpush1.msra.mxu0 0.0
      %6559 = vmatprep.subr.mxu0 0.0
      %6560 = vmatpush1.msra.mxu0 0.0
      %6561 = vmatprep.subr.mxu0 0.0
      %6562 = vmatpush1.msra.mxu0 0.0
      %6563 = vmatprep.subr.mxu0 0.0
      %6564 = vmatpush1.msra.mxu0 0.0
      %6565 = vmatprep.subr.mxu0 0.0
      %6566 = vmatpush1.msra.mxu0 0.0
      %6567 = vmatprep.subr.mxu0 0.0
      %6568 = vmatpush1.msra.mxu0 0.0
      %6569 = vmatprep.subr.mxu0 0.0
      %6570 = vmatpush1.msra.mxu0 %v6534
      %6571 = vmatprep.subr.mxu0 0.0
      %6572 = vmatpush2.msra.mxu0 0.0
      %6573 = vmatprep.subr.mxu0 0.0
      %6574 = vmatpush2.msra.mxu0 0.0
      %6575 = vmatprep.subr.mxu0 0.0
      %6576 = vmatpush2.msra.mxu0 0.0
      %6577 = vmatprep.subr.mxu0 0.0
      %6578 = vmatpush2.msra.mxu0 0.0
      %6579 = vmatprep.subr.mxu0 0.0
      %6580 = vmatpush2.msra.mxu0 0.0
      %6581 = vmatprep.subr.mxu0 0.0
      %6582 = vmatpush2.msra.mxu0 0.0
      %6583 = vmatprep.subr.mxu0 0.0
      %6584 = vmatpush2.msra.mxu0 0.0
      %6585 = vmatprep.subr.mxu0 0.0
      %6586 = vmatpush2.msra.mxu0 0.0
      %6587 = vmatprep.subr.mxu0 0.0
      %6588 = vmatpush2.msra.mxu0 0.0
      %6589 = vmatprep.subr.mxu0 0.0
      %6590 = vmatpush2.msra.mxu0 0.0
      %6591 = vmatprep.subr.mxu0 0.0
      %6592 = vmatpush2.msra.mxu0 0.0
      %6593 = vmatprep.subr.mxu0 0.0
      %6594 = vmatpush2.msra.mxu0 0.0
      %6595 = vmatprep.subr.mxu0 0.0
      %6596 = vmatpush2.msra.mxu0 0.0
      %6597 = vmatprep.subr.mxu0 0.0
      %6598 = vmatpush2.msra.mxu0 0.0
      %6599 = vmatprep.subr.mxu0 0.0
      %6600 = vmatpush2.msra.mxu0 0.0
      %6601 = vmatprep.subr.mxu0 0.0
      %6602 = vmatpush2.msra.mxu0 0.0
      %6603 = vmatprep.mubr.f32.mxu0 0.0
      %6604 = vmatmul.mubr.f32.gmra.mxu0 %v6537
      %v6605 = vpop.f32.mrf.mxu0
      %v6606 = vadd.f32 0.0, %v6605
      %v6607 = vpop.f32.mrf.mxu0
      %6608 = vdwg.mxu0
      %6609 = vrot.lane.b32.xlu0 %v1192, 40
      %v6610 = vpop.permute.xlu0 %6609
      %v6613 = vsel %vm1213, %v6298, 0
      %6615 = vmatprep.subr.mxu0 0.0
      %6616 = vmatpush1.msra.mxu0 0.0
      %6617 = vmatprep.subr.mxu0 0.0
      %6618 = vmatpush1.msra.mxu0 0.0
      %6619 = vmatprep.subr.mxu0 0.0
      %6620 = vmatpush1.msra.mxu0 0.0
      %6621 = vmatprep.subr.mxu0 0.0
      %6622 = vmatpush1.msra.mxu0 0.0
      %6623 = vmatprep.subr.mxu0 0.0
      %6624 = vmatpush1.msra.mxu0 0.0
      %6625 = vmatprep.subr.mxu0 0.0
      %6626 = vmatpush1.msra.mxu0 0.0
      %6627 = vmatprep.subr.mxu0 0.0
      %6628 = vmatpush1.msra.mxu0 0.0
      %6629 = vmatprep.subr.mxu0 0.0
      %6630 = vmatpush1.msra.mxu0 0.0
      %6631 = vmatprep.subr.mxu0 0.0
      %6632 = vmatpush1.msra.mxu0 0.0
      %6633 = vmatprep.subr.mxu0 0.0
      %6634 = vmatpush1.msra.mxu0 0.0
      %6635 = vmatprep.subr.mxu0 0.0
      %6636 = vmatpush1.msra.mxu0 0.0
      %6637 = vmatprep.subr.mxu0 0.0
      %6638 = vmatpush1.msra.mxu0 0.0
      %6639 = vmatprep.subr.mxu0 0.0
      %6640 = vmatpush1.msra.mxu0 0.0
      %6641 = vmatprep.subr.mxu0 0.0
      %6642 = vmatpush1.msra.mxu0 0.0
      %6643 = vmatprep.subr.mxu0 0.0
      %6644 = vmatpush1.msra.mxu0 0.0
      %6645 = vmatprep.subr.mxu0 0.0
      %6646 = vmatpush1.msra.mxu0 %v6610
      %6647 = vmatprep.subr.mxu0 0.0
      %6648 = vmatpush2.msra.mxu0 0.0
      %6649 = vmatprep.subr.mxu0 0.0
      %6650 = vmatpush2.msra.mxu0 0.0
      %6651 = vmatprep.subr.mxu0 0.0
      %6652 = vmatpush2.msra.mxu0 0.0
      %6653 = vmatprep.subr.mxu0 0.0
      %6654 = vmatpush2.msra.mxu0 0.0
      %6655 = vmatprep.subr.mxu0 0.0
      %6656 = vmatpush2.msra.mxu0 0.0
      %6657 = vmatprep.subr.mxu0 0.0
      %6658 = vmatpush2.msra.mxu0 0.0
      %6659 = vmatprep.subr.mxu0 0.0
      %6660 = vmatpush2.msra.mxu0 0.0
      %6661 = vmatprep.subr.mxu0 0.0
      %6662 = vmatpush2.msra.mxu0 0.0
      %6663 = vmatprep.subr.mxu0 0.0
      %6664 = vmatpush2.msra.mxu0 0.0
      %6665 = vmatprep.subr.mxu0 0.0
      %6666 = vmatpush2.msra.mxu0 0.0
      %6667 = vmatprep.subr.mxu0 0.0
      %6668 = vmatpush2.msra.mxu0 0.0
      %6669 = vmatprep.subr.mxu0 0.0
      %6670 = vmatpush2.msra.mxu0 0.0
      %6671 = vmatprep.subr.mxu0 0.0
      %6672 = vmatpush2.msra.mxu0 0.0
      %6673 = vmatprep.subr.mxu0 0.0
      %6674 = vmatpush2.msra.mxu0 0.0
      %6675 = vmatprep.subr.mxu0 0.0
      %6676 = vmatpush2.msra.mxu0 0.0
      %6677 = vmatprep.subr.mxu0 0.0
      %6678 = vmatpush2.msra.mxu0 0.0
      %6679 = vmatprep.mubr.f32.mxu0 0.0
      %6680 = vmatmul.mubr.f32.gmra.mxu0 %v6613
      %v6681 = vpop.f32.mrf.mxu0
      %v6682 = vadd.f32 0.0, %v6681
      %v6683 = vpop.f32.mrf.mxu0
      %6684 = vdwg.mxu0
      %6685 = vrot.lane.b32.xlu0 %v1197, 40
      %v6686 = vpop.permute.xlu0 %6685
      %v6689 = vsel %vm1213, %v6300, 0
      %6691 = vmatprep.subr.mxu0 0.0
      %6692 = vmatpush1.msra.mxu0 0.0
      %6693 = vmatprep.subr.mxu0 0.0
      %6694 = vmatpush1.msra.mxu0 0.0
      %6695 = vmatprep.subr.mxu0 0.0
      %6696 = vmatpush1.msra.mxu0 0.0
      %6697 = vmatprep.subr.mxu0 0.0
      %6698 = vmatpush1.msra.mxu0 0.0
      %6699 = vmatprep.subr.mxu0 0.0
      %6700 = vmatpush1.msra.mxu0 0.0
      %6701 = vmatprep.subr.mxu0 0.0
      %6702 = vmatpush1.msra.mxu0 0.0
      %6703 = vmatprep.subr.mxu0 0.0
      %6704 = vmatpush1.msra.mxu0 0.0
      %6705 = vmatprep.subr.mxu0 0.0
      %6706 = vmatpush1.msra.mxu0 0.0
      %6707 = vmatprep.subr.mxu0 0.0
      %6708 = vmatpush1.msra.mxu0 0.0
      %6709 = vmatprep.subr.mxu0 0.0
      %6710 = vmatpush1.msra.mxu0 0.0
      %6711 = vmatprep.subr.mxu0 0.0
      %6712 = vmatpush1.msra.mxu0 0.0
      %6713 = vmatprep.subr.mxu0 0.0
      %6714 = vmatpush1.msra.mxu0 0.0
      %6715 = vmatprep.subr.mxu0 0.0
      %6716 = vmatpush1.msra.mxu0 0.0
      %6717 = vmatprep.subr.mxu0 0.0
      %6718 = vmatpush1.msra.mxu0 0.0
      %6719 = vmatprep.subr.mxu0 0.0
      %6720 = vmatpush1.msra.mxu0 0.0
      %6721 = vmatprep.subr.mxu0 0.0
      %6722 = vmatpush1.msra.mxu0 %v6686
      %6723 = vmatprep.subr.mxu0 0.0
      %6724 = vmatpush2.msra.mxu0 0.0
      %6725 = vmatprep.subr.mxu0 0.0
      %6726 = vmatpush2.msra.mxu0 0.0
      %6727 = vmatprep.subr.mxu0 0.0
      %6728 = vmatpush2.msra.mxu0 0.0
      %6729 = vmatprep.subr.mxu0 0.0
      %6730 = vmatpush2.msra.mxu0 0.0
      %6731 = vmatprep.subr.mxu0 0.0
      %6732 = vmatpush2.msra.mxu0 0.0
      %6733 = vmatprep.subr.mxu0 0.0
      %6734 = vmatpush2.msra.mxu0 0.0
      %6735 = vmatprep.subr.mxu0 0.0
      %6736 = vmatpush2.msra.mxu0 0.0
      %6737 = vmatprep.subr.mxu0 0.0
      %6738 = vmatpush2.msra.mxu0 0.0
      %6739 = vmatprep.subr.mxu0 0.0
      %6740 = vmatpush2.msra.mxu0 0.0
      %6741 = vmatprep.subr.mxu0 0.0
      %6742 = vmatpush2.msra.mxu0 0.0
      %6743 = vmatprep.subr.mxu0 0.0
      %6744 = vmatpush2.msra.mxu0 0.0
      %6745 = vmatprep.subr.mxu0 0.0
      %6746 = vmatpush2.msra.mxu0 0.0
      %6747 = vmatprep.subr.mxu0 0.0
      %6748 = vmatpush2.msra.mxu0 0.0
      %6749 = vmatprep.subr.mxu0 0.0
      %6750 = vmatpush2.msra.mxu0 0.0
      %6751 = vmatprep.subr.mxu0 0.0
      %6752 = vmatpush2.msra.mxu0 0.0
      %6753 = vmatprep.subr.mxu0 0.0
      %6754 = vmatpush2.msra.mxu0 0.0
      %6755 = vmatprep.mubr.f32.mxu0 0.0
      %6756 = vmatmul.mubr.f32.gmra.mxu0 %v6689
      %v6757 = vpop.f32.mrf.mxu0
      %v6758 = vadd.f32 0.0, %v6757
      %v6759 = vpop.f32.mrf.mxu0
      %6760 = vdwg.mxu0
      %6761 = vrot.lane.b32.xlu0 %v1202, 40
      %v6762 = vpop.permute.xlu0 %6761
      %v6765 = vsel %vm1213, %v6302, 0
      %6767 = vmatprep.subr.mxu0 0.0
      %6768 = vmatpush1.msra.mxu0 0.0
      %6769 = vmatprep.subr.mxu0 0.0
      %6770 = vmatpush1.msra.mxu0 0.0
      %6771 = vmatprep.subr.mxu0 0.0
      %6772 = vmatpush1.msra.mxu0 0.0
      %6773 = vmatprep.subr.mxu0 0.0
      %6774 = vmatpush1.msra.mxu0 0.0
      %6775 = vmatprep.subr.mxu0 0.0
      %6776 = vmatpush1.msra.mxu0 0.0
      %6777 = vmatprep.subr.mxu0 0.0
      %6778 = vmatpush1.msra.mxu0 0.0
      %6779 = vmatprep.subr.mxu0 0.0
      %6780 = vmatpush1.msra.mxu0 0.0
      %6781 = vmatprep.subr.mxu0 0.0
      %6782 = vmatpush1.msra.mxu0 0.0
      %6783 = vmatprep.subr.mxu0 0.0
      %6784 = vmatpush1.msra.mxu0 0.0
      %6785 = vmatprep.subr.mxu0 0.0
      %6786 = vmatpush1.msra.mxu0 0.0
      %6787 = vmatprep.subr.mxu0 0.0
      %6788 = vmatpush1.msra.mxu0 0.0
      %6789 = vmatprep.subr.mxu0 0.0
      %6790 = vmatpush1.msra.mxu0 0.0
      %6791 = vmatprep.subr.mxu0 0.0
      %6792 = vmatpush1.msra.mxu0 0.0
      %6793 = vmatprep.subr.mxu0 0.0
      %6794 = vmatpush1.msra.mxu0 0.0
      %6795 = vmatprep.subr.mxu0 0.0
      %6796 = vmatpush1.msra.mxu0 0.0
      %6797 = vmatprep.subr.mxu0 0.0
      %6798 = vmatpush1.msra.mxu0 %v6762
      %6799 = vmatprep.subr.mxu0 0.0
      %6800 = vmatpush2.msra.mxu0 0.0
      %6801 = vmatprep.subr.mxu0 0.0
      %6802 = vmatpush2.msra.mxu0 0.0
      %6803 = vmatprep.subr.mxu0 0.0
      %6804 = vmatpush2.msra.mxu0 0.0
      %6805 = vmatprep.subr.mxu0 0.0
      %6806 = vmatpush2.msra.mxu0 0.0
      %6807 = vmatprep.subr.mxu0 0.0
      %6808 = vmatpush2.msra.mxu0 0.0
      %6809 = vmatprep.subr.mxu0 0.0
      %6810 = vmatpush2.msra.mxu0 0.0
      %6811 = vmatprep.subr.mxu0 0.0
      %6812 = vmatpush2.msra.mxu0 0.0
      %6813 = vmatprep.subr.mxu0 0.0
      %6814 = vmatpush2.msra.mxu0 0.0
      %6815 = vmatprep.subr.mxu0 0.0
      %6816 = vmatpush2.msra.mxu0 0.0
      %6817 = vmatprep.subr.mxu0 0.0
      %6818 = vmatpush2.msra.mxu0 0.0
      %6819 = vmatprep.subr.mxu0 0.0
      %6820 = vmatpush2.msra.mxu0 0.0
      %6821 = vmatprep.subr.mxu0 0.0
      %6822 = vmatpush2.msra.mxu0 0.0
      %6823 = vmatprep.subr.mxu0 0.0
      %6824 = vmatpush2.msra.mxu0 0.0
      %6825 = vmatprep.subr.mxu0 0.0
      %6826 = vmatpush2.msra.mxu0 0.0
      %6827 = vmatprep.subr.mxu0 0.0
      %6828 = vmatpush2.msra.mxu0 0.0
      %6829 = vmatprep.subr.mxu0 0.0
      %6830 = vmatpush2.msra.mxu0 0.0
      %6831 = vmatprep.mubr.f32.mxu0 0.0
      %6832 = vmatmul.mubr.f32.gmra.mxu0 %v6765
      %v6833 = vpop.f32.mrf.mxu0
      %v6834 = vadd.f32 0.0, %v6833
      %v6835 = vpop.f32.mrf.mxu0
      %6836 = vdwg.mxu0
      %6837 = vrot.lane.b32.xlu0 %v1207, 40
      %v6838 = vpop.permute.xlu0 %6837
      %v6841 = vsel %vm1213, %v6304, 0
      %6843 = vmatprep.subr.mxu0 0.0
      %6844 = vmatpush1.msra.mxu0 0.0
      %6845 = vmatprep.subr.mxu0 0.0
      %6846 = vmatpush1.msra.mxu0 0.0
      %6847 = vmatprep.subr.mxu0 0.0
      %6848 = vmatpush1.msra.mxu0 0.0
      %6849 = vmatprep.subr.mxu0 0.0
      %6850 = vmatpush1.msra.mxu0 0.0
      %6851 = vmatprep.subr.mxu0 0.0
      %6852 = vmatpush1.msra.mxu0 0.0
      %6853 = vmatprep.subr.mxu0 0.0
      %6854 = vmatpush1.msra.mxu0 0.0
      %6855 = vmatprep.subr.mxu0 0.0
      %6856 = vmatpush1.msra.mxu0 0.0
      %6857 = vmatprep.subr.mxu0 0.0
      %6858 = vmatpush1.msra.mxu0 0.0
      %6859 = vmatprep.subr.mxu0 0.0
      %6860 = vmatpush1.msra.mxu0 0.0
      %6861 = vmatprep.subr.mxu0 0.0
      %6862 = vmatpush1.msra.mxu0 0.0
      %6863 = vmatprep.subr.mxu0 0.0
      %6864 = vmatpush1.msra.mxu0 0.0
      %6865 = vmatprep.subr.mxu0 0.0
      %6866 = vmatpush1.msra.mxu0 0.0
      %6867 = vmatprep.subr.mxu0 0.0
      %6868 = vmatpush1.msra.mxu0 0.0
      %6869 = vmatprep.subr.mxu0 0.0
      %6870 = vmatpush1.msra.mxu0 0.0
      %6871 = vmatprep.subr.mxu0 0.0
      %6872 = vmatpush1.msra.mxu0 0.0
      %6873 = vmatprep.subr.mxu0 0.0
      %6874 = vmatpush1.msra.mxu0 %v6838
      %6875 = vmatprep.subr.mxu0 0.0
      %6876 = vmatpush2.msra.mxu0 0.0
      %6877 = vmatprep.subr.mxu0 0.0
      %6878 = vmatpush2.msra.mxu0 0.0
      %6879 = vmatprep.subr.mxu0 0.0
      %6880 = vmatpush2.msra.mxu0 0.0
      %6881 = vmatprep.subr.mxu0 0.0
      %6882 = vmatpush2.msra.mxu0 0.0
      %6883 = vmatprep.subr.mxu0 0.0
      %6884 = vmatpush2.msra.mxu0 0.0
      %6885 = vmatprep.subr.mxu0 0.0
      %6886 = vmatpush2.msra.mxu0 0.0
      %6887 = vmatprep.subr.mxu0 0.0
      %6888 = vmatpush2.msra.mxu0 0.0
      %6889 = vmatprep.subr.mxu0 0.0
      %6890 = vmatpush2.msra.mxu0 0.0
      %6891 = vmatprep.subr.mxu0 0.0
      %6892 = vmatpush2.msra.mxu0 0.0
      %6893 = vmatprep.subr.mxu0 0.0
      %6894 = vmatpush2.msra.mxu0 0.0
      %6895 = vmatprep.subr.mxu0 0.0
      %6896 = vmatpush2.msra.mxu0 0.0
      %6897 = vmatprep.subr.mxu0 0.0
      %6898 = vmatpush2.msra.mxu0 0.0
      %6899 = vmatprep.subr.mxu0 0.0
      %6900 = vmatpush2.msra.mxu0 0.0
      %6901 = vmatprep.subr.mxu0 0.0
      %6902 = vmatpush2.msra.mxu0 0.0
      %6903 = vmatprep.subr.mxu0 0.0
      %6904 = vmatpush2.msra.mxu0 0.0
      %6905 = vmatprep.subr.mxu0 0.0
      %6906 = vmatpush2.msra.mxu0 0.0
      %6907 = vmatprep.mubr.f32.mxu0 0.0
      %6908 = vmatmul.mubr.f32.gmra.mxu0 %v6841
      %v6909 = vpop.f32.mrf.mxu0
      %v6910 = vadd.f32 0.0, %v6909
      %v6911 = vpop.f32.mrf.mxu0
      %6912 = vdwg.mxu0
      %v6913 = vld [vmem:[%s8 + $0x18] sm:$0xff]
      %v6915 = vsel %vm1213, %v6378, 0
      %v6918 = vsel %vm1213, %v6454, 0
      %v6921 = vsel %vm1213, %v6530, 0
      %v6924 = vsel %vm1213, %v6606, 0
      %v6927 = vsel %vm1213, %v6682, 0
      %v6930 = vsel %vm1213, %v6758, 0
      %v6933 = vsel %vm1213, %v6834, 0
      %v6936 = vsel %vm1213, %v6910, 0
      %6938 = vmatprep.subr.mxu0 0.0
      %6939 = vmatpush1.msra.mxu0 0.0
      %6940 = vmatprep.subr.mxu0 0.0
      %6941 = vmatpush1.msra.mxu0 0.0
      %6942 = vmatprep.subr.mxu0 0.0
      %6943 = vmatpush1.msra.mxu0 0.0
      %6944 = vmatprep.subr.mxu0 0.0
      %6945 = vmatpush1.msra.mxu0 0.0
      %6946 = vmatprep.subr.mxu0 0.0
      %6947 = vmatpush1.msra.mxu0 0.0
      %6948 = vmatprep.subr.mxu0 0.0
      %6949 = vmatpush1.msra.mxu0 0.0
      %6950 = vmatprep.subr.mxu0 0.0
      %6951 = vmatpush1.msra.mxu0 0.0
      %6952 = vmatprep.subr.mxu0 0.0
      %6953 = vmatpush1.msra.mxu0 0.0
      %6954 = vmatprep.subr.mxu0 0.0
      %6955 = vmatpush1.msra.mxu0 0.0
      %6956 = vmatprep.subr.mxu0 0.0
      %6957 = vmatpush1.msra.mxu0 0.0
      %6958 = vmatprep.subr.mxu0 0.0
      %6959 = vmatpush1.msra.mxu0 0.0
      %6960 = vmatprep.subr.mxu0 0.0
      %6961 = vmatpush1.msra.mxu0 0.0
      %6962 = vmatprep.subr.mxu0 0.0
      %6963 = vmatpush1.msra.mxu0 0.0
      %6964 = vmatprep.subr.mxu0 0.0
      %6965 = vmatpush1.msra.mxu0 0.0
      %6966 = vmatprep.subr.mxu0 0.0
      %6967 = vmatpush1.msra.mxu0 0.0
      %6968 = vmatprep.subr.mxu0 0.0
      %6969 = vmatpush1.msra.mxu0 %v6913
      %6970 = vmatprep.subr.mxu0 0.0
      %6971 = vmatpush2.msra.mxu0 0.0
      %6972 = vmatprep.subr.mxu0 0.0
      %6973 = vmatpush2.msra.mxu0 0.0
      %6974 = vmatprep.subr.mxu0 0.0
      %6975 = vmatpush2.msra.mxu0 0.0
      %6976 = vmatprep.subr.mxu0 0.0
      %6977 = vmatpush2.msra.mxu0 0.0
      %6978 = vmatprep.subr.mxu0 0.0
      %6979 = vmatpush2.msra.mxu0 0.0
      %6980 = vmatprep.subr.mxu0 0.0
      %6981 = vmatpush2.msra.mxu0 0.0
      %6982 = vmatprep.subr.mxu0 0.0
      %6983 = vmatpush2.msra.mxu0 0.0
      %6984 = vmatprep.subr.mxu0 0.0
      %6985 = vmatpush2.msra.mxu0 0.0
      %6986 = vmatprep.subr.mxu0 0.0
      %6987 = vmatpush2.msra.mxu0 0.0
      %6988 = vmatprep.subr.mxu0 0.0
      %6989 = vmatpush2.msra.mxu0 0.0
      %6990 = vmatprep.subr.mxu0 0.0
      %6991 = vmatpush2.msra.mxu0 0.0
      %6992 = vmatprep.subr.mxu0 0.0
      %6993 = vmatpush2.msra.mxu0 0.0
      %6994 = vmatprep.subr.mxu0 0.0
      %6995 = vmatpush2.msra.mxu0 0.0
      %6996 = vmatprep.subr.mxu0 0.0
      %6997 = vmatpush2.msra.mxu0 0.0
      %6998 = vmatprep.subr.mxu0 0.0
      %6999 = vmatpush2.msra.mxu0 0.0
      %7000 = vmatprep.subr.mxu0 0.0
      %7001 = vmatpush2.msra.mxu0 0.0
      %7002 = vmatprep.mubr.f32.mxu0 0.0
      %7003 = vmatmul.mubr.f32.gmra.mxu0 %v6915
      %v7004 = vpop.f32.mrf.mxu0
      %v7005 = vadd.f32 0.0, %v7004
      %v7006 = vpop.f32.mrf.mxu0
      %7007 = vmatprep.mubr.f32.mxu0 0.0
      %7008 = vmatmul.mubr.f32.gmra.mxu0 %v6918
      %v7009 = vpop.f32.mrf.mxu0
      %v7010 = vadd.f32 0.0, %v7009
      %v7011 = vpop.f32.mrf.mxu0
      %7012 = vmatprep.mubr.f32.mxu0 0.0
      %7013 = vmatmul.mubr.f32.gmra.mxu0 %v6921
      %v7014 = vpop.f32.mrf.mxu0
      %v7015 = vadd.f32 0.0, %v7014
      %v7016 = vpop.f32.mrf.mxu0
      %7017 = vmatprep.mubr.f32.mxu0 0.0
      %7018 = vmatmul.mubr.f32.gmra.mxu0 %v6924
      %v7019 = vpop.f32.mrf.mxu0
      %v7020 = vadd.f32 0.0, %v7019
      %v7021 = vpop.f32.mrf.mxu0
      %7022 = vmatprep.mubr.f32.mxu0 0.0
      %7023 = vmatmul.mubr.f32.gmra.mxu0 %v6927
      %v7024 = vpop.f32.mrf.mxu0
      %v7025 = vadd.f32 0.0, %v7024
      %v7026 = vpop.f32.mrf.mxu0
      %7027 = vmatprep.mubr.f32.mxu0 0.0
      %7028 = vmatmul.mubr.f32.gmra.mxu0 %v6930
      %v7029 = vpop.f32.mrf.mxu0
      %v7030 = vadd.f32 0.0, %v7029
      %v7031 = vpop.f32.mrf.mxu0
      %7032 = vmatprep.mubr.f32.mxu0 0.0
      %7033 = vmatmul.mubr.f32.gmra.mxu0 %v6933
      %v7034 = vpop.f32.mrf.mxu0
      %v7035 = vadd.f32 0.0, %v7034
      %v7036 = vpop.f32.mrf.mxu0
      %7037 = vmatprep.mubr.f32.mxu0 0.0
      %7038 = vmatmul.mubr.f32.gmra.mxu0 %v6936
      %v7039 = vpop.f32.mrf.mxu0
      %v7040 = vadd.f32 0.0, %v7039
      %v7041 = vpop.f32.mrf.mxu0
      %7042 = vdwg.mxu0
      %v7043 = vadd.f32 %v5577, %v7005
      %v7044 = vadd.f32 %v5578, %v7010
      %v7045 = vadd.f32 %v5579, %v7015
      %v7046 = vadd.f32 %v5580, %v7020
      %v7047 = vadd.f32 %v5581, %v7025
      %v7048 = vadd.f32 %v5582, %v7030
      %v7049 = vadd.f32 %v5583, %v7035
      %v7050 = vadd.f32 %v5584, %v7040
      %v7051 = vld [vmem:[%s9] sm:$0x1]
      %v7053 = vlaneseq
      %v7054 = vshrl.u32 %v7053, 7
      %v7055 = vsub.s32 0, %v7054
      %v7056 = vrot.slane %v7051, %v7055
      %v7058 = vadd.f32 %v7043, %v7056
      %v7059 = vadd.f32 %v7044, %v7056
      %v7060 = vadd.f32 %v7045, %v7056
      %v7061 = vadd.f32 %v7046, %v7056
      %v7062 = vadd.f32 %v7047, %v7056
      %v7063 = vadd.f32 %v7048, %v7056
      %v7064 = vadd.f32 %v7049, %v7056
      %v7065 = vadd.f32 %v7050, %v7056
      %v7066 = vld [vmem:[%s10] sm:$0xff]
      %v7067 = vld [vmem:[%s10 + $0x8] sm:$0xff]
      %v7068 = vld [vmem:[%s10 + $0x10] sm:$0xff]
      %v7069 = vld [vmem:[%s10 + $0x18] sm:$0xff]
      %v7070 = vld [vmem:[%s11] sm:$0x1]
      %v7072 = vlaneseq
      %v7073 = vshrl.u32 %v7072, 7
      %v7074 = vsub.s32 0, %v7073
      %v7075 = vrot.slane %v7070, %v7074
      %v7078 = vsel %vm820, %v7058, 0
      %v7081 = vsel %vm820, %v7059, 0
      %v7084 = vsel %vm820, %v7060, 0
      %v7087 = vsel %vm820, %v7061, 0
      %v7090 = vsel %vm820, %v7062, 0
      %v7093 = vsel %vm820, %v7063, 0
      %v7096 = vsel %vm820, %v7064, 0
      %v7099 = vsel %vm820, %v7065, 0
      %7101 = vmatprep.subr.mxu0 0.0
      %7102 = vmatpush1.msra.mxu0 0.0
      %7103 = vmatprep.subr.mxu0 0.0
      %7104 = vmatpush1.msra.mxu0 0.0
      %7105 = vmatprep.subr.mxu0 0.0
      %7106 = vmatpush1.msra.mxu0 0.0
      %7107 = vmatprep.subr.mxu0 0.0
      %7108 = vmatpush1.msra.mxu0 0.0
      %7109 = vmatprep.subr.mxu0 0.0
      %7110 = vmatpush1.msra.mxu0 0.0
      %7111 = vmatprep.subr.mxu0 0.0
      %7112 = vmatpush1.msra.mxu0 0.0
      %7113 = vmatprep.subr.mxu0 0.0
      %7114 = vmatpush1.msra.mxu0 0.0
      %7115 = vmatprep.subr.mxu0 0.0
      %7116 = vmatpush1.msra.mxu0 0.0
      %7117 = vmatprep.subr.mxu0 0.0
      %7118 = vmatpush1.msra.mxu0 0.0
      %7119 = vmatprep.subr.mxu0 0.0
      %7120 = vmatpush1.msra.mxu0 0.0
      %7121 = vmatprep.subr.mxu0 0.0
      %7122 = vmatpush1.msra.mxu0 0.0
      %7123 = vmatprep.subr.mxu0 0.0
      %7124 = vmatpush1.msra.mxu0 0.0
      %7125 = vmatprep.subr.mxu0 0.0
      %7126 = vmatpush1.msra.mxu0 %v7069
      %7127 = vmatprep.subr.mxu0 0.0
      %7128 = vmatpush1.msra.mxu0 %v7068
      %7129 = vmatprep.subr.mxu0 0.0
      %7130 = vmatpush1.msra.mxu0 %v7067
      %7131 = vmatprep.subr.mxu0 0.0
      %7132 = vmatpush1.msra.mxu0 %v7066
      %7133 = vmatprep.subr.mxu0 0.0
      %7134 = vmatpush2.msra.mxu0 0.0
      %7135 = vmatprep.subr.mxu0 0.0
      %7136 = vmatpush2.msra.mxu0 0.0
      %7137 = vmatprep.subr.mxu0 0.0
      %7138 = vmatpush2.msra.mxu0 0.0
      %7139 = vmatprep.subr.mxu0 0.0
      %7140 = vmatpush2.msra.mxu0 0.0
      %7141 = vmatprep.subr.mxu0 0.0
      %7142 = vmatpush2.msra.mxu0 0.0
      %7143 = vmatprep.subr.mxu0 0.0
      %7144 = vmatpush2.msra.mxu0 0.0
      %7145 = vmatprep.subr.mxu0 0.0
      %7146 = vmatpush2.msra.mxu0 0.0
      %7147 = vmatprep.subr.mxu0 0.0
      %7148 = vmatpush2.msra.mxu0 0.0
      %7149 = vmatprep.subr.mxu0 0.0
      %7150 = vmatpush2.msra.mxu0 0.0
      %7151 = vmatprep.subr.mxu0 0.0
      %7152 = vmatpush2.msra.mxu0 0.0
      %7153 = vmatprep.subr.mxu0 0.0
      %7154 = vmatpush2.msra.mxu0 0.0
      %7155 = vmatprep.subr.mxu0 0.0
      %7156 = vmatpush2.msra.mxu0 0.0
      %7157 = vmatprep.subr.mxu0 0.0
      %7158 = vmatpush2.msra.mxu0 0.0
      %7159 = vmatprep.subr.mxu0 0.0
      %7160 = vmatpush2.msra.mxu0 0.0
      %7161 = vmatprep.subr.mxu0 0.0
      %7162 = vmatpush2.msra.mxu0 0.0
      %7163 = vmatprep.subr.mxu0 0.0
      %7164 = vmatpush2.msra.mxu0 0.0
      %7165 = vmatprep.mubr.f32.mxu0 0.0
      %7166 = vmatmul.mubr.f32.gmra.mxu0 %v7078
      %v7167 = vpop.f32.mrf.mxu0
      %v7168 = vadd.f32 %v7075, %v7167
      %v7169 = vpop.f32.mrf.mxu0
      %7170 = vmatprep.mubr.f32.mxu0 0.0
      %7171 = vmatmul.mubr.f32.gmra.mxu0 %v7081
      %v7172 = vpop.f32.mrf.mxu0
      %v7173 = vadd.f32 %v7075, %v7172
      %v7174 = vpop.f32.mrf.mxu0
      %7175 = vmatprep.mubr.f32.mxu0 0.0
      %7176 = vmatmul.mubr.f32.gmra.mxu0 %v7084
      %v7177 = vpop.f32.mrf.mxu0
      %v7178 = vadd.f32 %v7075, %v7177
      %v7179 = vpop.f32.mrf.mxu0
      %7180 = vmatprep.mubr.f32.mxu0 0.0
      %7181 = vmatmul.mubr.f32.gmra.mxu0 %v7087
      %v7182 = vpop.f32.mrf.mxu0
      %v7183 = vadd.f32 %v7075, %v7182
      %v7184 = vpop.f32.mrf.mxu0
      %7185 = vmatprep.mubr.f32.mxu0 0.0
      %7186 = vmatmul.mubr.f32.gmra.mxu0 %v7090
      %v7187 = vpop.f32.mrf.mxu0
      %v7188 = vadd.f32 %v7075, %v7187
      %v7189 = vpop.f32.mrf.mxu0
      %7190 = vmatprep.mubr.f32.mxu0 0.0
      %7191 = vmatmul.mubr.f32.gmra.mxu0 %v7093
      %v7192 = vpop.f32.mrf.mxu0
      %v7193 = vadd.f32 %v7075, %v7192
      %v7194 = vpop.f32.mrf.mxu0
      %7195 = vmatprep.mubr.f32.mxu0 0.0
      %7196 = vmatmul.mubr.f32.gmra.mxu0 %v7096
      %v7197 = vpop.f32.mrf.mxu0
      %v7198 = vadd.f32 %v7075, %v7197
      %v7199 = vpop.f32.mrf.mxu0
      %7200 = vmatprep.mubr.f32.mxu0 0.0
      %7201 = vmatmul.mubr.f32.gmra.mxu0 %v7099
      %v7202 = vpop.f32.mrf.mxu0
      %v7203 = vadd.f32 %v7075, %v7202
      %v7204 = vpop.f32.mrf.mxu0
      %7205 = vdwg.mxu0
      %v7206 = vld [vmem:[%s12] sm:$0xff]
      %v7207 = vld [vmem:[%s12 + $0x8] sm:$0xff]
      %v7208 = vld [vmem:[%s12 + $0x10] sm:$0xff]
      %v7209 = vld [vmem:[%s12 + $0x18] sm:$0xff]
      %v7210 = vld [vmem:[%s13] sm:$0x1]
      %v7212 = vlaneseq
      %v7213 = vshrl.u32 %v7212, 7
      %v7214 = vsub.s32 0, %v7213
      %v7215 = vrot.slane %v7210, %v7214
      %v7218 = vsel %vm820, 0.0, 0
      %7220 = vmatprep.subr.mxu0 0.0
      %7221 = vmatpush1.msra.mxu0 0.0
      %7222 = vmatprep.subr.mxu0 0.0
      %7223 = vmatpush1.msra.mxu0 0.0
      %7224 = vmatprep.subr.mxu0 0.0
      %7225 = vmatpush1.msra.mxu0 0.0
      %7226 = vmatprep.subr.mxu0 0.0
      %7227 = vmatpush1.msra.mxu0 0.0
      %7228 = vmatprep.subr.mxu0 0.0
      %7229 = vmatpush1.msra.mxu0 0.0
      %7230 = vmatprep.subr.mxu0 0.0
      %7231 = vmatpush1.msra.mxu0 0.0
      %7232 = vmatprep.subr.mxu0 0.0
      %7233 = vmatpush1.msra.mxu0 0.0
      %7234 = vmatprep.subr.mxu0 0.0
      %7235 = vmatpush1.msra.mxu0 0.0
      %7236 = vmatprep.subr.mxu0 0.0
      %7237 = vmatpush1.msra.mxu0 0.0
      %7238 = vmatprep.subr.mxu0 0.0
      %7239 = vmatpush1.msra.mxu0 0.0
      %7240 = vmatprep.subr.mxu0 0.0
      %7241 = vmatpush1.msra.mxu0 0.0
      %7242 = vmatprep.subr.mxu0 0.0
      %7243 = vmatpush1.msra.mxu0 0.0
      %7244 = vmatprep.subr.mxu0 0.0
      %7245 = vmatpush1.msra.mxu0 %v7209
      %7246 = vmatprep.subr.mxu0 0.0
      %7247 = vmatpush1.msra.mxu0 %v7208
      %7248 = vmatprep.subr.mxu0 0.0
      %7249 = vmatpush1.msra.mxu0 %v7207
      %7250 = vmatprep.subr.mxu0 0.0
      %7251 = vmatpush1.msra.mxu0 %v7206
      %7252 = vmatprep.subr.mxu0 0.0
      %7253 = vmatpush2.msra.mxu0 0.0
      %7254 = vmatprep.subr.mxu0 0.0
      %7255 = vmatpush2.msra.mxu0 0.0
      %7256 = vmatprep.subr.mxu0 0.0
      %7257 = vmatpush2.msra.mxu0 0.0
      %7258 = vmatprep.subr.mxu0 0.0
      %7259 = vmatpush2.msra.mxu0 0.0
      %7260 = vmatprep.subr.mxu0 0.0
      %7261 = vmatpush2.msra.mxu0 0.0
      %7262 = vmatprep.subr.mxu0 0.0
      %7263 = vmatpush2.msra.mxu0 0.0
      %7264 = vmatprep.subr.mxu0 0.0
      %7265 = vmatpush2.msra.mxu0 0.0
      %7266 = vmatprep.subr.mxu0 0.0
      %7267 = vmatpush2.msra.mxu0 0.0
      %7268 = vmatprep.subr.mxu0 0.0
      %7269 = vmatpush2.msra.mxu0 0.0
      %7270 = vmatprep.subr.mxu0 0.0
      %7271 = vmatpush2.msra.mxu0 0.0
      %7272 = vmatprep.subr.mxu0 0.0
      %7273 = vmatpush2.msra.mxu0 0.0
      %7274 = vmatprep.subr.mxu0 0.0
      %7275 = vmatpush2.msra.mxu0 0.0
      %7276 = vmatprep.subr.mxu0 0.0
      %7277 = vmatpush2.msra.mxu0 0.0
      %7278 = vmatprep.subr.mxu0 0.0
      %7279 = vmatpush2.msra.mxu0 0.0
      %7280 = vmatprep.subr.mxu0 0.0
      %7281 = vmatpush2.msra.mxu0 0.0
      %7282 = vmatprep.subr.mxu0 0.0
      %7283 = vmatpush2.msra.mxu0 0.0
      %7284 = vmatprep.mubr.f32.mxu0 0.0
      %7285 = vmatmul.mubr.f32.gmra.mxu0 %v7218
      %v7286 = vpop.f32.mrf.mxu0
      %v7287 = vadd.f32 %v7215, %v7286
      %v7288 = vpop.f32.mrf.mxu0
      %7289 = vdwg.mxu0
      %v7290 = vadd.f32 %v7168, %v7287
      %v7291 = vxor.u32 %v7290, 2147483648
      %v7292 = vmul.f32 %v7291, 1.442695
      %v7293 = vpow.pop %v7292
      %v7294 = vadd.f32 %v7293, 1.0
      %v7295 = vrcp.pop %v7294
      %v7296 = vmul.f32 1.0, %v7295
      %7298 = vrot.lane.b32.xlu0 %v7287, 64
      %v7299 = vpop.permute.xlu0 %7298
      %v7301 = vmul.f32 %v7296, %v7299
      %7303 = vrot.lane.b32.xlu0 %v7301, 64
      %v7304 = vpop.permute.xlu0 %7303
      %v7306 = vadd.f32 %v7168, %v7304
      %v7307 = vtanh.pop %v7306
      %v7308 = vsub.f32 1.0, %v7296
      %7310 = vrot.lane.b32.xlu0 %v7307, 96
      %v7311 = vpop.permute.xlu0 %7310
      %v7313 = vmul.f32 %v7308, %v7311
      %v7314 = vmul.f32 %v7296, 0.0
      %v7315 = vadd.f32 %v7313, %v7314
      %7317 = vrot.lane.b32.xlu0 %v7315, 96
      %v7318 = vpop.permute.xlu0 %7317
      %v7319 = vsel %vm820, %v7318, 0
      %7321 = vmatprep.subr.mxu0 0.0
      %7322 = vmatpush1.msra.mxu0 0.0
      %7323 = vmatprep.subr.mxu0 0.0
      %7324 = vmatpush1.msra.mxu0 0.0
      %7325 = vmatprep.subr.mxu0 0.0
      %7326 = vmatpush1.msra.mxu0 0.0
      %7327 = vmatprep.subr.mxu0 0.0
      %7328 = vmatpush1.msra.mxu0 0.0
      %7329 = vmatprep.subr.mxu0 0.0
      %7330 = vmatpush1.msra.mxu0 0.0
      %7331 = vmatprep.subr.mxu0 0.0
      %7332 = vmatpush1.msra.mxu0 0.0
      %7333 = vmatprep.subr.mxu0 0.0
      %7334 = vmatpush1.msra.mxu0 0.0
      %7335 = vmatprep.subr.mxu0 0.0
      %7336 = vmatpush1.msra.mxu0 0.0
      %7337 = vmatprep.subr.mxu0 0.0
      %7338 = vmatpush1.msra.mxu0 0.0
      %7339 = vmatprep.subr.mxu0 0.0
      %7340 = vmatpush1.msra.mxu0 0.0
      %7341 = vmatprep.subr.mxu0 0.0
      %7342 = vmatpush1.msra.mxu0 0.0
      %7343 = vmatprep.subr.mxu0 0.0
      %7344 = vmatpush1.msra.mxu0 0.0
      %7345 = vmatprep.subr.mxu0 0.0
      %7346 = vmatpush1.msra.mxu0 %v7209
      %7347 = vmatprep.subr.mxu0 0.0
      %7348 = vmatpush1.msra.mxu0 %v7208
      %7349 = vmatprep.subr.mxu0 0.0
      %7350 = vmatpush1.msra.mxu0 %v7207
      %7351 = vmatprep.subr.mxu0 0.0
      %7352 = vmatpush1.msra.mxu0 %v7206
      %7353 = vmatprep.subr.mxu0 0.0
      %7354 = vmatpush2.msra.mxu0 0.0
      %7355 = vmatprep.subr.mxu0 0.0
      %7356 = vmatpush2.msra.mxu0 0.0
      %7357 = vmatprep.subr.mxu0 0.0
      %7358 = vmatpush2.msra.mxu0 0.0
      %7359 = vmatprep.subr.mxu0 0.0
      %7360 = vmatpush2.msra.mxu0 0.0
      %7361 = vmatprep.subr.mxu0 0.0
      %7362 = vmatpush2.msra.mxu0 0.0
      %7363 = vmatprep.subr.mxu0 0.0
      %7364 = vmatpush2.msra.mxu0 0.0
      %7365 = vmatprep.subr.mxu0 0.0
      %7366 = vmatpush2.msra.mxu0 0.0
      %7367 = vmatprep.subr.mxu0 0.0
      %7368 = vmatpush2.msra.mxu0 0.0
      %7369 = vmatprep.subr.mxu0 0.0
      %7370 = vmatpush2.msra.mxu0 0.0
      %7371 = vmatprep.subr.mxu0 0.0
      %7372 = vmatpush2.msra.mxu0 0.0
      %7373 = vmatprep.subr.mxu0 0.0
      %7374 = vmatpush2.msra.mxu0 0.0
      %7375 = vmatprep.subr.mxu0 0.0
      %7376 = vmatpush2.msra.mxu0 0.0
      %7377 = vmatprep.subr.mxu0 0.0
      %7378 = vmatpush2.msra.mxu0 0.0
      %7379 = vmatprep.subr.mxu0 0.0
      %7380 = vmatpush2.msra.mxu0 0.0
      %7381 = vmatprep.subr.mxu0 0.0
      %7382 = vmatpush2.msra.mxu0 0.0
      %7383 = vmatprep.subr.mxu0 0.0
      %7384 = vmatpush2.msra.mxu0 0.0
      %7385 = vmatprep.mubr.f32.mxu0 0.0
      %7386 = vmatmul.mubr.f32.gmra.mxu0 %v7319
      %v7387 = vpop.f32.mrf.mxu0
      %v7388 = vadd.f32 %v7215, %v7387
      %v7389 = vpop.f32.mrf.mxu0
      %7390 = vdwg.mxu0
      %v7391 = vadd.f32 %v7173, %v7388
      %v7392 = vxor.u32 %v7391, 2147483648
      %v7393 = vmul.f32 %v7392, 1.442695
      %v7394 = vpow.pop %v7393
      %v7395 = vadd.f32 %v7394, 1.0
      %v7396 = vrcp.pop %v7395
      %v7397 = vmul.f32 1.0, %v7396
      %7399 = vrot.lane.b32.xlu0 %v7388, 64
      %v7400 = vpop.permute.xlu0 %7399
      %v7402 = vmul.f32 %v7397, %v7400
      %7404 = vrot.lane.b32.xlu0 %v7402, 64
      %v7405 = vpop.permute.xlu0 %7404
      %v7407 = vadd.f32 %v7173, %v7405
      %v7408 = vtanh.pop %v7407
      %v7409 = vsub.f32 1.0, %v7397
      %7411 = vrot.lane.b32.xlu0 %v7408, 96
      %v7412 = vpop.permute.xlu0 %7411
      %v7414 = vmul.f32 %v7409, %v7412
      %v7415 = vmul.f32 %v7397, %v7315
      %v7416 = vadd.f32 %v7414, %v7415
      %7418 = vrot.lane.b32.xlu0 %v7416, 96
      %v7419 = vpop.permute.xlu0 %7418
      %v7420 = vsel %vm820, %v7419, 0
      %7422 = vmatprep.subr.mxu0 0.0
      %7423 = vmatpush1.msra.mxu0 0.0
      %7424 = vmatprep.subr.mxu0 0.0
      %7425 = vmatpush1.msra.mxu0 0.0
      %7426 = vmatprep.subr.mxu0 0.0
      %7427 = vmatpush1.msra.mxu0 0.0
      %7428 = vmatprep.subr.mxu0 0.0
      %7429 = vmatpush1.msra.mxu0 0.0
      %7430 = vmatprep.subr.mxu0 0.0
      %7431 = vmatpush1.msra.mxu0 0.0
      %7432 = vmatprep.subr.mxu0 0.0
      %7433 = vmatpush1.msra.mxu0 0.0
      %7434 = vmatprep.subr.mxu0 0.0
      %7435 = vmatpush1.msra.mxu0 0.0
      %7436 = vmatprep.subr.mxu0 0.0
      %7437 = vmatpush1.msra.mxu0 0.0
      %7438 = vmatprep.subr.mxu0 0.0
      %7439 = vmatpush1.msra.mxu0 0.0
      %7440 = vmatprep.subr.mxu0 0.0
      %7441 = vmatpush1.msra.mxu0 0.0
      %7442 = vmatprep.subr.mxu0 0.0
      %7443 = vmatpush1.msra.mxu0 0.0
      %7444 = vmatprep.subr.mxu0 0.0
      %7445 = vmatpush1.msra.mxu0 0.0
      %7446 = vmatprep.subr.mxu0 0.0
      %7447 = vmatpush1.msra.mxu0 %v7209
      %7448 = vmatprep.subr.mxu0 0.0
      %7449 = vmatpush1.msra.mxu0 %v7208
      %7450 = vmatprep.subr.mxu0 0.0
      %7451 = vmatpush1.msra.mxu0 %v7207
      %7452 = vmatprep.subr.mxu0 0.0
      %7453 = vmatpush1.msra.mxu0 %v7206
      %7454 = vmatprep.subr.mxu0 0.0
      %7455 = vmatpush2.msra.mxu0 0.0
      %7456 = vmatprep.subr.mxu0 0.0
      %7457 = vmatpush2.msra.mxu0 0.0
      %7458 = vmatprep.subr.mxu0 0.0
      %7459 = vmatpush2.msra.mxu0 0.0
      %7460 = vmatprep.subr.mxu0 0.0
      %7461 = vmatpush2.msra.mxu0 0.0
      %7462 = vmatprep.subr.mxu0 0.0
      %7463 = vmatpush2.msra.mxu0 0.0
      %7464 = vmatprep.subr.mxu0 0.0
      %7465 = vmatpush2.msra.mxu0 0.0
      %7466 = vmatprep.subr.mxu0 0.0
      %7467 = vmatpush2.msra.mxu0 0.0
      %7468 = vmatprep.subr.mxu0 0.0
      %7469 = vmatpush2.msra.mxu0 0.0
      %7470 = vmatprep.subr.mxu0 0.0
      %7471 = vmatpush2.msra.mxu0 0.0
      %7472 = vmatprep.subr.mxu0 0.0
      %7473 = vmatpush2.msra.mxu0 0.0
      %7474 = vmatprep.subr.mxu0 0.0
      %7475 = vmatpush2.msra.mxu0 0.0
      %7476 = vmatprep.subr.mxu0 0.0
      %7477 = vmatpush2.msra.mxu0 0.0
      %7478 = vmatprep.subr.mxu0 0.0
      %7479 = vmatpush2.msra.mxu0 0.0
      %7480 = vmatprep.subr.mxu0 0.0
      %7481 = vmatpush2.msra.mxu0 0.0
      %7482 = vmatprep.subr.mxu0 0.0
      %7483 = vmatpush2.msra.mxu0 0.0
      %7484 = vmatprep.subr.mxu0 0.0
      %7485 = vmatpush2.msra.mxu0 0.0
      %7486 = vmatprep.mubr.f32.mxu0 0.0
      %7487 = vmatmul.mubr.f32.gmra.mxu0 %v7420
      %v7488 = vpop.f32.mrf.mxu0
      %v7489 = vadd.f32 %v7215, %v7488
      %v7490 = vpop.f32.mrf.mxu0
      %7491 = vdwg.mxu0
      %v7492 = vadd.f32 %v7178, %v7489
      %v7493 = vxor.u32 %v7492, 2147483648
      %v7494 = vmul.f32 %v7493, 1.442695
      %v7495 = vpow.pop %v7494
      %v7496 = vadd.f32 %v7495, 1.0
      %v7497 = vrcp.pop %v7496
      %v7498 = vmul.f32 1.0, %v7497
      %7500 = vrot.lane.b32.xlu0 %v7489, 64
      %v7501 = vpop.permute.xlu0 %7500
      %v7503 = vmul.f32 %v7498, %v7501
      %7505 = vrot.lane.b32.xlu0 %v7503, 64
      %v7506 = vpop.permute.xlu0 %7505
      %v7508 = vadd.f32 %v7178, %v7506
      %v7509 = vtanh.pop %v7508
      %v7510 = vsub.f32 1.0, %v7498
      %7512 = vrot.lane.b32.xlu0 %v7509, 96
      %v7513 = vpop.permute.xlu0 %7512
      %v7515 = vmul.f32 %v7510, %v7513
      %v7516 = vmul.f32 %v7498, %v7416
      %v7517 = vadd.f32 %v7515, %v7516
      %7519 = vrot.lane.b32.xlu0 %v7517, 96
      %v7520 = vpop.permute.xlu0 %7519
      %v7521 = vsel %vm820, %v7520, 0
      %7523 = vmatprep.subr.mxu0 0.0
      %7524 = vmatpush1.msra.mxu0 0.0
      %7525 = vmatprep.subr.mxu0 0.0
      %7526 = vmatpush1.msra.mxu0 0.0
      %7527 = vmatprep.subr.mxu0 0.0
      %7528 = vmatpush1.msra.mxu0 0.0
      %7529 = vmatprep.subr.mxu0 0.0
      %7530 = vmatpush1.msra.mxu0 0.0
      %7531 = vmatprep.subr.mxu0 0.0
      %7532 = vmatpush1.msra.mxu0 0.0
      %7533 = vmatprep.subr.mxu0 0.0
      %7534 = vmatpush1.msra.mxu0 0.0
      %7535 = vmatprep.subr.mxu0 0.0
      %7536 = vmatpush1.msra.mxu0 0.0
      %7537 = vmatprep.subr.mxu0 0.0
      %7538 = vmatpush1.msra.mxu0 0.0
      %7539 = vmatprep.subr.mxu0 0.0
      %7540 = vmatpush1.msra.mxu0 0.0
      %7541 = vmatprep.subr.mxu0 0.0
      %7542 = vmatpush1.msra.mxu0 0.0
      %7543 = vmatprep.subr.mxu0 0.0
      %7544 = vmatpush1.msra.mxu0 0.0
      %7545 = vmatprep.subr.mxu0 0.0
      %7546 = vmatpush1.msra.mxu0 0.0
      %7547 = vmatprep.subr.mxu0 0.0
      %7548 = vmatpush1.msra.mxu0 %v7209
      %7549 = vmatprep.subr.mxu0 0.0
      %7550 = vmatpush1.msra.mxu0 %v7208
      %7551 = vmatprep.subr.mxu0 0.0
      %7552 = vmatpush1.msra.mxu0 %v7207
      %7553 = vmatprep.subr.mxu0 0.0
      %7554 = vmatpush1.msra.mxu0 %v7206
      %7555 = vmatprep.subr.mxu0 0.0
      %7556 = vmatpush2.msra.mxu0 0.0
      %7557 = vmatprep.subr.mxu0 0.0
      %7558 = vmatpush2.msra.mxu0 0.0
      %7559 = vmatprep.subr.mxu0 0.0
      %7560 = vmatpush2.msra.mxu0 0.0
      %7561 = vmatprep.subr.mxu0 0.0
      %7562 = vmatpush2.msra.mxu0 0.0
      %7563 = vmatprep.subr.mxu0 0.0
      %7564 = vmatpush2.msra.mxu0 0.0
      %7565 = vmatprep.subr.mxu0 0.0
      %7566 = vmatpush2.msra.mxu0 0.0
      %7567 = vmatprep.subr.mxu0 0.0
      %7568 = vmatpush2.msra.mxu0 0.0
      %7569 = vmatprep.subr.mxu0 0.0
      %7570 = vmatpush2.msra.mxu0 0.0
      %7571 = vmatprep.subr.mxu0 0.0
      %7572 = vmatpush2.msra.mxu0 0.0
      %7573 = vmatprep.subr.mxu0 0.0
      %7574 = vmatpush2.msra.mxu0 0.0
      %7575 = vmatprep.subr.mxu0 0.0
      %7576 = vmatpush2.msra.mxu0 0.0
      %7577 = vmatprep.subr.mxu0 0.0
      %7578 = vmatpush2.msra.mxu0 0.0
      %7579 = vmatprep.subr.mxu0 0.0
      %7580 = vmatpush2.msra.mxu0 0.0
      %7581 = vmatprep.subr.mxu0 0.0
      %7582 = vmatpush2.msra.mxu0 0.0
      %7583 = vmatprep.subr.mxu0 0.0
      %7584 = vmatpush2.msra.mxu0 0.0
      %7585 = vmatprep.subr.mxu0 0.0
      %7586 = vmatpush2.msra.mxu0 0.0
      %7587 = vmatprep.mubr.f32.mxu0 0.0
      %7588 = vmatmul.mubr.f32.gmra.mxu0 %v7521
      %v7589 = vpop.f32.mrf.mxu0
      %v7590 = vadd.f32 %v7215, %v7589
      %v7591 = vpop.f32.mrf.mxu0
      %7592 = vdwg.mxu0
      %v7593 = vadd.f32 %v7183, %v7590
      %v7594 = vxor.u32 %v7593, 2147483648
      %v7595 = vmul.f32 %v7594, 1.442695
      %v7596 = vpow.pop %v7595
      %v7597 = vadd.f32 %v7596, 1.0
      %v7598 = vrcp.pop %v7597
      %v7599 = vmul.f32 1.0, %v7598
      %7601 = vrot.lane.b32.xlu0 %v7590, 64
      %v7602 = vpop.permute.xlu0 %7601
      %v7604 = vmul.f32 %v7599, %v7602
      %7606 = vrot.lane.b32.xlu0 %v7604, 64
      %v7607 = vpop.permute.xlu0 %7606
      %v7609 = vadd.f32 %v7183, %v7607
      %v7610 = vtanh.pop %v7609
      %v7611 = vsub.f32 1.0, %v7599
      %7613 = vrot.lane.b32.xlu0 %v7610, 96
      %v7614 = vpop.permute.xlu0 %7613
      %v7616 = vmul.f32 %v7611, %v7614
      %v7617 = vmul.f32 %v7599, %v7517
      %v7618 = vadd.f32 %v7616, %v7617
      %7620 = vrot.lane.b32.xlu0 %v7618, 96
      %v7621 = vpop.permute.xlu0 %7620
      %v7622 = vsel %vm820, %v7621, 0
      %7624 = vmatprep.subr.mxu0 0.0
      %7625 = vmatpush1.msra.mxu0 0.0
      %7626 = vmatprep.subr.mxu0 0.0
      %7627 = vmatpush1.msra.mxu0 0.0
      %7628 = vmatprep.subr.mxu0 0.0
      %7629 = vmatpush1.msra.mxu0 0.0
      %7630 = vmatprep.subr.mxu0 0.0
      %7631 = vmatpush1.msra.mxu0 0.0
      %7632 = vmatprep.subr.mxu0 0.0
      %7633 = vmatpush1.msra.mxu0 0.0
      %7634 = vmatprep.subr.mxu0 0.0
      %7635 = vmatpush1.msra.mxu0 0.0
      %7636 = vmatprep.subr.mxu0 0.0
      %7637 = vmatpush1.msra.mxu0 0.0
      %7638 = vmatprep.subr.mxu0 0.0
      %7639 = vmatpush1.msra.mxu0 0.0
      %7640 = vmatprep.subr.mxu0 0.0
      %7641 = vmatpush1.msra.mxu0 0.0
      %7642 = vmatprep.subr.mxu0 0.0
      %7643 = vmatpush1.msra.mxu0 0.0
      %7644 = vmatprep.subr.mxu0 0.0
      %7645 = vmatpush1.msra.mxu0 0.0
      %7646 = vmatprep.subr.mxu0 0.0
      %7647 = vmatpush1.msra.mxu0 0.0
      %7648 = vmatprep.subr.mxu0 0.0
      %7649 = vmatpush1.msra.mxu0 %v7209
      %7650 = vmatprep.subr.mxu0 0.0
      %7651 = vmatpush1.msra.mxu0 %v7208
      %7652 = vmatprep.subr.mxu0 0.0
      %7653 = vmatpush1.msra.mxu0 %v7207
      %7654 = vmatprep.subr.mxu0 0.0
      %7655 = vmatpush1.msra.mxu0 %v7206
      %7656 = vmatprep.subr.mxu0 0.0
      %7657 = vmatpush2.msra.mxu0 0.0
      %7658 = vmatprep.subr.mxu0 0.0
      %7659 = vmatpush2.msra.mxu0 0.0
      %7660 = vmatprep.subr.mxu0 0.0
      %7661 = vmatpush2.msra.mxu0 0.0
      %7662 = vmatprep.subr.mxu0 0.0
      %7663 = vmatpush2.msra.mxu0 0.0
      %7664 = vmatprep.subr.mxu0 0.0
      %7665 = vmatpush2.msra.mxu0 0.0
      %7666 = vmatprep.subr.mxu0 0.0
      %7667 = vmatpush2.msra.mxu0 0.0
      %7668 = vmatprep.subr.mxu0 0.0
      %7669 = vmatpush2.msra.mxu0 0.0
      %7670 = vmatprep.subr.mxu0 0.0
      %7671 = vmatpush2.msra.mxu0 0.0
      %7672 = vmatprep.subr.mxu0 0.0
      %7673 = vmatpush2.msra.mxu0 0.0
      %7674 = vmatprep.subr.mxu0 0.0
      %7675 = vmatpush2.msra.mxu0 0.0
      %7676 = vmatprep.subr.mxu0 0.0
      %7677 = vmatpush2.msra.mxu0 0.0
      %7678 = vmatprep.subr.mxu0 0.0
      %7679 = vmatpush2.msra.mxu0 0.0
      %7680 = vmatprep.subr.mxu0 0.0
      %7681 = vmatpush2.msra.mxu0 0.0
      %7682 = vmatprep.subr.mxu0 0.0
      %7683 = vmatpush2.msra.mxu0 0.0
      %7684 = vmatprep.subr.mxu0 0.0
      %7685 = vmatpush2.msra.mxu0 0.0
      %7686 = vmatprep.subr.mxu0 0.0
      %7687 = vmatpush2.msra.mxu0 0.0
      %7688 = vmatprep.mubr.f32.mxu0 0.0
      %7689 = vmatmul.mubr.f32.gmra.mxu0 %v7622
      %v7690 = vpop.f32.mrf.mxu0
      %v7691 = vadd.f32 %v7215, %v7690
      %v7692 = vpop.f32.mrf.mxu0
      %7693 = vdwg.mxu0
      %v7694 = vadd.f32 %v7188, %v7691
      %v7695 = vxor.u32 %v7694, 2147483648
      %v7696 = vmul.f32 %v7695, 1.442695
      %v7697 = vpow.pop %v7696
      %v7698 = vadd.f32 %v7697, 1.0
      %v7699 = vrcp.pop %v7698
      %v7700 = vmul.f32 1.0, %v7699
      %7702 = vrot.lane.b32.xlu0 %v7691, 64
      %v7703 = vpop.permute.xlu0 %7702
      %v7705 = vmul.f32 %v7700, %v7703
      %7707 = vrot.lane.b32.xlu0 %v7705, 64
      %v7708 = vpop.permute.xlu0 %7707
      %v7710 = vadd.f32 %v7188, %v7708
      %v7711 = vtanh.pop %v7710
      %v7712 = vsub.f32 1.0, %v7700
      %7714 = vrot.lane.b32.xlu0 %v7711, 96
      %v7715 = vpop.permute.xlu0 %7714
      %v7717 = vmul.f32 %v7712, %v7715
      %v7718 = vmul.f32 %v7700, %v7618
      %v7719 = vadd.f32 %v7717, %v7718
      %7721 = vrot.lane.b32.xlu0 %v7719, 96
      %v7722 = vpop.permute.xlu0 %7721
      %v7723 = vsel %vm820, %v7722, 0
      %7725 = vmatprep.subr.mxu0 0.0
      %7726 = vmatpush1.msra.mxu0 0.0
      %7727 = vmatprep.subr.mxu0 0.0
      %7728 = vmatpush1.msra.mxu0 0.0
      %7729 = vmatprep.subr.mxu0 0.0
      %7730 = vmatpush1.msra.mxu0 0.0
      %7731 = vmatprep.subr.mxu0 0.0
      %7732 = vmatpush1.msra.mxu0 0.0
      %7733 = vmatprep.subr.mxu0 0.0
      %7734 = vmatpush1.msra.mxu0 0.0
      %7735 = vmatprep.subr.mxu0 0.0
      %7736 = vmatpush1.msra.mxu0 0.0
      %7737 = vmatprep.subr.mxu0 0.0
      %7738 = vmatpush1.msra.mxu0 0.0
      %7739 = vmatprep.subr.mxu0 0.0
      %7740 = vmatpush1.msra.mxu0 0.0
      %7741 = vmatprep.subr.mxu0 0.0
      %7742 = vmatpush1.msra.mxu0 0.0
      %7743 = vmatprep.subr.mxu0 0.0
      %7744 = vmatpush1.msra.mxu0 0.0
      %7745 = vmatprep.subr.mxu0 0.0
      %7746 = vmatpush1.msra.mxu0 0.0
      %7747 = vmatprep.subr.mxu0 0.0
      %7748 = vmatpush1.msra.mxu0 0.0
      %7749 = vmatprep.subr.mxu0 0.0
      %7750 = vmatpush1.msra.mxu0 %v7209
      %7751 = vmatprep.subr.mxu0 0.0
      %7752 = vmatpush1.msra.mxu0 %v7208
      %7753 = vmatprep.subr.mxu0 0.0
      %7754 = vmatpush1.msra.mxu0 %v7207
      %7755 = vmatprep.subr.mxu0 0.0
      %7756 = vmatpush1.msra.mxu0 %v7206
      %7757 = vmatprep.subr.mxu0 0.0
      %7758 = vmatpush2.msra.mxu0 0.0
      %7759 = vmatprep.subr.mxu0 0.0
      %7760 = vmatpush2.msra.mxu0 0.0
      %7761 = vmatprep.subr.mxu0 0.0
      %7762 = vmatpush2.msra.mxu0 0.0
      %7763 = vmatprep.subr.mxu0 0.0
      %7764 = vmatpush2.msra.mxu0 0.0
      %7765 = vmatprep.subr.mxu0 0.0
      %7766 = vmatpush2.msra.mxu0 0.0
      %7767 = vmatprep.subr.mxu0 0.0
      %7768 = vmatpush2.msra.mxu0 0.0
      %7769 = vmatprep.subr.mxu0 0.0
      %7770 = vmatpush2.msra.mxu0 0.0
      %7771 = vmatprep.subr.mxu0 0.0
      %7772 = vmatpush2.msra.mxu0 0.0
      %7773 = vmatprep.subr.mxu0 0.0
      %7774 = vmatpush2.msra.mxu0 0.0
      %7775 = vmatprep.subr.mxu0 0.0
      %7776 = vmatpush2.msra.mxu0 0.0
      %7777 = vmatprep.subr.mxu0 0.0
      %7778 = vmatpush2.msra.mxu0 0.0
      %7779 = vmatprep.subr.mxu0 0.0
      %7780 = vmatpush2.msra.mxu0 0.0
      %7781 = vmatprep.subr.mxu0 0.0
      %7782 = vmatpush2.msra.mxu0 0.0
      %7783 = vmatprep.subr.mxu0 0.0
      %7784 = vmatpush2.msra.mxu0 0.0
      %7785 = vmatprep.subr.mxu0 0.0
      %7786 = vmatpush2.msra.mxu0 0.0
      %7787 = vmatprep.subr.mxu0 0.0
      %7788 = vmatpush2.msra.mxu0 0.0
      %7789 = vmatprep.mubr.f32.mxu0 0.0
      %7790 = vmatmul.mubr.f32.gmra.mxu0 %v7723
      %v7791 = vpop.f32.mrf.mxu0
      %v7792 = vadd.f32 %v7215, %v7791
      %v7793 = vpop.f32.mrf.mxu0
      %7794 = vdwg.mxu0
      %v7795 = vadd.f32 %v7193, %v7792
      %v7796 = vxor.u32 %v7795, 2147483648
      %v7797 = vmul.f32 %v7796, 1.442695
      %v7798 = vpow.pop %v7797
      %v7799 = vadd.f32 %v7798, 1.0
      %v7800 = vrcp.pop %v7799
      %v7801 = vmul.f32 1.0, %v7800
      %7803 = vrot.lane.b32.xlu0 %v7792, 64
      %v7804 = vpop.permute.xlu0 %7803
      %v7806 = vmul.f32 %v7801, %v7804
      %7808 = vrot.lane.b32.xlu0 %v7806, 64
      %v7809 = vpop.permute.xlu0 %7808
      %v7811 = vadd.f32 %v7193, %v7809
      %v7812 = vtanh.pop %v7811
      %v7813 = vsub.f32 1.0, %v7801
      %7815 = vrot.lane.b32.xlu0 %v7812, 96
      %v7816 = vpop.permute.xlu0 %7815
      %v7818 = vmul.f32 %v7813, %v7816
      %v7819 = vmul.f32 %v7801, %v7719
      %v7820 = vadd.f32 %v7818, %v7819
      %7822 = vrot.lane.b32.xlu0 %v7820, 96
      %v7823 = vpop.permute.xlu0 %7822
      %v7824 = vsel %vm820, %v7823, 0
      %7826 = vmatprep.subr.mxu0 0.0
      %7827 = vmatpush1.msra.mxu0 0.0
      %7828 = vmatprep.subr.mxu0 0.0
      %7829 = vmatpush1.msra.mxu0 0.0
      %7830 = vmatprep.subr.mxu0 0.0
      %7831 = vmatpush1.msra.mxu0 0.0
      %7832 = vmatprep.subr.mxu0 0.0
      %7833 = vmatpush1.msra.mxu0 0.0
      %7834 = vmatprep.subr.mxu0 0.0
      %7835 = vmatpush1.msra.mxu0 0.0
      %7836 = vmatprep.subr.mxu0 0.0
      %7837 = vmatpush1.msra.mxu0 0.0
      %7838 = vmatprep.subr.mxu0 0.0
      %7839 = vmatpush1.msra.mxu0 0.0
      %7840 = vmatprep.subr.mxu0 0.0
      %7841 = vmatpush1.msra.mxu0 0.0
      %7842 = vmatprep.subr.mxu0 0.0
      %7843 = vmatpush1.msra.mxu0 0.0
      %7844 = vmatprep.subr.mxu0 0.0
      %7845 = vmatpush1.msra.mxu0 0.0
      %7846 = vmatprep.subr.mxu0 0.0
      %7847 = vmatpush1.msra.mxu0 0.0
      %7848 = vmatprep.subr.mxu0 0.0
      %7849 = vmatpush1.msra.mxu0 0.0
      %7850 = vmatprep.subr.mxu0 0.0
      %7851 = vmatpush1.msra.mxu0 %v7209
      %7852 = vmatprep.subr.mxu0 0.0
      %7853 = vmatpush1.msra.mxu0 %v7208
      %7854 = vmatprep.subr.mxu0 0.0
      %7855 = vmatpush1.msra.mxu0 %v7207
      %7856 = vmatprep.subr.mxu0 0.0
      %7857 = vmatpush1.msra.mxu0 %v7206
      %7858 = vmatprep.subr.mxu0 0.0
      %7859 = vmatpush2.msra.mxu0 0.0
      %7860 = vmatprep.subr.mxu0 0.0
      %7861 = vmatpush2.msra.mxu0 0.0
      %7862 = vmatprep.subr.mxu0 0.0
      %7863 = vmatpush2.msra.mxu0 0.0
      %7864 = vmatprep.subr.mxu0 0.0
      %7865 = vmatpush2.msra.mxu0 0.0
      %7866 = vmatprep.subr.mxu0 0.0
      %7867 = vmatpush2.msra.mxu0 0.0
      %7868 = vmatprep.subr.mxu0 0.0
      %7869 = vmatpush2.msra.mxu0 0.0
      %7870 = vmatprep.subr.mxu0 0.0
      %7871 = vmatpush2.msra.mxu0 0.0
      %7872 = vmatprep.subr.mxu0 0.0
      %7873 = vmatpush2.msra.mxu0 0.0
      %7874 = vmatprep.subr.mxu0 0.0
      %7875 = vmatpush2.msra.mxu0 0.0
      %7876 = vmatprep.subr.mxu0 0.0
      %7877 = vmatpush2.msra.mxu0 0.0
      %7878 = vmatprep.subr.mxu0 0.0
      %7879 = vmatpush2.msra.mxu0 0.0
      %7880 = vmatprep.subr.mxu0 0.0
      %7881 = vmatpush2.msra.mxu0 0.0
      %7882 = vmatprep.subr.mxu0 0.0
      %7883 = vmatpush2.msra.mxu0 0.0
      %7884 = vmatprep.subr.mxu0 0.0
      %7885 = vmatpush2.msra.mxu0 0.0
      %7886 = vmatprep.subr.mxu0 0.0
      %7887 = vmatpush2.msra.mxu0 0.0
      %7888 = vmatprep.subr.mxu0 0.0
      %7889 = vmatpush2.msra.mxu0 0.0
      %7890 = vmatprep.mubr.f32.mxu0 0.0
      %7891 = vmatmul.mubr.f32.gmra.mxu0 %v7824
      %v7892 = vpop.f32.mrf.mxu0
      %v7893 = vadd.f32 %v7215, %v7892
      %v7894 = vpop.f32.mrf.mxu0
      %7895 = vdwg.mxu0
      %v7896 = vadd.f32 %v7198, %v7893
      %v7897 = vxor.u32 %v7896, 2147483648
      %v7898 = vmul.f32 %v7897, 1.442695
      %v7899 = vpow.pop %v7898
      %v7900 = vadd.f32 %v7899, 1.0
      %v7901 = vrcp.pop %v7900
      %v7902 = vmul.f32 1.0, %v7901
      %7904 = vrot.lane.b32.xlu0 %v7893, 64
      %v7905 = vpop.permute.xlu0 %7904
      %v7907 = vmul.f32 %v7902, %v7905
      %7909 = vrot.lane.b32.xlu0 %v7907, 64
      %v7910 = vpop.permute.xlu0 %7909
      %v7912 = vadd.f32 %v7198, %v7910
      %v7913 = vtanh.pop %v7912
      %v7914 = vsub.f32 1.0, %v7902
      %7916 = vrot.lane.b32.xlu0 %v7913, 96
      %v7917 = vpop.permute.xlu0 %7916
      %v7919 = vmul.f32 %v7914, %v7917
      %v7920 = vmul.f32 %v7902, %v7820
      %v7921 = vadd.f32 %v7919, %v7920
      %7923 = vrot.lane.b32.xlu0 %v7921, 96
      %v7924 = vpop.permute.xlu0 %7923
      %v7925 = vsel %vm820, %v7924, 0
      %7927 = vmatprep.subr.mxu0 0.0
      %7928 = vmatpush1.msra.mxu0 0.0
      %7929 = vmatprep.subr.mxu0 0.0
      %7930 = vmatpush1.msra.mxu0 0.0
      %7931 = vmatprep.subr.mxu0 0.0
      %7932 = vmatpush1.msra.mxu0 0.0
      %7933 = vmatprep.subr.mxu0 0.0
      %7934 = vmatpush1.msra.mxu0 0.0
      %7935 = vmatprep.subr.mxu0 0.0
      %7936 = vmatpush1.msra.mxu0 0.0
      %7937 = vmatprep.subr.mxu0 0.0
      %7938 = vmatpush1.msra.mxu0 0.0
      %7939 = vmatprep.subr.mxu0 0.0
      %7940 = vmatpush1.msra.mxu0 0.0
      %7941 = vmatprep.subr.mxu0 0.0
      %7942 = vmatpush1.msra.mxu0 0.0
      %7943 = vmatprep.subr.mxu0 0.0
      %7944 = vmatpush1.msra.mxu0 0.0
      %7945 = vmatprep.subr.mxu0 0.0
      %7946 = vmatpush1.msra.mxu0 0.0
      %7947 = vmatprep.subr.mxu0 0.0
      %7948 = vmatpush1.msra.mxu0 0.0
      %7949 = vmatprep.subr.mxu0 0.0
      %7950 = vmatpush1.msra.mxu0 0.0
      %7951 = vmatprep.subr.mxu0 0.0
      %7952 = vmatpush1.msra.mxu0 %v7209
      %7953 = vmatprep.subr.mxu0 0.0
      %7954 = vmatpush1.msra.mxu0 %v7208
      %7955 = vmatprep.subr.mxu0 0.0
      %7956 = vmatpush1.msra.mxu0 %v7207
      %7957 = vmatprep.subr.mxu0 0.0
      %7958 = vmatpush1.msra.mxu0 %v7206
      %7959 = vmatprep.subr.mxu0 0.0
      %7960 = vmatpush2.msra.mxu0 0.0
      %7961 = vmatprep.subr.mxu0 0.0
      %7962 = vmatpush2.msra.mxu0 0.0
      %7963 = vmatprep.subr.mxu0 0.0
      %7964 = vmatpush2.msra.mxu0 0.0
      %7965 = vmatprep.subr.mxu0 0.0
      %7966 = vmatpush2.msra.mxu0 0.0
      %7967 = vmatprep.subr.mxu0 0.0
      %7968 = vmatpush2.msra.mxu0 0.0
      %7969 = vmatprep.subr.mxu0 0.0
      %7970 = vmatpush2.msra.mxu0 0.0
      %7971 = vmatprep.subr.mxu0 0.0
      %7972 = vmatpush2.msra.mxu0 0.0
      %7973 = vmatprep.subr.mxu0 0.0
      %7974 = vmatpush2.msra.mxu0 0.0
      %7975 = vmatprep.subr.mxu0 0.0
      %7976 = vmatpush2.msra.mxu0 0.0
      %7977 = vmatprep.subr.mxu0 0.0
      %7978 = vmatpush2.msra.mxu0 0.0
      %7979 = vmatprep.subr.mxu0 0.0
      %7980 = vmatpush2.msra.mxu0 0.0
      %7981 = vmatprep.subr.mxu0 0.0
      %7982 = vmatpush2.msra.mxu0 0.0
      %7983 = vmatprep.subr.mxu0 0.0
      %7984 = vmatpush2.msra.mxu0 0.0
      %7985 = vmatprep.subr.mxu0 0.0
      %7986 = vmatpush2.msra.mxu0 0.0
      %7987 = vmatprep.subr.mxu0 0.0
      %7988 = vmatpush2.msra.mxu0 0.0
      %7989 = vmatprep.subr.mxu0 0.0
      %7990 = vmatpush2.msra.mxu0 0.0
      %7991 = vmatprep.mubr.f32.mxu0 0.0
      %7992 = vmatmul.mubr.f32.gmra.mxu0 %v7925
      %v7993 = vpop.f32.mrf.mxu0
      %v7994 = vadd.f32 %v7215, %v7993
      %v7995 = vpop.f32.mrf.mxu0
      %7996 = vdwg.mxu0
      %v7997 = vadd.f32 %v7203, %v7994
      %v7998 = vxor.u32 %v7997, 2147483648
      %v7999 = vmul.f32 %v7998, 1.442695
      %v8000 = vpow.pop %v7999
      %v8001 = vadd.f32 %v8000, 1.0
      %v8002 = vrcp.pop %v8001
      %v8003 = vmul.f32 1.0, %v8002
      %8005 = vrot.lane.b32.xlu0 %v7994, 64
      %v8006 = vpop.permute.xlu0 %8005
      %v8008 = vmul.f32 %v8003, %v8006
      %8010 = vrot.lane.b32.xlu0 %v8008, 64
      %v8011 = vpop.permute.xlu0 %8010
      %v8013 = vadd.f32 %v7203, %v8011
      %v8014 = vtanh.pop %v8013
      %v8015 = vsub.f32 1.0, %v8003
      %8017 = vrot.lane.b32.xlu0 %v8014, 96
      %v8018 = vpop.permute.xlu0 %8017
      %v8020 = vmul.f32 %v8015, %v8018
      %v8021 = vmul.f32 %v8003, %v7921
      %v8022 = vadd.f32 %v8020, %v8021
      %v8023 = vld [vmem:[%s14] sm:$0xff]
      %v8024 = vld [vmem:[%s14 + $0x8] sm:$0xff]
      %v8025 = vld [vmem:[%s14 + $0x10] sm:$0xff]
      %v8026 = vld [vmem:[%s14 + $0x18] sm:$0xff]
      %v8027 = vld [vmem:[%s15] sm:$0x1]
      %v8029 = vlaneseq
      %v8030 = vshrl.u32 %v8029, 7
      %v8031 = vsub.s32 0, %v8030
      %v8032 = vrot.slane %v8027, %v8031
      %8035 = vrot.lane.b32.xlu0 %v8022, 96
      %v8036 = vpop.permute.xlu0 %8035
      %v8037 = vsel %vm820, %v8036, 0
      %8039 = vmatprep.subr.mxu0 0.0
      %8040 = vmatpush1.msra.mxu0 0.0
      %8041 = vmatprep.subr.mxu0 0.0
      %8042 = vmatpush1.msra.mxu0 0.0
      %8043 = vmatprep.subr.mxu0 0.0
      %8044 = vmatpush1.msra.mxu0 0.0
      %8045 = vmatprep.subr.mxu0 0.0
      %8046 = vmatpush1.msra.mxu0 0.0
      %8047 = vmatprep.subr.mxu0 0.0
      %8048 = vmatpush1.msra.mxu0 0.0
      %8049 = vmatprep.subr.mxu0 0.0
      %8050 = vmatpush1.msra.mxu0 0.0
      %8051 = vmatprep.subr.mxu0 0.0
      %8052 = vmatpush1.msra.mxu0 0.0
      %8053 = vmatprep.subr.mxu0 0.0
      %8054 = vmatpush1.msra.mxu0 0.0
      %8055 = vmatprep.subr.mxu0 0.0
      %8056 = vmatpush1.msra.mxu0 0.0
      %8057 = vmatprep.subr.mxu0 0.0
      %8058 = vmatpush1.msra.mxu0 0.0
      %8059 = vmatprep.subr.mxu0 0.0
      %8060 = vmatpush1.msra.mxu0 0.0
      %8061 = vmatprep.subr.mxu0 0.0
      %8062 = vmatpush1.msra.mxu0 0.0
      %8063 = vmatprep.subr.mxu0 0.0
      %8064 = vmatpush1.msra.mxu0 %v8026
      %8065 = vmatprep.subr.mxu0 0.0
      %8066 = vmatpush1.msra.mxu0 %v8025
      %8067 = vmatprep.subr.mxu0 0.0
      %8068 = vmatpush1.msra.mxu0 %v8024
      %8069 = vmatprep.subr.mxu0 0.0
      %8070 = vmatpush1.msra.mxu0 %v8023
      %8071 = vmatprep.subr.mxu0 0.0
      %8072 = vmatpush2.msra.mxu0 0.0
      %8073 = vmatprep.subr.mxu0 0.0
      %8074 = vmatpush2.msra.mxu0 0.0
      %8075 = vmatprep.subr.mxu0 0.0
      %8076 = vmatpush2.msra.mxu0 0.0
      %8077 = vmatprep.subr.mxu0 0.0
      %8078 = vmatpush2.msra.mxu0 0.0
      %8079 = vmatprep.subr.mxu0 0.0
      %8080 = vmatpush2.msra.mxu0 0.0
      %8081 = vmatprep.subr.mxu0 0.0
      %8082 = vmatpush2.msra.mxu0 0.0
      %8083 = vmatprep.subr.mxu0 0.0
      %8084 = vmatpush2.msra.mxu0 0.0
      %8085 = vmatprep.subr.mxu0 0.0
      %8086 = vmatpush2.msra.mxu0 0.0
      %8087 = vmatprep.subr.mxu0 0.0
      %8088 = vmatpush2.msra.mxu0 0.0
      %8089 = vmatprep.subr.mxu0 0.0
      %8090 = vmatpush2.msra.mxu0 0.0
      %8091 = vmatprep.subr.mxu0 0.0
      %8092 = vmatpush2.msra.mxu0 0.0
      %8093 = vmatprep.subr.mxu0 0.0
      %8094 = vmatpush2.msra.mxu0 0.0
      %8095 = vmatprep.subr.mxu0 0.0
      %8096 = vmatpush2.msra.mxu0 0.0
      %8097 = vmatprep.subr.mxu0 0.0
      %8098 = vmatpush2.msra.mxu0 0.0
      %8099 = vmatprep.subr.mxu0 0.0
      %8100 = vmatpush2.msra.mxu0 0.0
      %8101 = vmatprep.subr.mxu0 0.0
      %8102 = vmatpush2.msra.mxu0 0.0
      %8103 = vmatprep.mubr.f32.mxu0 0.0
      %8104 = vmatmul.mubr.f32.gmra.mxu0 %v8037
      %v8105 = vpop.f32.mrf.mxu0
      %v8106 = vadd.f32 %v8032, %v8105
      %v8107 = vpop.f32.mrf.mxu0
      %8108 = vdwg.mxu0
      %vm8109 = vcmp.gt.f32.partialorder %v8106, 20.0
      %v8110 = vmin.f32 %v8106, 20.0
      %v8111 = vmul.f32 %v8110, 1.442695
      %v8112 = vpow.pop %v8111
      %v8113 = vadd.f32 %v8112, 1.0
      %v8114 = vlog2.pop %v8113
      %v8115 = vmul.f32 %v8114, 0.6931472
      %v8116 = vmul.f32 -0.5, %v8112
      %v8117 = vadd.f32 %v8116, 1.0
      %v8118 = vmul.f32 %v8117, %v8112
      %v8119 = vand.u32 2147483647, %v8112
      %vm8120 = vcmp.lt.f32.partialorder %v8119, 0.0004427343
      %v8121 = vsel %vm8120, %v8118, %v8115
      %v8122 = vsel %vm8109, %v8106, %v8121
      %vm8123 = vcmask 15360
      %8124 = vst.msk [vmem:[%s519] sm:$0xff] %vm8123, %v8122
      %p8125 = scmp.lt.s32.totalorder %s27, 1
      %s8126 = scalar_select %p8125, %s27, 1
      %s8127 = smul.addr %s8126, 8
      %s8128 = scalar_lea.vmem %s16, %s8127
      // Predicated region
      $region85: #{_lambda_.1} parent=83 // pred_check
        %p8129 = pneg %p386
      $region86: #{_lambda_.1} parent=83 // pred_check_branch
        %8131 = sbr.rel (%p8129) target = $region88
      $region87: #{_lambda_.1} parent=83 // pred_region
        _
      $region88: #{_lambda_.1} parent=83 // pred_fallthru
        _
    $region84: #{_lambda_.1} parent=5 // pred_fallthru
      _
    %p8132 = scmp.le.s32.totalorder 2, %s22
    // Predicated region
    $region89: #{_lambda_.1} parent=5 // pred_check
      %p8133 = pneg %p8132
    $region90: #{_lambda_.1} parent=5 // pred_check_branch
      %8135 = sbr.rel (%p8133) target = $region92
    $region91: #{_lambda_.1} parent=5 // pred_region
      %s8136 = ssub.s32 %s22, 2
      // Predicated region
      $region93: #{_lambda_.1} parent=91 // pred_check
        %p8137 = pneg %p392
      $region94: #{_lambda_.1} parent=91 // pred_check_branch
        %8139 = sbr.rel (%p8137) target = $region96
      $region95: #{_lambda_.1} parent=91 // pred_region
        %p8140 = scmp.lt.s32.totalorder %s28, 1
        %s8141 = scalar_select %p8140, %s28, 1
        %s8142 = smul.addr %s8141, 8
        %s8143 = scalar_lea.vmem %s16, %s8142
      $region96: #{_lambda_.1} parent=91 // pred_fallthru
        _
    $region92: #{_lambda_.1} parent=5 // pred_fallthru
      _
  $region6: #{_lambda_.1} parent=0 // loop_footer
    %s26 = sadd.s32 1, %s22
  $region7: #{_lambda_.1} parent=0 // loop_footer_branch
    %21 = sbr.rel target = $region3
  $region8: #{_lambda_.1} parent=0 // loop_exit
    _

</llo_original>
